<compile_context>
chip_gen: v7x
topology: tpu7x:2x2x1
jax: 0.10.0
libtpu: 0.0.40
codegen_flags: <defaults>
</compile_context>

<pallas_src>
import numpy as np

import jax
import jax.numpy as jnp
from jax.experimental import pallas as pl
from jax.experimental.pallas import tpu as pltpu

EPS = 1e-9        # same as the PyTorch module
BN_EPS = 1e-5     # torch.nn.BatchNorm1d default
N_FFT = 64        # synthetic FFT size -> spectral bins = N_FFT//2 + 1 = 33
N_SPEAKERS = 4

_VMEM_SPEC = pl.BlockSpec(memory_space=pltpu.MemorySpace.VMEM)


# ---------------------------------------------------------------------------
# Static "time gather" matrices (numpy -> constants).
#   conv:   out[t] = sum_k x[t*stride + k - pad] @ W_k         (zero if OOB)
#   deconv: out[t] = sum_k x[(t + pad - k)/stride] @ Wt_k      (if integral & in range)
# ---------------------------------------------------------------------------
def _conv_gather(t_in, t_out, k, stride, pad):
    g = np.zeros((k * t_out, t_in), np.float32)
    for kk in range(k):
        for t in range(t_out):
            tau = t * stride + kk - pad
            if 0 <= tau < t_in:
                g[kk * t_out + t, tau] = 1.0
    return g


def _deconv_gather(t_in, t_out, k, stride, pad):
    g = np.zeros((k * t_out, t_in), np.float32)
    for kk in range(k):
        for t in range(t_out):
            num = t + pad - kk
            if num % stride == 0:
                ti = num // stride
                if 0 <= ti < t_in:
                    g[kk * t_out + t, ti] = 1.0
    return g


# ---------------------------------------------------------------------------
# The fused kernel (whole CVAE forward, no grid, everything in VMEM).
# ---------------------------------------------------------------------------
def _make_cvae_kernel(B, T, Tz, Cz, dims):
    L_E1, L_E2, L_HD, L_D1, L_D2, L_D3 = dims

    def conv_block(h_list, g_ref, w_ref, m_ref, layer):
        """Conv/deconv as: (G @ H) per-tap matmuls + (bias + speaker) map."""
        K, _t_in, t_out, cin, _cout = layer
        g = g_ref[...]
        w = w_ref[...]
        outs = []
        for b, h in enumerate(h_list):
            p = jnp.dot(g, h, preferred_element_type=jnp.float32)   # (K*t_out, cin)
            acc = m_ref[b * t_out:(b + 1) * t_out, :]                # bias + speaker (+log_g)
            for k in range(K):
                acc = acc + jnp.dot(p[k * t_out:(k + 1) * t_out, :],
                                    w[k * cin:(k + 1) * cin, :],
                                    preferred_element_type=jnp.float32)
            outs.append(acc)
        return outs

    def bn_glu(y_list, ga_ref, be_ref):
        """BatchNorm1d (training-mode batch stats, biased var) + GLU(dim=channels)."""
        n = float(sum(y.shape[0] for y in y_list))
        s = jnp.sum(y_list[0], axis=0, keepdims=True)
        for y in y_list[1:]:
            s = s + jnp.sum(y, axis=0, keepdims=True)
        mean = s * (1.0 / n)
        sq = jnp.sum(jnp.square(y_list[0] - mean), axis=0, keepdims=True)
        for y in y_list[1:]:
            sq = sq + jnp.sum(jnp.square(y - mean), axis=0, keepdims=True)
        inv = jax.lax.rsqrt(sq * (1.0 / n) + BN_EPS)
        gamma = ga_ref[...]
        beta = be_ref[...]
        half = y_list[0].shape[1] // 2
        outs = []
        for y in y_list:
            yn = (y - mean) * inv * gamma + beta
            outs.append(yn[:, :half] * jax.nn.sigmoid(yn[:, half:]))
        return outs

    def kernel(x_ref, eps_ref,
               g1, w1, m1, ga1, be1,
               g2, w2, m2, ga2, be2,
               gh, wh, mh,
               gd1, wd1, md1, gad1, bed1,
               gd2, wd2, md2, gad2, bed2,
               gd3, wd3, md3,
               out_ref, mu_ref, lv_ref):
        # ----- encoder -----
        h = [jnp.log(x_ref[b * T:(b + 1) * T, :] + EPS) for b in range(B)]
        h = bn_glu(conv_block(h, g1, w1, m1, L_E1), ga1, be1)
        h = bn_glu(conv_block(h, g2, w2, m2, L_E2), ga2, be2)
        heads = conv_block(h, gh, wh, mh, L_HD)   # cols [0:Cz] = mu, [Cz:2Cz] = logvar

        # ----- reparameterize (fused) -----
        z = []
        for b, yb in enumerate(heads):
            mu_b = yb[:, :Cz]
            lv_b = yb[:, Cz:]
            mu_ref[b * Tz:(b + 1) * Tz, :] = mu_b
            lv_ref[b * Tz:(b + 1) * Tz, :] = lv_b
            z.append(mu_b + eps_ref[b * Tz:(b + 1) * Tz, :] * jnp.exp(0.5 * lv_b))

        # ----- decoder (log_g folded into md3) -----
        h = bn_glu(conv_block(z, gd1, wd1, md1, L_D1), gad1, bed1)
        h = bn_glu(conv_block(h, gd2, wd2, md2, L_D2), gad2, bed2)
        y = conv_block(h, gd3, wd3, md3, L_D3)
        t3 = L_D3[2]
        for b, yb in enumerate(y):
            out_ref[b * t3:(b + 1) * t3, :] = yb

    return kernel


# ---------------------------------------------------------------------------
# Parameters (torch layouts) and forward wrapper
# ---------------------------------------------------------------------------
def init_params(key, n_speakers):
    f = N_FFT
    shapes = {
        # Conv1d weights: (C_out, C_in, K); ConvTranspose1d weights: (C_in, C_out, K)
        "ec1_w": (2 * (f // 4), f // 2 + 1 + n_speakers, 5), "ec1_b": (2 * (f // 4),),
        "ec1_g": (2 * (f // 4),), "ec1_beta": (2 * (f // 4),),
        "ec2_w": (2 * (f // 8), f // 4 + n_speakers, 4), "ec2_b": (2 * (f // 8),),
        "ec2_g": (2 * (f // 8),), "ec2_beta": (2 * (f // 8),),
        "emu_w": (f // 16, f // 8 + n_speakers, 4), "emu_b": (f // 16,),
        "elv_w": (f // 16, f // 8 + n_speakers, 4), "elv_b": (f // 16,),
        "dd1_w": (f // 16 + n_speakers, 2 * (f // 8), 4), "dd1_b": (2 * (f // 8),),
        "dd1_g": (2 * (f // 8),), "dd1_beta": (2 * (f // 8),),
        "dd2_w": (f // 8 + n_speakers, 2 * (f // 4), 4), "dd2_b": (2 * (f // 4),),
        "dd2_g": (2 * (f // 4),), "dd2_beta": (2 * (f // 4),),
        "dd3_w": (f // 4 + n_speakers, f // 2 + 1, 5), "dd3_b": (f // 2 + 1,),
    }
    params = {}
    keys = jax.random.split(key, len(shapes))
    for (name, shp), k in zip(sorted(shapes.items()), keys):
        if name.endswith("_g"):                      # BN gamma (torch default = 1)
            params[name] = jnp.ones(shp, jnp.float32)
        elif name.endswith("_beta") or name.endswith("_b"):
            params[name] = jnp.zeros(shp, jnp.float32)
        else:
            params[name] = 0.05 * jax.random.normal(k, shp, jnp.float32)
    params["log_g"] = jnp.ones((), jnp.float32)      # torch.ones([])
    return params


def cvae_forward(params, x, c, key):
    """x: (B, N_FFT//2+1, T) positive spectra, c: (B, n_speakers) one-hot."""
    B, n_bins, T = x.shape
    f = N_FFT
    Tz, Cz = T // 4, f // 16

    # static gather matrices (trace-time numpy constants)
    g_e1 = _conv_gather(T, T, 5, 1, 2)
    g_e2 = _conv_gather(T, T // 2, 4, 2, 1)
    g_hd = _conv_gather(T // 2, Tz, 4, 2, 1)
    g_d1 = _deconv_gather(Tz, T // 2, 4, 2, 1)
    g_d2 = _deconv_gather(T // 2, T, 4, 2, 1)
    g_d3 = _deconv_gather(T, T, 5, 1, 2)

    # ---- weight packing + (bias + exact speaker contribution [+ log_g]) maps ----
    def pack_conv(w, cin_main):               # torch Conv1d weight (Cout, Cin_full, K)
        k = w.shape[-1]
        wm = jnp.transpose(w[:, :cin_main, :], (2, 1, 0)).reshape(k * cin_main, w.shape[0])
        wspk = jnp.transpose(w[:, cin_main:, :], (2, 1, 0))        # (K, n_spk, Cout)
        return wm, wspk

    def pack_deconv(w, cin_main):             # torch ConvTranspose1d weight (Cin_full, Cout, K)
        k = w.shape[-1]
        wm = jnp.transpose(w[:cin_main, :, :], (2, 0, 1)).reshape(k * cin_main, w.shape[1])
        wspk = jnp.transpose(w[cin_main:, :, :], (2, 0, 1))        # (K, n_spk, Cout)
        return wm, wspk

    def bias_map(g_np, k, wspk, bias, extra=None):
        t_out = g_np.shape[0] // k
        # valid-tap indicator V[t, k] (exactly reproduces zero-padding / zero-stuffing
        # of the concatenated speaker channels in the torch module)
        v = jnp.asarray(g_np.reshape(k, t_out, g_np.shape[1]).sum(axis=-1).T)
        m = jnp.einsum("tk,bs,kso->bto", v, c, wspk,
                       precision=jax.lax.Precision.HIGHEST) + bias[None, None, :]
        if extra is not None:
            m = m + extra
        return m.reshape(B * t_out, -1)

    w1, s1 = pack_conv(params["ec1_w"], n_bins)
    m1 = bias_map(g_e1, 5, s1, params["ec1_b"])
    w2, s2 = pack_conv(params["ec2_w"], f // 4)
    m2 = bias_map(g_e2, 4, s2, params["ec2_b"])

    wh_full = jnp.concatenate([params["emu_w"], params["elv_w"]], axis=0)
    bh_full = jnp.concatenate([params["emu_b"], params["elv_b"]], axis=0)
    wh, sh = pack_conv(wh_full, f // 8)
    mh = bias_map(g_hd, 4, sh, bh_full)

    wd1, sd1 = pack_deconv(params["dd1_w"], Cz)
    md1 = bias_map(g_d1, 4, sd1, params["dd1_b"])
    wd2, sd2 = pack_deconv(params["dd2_w"], f // 8)
    md2 = bias_map(g_d2, 4, sd2, params["dd2_b"])
    wd3, sd3 = pack_deconv(params["dd3_w"], f // 4)
    md3 = bias_map(g_d3, 5, sd3, params["dd3_b"], extra=params["log_g"])

    ga1 = params["ec1_g"].reshape(1, -1); be1 = params["ec1_beta"].reshape(1, -1)
    ga2 = params["ec2_g"].reshape(1, -1); be2 = params["ec2_beta"].reshape(1, -1)
    gad1 = params["dd1_g"].reshape(1, -1); bed1 = params["dd1_beta"].reshape(1, -1)
    gad2 = params["dd2_g"].reshape(1, -1); bed2 = params["dd2_beta"].reshape(1, -1)

    G1, G2, GH = jnp.asarray(g_e1), jnp.asarray(g_e2), jnp.asarray(g_hd)
    GD1, GD2, GD3 = jnp.asarray(g_d1), jnp.asarray(g_d2), jnp.asarray(g_d3)

    # layer dims: (K, T_in, T_out, Cin_main, Cout_total)
    dims = (
        (5, T, T, n_bins, 2 * (f // 4)),
        (4, T, T // 2, f // 4, 2 * (f // 8)),
        (4, T // 2, Tz, f // 8, 2 * Cz),
        (4, Tz, T // 2, Cz, 2 * (f // 8)),
        (4, T // 2, T, f // 8, 2 * (f // 4)),
        (5, T, T, f // 4, n_bins),
    )

    # activations in (time, channel) layout; transpose only at the API boundary
    x2 = jnp.transpose(x, (0, 2, 1)).reshape(B * T, n_bins)
    eps2 = jax.random.normal(key, (B * Tz, Cz), jnp.float32)

    kernel = _make_cvae_kernel(B, T, Tz, Cz, dims)
    out2, mu2, lv2 = pl.pallas_call(
        kernel,
        out_shape=(
            jax.ShapeDtypeStruct((B * T, n_bins), jnp.float32),
            jax.ShapeDtypeStruct((B * Tz, Cz), jnp.float32),
            jax.ShapeDtypeStruct((B * Tz, Cz), jnp.float32),
        ),
        in_specs=[_VMEM_SPEC] * 28,
        out_specs=(_VMEM_SPEC, _VMEM_SPEC, _VMEM_SPEC),
    )(x2, eps2,
      G1, w1, m1, ga1, be1,
      G2, w2, m2, ga2, be2,
      GH, wh, mh,
      GD1, wd1, md1, gad1, bed1,
      GD2, wd2, md2, gad2, bed2,
      GD3, wd3, md3)

    log_sigma_sq = jnp.transpose(out2.reshape(B, T, n_bins), (0, 2, 1))
    mu = jnp.transpose(mu2.reshape(B, Tz, Cz), (0, 2, 1))
    logvar = jnp.transpose(lv2.reshape(B, Tz, Cz), (0, 2, 1))
    return log_sigma_sq, mu, logvar


# ---------------------------------------------------------------------------
# Pure-JAX (XLA conv) reference of the PyTorch module, for self-checking.
# ---------------------------------------------------------------------------
def _reference_forward(params, x, c, key):
    B, n_bins, T = x.shape
    f = N_FFT
    Tz, Cz = T // 4, f // 16
    dn = ("NCH", "OIH", "NCH")
    hi = jax.lax.Precision.HIGHEST

    def conv(h, w, b, stride, pad):
        y = jax.lax.conv_general_dilated(h, w, (stride,), [(pad, pad)],
                                         dimension_numbers=dn, precision=hi)
        return y + b[None, :, None]

    def deconv(h, w, b, stride, pad):
        k = w.shape[-1]
        w2 = jnp.flip(jnp.transpose(w, (1, 0, 2)), axis=-1)
        y = jax.lax.conv_general_dilated(h, w2, (1,), [(k - 1 - pad, k - 1 - pad)],
                                         lhs_dilation=(stride,),
                                         dimension_numbers=dn, precision=hi)
        return y + b[None, :, None]

    def bn_glu(y, gamma, beta):
        mean = jnp.mean(y, axis=(0, 2), keepdims=True)
        var = jnp.mean(jnp.square(y - mean), axis=(0, 2), keepdims=True)
        yn = (y - mean) * jax.lax.rsqrt(var + BN_EPS)
        yn = yn * gamma[None, :, None] + beta[None, :, None]
        half = yn.shape[1] // 2
        return yn[:, :half] * jax.nn.sigmoid(yn[:, half:])

    def cat_c(h):
        cexp = jnp.broadcast_to(c[:, :, None], (B, c.shape[1], h.shape[2]))
        return jnp.concatenate([h, cexp], axis=1)

    h = cat_c(jnp.log(x + EPS))
    h = bn_glu(conv(h, params["ec1_w"], params["ec1_b"], 1, 2),
               params["ec1_g"], params["ec1_beta"])
    h = cat_c(h)
    h = bn_glu(conv(h, params["ec2_w"], params["ec2_b"], 2, 1),
               params["ec2_g"], params["ec2_beta"])
    h = cat_c(h)
    mu = conv(h, params["emu_w"], params["emu_b"], 2, 1)
    logvar = conv(h, params["elv_w"], params["elv_b"], 2, 1)

    eps2 = jax.random.normal(key, (B * Tz, Cz), jnp.float32)
    eps = jnp.transpose(eps2.reshape(B, Tz, Cz), (0, 2, 1))
    z = mu + eps * jnp.exp(0.5 * logvar)

    h = cat_c(z)
    h = bn_glu(deconv(h, params["dd1_w"], params["dd1_b"], 2, 1),
               params["dd1_g"], params["dd1_beta"])
    h = cat_c(h)
    h = bn_glu(deconv(h, params["dd2_w"], params["dd2_b"], 2, 1),
               params["dd2_g"], params["dd2_beta"])
    h = cat_c(h)
    out = deconv(h, params["dd3_w"], params["dd3_b"], 1, 2) + params["log_g"]
    return out, mu, logvar


if __name__ == "__main__":
    key = jax.random.PRNGKey(0)
    k_param, k_x, k_c, k_eps = jax.random.split(key, 4)

    B, T = 2, 16
    n_bins = N_FFT // 2 + 1                                   # 33
    x = jax.random.uniform(k_x, (B, n_bins, T), jnp.float32,
                           minval=0.01, maxval=2.0)           # positive spectra
    spk = jax.random.randint(k_c, (B,), 0, N_SPEAKERS)
    c = jax.nn.one_hot(spk, N_SPEAKERS, dtype=jnp.float32)    # (B, n_speakers)

    params = init_params(k_param, N_SPEAKERS)

    fwd = jax.jit(cvae_forward)
    log_sigma_sq, mu, logvar = fwd(params, x, c, k_eps)
    jax.block_until_ready((log_sigma_sq, mu, logvar))

    assert log_sigma_sq.shape == (B, n_bins, T)
    assert mu.shape == (B, N_FFT // 16, T // 4)
    assert logvar.shape == (B, N_FFT // 16, T // 4)
    assert bool(jnp.all(jnp.isfinite(log_sigma_sq)))

    # self-check against an XLA-conv reference of the same module (same eps key)
    ref_out, ref_mu, ref_lv = _reference_forward(params, x, c, k_eps)
    assert bool(jnp.allclose(log_sigma_sq, ref_out, rtol=5e-2, atol=5e-2))
    assert bool(jnp.allclose(mu, ref_mu, rtol=5e-2, atol=5e-2))
    assert bool(jnp.allclose(logvar, ref_lv, rtol=5e-2, atol=5e-2))

    print("KERNEL_OK")
</pallas_src>

<mosaic_0001>
module attributes {stable_mosaic.version = 11 : i64} {
  func.func @kernel(%arg0: memref<32x33xf32, #tpu.memory_space<vmem>>, %arg1: memref<8x4xf32, #tpu.memory_space<vmem>>, %arg2: memref<80x16xf32, #tpu.memory_space<vmem>>, %arg3: memref<165x32xf32, #tpu.memory_space<vmem>>, %arg4: memref<32x32xf32, #tpu.memory_space<vmem>>, %arg5: memref<1x32xf32, #tpu.memory_space<vmem>>, %arg6: memref<1x32xf32, #tpu.memory_space<vmem>>, %arg7: memref<32x16xf32, #tpu.memory_space<vmem>>, %arg8: memref<64x16xf32, #tpu.memory_space<vmem>>, %arg9: memref<16x16xf32, #tpu.memory_space<vmem>>, %arg10: memref<1x16xf32, #tpu.memory_space<vmem>>, %arg11: memref<1x16xf32, #tpu.memory_space<vmem>>, %arg12: memref<16x8xf32, #tpu.memory_space<vmem>>, %arg13: memref<32x8xf32, #tpu.memory_space<vmem>>, %arg14: memref<8x8xf32, #tpu.memory_space<vmem>>, %arg15: memref<32x4xf32, #tpu.memory_space<vmem>>, %arg16: memref<16x16xf32, #tpu.memory_space<vmem>>, %arg17: memref<16x16xf32, #tpu.memory_space<vmem>>, %arg18: memref<1x16xf32, #tpu.memory_space<vmem>>, %arg19: memref<1x16xf32, #tpu.memory_space<vmem>>, %arg20: memref<64x8xf32, #tpu.memory_space<vmem>>, %arg21: memref<32x32xf32, #tpu.memory_space<vmem>>, %arg22: memref<32x32xf32, #tpu.memory_space<vmem>>, %arg23: memref<1x32xf32, #tpu.memory_space<vmem>>, %arg24: memref<1x32xf32, #tpu.memory_space<vmem>>, %arg25: memref<80x16xf32, #tpu.memory_space<vmem>>, %arg26: memref<80x33xf32, #tpu.memory_space<vmem>>, %arg27: memref<32x33xf32, #tpu.memory_space<vmem>>, %arg28: memref<32x33xf32, #tpu.memory_space<vmem>>, %arg29: memref<8x4xf32, #tpu.memory_space<vmem>>, %arg30: memref<8x4xf32, #tpu.memory_space<vmem>>) attributes {dimension_semantics = [], scalar_prefetch = 0 : i64, scratch_operands = 0 : i64, tpu.core_type = #tpu.core_type<tc>} {
    %c0 = arith.constant 0 : index
    %c0_0 = arith.constant 0 : index
    %0 = vector.load %arg0[%c0, %c0_0] : memref<32x33xf32, #tpu.memory_space<vmem>>, vector<16x33xf32>
    %cst = arith.constant 9.99999971E-10 : f32
    %1 = vector.broadcast %cst : f32 to vector<16x33xf32>
    %2 = arith.addf %0, %1 : vector<16x33xf32>
    %3 = math.log %2 : vector<16x33xf32>
    %c16 = arith.constant 16 : index
    %c0_1 = arith.constant 0 : index
    %4 = vector.load %arg0[%c16, %c0_1] : memref<32x33xf32, #tpu.memory_space<vmem>>, vector<16x33xf32>
    %cst_2 = arith.constant 9.99999971E-10 : f32
    %5 = vector.broadcast %cst_2 : f32 to vector<16x33xf32>
    %6 = arith.addf %4, %5 : vector<16x33xf32>
    %7 = math.log %6 : vector<16x33xf32>
    %c0_3 = arith.constant 0 : index
    %c0_4 = arith.constant 0 : index
    %8 = vector.load %arg2[%c0_3, %c0_4] : memref<80x16xf32, #tpu.memory_space<vmem>>, vector<80x16xf32>
    %c0_5 = arith.constant 0 : index
    %c0_6 = arith.constant 0 : index
    %9 = vector.load %arg3[%c0_5, %c0_6] : memref<165x32xf32, #tpu.memory_space<vmem>>, vector<165x32xf32>
    %cst_7 = arith.constant dense<0.000000e+00> : vector<80x33xf32>
    %10 = tpu.matmul %8, %3, %cst_7 {dimension_numbers = #tpu.dot_dimension_numbers<[1], [0], [0], [1], [0, 0, 1, 1], [], []>} : vector<80x16xf32>, vector<16x33xf32>, vector<80x33xf32> -> vector<80x33xf32>
    %c0_8 = arith.constant 0 : index
    %c0_9 = arith.constant 0 : index
    %11 = vector.load %arg4[%c0_8, %c0_9] : memref<32x32xf32, #tpu.memory_space<vmem>>, vector<16x32xf32>
    %12 = vector.extract_strided_slice %10 {offsets = [0, 0], sizes = [16, 33], strides = [1, 1]} : vector<80x33xf32> to vector<16x33xf32>
    %13 = vector.extract_strided_slice %9 {offsets = [0, 0], sizes = [33, 32], strides = [1, 1]} : vector<165x32xf32> to vector<33x32xf32>
    %cst_10 = arith.constant dense<0.000000e+00> : vector<16x32xf32>
    %14 = tpu.matmul %12, %13, %cst_10 {dimension_numbers = #tpu.dot_dimension_numbers<[1], [0], [0], [1], [0, 0, 1, 1], [], []>} : vector<16x33xf32>, vector<33x32xf32>, vector<16x32xf32> -> vector<16x32xf32>
    %15 = arith.addf %11, %14 : vector<16x32xf32>
    %16 = vector.extract_strided_slice %10 {offsets = [16, 0], sizes = [16, 33], strides = [1, 1]} : vector<80x33xf32> to vector<16x33xf32>
    %17 = vector.extract_strided_slice %9 {offsets = [33, 0], sizes = [33, 32], strides = [1, 1]} : vector<165x32xf32> to vector<33x32xf32>
    %cst_11 = arith.constant dense<0.000000e+00> : vector<16x32xf32>
    %18 = tpu.matmul %16, %17, %cst_11 {dimension_numbers = #tpu.dot_dimension_numbers<[1], [0], [0], [1], [0, 0, 1, 1], [], []>} : vector<16x33xf32>, vector<33x32xf32>, vector<16x32xf32> -> vector<16x32xf32>
    %19 = arith.addf %15, %18 : vector<16x32xf32>
    %20 = vector.extract_strided_slice %10 {offsets = [32, 0], sizes = [16, 33], strides = [1, 1]} : vector<80x33xf32> to vector<16x33xf32>
    %21 = vector.extract_strided_slice %9 {offsets = [66, 0], sizes = [33, 32], strides = [1, 1]} : vector<165x32xf32> to vector<33x32xf32>
    %cst_12 = arith.constant dense<0.000000e+00> : vector<16x32xf32>
    %22 = tpu.matmul %20, %21, %cst_12 {dimension_numbers = #tpu.dot_dimension_numbers<[1], [0], [0], [1], [0, 0, 1, 1], [], []>} : vector<16x33xf32>, vector<33x32xf32>, vector<16x32xf32> -> vector<16x32xf32>
    %23 = arith.addf %19, %22 : vector<16x32xf32>
    %24 = vector.extract_strided_slice %10 {offsets = [48, 0], sizes = [16, 33], strides = [1, 1]} : vector<80x33xf32> to vector<16x33xf32>
    %25 = vector.extract_strided_slice %9 {offsets = [99, 0], sizes = [33, 32], strides = [1, 1]} : vector<165x32xf32> to vector<33x32xf32>
    %cst_13 = arith.constant dense<0.000000e+00> : vector<16x32xf32>
    %26 = tpu.matmul %24, %25, %cst_13 {dimension_numbers = #tpu.dot_dimension_numbers<[1], [0], [0], [1], [0, 0, 1, 1], [], []>} : vector<16x33xf32>, vector<33x32xf32>, vector<16x32xf32> -> vector<16x32xf32>
    %27 = arith.addf %23, %26 : vector<16x32xf32>
    %28 = vector.extract_strided_slice %10 {offsets = [64, 0], sizes = [16, 33], strides = [1, 1]} : vector<80x33xf32> to vector<16x33xf32>
    %29 = vector.extract_strided_slice %9 {offsets = [132, 0], sizes = [33, 32], strides = [1, 1]} : vector<165x32xf32> to vector<33x32xf32>
    %cst_14 = arith.constant dense<0.000000e+00> : vector<16x32xf32>
    %30 = tpu.matmul %28, %29, %cst_14 {dimension_numbers = #tpu.dot_dimension_numbers<[1], [0], [0], [1], [0, 0, 1, 1], [], []>} : vector<16x33xf32>, vector<33x32xf32>, vector<16x32xf32> -> vector<16x32xf32>
    %31 = arith.addf %27, %30 : vector<16x32xf32>
    %cst_15 = arith.constant dense<0.000000e+00> : vector<80x33xf32>
    %32 = tpu.matmul %8, %7, %cst_15 {dimension_numbers = #tpu.dot_dimension_numbers<[1], [0], [0], [1], [0, 0, 1, 1], [], []>} : vector<80x16xf32>, vector<16x33xf32>, vector<80x33xf32> -> vector<80x33xf32>
    %c16_16 = arith.constant 16 : index
    %c0_17 = arith.constant 0 : index
    %33 = vector.load %arg4[%c16_16, %c0_17] : memref<32x32xf32, #tpu.memory_space<vmem>>, vector<16x32xf32>
    %34 = vector.extract_strided_slice %32 {offsets = [0, 0], sizes = [16, 33], strides = [1, 1]} : vector<80x33xf32> to vector<16x33xf32>
    %35 = vector.extract_strided_slice %9 {offsets = [0, 0], sizes = [33, 32], strides = [1, 1]} : vector<165x32xf32> to vector<33x32xf32>
    %cst_18 = arith.constant dense<0.000000e+00> : vector<16x32xf32>
    %36 = tpu.matmul %34, %35, %cst_18 {dimension_numbers = #tpu.dot_dimension_numbers<[1], [0], [0], [1], [0, 0, 1, 1], [], []>} : vector<16x33xf32>, vector<33x32xf32>, vector<16x32xf32> -> vector<16x32xf32>
    %37 = arith.addf %33, %36 : vector<16x32xf32>
    %38 = vector.extract_strided_slice %32 {offsets = [16, 0], sizes = [16, 33], strides = [1, 1]} : vector<80x33xf32> to vector<16x33xf32>
    %39 = vector.extract_strided_slice %9 {offsets = [33, 0], sizes = [33, 32], strides = [1, 1]} : vector<165x32xf32> to vector<33x32xf32>
    %cst_19 = arith.constant dense<0.000000e+00> : vector<16x32xf32>
    %40 = tpu.matmul %38, %39, %cst_19 {dimension_numbers = #tpu.dot_dimension_numbers<[1], [0], [0], [1], [0, 0, 1, 1], [], []>} : vector<16x33xf32>, vector<33x32xf32>, vector<16x32xf32> -> vector<16x32xf32>
    %41 = arith.addf %37, %40 : vector<16x32xf32>
    %42 = vector.extract_strided_slice %32 {offsets = [32, 0], sizes = [16, 33], strides = [1, 1]} : vector<80x33xf32> to vector<16x33xf32>
    %43 = vector.extract_strided_slice %9 {offsets = [66, 0], sizes = [33, 32], strides = [1, 1]} : vector<165x32xf32> to vector<33x32xf32>
    %cst_20 = arith.constant dense<0.000000e+00> : vector<16x32xf32>
    %44 = tpu.matmul %42, %43, %cst_20 {dimension_numbers = #tpu.dot_dimension_numbers<[1], [0], [0], [1], [0, 0, 1, 1], [], []>} : vector<16x33xf32>, vector<33x32xf32>, vector<16x32xf32> -> vector<16x32xf32>
    %45 = arith.addf %41, %44 : vector<16x32xf32>
    %46 = vector.extract_strided_slice %32 {offsets = [48, 0], sizes = [16, 33], strides = [1, 1]} : vector<80x33xf32> to vector<16x33xf32>
    %47 = vector.extract_strided_slice %9 {offsets = [99, 0], sizes = [33, 32], strides = [1, 1]} : vector<165x32xf32> to vector<33x32xf32>
    %cst_21 = arith.constant dense<0.000000e+00> : vector<16x32xf32>
    %48 = tpu.matmul %46, %47, %cst_21 {dimension_numbers = #tpu.dot_dimension_numbers<[1], [0], [0], [1], [0, 0, 1, 1], [], []>} : vector<16x33xf32>, vector<33x32xf32>, vector<16x32xf32> -> vector<16x32xf32>
    %49 = arith.addf %45, %48 : vector<16x32xf32>
    %50 = vector.extract_strided_slice %32 {offsets = [64, 0], sizes = [16, 33], strides = [1, 1]} : vector<80x33xf32> to vector<16x33xf32>
    %51 = vector.extract_strided_slice %9 {offsets = [132, 0], sizes = [33, 32], strides = [1, 1]} : vector<165x32xf32> to vector<33x32xf32>
    %cst_22 = arith.constant dense<0.000000e+00> : vector<16x32xf32>
    %52 = tpu.matmul %50, %51, %cst_22 {dimension_numbers = #tpu.dot_dimension_numbers<[1], [0], [0], [1], [0, 0, 1, 1], [], []>} : vector<16x33xf32>, vector<33x32xf32>, vector<16x32xf32> -> vector<16x32xf32>
    %53 = arith.addf %49, %52 : vector<16x32xf32>
    %cst_23 = arith.constant dense<0.000000e+00> : vector<32xf32>
    %54 = vector.multi_reduction <add>, %31, %cst_23 [0] : vector<16x32xf32> to vector<32xf32>
    %55 = vector.shape_cast %54 : vector<32xf32> to vector<1x32xf32>
    %cst_24 = arith.constant dense<0.000000e+00> : vector<32xf32>
    %56 = vector.multi_reduction <add>, %53, %cst_24 [0] : vector<16x32xf32> to vector<32xf32>
    %57 = vector.shape_cast %56 : vector<32xf32> to vector<1x32xf32>
    %58 = arith.addf %55, %57 : vector<1x32xf32>
    %cst_25 = arith.constant 3.125000e-02 : f32
    %59 = vector.broadcast %cst_25 : f32 to vector<1x32xf32>
    %60 = arith.mulf %58, %59 : vector<1x32xf32>
    %61 = vector.broadcast %60 : vector<1x32xf32> to vector<16x32xf32>
    %62 = arith.subf %31, %61 : vector<16x32xf32>
    %63 = arith.mulf %62, %62 : vector<16x32xf32>
    %cst_26 = arith.constant dense<0.000000e+00> : vector<32xf32>
    %64 = vector.multi_reduction <add>, %63, %cst_26 [0] : vector<16x32xf32> to vector<32xf32>
    %65 = vector.shape_cast %64 : vector<32xf32> to vector<1x32xf32>
    %66 = vector.broadcast %60 : vector<1x32xf32> to vector<16x32xf32>
    %67 = arith.subf %53, %66 : vector<16x32xf32>
    %68 = arith.mulf %67, %67 : vector<16x32xf32>
    %cst_27 = arith.constant dense<0.000000e+00> : vector<32xf32>
    %69 = vector.multi_reduction <add>, %68, %cst_27 [0] : vector<16x32xf32> to vector<32xf32>
    %70 = vector.shape_cast %69 : vector<32xf32> to vector<1x32xf32>
    %71 = arith.addf %65, %70 : vector<1x32xf32>
    %cst_28 = arith.constant 3.125000e-02 : f32
    %72 = vector.broadcast %cst_28 : f32 to vector<1x32xf32>
    %73 = arith.mulf %71, %72 : vector<1x32xf32>
    %cst_29 = arith.constant 9.99999974E-6 : f32
    %74 = vector.broadcast %cst_29 : f32 to vector<1x32xf32>
    %75 = arith.addf %73, %74 : vector<1x32xf32>
    %76 = math.rsqrt %75 : vector<1x32xf32>
    %c0_30 = arith.constant 0 : index
    %c0_31 = arith.constant 0 : index
    %77 = vector.load %arg5[%c0_30, %c0_31] : memref<1x32xf32, #tpu.memory_space<vmem>>, vector<1x32xf32>
    %c0_32 = arith.constant 0 : index
    %c0_33 = arith.constant 0 : index
    %78 = vector.load %arg6[%c0_32, %c0_33] : memref<1x32xf32, #tpu.memory_space<vmem>>, vector<1x32xf32>
    %79 = vector.broadcast %60 : vector<1x32xf32> to vector<16x32xf32>
    %80 = arith.subf %31, %79 : vector<16x32xf32>
    %81 = vector.broadcast %76 : vector<1x32xf32> to vector<16x32xf32>
    %82 = arith.mulf %80, %81 : vector<16x32xf32>
    %83 = vector.broadcast %77 : vector<1x32xf32> to vector<16x32xf32>
    %84 = arith.mulf %82, %83 : vector<16x32xf32>
    %85 = vector.broadcast %78 : vector<1x32xf32> to vector<16x32xf32>
    %86 = arith.addf %84, %85 : vector<16x32xf32>
    %87 = vector.extract_strided_slice %86 {offsets = [0, 0], sizes = [16, 16], strides = [1, 1]} : vector<16x32xf32> to vector<16x16xf32>
    %88 = vector.extract_strided_slice %86 {offsets = [0, 16], sizes = [16, 16], strides = [1, 1]} : vector<16x32xf32> to vector<16x16xf32>
    %89 = arith.negf %88 : vector<16x16xf32>
    %90 = math.exp %89 : vector<16x16xf32>
    %cst_34 = arith.constant 1.000000e+00 : f32
    %91 = vector.broadcast %cst_34 : f32 to vector<16x16xf32>
    %92 = arith.addf %91, %90 : vector<16x16xf32>
    %93 = arith.divf %91, %92 : vector<16x16xf32>
    %94 = arith.mulf %87, %93 : vector<16x16xf32>
    %95 = vector.broadcast %60 : vector<1x32xf32> to vector<16x32xf32>
    %96 = arith.subf %53, %95 : vector<16x32xf32>
    %97 = vector.broadcast %76 : vector<1x32xf32> to vector<16x32xf32>
    %98 = arith.mulf %96, %97 : vector<16x32xf32>
    %99 = vector.broadcast %77 : vector<1x32xf32> to vector<16x32xf32>
    %100 = arith.mulf %98, %99 : vector<16x32xf32>
    %101 = vector.broadcast %78 : vector<1x32xf32> to vector<16x32xf32>
    %102 = arith.addf %100, %101 : vector<16x32xf32>
    %103 = vector.extract_strided_slice %102 {offsets = [0, 0], sizes = [16, 16], strides = [1, 1]} : vector<16x32xf32> to vector<16x16xf32>
    %104 = vector.extract_strided_slice %102 {offsets = [0, 16], sizes = [16, 16], strides = [1, 1]} : vector<16x32xf32> to vector<16x16xf32>
    %105 = arith.negf %104 : vector<16x16xf32>
    %106 = math.exp %105 : vector<16x16xf32>
    %cst_35 = arith.constant 1.000000e+00 : f32
    %107 = vector.broadcast %cst_35 : f32 to vector<16x16xf32>
    %108 = arith.addf %107, %106 : vector<16x16xf32>
    %109 = arith.divf %107, %108 : vector<16x16xf32>
    %110 = arith.mulf %103, %109 : vector<16x16xf32>
    %c0_36 = arith.constant 0 : index
    %c0_37 = arith.constant 0 : index
    %111 = vector.load %arg7[%c0_36, %c0_37] : memref<32x16xf32, #tpu.memory_space<vmem>>, vector<32x16xf32>
    %c0_38 = arith.constant 0 : index
    %c0_39 = arith.constant 0 : index
    %112 = vector.load %arg8[%c0_38, %c0_39] : memref<64x16xf32, #tpu.memory_space<vmem>>, vector<64x16xf32>
    %cst_40 = arith.constant dense<0.000000e+00> : vector<32x16xf32>
    %113 = tpu.matmul %111, %94, %cst_40 {dimension_numbers = #tpu.dot_dimension_numbers<[1], [0], [0], [1], [0, 0, 1, 1], [], []>} : vector<32x16xf32>, vector<16x16xf32>, vector<32x16xf32> -> vector<32x16xf32>
    %c0_41 = arith.constant 0 : index
    %c0_42 = arith.constant 0 : index
    %114 = vector.load %arg9[%c0_41, %c0_42] : memref<16x16xf32, #tpu.memory_space<vmem>>, vector<8x16xf32>
    %115 = vector.extract_strided_slice %113 {offsets = [0, 0], sizes = [8, 16], strides = [1, 1]} : vector<32x16xf32> to vector<8x16xf32>
    %116 = vector.extract_strided_slice %112 {offsets = [0, 0], sizes = [16, 16], strides = [1, 1]} : vector<64x16xf32> to vector<16x16xf32>
    %cst_43 = arith.constant dense<0.000000e+00> : vector<8x16xf32>
    %117 = tpu.matmul %115, %116, %cst_43 {dimension_numbers = #tpu.dot_dimension_numbers<[1], [0], [0], [1], [0, 0, 1, 1], [], []>} : vector<8x16xf32>, vector<16x16xf32>, vector<8x16xf32> -> vector<8x16xf32>
    %118 = arith.addf %114, %117 : vector<8x16xf32>
    %119 = vector.extract_strided_slice %113 {offsets = [8, 0], sizes = [8, 16], strides = [1, 1]} : vector<32x16xf32> to vector<8x16xf32>
    %120 = vector.extract_strided_slice %112 {offsets = [16, 0], sizes = [16, 16], strides = [1, 1]} : vector<64x16xf32> to vector<16x16xf32>
    %cst_44 = arith.constant dense<0.000000e+00> : vector<8x16xf32>
    %121 = tpu.matmul %119, %120, %cst_44 {dimension_numbers = #tpu.dot_dimension_numbers<[1], [0], [0], [1], [0, 0, 1, 1], [], []>} : vector<8x16xf32>, vector<16x16xf32>, vector<8x16xf32> -> vector<8x16xf32>
    %122 = arith.addf %118, %121 : vector<8x16xf32>
    %123 = vector.extract_strided_slice %113 {offsets = [16, 0], sizes = [8, 16], strides = [1, 1]} : vector<32x16xf32> to vector<8x16xf32>
    %124 = vector.extract_strided_slice %112 {offsets = [32, 0], sizes = [16, 16], strides = [1, 1]} : vector<64x16xf32> to vector<16x16xf32>
    %cst_45 = arith.constant dense<0.000000e+00> : vector<8x16xf32>
    %125 = tpu.matmul %123, %124, %cst_45 {dimension_numbers = #tpu.dot_dimension_numbers<[1], [0], [0], [1], [0, 0, 1, 1], [], []>} : vector<8x16xf32>, vector<16x16xf32>, vector<8x16xf32> -> vector<8x16xf32>
    %126 = arith.addf %122, %125 : vector<8x16xf32>
    %127 = vector.extract_strided_slice %113 {offsets = [24, 0], sizes = [8, 16], strides = [1, 1]} : vector<32x16xf32> to vector<8x16xf32>
    %128 = vector.extract_strided_slice %112 {offsets = [48, 0], sizes = [16, 16], strides = [1, 1]} : vector<64x16xf32> to vector<16x16xf32>
    %cst_46 = arith.constant dense<0.000000e+00> : vector<8x16xf32>
    %129 = tpu.matmul %127, %128, %cst_46 {dimension_numbers = #tpu.dot_dimension_numbers<[1], [0], [0], [1], [0, 0, 1, 1], [], []>} : vector<8x16xf32>, vector<16x16xf32>, vector<8x16xf32> -> vector<8x16xf32>
    %130 = arith.addf %126, %129 : vector<8x16xf32>
    %cst_47 = arith.constant dense<0.000000e+00> : vector<32x16xf32>
    %131 = tpu.matmul %111, %110, %cst_47 {dimension_numbers = #tpu.dot_dimension_numbers<[1], [0], [0], [1], [0, 0, 1, 1], [], []>} : vector<32x16xf32>, vector<16x16xf32>, vector<32x16xf32> -> vector<32x16xf32>
    %c8 = arith.constant 8 : index
    %c0_48 = arith.constant 0 : index
    %132 = vector.load %arg9[%c8, %c0_48] : memref<16x16xf32, #tpu.memory_space<vmem>>, vector<8x16xf32>
    %133 = vector.extract_strided_slice %131 {offsets = [0, 0], sizes = [8, 16], strides = [1, 1]} : vector<32x16xf32> to vector<8x16xf32>
    %134 = vector.extract_strided_slice %112 {offsets = [0, 0], sizes = [16, 16], strides = [1, 1]} : vector<64x16xf32> to vector<16x16xf32>
    %cst_49 = arith.constant dense<0.000000e+00> : vector<8x16xf32>
    %135 = tpu.matmul %133, %134, %cst_49 {dimension_numbers = #tpu.dot_dimension_numbers<[1], [0], [0], [1], [0, 0, 1, 1], [], []>} : vector<8x16xf32>, vector<16x16xf32>, vector<8x16xf32> -> vector<8x16xf32>
    %136 = arith.addf %132, %135 : vector<8x16xf32>
    %137 = vector.extract_strided_slice %131 {offsets = [8, 0], sizes = [8, 16], strides = [1, 1]} : vector<32x16xf32> to vector<8x16xf32>
    %138 = vector.extract_strided_slice %112 {offsets = [16, 0], sizes = [16, 16], strides = [1, 1]} : vector<64x16xf32> to vector<16x16xf32>
    %cst_50 = arith.constant dense<0.000000e+00> : vector<8x16xf32>
    %139 = tpu.matmul %137, %138, %cst_50 {dimension_numbers = #tpu.dot_dimension_numbers<[1], [0], [0], [1], [0, 0, 1, 1], [], []>} : vector<8x16xf32>, vector<16x16xf32>, vector<8x16xf32> -> vector<8x16xf32>
    %140 = arith.addf %136, %139 : vector<8x16xf32>
    %141 = vector.extract_strided_slice %131 {offsets = [16, 0], sizes = [8, 16], strides = [1, 1]} : vector<32x16xf32> to vector<8x16xf32>
    %142 = vector.extract_strided_slice %112 {offsets = [32, 0], sizes = [16, 16], strides = [1, 1]} : vector<64x16xf32> to vector<16x16xf32>
    %cst_51 = arith.constant dense<0.000000e+00> : vector<8x16xf32>
    %143 = tpu.matmul %141, %142, %cst_51 {dimension_numbers = #tpu.dot_dimension_numbers<[1], [0], [0], [1], [0, 0, 1, 1], [], []>} : vector<8x16xf32>, vector<16x16xf32>, vector<8x16xf32> -> vector<8x16xf32>
    %144 = arith.addf %140, %143 : vector<8x16xf32>
    %145 = vector.extract_strided_slice %131 {offsets = [24, 0], sizes = [8, 16], strides = [1, 1]} : vector<32x16xf32> to vector<8x16xf32>
    %146 = vector.extract_strided_slice %112 {offsets = [48, 0], sizes = [16, 16], strides = [1, 1]} : vector<64x16xf32> to vector<16x16xf32>
    %cst_52 = arith.constant dense<0.000000e+00> : vector<8x16xf32>
    %147 = tpu.matmul %145, %146, %cst_52 {dimension_numbers = #tpu.dot_dimension_numbers<[1], [0], [0], [1], [0, 0, 1, 1], [], []>} : vector<8x16xf32>, vector<16x16xf32>, vector<8x16xf32> -> vector<8x16xf32>
    %148 = arith.addf %144, %147 : vector<8x16xf32>
    %cst_53 = arith.constant dense<0.000000e+00> : vector<16xf32>
    %149 = vector.multi_reduction <add>, %130, %cst_53 [0] : vector<8x16xf32> to vector<16xf32>
    %150 = vector.shape_cast %149 : vector<16xf32> to vector<1x16xf32>
    %cst_54 = arith.constant dense<0.000000e+00> : vector<16xf32>
    %151 = vector.multi_reduction <add>, %148, %cst_54 [0] : vector<8x16xf32> to vector<16xf32>
    %152 = vector.shape_cast %151 : vector<16xf32> to vector<1x16xf32>
    %153 = arith.addf %150, %152 : vector<1x16xf32>
    %cst_55 = arith.constant 6.250000e-02 : f32
    %154 = vector.broadcast %cst_55 : f32 to vector<1x16xf32>
    %155 = arith.mulf %153, %154 : vector<1x16xf32>
    %156 = vector.broadcast %155 : vector<1x16xf32> to vector<8x16xf32>
    %157 = arith.subf %130, %156 : vector<8x16xf32>
    %158 = arith.mulf %157, %157 : vector<8x16xf32>
    %cst_56 = arith.constant dense<0.000000e+00> : vector<16xf32>
    %159 = vector.multi_reduction <add>, %158, %cst_56 [0] : vector<8x16xf32> to vector<16xf32>
    %160 = vector.shape_cast %159 : vector<16xf32> to vector<1x16xf32>
    %161 = vector.broadcast %155 : vector<1x16xf32> to vector<8x16xf32>
    %162 = arith.subf %148, %161 : vector<8x16xf32>
    %163 = arith.mulf %162, %162 : vector<8x16xf32>
    %cst_57 = arith.constant dense<0.000000e+00> : vector<16xf32>
    %164 = vector.multi_reduction <add>, %163, %cst_57 [0] : vector<8x16xf32> to vector<16xf32>
    %165 = vector.shape_cast %164 : vector<16xf32> to vector<1x16xf32>
    %166 = arith.addf %160, %165 : vector<1x16xf32>
    %cst_58 = arith.constant 6.250000e-02 : f32
    %167 = vector.broadcast %cst_58 : f32 to vector<1x16xf32>
    %168 = arith.mulf %166, %167 : vector<1x16xf32>
    %cst_59 = arith.constant 9.99999974E-6 : f32
    %169 = vector.broadcast %cst_59 : f32 to vector<1x16xf32>
    %170 = arith.addf %168, %169 : vector<1x16xf32>
    %171 = math.rsqrt %170 : vector<1x16xf32>
    %c0_60 = arith.constant 0 : index
    %c0_61 = arith.constant 0 : index
    %172 = vector.load %arg10[%c0_60, %c0_61] : memref<1x16xf32, #tpu.memory_space<vmem>>, vector<1x16xf32>
    %c0_62 = arith.constant 0 : index
    %c0_63 = arith.constant 0 : index
    %173 = vector.load %arg11[%c0_62, %c0_63] : memref<1x16xf32, #tpu.memory_space<vmem>>, vector<1x16xf32>
    %174 = vector.broadcast %155 : vector<1x16xf32> to vector<8x16xf32>
    %175 = arith.subf %130, %174 : vector<8x16xf32>
    %176 = vector.broadcast %171 : vector<1x16xf32> to vector<8x16xf32>
    %177 = arith.mulf %175, %176 : vector<8x16xf32>
    %178 = vector.broadcast %172 : vector<1x16xf32> to vector<8x16xf32>
    %179 = arith.mulf %177, %178 : vector<8x16xf32>
    %180 = vector.broadcast %173 : vector<1x16xf32> to vector<8x16xf32>
    %181 = arith.addf %179, %180 : vector<8x16xf32>
    %182 = vector.extract_strided_slice %181 {offsets = [0, 0], sizes = [8, 8], strides = [1, 1]} : vector<8x16xf32> to vector<8x8xf32>
    %183 = vector.extract_strided_slice %181 {offsets = [0, 8], sizes = [8, 8], strides = [1, 1]} : vector<8x16xf32> to vector<8x8xf32>
    %184 = arith.negf %183 : vector<8x8xf32>
    %185 = math.exp %184 : vector<8x8xf32>
    %cst_64 = arith.constant 1.000000e+00 : f32
    %186 = vector.broadcast %cst_64 : f32 to vector<8x8xf32>
    %187 = arith.addf %186, %185 : vector<8x8xf32>
    %188 = arith.divf %186, %187 : vector<8x8xf32>
    %189 = arith.mulf %182, %188 : vector<8x8xf32>
    %190 = vector.broadcast %155 : vector<1x16xf32> to vector<8x16xf32>
    %191 = arith.subf %148, %190 : vector<8x16xf32>
    %192 = vector.broadcast %171 : vector<1x16xf32> to vector<8x16xf32>
    %193 = arith.mulf %191, %192 : vector<8x16xf32>
    %194 = vector.broadcast %172 : vector<1x16xf32> to vector<8x16xf32>
    %195 = arith.mulf %193, %194 : vector<8x16xf32>
    %196 = vector.broadcast %173 : vector<1x16xf32> to vector<8x16xf32>
    %197 = arith.addf %195, %196 : vector<8x16xf32>
    %198 = vector.extract_strided_slice %197 {offsets = [0, 0], sizes = [8, 8], strides = [1, 1]} : vector<8x16xf32> to vector<8x8xf32>
    %199 = vector.extract_strided_slice %197 {offsets = [0, 8], sizes = [8, 8], strides = [1, 1]} : vector<8x16xf32> to vector<8x8xf32>
    %200 = arith.negf %199 : vector<8x8xf32>
    %201 = math.exp %200 : vector<8x8xf32>
    %cst_65 = arith.constant 1.000000e+00 : f32
    %202 = vector.broadcast %cst_65 : f32 to vector<8x8xf32>
    %203 = arith.addf %202, %201 : vector<8x8xf32>
    %204 = arith.divf %202, %203 : vector<8x8xf32>
    %205 = arith.mulf %198, %204 : vector<8x8xf32>
    %c0_66 = arith.constant 0 : index
    %c0_67 = arith.constant 0 : index
    %206 = vector.load %arg12[%c0_66, %c0_67] : memref<16x8xf32, #tpu.memory_space<vmem>>, vector<16x8xf32>
    %c0_68 = arith.constant 0 : index
    %c0_69 = arith.constant 0 : index
    %207 = vector.load %arg13[%c0_68, %c0_69] : memref<32x8xf32, #tpu.memory_space<vmem>>, vector<32x8xf32>
    %cst_70 = arith.constant dense<0.000000e+00> : vector<16x8xf32>
    %208 = tpu.matmul %206, %189, %cst_70 {dimension_numbers = #tpu.dot_dimension_numbers<[1], [0], [0], [1], [0, 0, 1, 1], [], []>} : vector<16x8xf32>, vector<8x8xf32>, vector<16x8xf32> -> vector<16x8xf32>
    %c0_71 = arith.constant 0 : index
    %c0_72 = arith.constant 0 : index
    %209 = vector.load %arg14[%c0_71, %c0_72] : memref<8x8xf32, #tpu.memory_space<vmem>>, vector<4x8xf32>
    %210 = vector.extract_strided_slice %208 {offsets = [0, 0], sizes = [4, 8], strides = [1, 1]} : vector<16x8xf32> to vector<4x8xf32>
    %211 = vector.extract_strided_slice %207 {offsets = [0, 0], sizes = [8, 8], strides = [1, 1]} : vector<32x8xf32> to vector<8x8xf32>
    %cst_73 = arith.constant dense<0.000000e+00> : vector<4x8xf32>
    %212 = tpu.matmul %210, %211, %cst_73 {dimension_numbers = #tpu.dot_dimension_numbers<[1], [0], [0], [1], [0, 0, 1, 1], [], []>} : vector<4x8xf32>, vector<8x8xf32>, vector<4x8xf32> -> vector<4x8xf32>
    %213 = arith.addf %209, %212 : vector<4x8xf32>
    %214 = vector.extract_strided_slice %208 {offsets = [4, 0], sizes = [4, 8], strides = [1, 1]} : vector<16x8xf32> to vector<4x8xf32>
    %215 = vector.extract_strided_slice %207 {offsets = [8, 0], sizes = [8, 8], strides = [1, 1]} : vector<32x8xf32> to vector<8x8xf32>
    %cst_74 = arith.constant dense<0.000000e+00> : vector<4x8xf32>
    %216 = tpu.matmul %214, %215, %cst_74 {dimension_numbers = #tpu.dot_dimension_numbers<[1], [0], [0], [1], [0, 0, 1, 1], [], []>} : vector<4x8xf32>, vector<8x8xf32>, vector<4x8xf32> -> vector<4x8xf32>
    %217 = arith.addf %213, %216 : vector<4x8xf32>
    %218 = vector.extract_strided_slice %208 {offsets = [8, 0], sizes = [4, 8], strides = [1, 1]} : vector<16x8xf32> to vector<4x8xf32>
    %219 = vector.extract_strided_slice %207 {offsets = [16, 0], sizes = [8, 8], strides = [1, 1]} : vector<32x8xf32> to vector<8x8xf32>
    %cst_75 = arith.constant dense<0.000000e+00> : vector<4x8xf32>
    %220 = tpu.matmul %218, %219, %cst_75 {dimension_numbers = #tpu.dot_dimension_numbers<[1], [0], [0], [1], [0, 0, 1, 1], [], []>} : vector<4x8xf32>, vector<8x8xf32>, vector<4x8xf32> -> vector<4x8xf32>
    %221 = arith.addf %217, %220 : vector<4x8xf32>
    %222 = vector.extract_strided_slice %208 {offsets = [12, 0], sizes = [4, 8], strides = [1, 1]} : vector<16x8xf32> to vector<4x8xf32>
    %223 = vector.extract_strided_slice %207 {offsets = [24, 0], sizes = [8, 8], strides = [1, 1]} : vector<32x8xf32> to vector<8x8xf32>
    %cst_76 = arith.constant dense<0.000000e+00> : vector<4x8xf32>
    %224 = tpu.matmul %222, %223, %cst_76 {dimension_numbers = #tpu.dot_dimension_numbers<[1], [0], [0], [1], [0, 0, 1, 1], [], []>} : vector<4x8xf32>, vector<8x8xf32>, vector<4x8xf32> -> vector<4x8xf32>
    %225 = arith.addf %221, %224 : vector<4x8xf32>
    %cst_77 = arith.constant dense<0.000000e+00> : vector<16x8xf32>
    %226 = tpu.matmul %206, %205, %cst_77 {dimension_numbers = #tpu.dot_dimension_numbers<[1], [0], [0], [1], [0, 0, 1, 1], [], []>} : vector<16x8xf32>, vector<8x8xf32>, vector<16x8xf32> -> vector<16x8xf32>
    %c4 = arith.constant 4 : index
    %c0_78 = arith.constant 0 : index
    %227 = vector.load %arg14[%c4, %c0_78] : memref<8x8xf32, #tpu.memory_space<vmem>>, vector<4x8xf32>
    %228 = vector.extract_strided_slice %226 {offsets = [0, 0], sizes = [4, 8], strides = [1, 1]} : vector<16x8xf32> to vector<4x8xf32>
    %229 = vector.extract_strided_slice %207 {offsets = [0, 0], sizes = [8, 8], strides = [1, 1]} : vector<32x8xf32> to vector<8x8xf32>
    %cst_79 = arith.constant dense<0.000000e+00> : vector<4x8xf32>
    %230 = tpu.matmul %228, %229, %cst_79 {dimension_numbers = #tpu.dot_dimension_numbers<[1], [0], [0], [1], [0, 0, 1, 1], [], []>} : vector<4x8xf32>, vector<8x8xf32>, vector<4x8xf32> -> vector<4x8xf32>
    %231 = arith.addf %227, %230 : vector<4x8xf32>
    %232 = vector.extract_strided_slice %226 {offsets = [4, 0], sizes = [4, 8], strides = [1, 1]} : vector<16x8xf32> to vector<4x8xf32>
    %233 = vector.extract_strided_slice %207 {offsets = [8, 0], sizes = [8, 8], strides = [1, 1]} : vector<32x8xf32> to vector<8x8xf32>
    %cst_80 = arith.constant dense<0.000000e+00> : vector<4x8xf32>
    %234 = tpu.matmul %232, %233, %cst_80 {dimension_numbers = #tpu.dot_dimension_numbers<[1], [0], [0], [1], [0, 0, 1, 1], [], []>} : vector<4x8xf32>, vector<8x8xf32>, vector<4x8xf32> -> vector<4x8xf32>
    %235 = arith.addf %231, %234 : vector<4x8xf32>
    %236 = vector.extract_strided_slice %226 {offsets = [8, 0], sizes = [4, 8], strides = [1, 1]} : vector<16x8xf32> to vector<4x8xf32>
    %237 = vector.extract_strided_slice %207 {offsets = [16, 0], sizes = [8, 8], strides = [1, 1]} : vector<32x8xf32> to vector<8x8xf32>
    %cst_81 = arith.constant dense<0.000000e+00> : vector<4x8xf32>
    %238 = tpu.matmul %236, %237, %cst_81 {dimension_numbers = #tpu.dot_dimension_numbers<[1], [0], [0], [1], [0, 0, 1, 1], [], []>} : vector<4x8xf32>, vector<8x8xf32>, vector<4x8xf32> -> vector<4x8xf32>
    %239 = arith.addf %235, %238 : vector<4x8xf32>
    %240 = vector.extract_strided_slice %226 {offsets = [12, 0], sizes = [4, 8], strides = [1, 1]} : vector<16x8xf32> to vector<4x8xf32>
    %241 = vector.extract_strided_slice %207 {offsets = [24, 0], sizes = [8, 8], strides = [1, 1]} : vector<32x8xf32> to vector<8x8xf32>
    %cst_82 = arith.constant dense<0.000000e+00> : vector<4x8xf32>
    %242 = tpu.matmul %240, %241, %cst_82 {dimension_numbers = #tpu.dot_dimension_numbers<[1], [0], [0], [1], [0, 0, 1, 1], [], []>} : vector<4x8xf32>, vector<8x8xf32>, vector<4x8xf32> -> vector<4x8xf32>
    %243 = arith.addf %239, %242 : vector<4x8xf32>
    %244 = vector.extract_strided_slice %225 {offsets = [0, 0], sizes = [4, 4], strides = [1, 1]} : vector<4x8xf32> to vector<4x4xf32>
    %245 = vector.extract_strided_slice %225 {offsets = [0, 4], sizes = [4, 4], strides = [1, 1]} : vector<4x8xf32> to vector<4x4xf32>
    %c0_83 = arith.constant 0 : index
    %c0_84 = arith.constant 0 : index
    %246 = vector.load %arg29[%c0_83, %c0_84] : memref<8x4xf32, #tpu.memory_space<vmem>>, vector<4x4xf32>
    tpu.vector_store %arg29[%c0_83, %c0_84], %244 {strides = array<i32>} : memref<8x4xf32, #tpu.memory_space<vmem>>, vector<4x4xf32>,
    %c0_85 = arith.constant 0 : index
    %c0_86 = arith.constant 0 : index
    %247 = vector.load %arg30[%c0_85, %c0_86] : memref<8x4xf32, #tpu.memory_space<vmem>>, vector<4x4xf32>
    tpu.vector_store %arg30[%c0_85, %c0_86], %245 {strides = array<i32>} : memref<8x4xf32, #tpu.memory_space<vmem>>, vector<4x4xf32>,
    %c0_87 = arith.constant 0 : index
    %c0_88 = arith.constant 0 : index
    %248 = vector.load %arg1[%c0_87, %c0_88] : memref<8x4xf32, #tpu.memory_space<vmem>>, vector<4x4xf32>
    %cst_89 = arith.constant 5.000000e-01 : f32
    %249 = vector.broadcast %cst_89 : f32 to vector<4x4xf32>
    %250 = arith.mulf %249, %245 : vector<4x4xf32>
    %251 = math.exp %250 : vector<4x4xf32>
    %252 = arith.mulf %248, %251 : vector<4x4xf32>
    %253 = arith.addf %244, %252 : vector<4x4xf32>
    %254 = vector.extract_strided_slice %243 {offsets = [0, 0], sizes = [4, 4], strides = [1, 1]} : vector<4x8xf32> to vector<4x4xf32>
    %255 = vector.extract_strided_slice %243 {offsets = [0, 4], sizes = [4, 4], strides = [1, 1]} : vector<4x8xf32> to vector<4x4xf32>
    %c4_90 = arith.constant 4 : index
    %c0_91 = arith.constant 0 : index
    %256 = vector.load %arg29[%c4_90, %c0_91] : memref<8x4xf32, #tpu.memory_space<vmem>>, vector<4x4xf32>
    tpu.vector_store %arg29[%c4_90, %c0_91], %254 {strides = array<i32>} : memref<8x4xf32, #tpu.memory_space<vmem>>, vector<4x4xf32>,
    %c4_92 = arith.constant 4 : index
    %c0_93 = arith.constant 0 : index
    %257 = vector.load %arg30[%c4_92, %c0_93] : memref<8x4xf32, #tpu.memory_space<vmem>>, vector<4x4xf32>
    tpu.vector_store %arg30[%c4_92, %c0_93], %255 {strides = array<i32>} : memref<8x4xf32, #tpu.memory_space<vmem>>, vector<4x4xf32>,
    %c4_94 = arith.constant 4 : index
    %c0_95 = arith.constant 0 : index
    %258 = vector.load %arg1[%c4_94, %c0_95] : memref<8x4xf32, #tpu.memory_space<vmem>>, vector<4x4xf32>
    %cst_96 = arith.constant 5.000000e-01 : f32
    %259 = vector.broadcast %cst_96 : f32 to vector<4x4xf32>
    %260 = arith.mulf %259, %255 : vector<4x4xf32>
    %261 = math.exp %260 : vector<4x4xf32>
    %262 = arith.mulf %258, %261 : vector<4x4xf32>
    %263 = arith.addf %254, %262 : vector<4x4xf32>
    %c0_97 = arith.constant 0 : index
    %c0_98 = arith.constant 0 : index
    %264 = vector.load %arg15[%c0_97, %c0_98] : memref<32x4xf32, #tpu.memory_space<vmem>>, vector<32x4xf32>
    %c0_99 = arith.constant 0 : index
    %c0_100 = arith.constant 0 : index
    %265 = vector.load %arg16[%c0_99, %c0_100] : memref<16x16xf32, #tpu.memory_space<vmem>>, vector<16x16xf32>
    %cst_101 = arith.constant dense<0.000000e+00> : vector<32x4xf32>
    %266 = tpu.matmul %264, %253, %cst_101 {dimension_numbers = #tpu.dot_dimension_numbers<[1], [0], [0], [1], [0, 0, 1, 1], [], []>} : vector<32x4xf32>, vector<4x4xf32>, vector<32x4xf32> -> vector<32x4xf32>
    %c0_102 = arith.constant 0 : index
    %c0_103 = arith.constant 0 : index
    %267 = vector.load %arg17[%c0_102, %c0_103] : memref<16x16xf32, #tpu.memory_space<vmem>>, vector<8x16xf32>
    %268 = vector.extract_strided_slice %266 {offsets = [0, 0], sizes = [8, 4], strides = [1, 1]} : vector<32x4xf32> to vector<8x4xf32>
    %269 = vector.extract_strided_slice %265 {offsets = [0, 0], sizes = [4, 16], strides = [1, 1]} : vector<16x16xf32> to vector<4x16xf32>
    %cst_104 = arith.constant dense<0.000000e+00> : vector<8x16xf32>
    %270 = tpu.matmul %268, %269, %cst_104 {dimension_numbers = #tpu.dot_dimension_numbers<[1], [0], [0], [1], [0, 0, 1, 1], [], []>} : vector<8x4xf32>, vector<4x16xf32>, vector<8x16xf32> -> vector<8x16xf32>
    %271 = arith.addf %267, %270 : vector<8x16xf32>
    %272 = vector.extract_strided_slice %266 {offsets = [8, 0], sizes = [8, 4], strides = [1, 1]} : vector<32x4xf32> to vector<8x4xf32>
    %273 = vector.extract_strided_slice %265 {offsets = [4, 0], sizes = [4, 16], strides = [1, 1]} : vector<16x16xf32> to vector<4x16xf32>
    %cst_105 = arith.constant dense<0.000000e+00> : vector<8x16xf32>
    %274 = tpu.matmul %272, %273, %cst_105 {dimension_numbers = #tpu.dot_dimension_numbers<[1], [0], [0], [1], [0, 0, 1, 1], [], []>} : vector<8x4xf32>, vector<4x16xf32>, vector<8x16xf32> -> vector<8x16xf32>
    %275 = arith.addf %271, %274 : vector<8x16xf32>
    %276 = vector.extract_strided_slice %266 {offsets = [16, 0], sizes = [8, 4], strides = [1, 1]} : vector<32x4xf32> to vector<8x4xf32>
    %277 = vector.extract_strided_slice %265 {offsets = [8, 0], sizes = [4, 16], strides = [1, 1]} : vector<16x16xf32> to vector<4x16xf32>
    %cst_106 = arith.constant dense<0.000000e+00> : vector<8x16xf32>
    %278 = tpu.matmul %276, %277, %cst_106 {dimension_numbers = #tpu.dot_dimension_numbers<[1], [0], [0], [1], [0, 0, 1, 1], [], []>} : vector<8x4xf32>, vector<4x16xf32>, vector<8x16xf32> -> vector<8x16xf32>
    %279 = arith.addf %275, %278 : vector<8x16xf32>
    %280 = vector.extract_strided_slice %266 {offsets = [24, 0], sizes = [8, 4], strides = [1, 1]} : vector<32x4xf32> to vector<8x4xf32>
    %281 = vector.extract_strided_slice %265 {offsets = [12, 0], sizes = [4, 16], strides = [1, 1]} : vector<16x16xf32> to vector<4x16xf32>
    %cst_107 = arith.constant dense<0.000000e+00> : vector<8x16xf32>
    %282 = tpu.matmul %280, %281, %cst_107 {dimension_numbers = #tpu.dot_dimension_numbers<[1], [0], [0], [1], [0, 0, 1, 1], [], []>} : vector<8x4xf32>, vector<4x16xf32>, vector<8x16xf32> -> vector<8x16xf32>
    %283 = arith.addf %279, %282 : vector<8x16xf32>
    %cst_108 = arith.constant dense<0.000000e+00> : vector<32x4xf32>
    %284 = tpu.matmul %264, %263, %cst_108 {dimension_numbers = #tpu.dot_dimension_numbers<[1], [0], [0], [1], [0, 0, 1, 1], [], []>} : vector<32x4xf32>, vector<4x4xf32>, vector<32x4xf32> -> vector<32x4xf32>
    %c8_109 = arith.constant 8 : index
    %c0_110 = arith.constant 0 : index
    %285 = vector.load %arg17[%c8_109, %c0_110] : memref<16x16xf32, #tpu.memory_space<vmem>>, vector<8x16xf32>
    %286 = vector.extract_strided_slice %284 {offsets = [0, 0], sizes = [8, 4], strides = [1, 1]} : vector<32x4xf32> to vector<8x4xf32>
    %287 = vector.extract_strided_slice %265 {offsets = [0, 0], sizes = [4, 16], strides = [1, 1]} : vector<16x16xf32> to vector<4x16xf32>
    %cst_111 = arith.constant dense<0.000000e+00> : vector<8x16xf32>
    %288 = tpu.matmul %286, %287, %cst_111 {dimension_numbers = #tpu.dot_dimension_numbers<[1], [0], [0], [1], [0, 0, 1, 1], [], []>} : vector<8x4xf32>, vector<4x16xf32>, vector<8x16xf32> -> vector<8x16xf32>
    %289 = arith.addf %285, %288 : vector<8x16xf32>
    %290 = vector.extract_strided_slice %284 {offsets = [8, 0], sizes = [8, 4], strides = [1, 1]} : vector<32x4xf32> to vector<8x4xf32>
    %291 = vector.extract_strided_slice %265 {offsets = [4, 0], sizes = [4, 16], strides = [1, 1]} : vector<16x16xf32> to vector<4x16xf32>
    %cst_112 = arith.constant dense<0.000000e+00> : vector<8x16xf32>
    %292 = tpu.matmul %290, %291, %cst_112 {dimension_numbers = #tpu.dot_dimension_numbers<[1], [0], [0], [1], [0, 0, 1, 1], [], []>} : vector<8x4xf32>, vector<4x16xf32>, vector<8x16xf32> -> vector<8x16xf32>
    %293 = arith.addf %289, %292 : vector<8x16xf32>
    %294 = vector.extract_strided_slice %284 {offsets = [16, 0], sizes = [8, 4], strides = [1, 1]} : vector<32x4xf32> to vector<8x4xf32>
    %295 = vector.extract_strided_slice %265 {offsets = [8, 0], sizes = [4, 16], strides = [1, 1]} : vector<16x16xf32> to vector<4x16xf32>
    %cst_113 = arith.constant dense<0.000000e+00> : vector<8x16xf32>
    %296 = tpu.matmul %294, %295, %cst_113 {dimension_numbers = #tpu.dot_dimension_numbers<[1], [0], [0], [1], [0, 0, 1, 1], [], []>} : vector<8x4xf32>, vector<4x16xf32>, vector<8x16xf32> -> vector<8x16xf32>
    %297 = arith.addf %293, %296 : vector<8x16xf32>
    %298 = vector.extract_strided_slice %284 {offsets = [24, 0], sizes = [8, 4], strides = [1, 1]} : vector<32x4xf32> to vector<8x4xf32>
    %299 = vector.extract_strided_slice %265 {offsets = [12, 0], sizes = [4, 16], strides = [1, 1]} : vector<16x16xf32> to vector<4x16xf32>
    %cst_114 = arith.constant dense<0.000000e+00> : vector<8x16xf32>
    %300 = tpu.matmul %298, %299, %cst_114 {dimension_numbers = #tpu.dot_dimension_numbers<[1], [0], [0], [1], [0, 0, 1, 1], [], []>} : vector<8x4xf32>, vector<4x16xf32>, vector<8x16xf32> -> vector<8x16xf32>
    %301 = arith.addf %297, %300 : vector<8x16xf32>
    %cst_115 = arith.constant dense<0.000000e+00> : vector<16xf32>
    %302 = vector.multi_reduction <add>, %283, %cst_115 [0] : vector<8x16xf32> to vector<16xf32>
    %303 = vector.shape_cast %302 : vector<16xf32> to vector<1x16xf32>
    %cst_116 = arith.constant dense<0.000000e+00> : vector<16xf32>
    %304 = vector.multi_reduction <add>, %301, %cst_116 [0] : vector<8x16xf32> to vector<16xf32>
    %305 = vector.shape_cast %304 : vector<16xf32> to vector<1x16xf32>
    %306 = arith.addf %303, %305 : vector<1x16xf32>
    %cst_117 = arith.constant 6.250000e-02 : f32
    %307 = vector.broadcast %cst_117 : f32 to vector<1x16xf32>
    %308 = arith.mulf %306, %307 : vector<1x16xf32>
    %309 = vector.broadcast %308 : vector<1x16xf32> to vector<8x16xf32>
    %310 = arith.subf %283, %309 : vector<8x16xf32>
    %311 = arith.mulf %310, %310 : vector<8x16xf32>
    %cst_118 = arith.constant dense<0.000000e+00> : vector<16xf32>
    %312 = vector.multi_reduction <add>, %311, %cst_118 [0] : vector<8x16xf32> to vector<16xf32>
    %313 = vector.shape_cast %312 : vector<16xf32> to vector<1x16xf32>
    %314 = vector.broadcast %308 : vector<1x16xf32> to vector<8x16xf32>
    %315 = arith.subf %301, %314 : vector<8x16xf32>
    %316 = arith.mulf %315, %315 : vector<8x16xf32>
    %cst_119 = arith.constant dense<0.000000e+00> : vector<16xf32>
    %317 = vector.multi_reduction <add>, %316, %cst_119 [0] : vector<8x16xf32> to vector<16xf32>
    %318 = vector.shape_cast %317 : vector<16xf32> to vector<1x16xf32>
    %319 = arith.addf %313, %318 : vector<1x16xf32>
    %cst_120 = arith.constant 6.250000e-02 : f32
    %320 = vector.broadcast %cst_120 : f32 to vector<1x16xf32>
    %321 = arith.mulf %319, %320 : vector<1x16xf32>
    %cst_121 = arith.constant 9.99999974E-6 : f32
    %322 = vector.broadcast %cst_121 : f32 to vector<1x16xf32>
    %323 = arith.addf %321, %322 : vector<1x16xf32>
    %324 = math.rsqrt %323 : vector<1x16xf32>
    %c0_122 = arith.constant 0 : index
    %c0_123 = arith.constant 0 : index
    %325 = vector.load %arg18[%c0_122, %c0_123] : memref<1x16xf32, #tpu.memory_space<vmem>>, vector<1x16xf32>
    %c0_124 = arith.constant 0 : index
    %c0_125 = arith.constant 0 : index
    %326 = vector.load %arg19[%c0_124, %c0_125] : memref<1x16xf32, #tpu.memory_space<vmem>>, vector<1x16xf32>
    %327 = vector.broadcast %308 : vector<1x16xf32> to vector<8x16xf32>
    %328 = arith.subf %283, %327 : vector<8x16xf32>
    %329 = vector.broadcast %324 : vector<1x16xf32> to vector<8x16xf32>
    %330 = arith.mulf %328, %329 : vector<8x16xf32>
    %331 = vector.broadcast %325 : vector<1x16xf32> to vector<8x16xf32>
    %332 = arith.mulf %330, %331 : vector<8x16xf32>
    %333 = vector.broadcast %326 : vector<1x16xf32> to vector<8x16xf32>
    %334 = arith.addf %332, %333 : vector<8x16xf32>
    %335 = vector.extract_strided_slice %334 {offsets = [0, 0], sizes = [8, 8], strides = [1, 1]} : vector<8x16xf32> to vector<8x8xf32>
    %336 = vector.extract_strided_slice %334 {offsets = [0, 8], sizes = [8, 8], strides = [1, 1]} : vector<8x16xf32> to vector<8x8xf32>
    %337 = arith.negf %336 : vector<8x8xf32>
    %338 = math.exp %337 : vector<8x8xf32>
    %cst_126 = arith.constant 1.000000e+00 : f32
    %339 = vector.broadcast %cst_126 : f32 to vector<8x8xf32>
    %340 = arith.addf %339, %338 : vector<8x8xf32>
    %341 = arith.divf %339, %340 : vector<8x8xf32>
    %342 = arith.mulf %335, %341 : vector<8x8xf32>
    %343 = vector.broadcast %308 : vector<1x16xf32> to vector<8x16xf32>
    %344 = arith.subf %301, %343 : vector<8x16xf32>
    %345 = vector.broadcast %324 : vector<1x16xf32> to vector<8x16xf32>
    %346 = arith.mulf %344, %345 : vector<8x16xf32>
    %347 = vector.broadcast %325 : vector<1x16xf32> to vector<8x16xf32>
    %348 = arith.mulf %346, %347 : vector<8x16xf32>
    %349 = vector.broadcast %326 : vector<1x16xf32> to vector<8x16xf32>
    %350 = arith.addf %348, %349 : vector<8x16xf32>
    %351 = vector.extract_strided_slice %350 {offsets = [0, 0], sizes = [8, 8], strides = [1, 1]} : vector<8x16xf32> to vector<8x8xf32>
    %352 = vector.extract_strided_slice %350 {offsets = [0, 8], sizes = [8, 8], strides = [1, 1]} : vector<8x16xf32> to vector<8x8xf32>
    %353 = arith.negf %352 : vector<8x8xf32>
    %354 = math.exp %353 : vector<8x8xf32>
    %cst_127 = arith.constant 1.000000e+00 : f32
    %355 = vector.broadcast %cst_127 : f32 to vector<8x8xf32>
    %356 = arith.addf %355, %354 : vector<8x8xf32>
    %357 = arith.divf %355, %356 : vector<8x8xf32>
    %358 = arith.mulf %351, %357 : vector<8x8xf32>
    %c0_128 = arith.constant 0 : index
    %c0_129 = arith.constant 0 : index
    %359 = vector.load %arg20[%c0_128, %c0_129] : memref<64x8xf32, #tpu.memory_space<vmem>>, vector<64x8xf32>
    %c0_130 = arith.constant 0 : index
    %c0_131 = arith.constant 0 : index
    %360 = vector.load %arg21[%c0_130, %c0_131] : memref<32x32xf32, #tpu.memory_space<vmem>>, vector<32x32xf32>
    %cst_132 = arith.constant dense<0.000000e+00> : vector<64x8xf32>
    %361 = tpu.matmul %359, %342, %cst_132 {dimension_numbers = #tpu.dot_dimension_numbers<[1], [0], [0], [1], [0, 0, 1, 1], [], []>} : vector<64x8xf32>, vector<8x8xf32>, vector<64x8xf32> -> vector<64x8xf32>
    %c0_133 = arith.constant 0 : index
    %c0_134 = arith.constant 0 : index
    %362 = vector.load %arg22[%c0_133, %c0_134] : memref<32x32xf32, #tpu.memory_space<vmem>>, vector<16x32xf32>
    %363 = vector.extract_strided_slice %361 {offsets = [0, 0], sizes = [16, 8], strides = [1, 1]} : vector<64x8xf32> to vector<16x8xf32>
    %364 = vector.extract_strided_slice %360 {offsets = [0, 0], sizes = [8, 32], strides = [1, 1]} : vector<32x32xf32> to vector<8x32xf32>
    %cst_135 = arith.constant dense<0.000000e+00> : vector<16x32xf32>
    %365 = tpu.matmul %363, %364, %cst_135 {dimension_numbers = #tpu.dot_dimension_numbers<[1], [0], [0], [1], [0, 0, 1, 1], [], []>} : vector<16x8xf32>, vector<8x32xf32>, vector<16x32xf32> -> vector<16x32xf32>
    %366 = arith.addf %362, %365 : vector<16x32xf32>
    %367 = vector.extract_strided_slice %361 {offsets = [16, 0], sizes = [16, 8], strides = [1, 1]} : vector<64x8xf32> to vector<16x8xf32>
    %368 = vector.extract_strided_slice %360 {offsets = [8, 0], sizes = [8, 32], strides = [1, 1]} : vector<32x32xf32> to vector<8x32xf32>
    %cst_136 = arith.constant dense<0.000000e+00> : vector<16x32xf32>
    %369 = tpu.matmul %367, %368, %cst_136 {dimension_numbers = #tpu.dot_dimension_numbers<[1], [0], [0], [1], [0, 0, 1, 1], [], []>} : vector<16x8xf32>, vector<8x32xf32>, vector<16x32xf32> -> vector<16x32xf32>
    %370 = arith.addf %366, %369 : vector<16x32xf32>
    %371 = vector.extract_strided_slice %361 {offsets = [32, 0], sizes = [16, 8], strides = [1, 1]} : vector<64x8xf32> to vector<16x8xf32>
    %372 = vector.extract_strided_slice %360 {offsets = [16, 0], sizes = [8, 32], strides = [1, 1]} : vector<32x32xf32> to vector<8x32xf32>
    %cst_137 = arith.constant dense<0.000000e+00> : vector<16x32xf32>
    %373 = tpu.matmul %371, %372, %cst_137 {dimension_numbers = #tpu.dot_dimension_numbers<[1], [0], [0], [1], [0, 0, 1, 1], [], []>} : vector<16x8xf32>, vector<8x32xf32>, vector<16x32xf32> -> vector<16x32xf32>
    %374 = arith.addf %370, %373 : vector<16x32xf32>
    %375 = vector.extract_strided_slice %361 {offsets = [48, 0], sizes = [16, 8], strides = [1, 1]} : vector<64x8xf32> to vector<16x8xf32>
    %376 = vector.extract_strided_slice %360 {offsets = [24, 0], sizes = [8, 32], strides = [1, 1]} : vector<32x32xf32> to vector<8x32xf32>
    %cst_138 = arith.constant dense<0.000000e+00> : vector<16x32xf32>
    %377 = tpu.matmul %375, %376, %cst_138 {dimension_numbers = #tpu.dot_dimension_numbers<[1], [0], [0], [1], [0, 0, 1, 1], [], []>} : vector<16x8xf32>, vector<8x32xf32>, vector<16x32xf32> -> vector<16x32xf32>
    %378 = arith.addf %374, %377 : vector<16x32xf32>
    %cst_139 = arith.constant dense<0.000000e+00> : vector<64x8xf32>
    %379 = tpu.matmul %359, %358, %cst_139 {dimension_numbers = #tpu.dot_dimension_numbers<[1], [0], [0], [1], [0, 0, 1, 1], [], []>} : vector<64x8xf32>, vector<8x8xf32>, vector<64x8xf32> -> vector<64x8xf32>
    %c16_140 = arith.constant 16 : index
    %c0_141 = arith.constant 0 : index
    %380 = vector.load %arg22[%c16_140, %c0_141] : memref<32x32xf32, #tpu.memory_space<vmem>>, vector<16x32xf32>
    %381 = vector.extract_strided_slice %379 {offsets = [0, 0], sizes = [16, 8], strides = [1, 1]} : vector<64x8xf32> to vector<16x8xf32>
    %382 = vector.extract_strided_slice %360 {offsets = [0, 0], sizes = [8, 32], strides = [1, 1]} : vector<32x32xf32> to vector<8x32xf32>
    %cst_142 = arith.constant dense<0.000000e+00> : vector<16x32xf32>
    %383 = tpu.matmul %381, %382, %cst_142 {dimension_numbers = #tpu.dot_dimension_numbers<[1], [0], [0], [1], [0, 0, 1, 1], [], []>} : vector<16x8xf32>, vector<8x32xf32>, vector<16x32xf32> -> vector<16x32xf32>
    %384 = arith.addf %380, %383 : vector<16x32xf32>
    %385 = vector.extract_strided_slice %379 {offsets = [16, 0], sizes = [16, 8], strides = [1, 1]} : vector<64x8xf32> to vector<16x8xf32>
    %386 = vector.extract_strided_slice %360 {offsets = [8, 0], sizes = [8, 32], strides = [1, 1]} : vector<32x32xf32> to vector<8x32xf32>
    %cst_143 = arith.constant dense<0.000000e+00> : vector<16x32xf32>
    %387 = tpu.matmul %385, %386, %cst_143 {dimension_numbers = #tpu.dot_dimension_numbers<[1], [0], [0], [1], [0, 0, 1, 1], [], []>} : vector<16x8xf32>, vector<8x32xf32>, vector<16x32xf32> -> vector<16x32xf32>
    %388 = arith.addf %384, %387 : vector<16x32xf32>
    %389 = vector.extract_strided_slice %379 {offsets = [32, 0], sizes = [16, 8], strides = [1, 1]} : vector<64x8xf32> to vector<16x8xf32>
    %390 = vector.extract_strided_slice %360 {offsets = [16, 0], sizes = [8, 32], strides = [1, 1]} : vector<32x32xf32> to vector<8x32xf32>
    %cst_144 = arith.constant dense<0.000000e+00> : vector<16x32xf32>
    %391 = tpu.matmul %389, %390, %cst_144 {dimension_numbers = #tpu.dot_dimension_numbers<[1], [0], [0], [1], [0, 0, 1, 1], [], []>} : vector<16x8xf32>, vector<8x32xf32>, vector<16x32xf32> -> vector<16x32xf32>
    %392 = arith.addf %388, %391 : vector<16x32xf32>
    %393 = vector.extract_strided_slice %379 {offsets = [48, 0], sizes = [16, 8], strides = [1, 1]} : vector<64x8xf32> to vector<16x8xf32>
    %394 = vector.extract_strided_slice %360 {offsets = [24, 0], sizes = [8, 32], strides = [1, 1]} : vector<32x32xf32> to vector<8x32xf32>
    %cst_145 = arith.constant dense<0.000000e+00> : vector<16x32xf32>
    %395 = tpu.matmul %393, %394, %cst_145 {dimension_numbers = #tpu.dot_dimension_numbers<[1], [0], [0], [1], [0, 0, 1, 1], [], []>} : vector<16x8xf32>, vector<8x32xf32>, vector<16x32xf32> -> vector<16x32xf32>
    %396 = arith.addf %392, %395 : vector<16x32xf32>
    %cst_146 = arith.constant dense<0.000000e+00> : vector<32xf32>
    %397 = vector.multi_reduction <add>, %378, %cst_146 [0] : vector<16x32xf32> to vector<32xf32>
    %398 = vector.shape_cast %397 : vector<32xf32> to vector<1x32xf32>
    %cst_147 = arith.constant dense<0.000000e+00> : vector<32xf32>
    %399 = vector.multi_reduction <add>, %396, %cst_147 [0] : vector<16x32xf32> to vector<32xf32>
    %400 = vector.shape_cast %399 : vector<32xf32> to vector<1x32xf32>
    %401 = arith.addf %398, %400 : vector<1x32xf32>
    %cst_148 = arith.constant 3.125000e-02 : f32
    %402 = vector.broadcast %cst_148 : f32 to vector<1x32xf32>
    %403 = arith.mulf %401, %402 : vector<1x32xf32>
    %404 = vector.broadcast %403 : vector<1x32xf32> to vector<16x32xf32>
    %405 = arith.subf %378, %404 : vector<16x32xf32>
    %406 = arith.mulf %405, %405 : vector<16x32xf32>
    %cst_149 = arith.constant dense<0.000000e+00> : vector<32xf32>
    %407 = vector.multi_reduction <add>, %406, %cst_149 [0] : vector<16x32xf32> to vector<32xf32>
    %408 = vector.shape_cast %407 : vector<32xf32> to vector<1x32xf32>
    %409 = vector.broadcast %403 : vector<1x32xf32> to vector<16x32xf32>
    %410 = arith.subf %396, %409 : vector<16x32xf32>
    %411 = arith.mulf %410, %410 : vector<16x32xf32>
    %cst_150 = arith.constant dense<0.000000e+00> : vector<32xf32>
    %412 = vector.multi_reduction <add>, %411, %cst_150 [0] : vector<16x32xf32> to vector<32xf32>
    %413 = vector.shape_cast %412 : vector<32xf32> to vector<1x32xf32>
    %414 = arith.addf %408, %413 : vector<1x32xf32>
    %cst_151 = arith.constant 3.125000e-02 : f32
    %415 = vector.broadcast %cst_151 : f32 to vector<1x32xf32>
    %416 = arith.mulf %414, %415 : vector<1x32xf32>
    %cst_152 = arith.constant 9.99999974E-6 : f32
    %417 = vector.broadcast %cst_152 : f32 to vector<1x32xf32>
    %418 = arith.addf %416, %417 : vector<1x32xf32>
    %419 = math.rsqrt %418 : vector<1x32xf32>
    %c0_153 = arith.constant 0 : index
    %c0_154 = arith.constant 0 : index
    %420 = vector.load %arg23[%c0_153, %c0_154] : memref<1x32xf32, #tpu.memory_space<vmem>>, vector<1x32xf32>
    %c0_155 = arith.constant 0 : index
    %c0_156 = arith.constant 0 : index
    %421 = vector.load %arg24[%c0_155, %c0_156] : memref<1x32xf32, #tpu.memory_space<vmem>>, vector<1x32xf32>
    %422 = vector.broadcast %403 : vector<1x32xf32> to vector<16x32xf32>
    %423 = arith.subf %378, %422 : vector<16x32xf32>
    %424 = vector.broadcast %419 : vector<1x32xf32> to vector<16x32xf32>
    %425 = arith.mulf %423, %424 : vector<16x32xf32>
    %426 = vector.broadcast %420 : vector<1x32xf32> to vector<16x32xf32>
    %427 = arith.mulf %425, %426 : vector<16x32xf32>
    %428 = vector.broadcast %421 : vector<1x32xf32> to vector<16x32xf32>
    %429 = arith.addf %427, %428 : vector<16x32xf32>
    %430 = vector.extract_strided_slice %429 {offsets = [0, 0], sizes = [16, 16], strides = [1, 1]} : vector<16x32xf32> to vector<16x16xf32>
    %431 = vector.extract_strided_slice %429 {offsets = [0, 16], sizes = [16, 16], strides = [1, 1]} : vector<16x32xf32> to vector<16x16xf32>
    %432 = arith.negf %431 : vector<16x16xf32>
    %433 = math.exp %432 : vector<16x16xf32>
    %cst_157 = arith.constant 1.000000e+00 : f32
    %434 = vector.broadcast %cst_157 : f32 to vector<16x16xf32>
    %435 = arith.addf %434, %433 : vector<16x16xf32>
    %436 = arith.divf %434, %435 : vector<16x16xf32>
    %437 = arith.mulf %430, %436 : vector<16x16xf32>
    %438 = vector.broadcast %403 : vector<1x32xf32> to vector<16x32xf32>
    %439 = arith.subf %396, %438 : vector<16x32xf32>
    %440 = vector.broadcast %419 : vector<1x32xf32> to vector<16x32xf32>
    %441 = arith.mulf %439, %440 : vector<16x32xf32>
    %442 = vector.broadcast %420 : vector<1x32xf32> to vector<16x32xf32>
    %443 = arith.mulf %441, %442 : vector<16x32xf32>
    %444 = vector.broadcast %421 : vector<1x32xf32> to vector<16x32xf32>
    %445 = arith.addf %443, %444 : vector<16x32xf32>
    %446 = vector.extract_strided_slice %445 {offsets = [0, 0], sizes = [16, 16], strides = [1, 1]} : vector<16x32xf32> to vector<16x16xf32>
    %447 = vector.extract_strided_slice %445 {offsets = [0, 16], sizes = [16, 16], strides = [1, 1]} : vector<16x32xf32> to vector<16x16xf32>
    %448 = arith.negf %447 : vector<16x16xf32>
    %449 = math.exp %448 : vector<16x16xf32>
    %cst_158 = arith.constant 1.000000e+00 : f32
    %450 = vector.broadcast %cst_158 : f32 to vector<16x16xf32>
    %451 = arith.addf %450, %449 : vector<16x16xf32>
    %452 = arith.divf %450, %451 : vector<16x16xf32>
    %453 = arith.mulf %446, %452 : vector<16x16xf32>
    %c0_159 = arith.constant 0 : index
    %c0_160 = arith.constant 0 : index
    %454 = vector.load %arg25[%c0_159, %c0_160] : memref<80x16xf32, #tpu.memory_space<vmem>>, vector<80x16xf32>
    %c0_161 = arith.constant 0 : index
    %c0_162 = arith.constant 0 : index
    %455 = vector.load %arg26[%c0_161, %c0_162] : memref<80x33xf32, #tpu.memory_space<vmem>>, vector<80x33xf32>
    %cst_163 = arith.constant dense<0.000000e+00> : vector<80x16xf32>
    %456 = tpu.matmul %454, %437, %cst_163 {dimension_numbers = #tpu.dot_dimension_numbers<[1], [0], [0], [1], [0, 0, 1, 1], [], []>} : vector<80x16xf32>, vector<16x16xf32>, vector<80x16xf32> -> vector<80x16xf32>
    %c0_164 = arith.constant 0 : index
    %c0_165 = arith.constant 0 : index
    %457 = vector.load %arg27[%c0_164, %c0_165] : memref<32x33xf32, #tpu.memory_space<vmem>>, vector<16x33xf32>
    %458 = vector.extract_strided_slice %456 {offsets = [0, 0], sizes = [16, 16], strides = [1, 1]} : vector<80x16xf32> to vector<16x16xf32>
    %459 = vector.extract_strided_slice %455 {offsets = [0, 0], sizes = [16, 33], strides = [1, 1]} : vector<80x33xf32> to vector<16x33xf32>
    %cst_166 = arith.constant dense<0.000000e+00> : vector<16x33xf32>
    %460 = tpu.matmul %458, %459, %cst_166 {dimension_numbers = #tpu.dot_dimension_numbers<[1], [0], [0], [1], [0, 0, 1, 1], [], []>} : vector<16x16xf32>, vector<16x33xf32>, vector<16x33xf32> -> vector<16x33xf32>
    %461 = arith.addf %457, %460 : vector<16x33xf32>
    %462 = vector.extract_strided_slice %456 {offsets = [16, 0], sizes = [16, 16], strides = [1, 1]} : vector<80x16xf32> to vector<16x16xf32>
    %463 = vector.extract_strided_slice %455 {offsets = [16, 0], sizes = [16, 33], strides = [1, 1]} : vector<80x33xf32> to vector<16x33xf32>
    %cst_167 = arith.constant dense<0.000000e+00> : vector<16x33xf32>
    %464 = tpu.matmul %462, %463, %cst_167 {dimension_numbers = #tpu.dot_dimension_numbers<[1], [0], [0], [1], [0, 0, 1, 1], [], []>} : vector<16x16xf32>, vector<16x33xf32>, vector<16x33xf32> -> vector<16x33xf32>
    %465 = arith.addf %461, %464 : vector<16x33xf32>
    %466 = vector.extract_strided_slice %456 {offsets = [32, 0], sizes = [16, 16], strides = [1, 1]} : vector<80x16xf32> to vector<16x16xf32>
    %467 = vector.extract_strided_slice %455 {offsets = [32, 0], sizes = [16, 33], strides = [1, 1]} : vector<80x33xf32> to vector<16x33xf32>
    %cst_168 = arith.constant dense<0.000000e+00> : vector<16x33xf32>
    %468 = tpu.matmul %466, %467, %cst_168 {dimension_numbers = #tpu.dot_dimension_numbers<[1], [0], [0], [1], [0, 0, 1, 1], [], []>} : vector<16x16xf32>, vector<16x33xf32>, vector<16x33xf32> -> vector<16x33xf32>
    %469 = arith.addf %465, %468 : vector<16x33xf32>
    %470 = vector.extract_strided_slice %456 {offsets = [48, 0], sizes = [16, 16], strides = [1, 1]} : vector<80x16xf32> to vector<16x16xf32>
    %471 = vector.extract_strided_slice %455 {offsets = [48, 0], sizes = [16, 33], strides = [1, 1]} : vector<80x33xf32> to vector<16x33xf32>
    %cst_169 = arith.constant dense<0.000000e+00> : vector<16x33xf32>
    %472 = tpu.matmul %470, %471, %cst_169 {dimension_numbers = #tpu.dot_dimension_numbers<[1], [0], [0], [1], [0, 0, 1, 1], [], []>} : vector<16x16xf32>, vector<16x33xf32>, vector<16x33xf32> -> vector<16x33xf32>
    %473 = arith.addf %469, %472 : vector<16x33xf32>
    %474 = vector.extract_strided_slice %456 {offsets = [64, 0], sizes = [16, 16], strides = [1, 1]} : vector<80x16xf32> to vector<16x16xf32>
    %475 = vector.extract_strided_slice %455 {offsets = [64, 0], sizes = [16, 33], strides = [1, 1]} : vector<80x33xf32> to vector<16x33xf32>
    %cst_170 = arith.constant dense<0.000000e+00> : vector<16x33xf32>
    %476 = tpu.matmul %474, %475, %cst_170 {dimension_numbers = #tpu.dot_dimension_numbers<[1], [0], [0], [1], [0, 0, 1, 1], [], []>} : vector<16x16xf32>, vector<16x33xf32>, vector<16x33xf32> -> vector<16x33xf32>
    %477 = arith.addf %473, %476 : vector<16x33xf32>
    %cst_171 = arith.constant dense<0.000000e+00> : vector<80x16xf32>
    %478 = tpu.matmul %454, %453, %cst_171 {dimension_numbers = #tpu.dot_dimension_numbers<[1], [0], [0], [1], [0, 0, 1, 1], [], []>} : vector<80x16xf32>, vector<16x16xf32>, vector<80x16xf32> -> vector<80x16xf32>
    %c16_172 = arith.constant 16 : index
    %c0_173 = arith.constant 0 : index
    %479 = vector.load %arg27[%c16_172, %c0_173] : memref<32x33xf32, #tpu.memory_space<vmem>>, vector<16x33xf32>
    %480 = vector.extract_strided_slice %478 {offsets = [0, 0], sizes = [16, 16], strides = [1, 1]} : vector<80x16xf32> to vector<16x16xf32>
    %481 = vector.extract_strided_slice %455 {offsets = [0, 0], sizes = [16, 33], strides = [1, 1]} : vector<80x33xf32> to vector<16x33xf32>
    %cst_174 = arith.constant dense<0.000000e+00> : vector<16x33xf32>
    %482 = tpu.matmul %480, %481, %cst_174 {dimension_numbers = #tpu.dot_dimension_numbers<[1], [0], [0], [1], [0, 0, 1, 1], [], []>} : vector<16x16xf32>, vector<16x33xf32>, vector<16x33xf32> -> vector<16x33xf32>
    %483 = arith.addf %479, %482 : vector<16x33xf32>
    %484 = vector.extract_strided_slice %478 {offsets = [16, 0], sizes = [16, 16], strides = [1, 1]} : vector<80x16xf32> to vector<16x16xf32>
    %485 = vector.extract_strided_slice %455 {offsets = [16, 0], sizes = [16, 33], strides = [1, 1]} : vector<80x33xf32> to vector<16x33xf32>
    %cst_175 = arith.constant dense<0.000000e+00> : vector<16x33xf32>
    %486 = tpu.matmul %484, %485, %cst_175 {dimension_numbers = #tpu.dot_dimension_numbers<[1], [0], [0], [1], [0, 0, 1, 1], [], []>} : vector<16x16xf32>, vector<16x33xf32>, vector<16x33xf32> -> vector<16x33xf32>
    %487 = arith.addf %483, %486 : vector<16x33xf32>
    %488 = vector.extract_strided_slice %478 {offsets = [32, 0], sizes = [16, 16], strides = [1, 1]} : vector<80x16xf32> to vector<16x16xf32>
    %489 = vector.extract_strided_slice %455 {offsets = [32, 0], sizes = [16, 33], strides = [1, 1]} : vector<80x33xf32> to vector<16x33xf32>
    %cst_176 = arith.constant dense<0.000000e+00> : vector<16x33xf32>
    %490 = tpu.matmul %488, %489, %cst_176 {dimension_numbers = #tpu.dot_dimension_numbers<[1], [0], [0], [1], [0, 0, 1, 1], [], []>} : vector<16x16xf32>, vector<16x33xf32>, vector<16x33xf32> -> vector<16x33xf32>
    %491 = arith.addf %487, %490 : vector<16x33xf32>
    %492 = vector.extract_strided_slice %478 {offsets = [48, 0], sizes = [16, 16], strides = [1, 1]} : vector<80x16xf32> to vector<16x16xf32>
    %493 = vector.extract_strided_slice %455 {offsets = [48, 0], sizes = [16, 33], strides = [1, 1]} : vector<80x33xf32> to vector<16x33xf32>
    %cst_177 = arith.constant dense<0.000000e+00> : vector<16x33xf32>
    %494 = tpu.matmul %492, %493, %cst_177 {dimension_numbers = #tpu.dot_dimension_numbers<[1], [0], [0], [1], [0, 0, 1, 1], [], []>} : vector<16x16xf32>, vector<16x33xf32>, vector<16x33xf32> -> vector<16x33xf32>
    %495 = arith.addf %491, %494 : vector<16x33xf32>
    %496 = vector.extract_strided_slice %478 {offsets = [64, 0], sizes = [16, 16], strides = [1, 1]} : vector<80x16xf32> to vector<16x16xf32>
    %497 = vector.extract_strided_slice %455 {offsets = [64, 0], sizes = [16, 33], strides = [1, 1]} : vector<80x33xf32> to vector<16x33xf32>
    %cst_178 = arith.constant dense<0.000000e+00> : vector<16x33xf32>
    %498 = tpu.matmul %496, %497, %cst_178 {dimension_numbers = #tpu.dot_dimension_numbers<[1], [0], [0], [1], [0, 0, 1, 1], [], []>} : vector<16x16xf32>, vector<16x33xf32>, vector<16x33xf32> -> vector<16x33xf32>
    %499 = arith.addf %495, %498 : vector<16x33xf32>
    %c0_179 = arith.constant 0 : index
    %c0_180 = arith.constant 0 : index
    %500 = vector.load %arg28[%c0_179, %c0_180] : memref<32x33xf32, #tpu.memory_space<vmem>>, vector<16x33xf32>
    tpu.vector_store %arg28[%c0_179, %c0_180], %477 {strides = array<i32>} : memref<32x33xf32, #tpu.memory_space<vmem>>, vector<16x33xf32>,
    %c16_181 = arith.constant 16 : index
    %c0_182 = arith.constant 0 : index
    %501 = vector.load %arg28[%c16_181, %c0_182] : memref<32x33xf32, #tpu.memory_space<vmem>>, vector<16x33xf32>
    tpu.vector_store %arg28[%c16_181, %c0_182], %499 {strides = array<i32>} : memref<32x33xf32, #tpu.memory_space<vmem>>, vector<16x33xf32>,
    return
  }
}

</mosaic_0001>

<llo_original>
// kernel: cvae_forward.1
$region0: #{cvae_forward.1}
  #allocation0 [shape = 'u32[]', space=smem, size = 0x4, offset = 0x4, fixed_abs, tag = 'smem constant byte address 0x4 - core index']
  #allocation1 [shape = 'u32[144,128]{1,0:T(1,128)}', space=vmem, size = 0x12000, scoped, tag = 'internal scratch']
  %s0 = inlined_call_operand.smem [shape: u32[31], index: -1, kind: input, shape index: {}]
  %s1 = sld [smem:[%s0]]
  %s2 = scalar_lea.smem %s0, 1
  %s3 = sld [smem:[%s2]]
  %s4 = scalar_lea.smem %s0, 2
  %s5 = sld [smem:[%s4]]
  %s6 = scalar_lea.smem %s0, 3
  %s7 = sld [smem:[%s6]]
  %s8 = scalar_lea.smem %s0, 4
  %s9 = sld [smem:[%s8]]
  %s10 = scalar_lea.smem %s0, 5
  %s11 = sld [smem:[%s10]]
  %s12 = scalar_lea.smem %s0, 6
  %s13 = sld [smem:[%s12]]
  %s14 = scalar_lea.smem %s0, 7
  %s15 = sld [smem:[%s14]]
  %s16 = scalar_lea.smem %s0, 8
  %s17 = sld [smem:[%s16]]
  %s18 = scalar_lea.smem %s0, 9
  %s19 = sld [smem:[%s18]]
  %s20 = scalar_lea.smem %s0, 10
  %s21 = sld [smem:[%s20]]
  %s22 = scalar_lea.smem %s0, 11
  %s23 = sld [smem:[%s22]]
  %s24 = scalar_lea.smem %s0, 12
  %s25 = sld [smem:[%s24]]
  %s26 = scalar_lea.smem %s0, 13
  %s27 = sld [smem:[%s26]]
  %s28 = scalar_lea.smem %s0, 14
  %s29 = sld [smem:[%s28]]
  %s30 = scalar_lea.smem %s0, 15
  %s31 = sld [smem:[%s30]]
  %s32 = scalar_lea.smem %s0, 16
  %s33 = sld [smem:[%s32]]
  %s34 = scalar_lea.smem %s0, 17
  %s35 = sld [smem:[%s34]]
  %s36 = scalar_lea.smem %s0, 18
  %s37 = sld [smem:[%s36]]
  %s38 = scalar_lea.smem %s0, 19
  %s39 = sld [smem:[%s38]]
  %s40 = scalar_lea.smem %s0, 20
  %s41 = sld [smem:[%s40]]
  %s42 = scalar_lea.smem %s0, 21
  %s43 = sld [smem:[%s42]]
  %s44 = scalar_lea.smem %s0, 22
  %s45 = sld [smem:[%s44]]
  %s46 = scalar_lea.smem %s0, 23
  %s47 = sld [smem:[%s46]]
  %s48 = scalar_lea.smem %s0, 24
  %s49 = sld [smem:[%s48]]
  %s50 = scalar_lea.smem %s0, 25
  %s51 = sld [smem:[%s50]]
  %s52 = scalar_lea.smem %s0, 26
  %s53 = sld [smem:[%s52]]
  %s54 = scalar_lea.smem %s0, 27
  %s55 = sld [smem:[%s54]]
  %s56 = scalar_lea.smem %s0, 28
  %s57 = sld [smem:[%s56]]
  %s58 = scalar_lea.smem %s0, 29
  %s59 = sld [smem:[%s58]]
  %s60 = scalar_lea.smem %s0, 30
  %s61 = sld [smem:[%s60]]
  %62 = xla_tuple %s57, %s59, %s61
  %s63 = sld [smem:[#allocation0]]
  $region138: #{cvae_forward.1} parent=0
    _
  %s65 = ssub.s32 1, %s63
  %s66 = scalar_select 0, %s65, %s63
  $region1: #{cvae_forward.1} parent=0
    #allocation2 [shape = 'u8[16384]{0}', space=vmem, size = 0x4000, scoped, tag = 'output window, operand 0, single buffered']
    #allocation3 [shape = 's32[1]{0}', space=sflag, size = 0x4, scoped, tag = 'scoped memory for cvae_forward.1']
    %67 = vsyncpa [#allocation3], 0
    // Predicated region
    $region2: #{cvae_forward.1} parent=1 // pred_check
      _
    $region3: #{cvae_forward.1} parent=1 // pred_check_branch
      %69 = sbr.rel (0) target = $region5
    $region4: #{cvae_forward.1} parent=1 // pred_region
      _
    $region5: #{cvae_forward.1} parent=1 // pred_fallthru
      _
    // Predicated region
    $region6: #{cvae_forward.1} parent=1 // pred_check
      _
    $region7: #{cvae_forward.1} parent=1 // pred_check_branch
      %71 = sbr.rel (0) target = $region9
    $region8: #{cvae_forward.1} parent=1 // pred_region
      _
    $region9: #{cvae_forward.1} parent=1 // pred_fallthru
      _
    // Predicated region
    $region10: #{cvae_forward.1} parent=1 // pred_check
      _
    $region11: #{cvae_forward.1} parent=1 // pred_check_branch
      %73 = sbr.rel (0) target = $region13
    $region12: #{cvae_forward.1} parent=1 // pred_region
      _
    $region13: #{cvae_forward.1} parent=1 // pred_fallthru
      _
    // Predicated region
    $region14: #{cvae_forward.1} parent=1 // pred_check
      _
    $region15: #{cvae_forward.1} parent=1 // pred_check_branch
      %75 = sbr.rel (0) target = $region17
    $region16: #{cvae_forward.1} parent=1 // pred_region
      _
    $region17: #{cvae_forward.1} parent=1 // pred_fallthru
      _
    // Predicated region
    $region18: #{cvae_forward.1} parent=1 // pred_check
      _
    $region19: #{cvae_forward.1} parent=1 // pred_check_branch
      %77 = sbr.rel (0) target = $region21
    $region20: #{cvae_forward.1} parent=1 // pred_region
      _
    $region21: #{cvae_forward.1} parent=1 // pred_fallthru
      _
    // Predicated region
    $region22: #{cvae_forward.1} parent=1 // pred_check
      _
    $region23: #{cvae_forward.1} parent=1 // pred_check_branch
      %79 = sbr.rel (0) target = $region25
    $region24: #{cvae_forward.1} parent=1 // pred_region
      _
    $region25: #{cvae_forward.1} parent=1 // pred_fallthru
      _
    // Predicated region
    $region26: #{cvae_forward.1} parent=1 // pred_check
      _
    $region27: #{cvae_forward.1} parent=1 // pred_check_branch
      %81 = sbr.rel (0) target = $region29
    $region28: #{cvae_forward.1} parent=1 // pred_region
      _
    $region29: #{cvae_forward.1} parent=1 // pred_fallthru
      _
    // Predicated region
    $region30: #{cvae_forward.1} parent=1 // pred_check
      _
    $region31: #{cvae_forward.1} parent=1 // pred_check_branch
      %83 = sbr.rel (0) target = $region33
    $region32: #{cvae_forward.1} parent=1 // pred_region
      _
    $region33: #{cvae_forward.1} parent=1 // pred_fallthru
      _
    // Predicated region
    $region34: #{cvae_forward.1} parent=1 // pred_check
      _
    $region35: #{cvae_forward.1} parent=1 // pred_check_branch
      %85 = sbr.rel (0) target = $region37
    $region36: #{cvae_forward.1} parent=1 // pred_region
      _
    $region37: #{cvae_forward.1} parent=1 // pred_fallthru
      _
    // Predicated region
    $region38: #{cvae_forward.1} parent=1 // pred_check
      _
    $region39: #{cvae_forward.1} parent=1 // pred_check_branch
      %87 = sbr.rel (0) target = $region41
    $region40: #{cvae_forward.1} parent=1 // pred_region
      _
    $region41: #{cvae_forward.1} parent=1 // pred_fallthru
      _
    // Predicated region
    $region42: #{cvae_forward.1} parent=1 // pred_check
      _
    $region43: #{cvae_forward.1} parent=1 // pred_check_branch
      %89 = sbr.rel (0) target = $region45
    $region44: #{cvae_forward.1} parent=1 // pred_region
      _
    $region45: #{cvae_forward.1} parent=1 // pred_fallthru
      _
    // Predicated region
    $region46: #{cvae_forward.1} parent=1 // pred_check
      _
    $region47: #{cvae_forward.1} parent=1 // pred_check_branch
      %91 = sbr.rel (0) target = $region49
    $region48: #{cvae_forward.1} parent=1 // pred_region
      _
    $region49: #{cvae_forward.1} parent=1 // pred_fallthru
      _
    // Predicated region
    $region50: #{cvae_forward.1} parent=1 // pred_check
      _
    $region51: #{cvae_forward.1} parent=1 // pred_check_branch
      %93 = sbr.rel (0) target = $region53
    $region52: #{cvae_forward.1} parent=1 // pred_region
      _
    $region53: #{cvae_forward.1} parent=1 // pred_fallthru
      _
    // Predicated region
    $region54: #{cvae_forward.1} parent=1 // pred_check
      _
    $region55: #{cvae_forward.1} parent=1 // pred_check_branch
      %95 = sbr.rel (0) target = $region57
    $region56: #{cvae_forward.1} parent=1 // pred_region
      _
    $region57: #{cvae_forward.1} parent=1 // pred_fallthru
      _
    // Predicated region
    $region58: #{cvae_forward.1} parent=1 // pred_check
      _
    $region59: #{cvae_forward.1} parent=1 // pred_check_branch
      %97 = sbr.rel (0) target = $region61
    $region60: #{cvae_forward.1} parent=1 // pred_region
      _
    $region61: #{cvae_forward.1} parent=1 // pred_fallthru
      _
    // Predicated region
    $region62: #{cvae_forward.1} parent=1 // pred_check
      _
    $region63: #{cvae_forward.1} parent=1 // pred_check_branch
      %99 = sbr.rel (0) target = $region65
    $region64: #{cvae_forward.1} parent=1 // pred_region
      _
    $region65: #{cvae_forward.1} parent=1 // pred_fallthru
      _
    // Predicated region
    $region66: #{cvae_forward.1} parent=1 // pred_check
      _
    $region67: #{cvae_forward.1} parent=1 // pred_check_branch
      %101 = sbr.rel (0) target = $region69
    $region68: #{cvae_forward.1} parent=1 // pred_region
      _
    $region69: #{cvae_forward.1} parent=1 // pred_fallthru
      _
    // Predicated region
    $region70: #{cvae_forward.1} parent=1 // pred_check
      _
    $region71: #{cvae_forward.1} parent=1 // pred_check_branch
      %103 = sbr.rel (0) target = $region73
    $region72: #{cvae_forward.1} parent=1 // pred_region
      _
    $region73: #{cvae_forward.1} parent=1 // pred_fallthru
      _
    // Predicated region
    $region74: #{cvae_forward.1} parent=1 // pred_check
      _
    $region75: #{cvae_forward.1} parent=1 // pred_check_branch
      %105 = sbr.rel (0) target = $region77
    $region76: #{cvae_forward.1} parent=1 // pred_region
      _
    $region77: #{cvae_forward.1} parent=1 // pred_fallthru
      _
    // Predicated region
    $region78: #{cvae_forward.1} parent=1 // pred_check
      _
    $region79: #{cvae_forward.1} parent=1 // pred_check_branch
      %107 = sbr.rel (0) target = $region81
    $region80: #{cvae_forward.1} parent=1 // pred_region
      _
    $region81: #{cvae_forward.1} parent=1 // pred_fallthru
      _
    // Predicated region
    $region82: #{cvae_forward.1} parent=1 // pred_check
      _
    $region83: #{cvae_forward.1} parent=1 // pred_check_branch
      %109 = sbr.rel (0) target = $region85
    $region84: #{cvae_forward.1} parent=1 // pred_region
      _
    $region85: #{cvae_forward.1} parent=1 // pred_fallthru
      _
    // Predicated region
    $region86: #{cvae_forward.1} parent=1 // pred_check
      _
    $region87: #{cvae_forward.1} parent=1 // pred_check_branch
      %111 = sbr.rel (0) target = $region89
    $region88: #{cvae_forward.1} parent=1 // pred_region
      _
    $region89: #{cvae_forward.1} parent=1 // pred_fallthru
      _
    // Predicated region
    $region90: #{cvae_forward.1} parent=1 // pred_check
      _
    $region91: #{cvae_forward.1} parent=1 // pred_check_branch
      %113 = sbr.rel (0) target = $region93
    $region92: #{cvae_forward.1} parent=1 // pred_region
      _
    $region93: #{cvae_forward.1} parent=1 // pred_fallthru
      _
    // Predicated region
    $region94: #{cvae_forward.1} parent=1 // pred_check
      _
    $region95: #{cvae_forward.1} parent=1 // pred_check_branch
      %115 = sbr.rel (0) target = $region97
    $region96: #{cvae_forward.1} parent=1 // pred_region
      _
    $region97: #{cvae_forward.1} parent=1 // pred_fallthru
      _
    // Predicated region
    $region98: #{cvae_forward.1} parent=1 // pred_check
      _
    $region99: #{cvae_forward.1} parent=1 // pred_check_branch
      %117 = sbr.rel (0) target = $region101
    $region100: #{cvae_forward.1} parent=1 // pred_region
      _
    $region101: #{cvae_forward.1} parent=1 // pred_fallthru
      _
    // Predicated region
    $region102: #{cvae_forward.1} parent=1 // pred_check
      _
    $region103: #{cvae_forward.1} parent=1 // pred_check_branch
      %119 = sbr.rel (0) target = $region105
    $region104: #{cvae_forward.1} parent=1 // pred_region
      _
    $region105: #{cvae_forward.1} parent=1 // pred_fallthru
      _
    // Predicated region
    $region106: #{cvae_forward.1} parent=1 // pred_check
      _
    $region107: #{cvae_forward.1} parent=1 // pred_check_branch
      %121 = sbr.rel (0) target = $region109
    $region108: #{cvae_forward.1} parent=1 // pred_region
      _
    $region109: #{cvae_forward.1} parent=1 // pred_fallthru
      _
    // Predicated region
    $region110: #{cvae_forward.1} parent=1 // pred_check
      _
    $region111: #{cvae_forward.1} parent=1 // pred_check_branch
      %123 = sbr.rel (0) target = $region113
    $region112: #{cvae_forward.1} parent=1 // pred_region
      _
    $region113: #{cvae_forward.1} parent=1 // pred_fallthru
      _
    %v124 = vld [vmem:[%s1] sm:$0xff]
    %v125 = vld [vmem:[%s1 + $0x8] sm:$0xff]
    %v126 = vadd.f32 %v124, 1e-09
    %v127 = vadd.f32 %v125, 1e-09
    %v128 = vlog2.pop %v126
    %v129 = vmul.f32 %v128, 0.6931472
    %v130 = vlog2.pop %v127
    %v131 = vmul.f32 %v130, 0.6931472
    %v132 = vld [vmem:[%s1 + $0x10] sm:$0xff]
    %v133 = vld [vmem:[%s1 + $0x18] sm:$0xff]
    %v134 = vadd.f32 %v132, 1e-09
    %v135 = vadd.f32 %v133, 1e-09
    %v136 = vlog2.pop %v134
    %v137 = vmul.f32 %v136, 0.6931472
    %v138 = vlog2.pop %v135
    %v139 = vmul.f32 %v138, 0.6931472
    %v140 = vld [vmem:[%s5] sm:$0xff]
    %v141 = vld [vmem:[%s5 + $0x8] sm:$0xff]
    %v142 = vld [vmem:[%s5 + $0x10] sm:$0xff]
    %v143 = vld [vmem:[%s5 + $0x18] sm:$0xff]
    %v144 = vld [vmem:[%s5 + $0x20] sm:$0xff]
    %v145 = vld [vmem:[%s5 + $0x28] sm:$0xff]
    %v146 = vld [vmem:[%s5 + $0x30] sm:$0xff]
    %v147 = vld [vmem:[%s5 + $0x38] sm:$0xff]
    %v148 = vld [vmem:[%s5 + $0x40] sm:$0xff]
    %v149 = vld [vmem:[%s5 + $0x48] sm:$0xff]
    %v150 = vld [vmem:[%s7] sm:$0xff]
    %v151 = vld [vmem:[%s7 + $0x8] sm:$0xff]
    %v152 = vld [vmem:[%s7 + $0x10] sm:$0xff]
    %v153 = vld [vmem:[%s7 + $0x18] sm:$0xff]
    %v154 = vld [vmem:[%s7 + $0x20] sm:$0xff]
    %v155 = vld [vmem:[%s7 + $0x28] sm:$0xff]
    %v156 = vld [vmem:[%s7 + $0x30] sm:$0xff]
    %v157 = vld [vmem:[%s7 + $0x38] sm:$0xff]
    %v158 = vld [vmem:[%s7 + $0x40] sm:$0xff]
    %v159 = vld [vmem:[%s7 + $0x48] sm:$0xff]
    %v160 = vld [vmem:[%s7 + $0x50] sm:$0xff]
    %v161 = vld [vmem:[%s7 + $0x58] sm:$0xff]
    %v162 = vld [vmem:[%s7 + $0x60] sm:$0xff]
    %v163 = vld [vmem:[%s7 + $0x68] sm:$0xff]
    %v164 = vld [vmem:[%s7 + $0x70] sm:$0xff]
    %v165 = vld [vmem:[%s7 + $0x78] sm:$0xff]
    %v166 = vld [vmem:[%s7 + $0x80] sm:$0xff]
    %v167 = vld [vmem:[%s7 + $0x88] sm:$0xff]
    %v168 = vld [vmem:[%s7 + $0x90] sm:$0xff]
    %v169 = vld [vmem:[%s7 + $0x98] sm:$0xff]
    %v170 = vld [vmem:[%s7 + $0xa0] sm:$0x1f]
    %vm171 = vcmask 130048
    %v173 = vsel %vm171, %v140, 0
    %v176 = vsel %vm171, %v141, 0
    %v179 = vsel %vm171, %v142, 0
    %v182 = vsel %vm171, %v143, 0
    %v185 = vsel %vm171, %v144, 0
    %v188 = vsel %vm171, %v145, 0
    %v191 = vsel %vm171, %v146, 0
    %v194 = vsel %vm171, %v147, 0
    %v197 = vsel %vm171, %v148, 0
    %v200 = vsel %vm171, %v149, 0
    %202 = vmatprep.subr.mxu0 0.0
    %203 = vmatpush1.msra.mxu0 %v129
    %204 = vmatprep.subr.mxu0 0.0
    %205 = vmatpush1.msra.mxu0 %v131
    %206 = vmatprep.subr.mxu0 0.0
    %207 = vmatpush1.msra.mxu0 0.0
    %208 = vmatprep.subr.mxu0 0.0
    %209 = vmatpush1.msra.mxu0 0.0
    %210 = vmatprep.subr.mxu0 0.0
    %211 = vmatpush1.msra.mxu0 0.0
    %212 = vmatprep.subr.mxu0 0.0
    %213 = vmatpush1.msra.mxu0 0.0
    %214 = vmatprep.subr.mxu0 0.0
    %215 = vmatpush1.msra.mxu0 0.0
    %216 = vmatprep.subr.mxu0 0.0
    %217 = vmatpush1.msra.mxu0 0.0
    %218 = vmatprep.subr.mxu0 0.0
    %219 = vmatpush1.msra.mxu0 0.0
    %220 = vmatprep.subr.mxu0 0.0
    %221 = vmatpush1.msra.mxu0 0.0
    %222 = vmatprep.subr.mxu0 0.0
    %223 = vmatpush1.msra.mxu0 0.0
    %224 = vmatprep.subr.mxu0 0.0
    %225 = vmatpush1.msra.mxu0 0.0
    %226 = vmatprep.subr.mxu0 0.0
    %227 = vmatpush1.msra.mxu0 0.0
    %228 = vmatprep.subr.mxu0 0.0
    %229 = vmatpush1.msra.mxu0 0.0
    %230 = vmatprep.subr.mxu0 0.0
    %231 = vmatpush1.msra.mxu0 0.0
    %232 = vmatprep.subr.mxu0 0.0
    %233 = vmatpush1.msra.mxu0 0.0
    %234 = vmatprep.subr.mxu0 0.0
    %235 = vmatpush1.msra.mxu0 0.0
    %236 = vmatprep.subr.mxu0 0.0
    %237 = vmatpush1.msra.mxu0 0.0
    %238 = vmatprep.subr.mxu0 0.0
    %239 = vmatpush1.msra.mxu0 0.0
    %240 = vmatprep.subr.mxu0 0.0
    %241 = vmatpush1.msra.mxu0 0.0
    %242 = vmatprep.subr.mxu0 0.0
    %243 = vmatpush1.msra.mxu0 0.0
    %244 = vmatprep.subr.mxu0 0.0
    %245 = vmatpush1.msra.mxu0 0.0
    %246 = vmatprep.subr.mxu0 0.0
    %247 = vmatpush1.msra.mxu0 0.0
    %248 = vmatprep.subr.mxu0 0.0
    %249 = vmatpush1.msra.mxu0 0.0
    %250 = vmatprep.subr.mxu0 0.0
    %251 = vmatpush1.msra.mxu0 0.0
    %252 = vmatprep.subr.mxu0 0.0
    %253 = vmatpush1.msra.mxu0 0.0
    %254 = vmatprep.subr.mxu0 0.0
    %255 = vmatpush1.msra.mxu0 0.0
    %256 = vmatprep.subr.mxu0 0.0
    %257 = vmatpush1.msra.mxu0 0.0
    %258 = vmatprep.subr.mxu0 0.0
    %259 = vmatpush1.msra.mxu0 0.0
    %260 = vmatprep.subr.mxu0 0.0
    %261 = vmatpush1.msra.mxu0 0.0
    %262 = vmatprep.subr.mxu0 0.0
    %263 = vmatpush1.msra.mxu0 0.0
    %264 = vmatprep.subr.mxu0 0.0
    %265 = vmatpush1.msra.mxu0 0.0
    %266 = vmatprep.mubr.f32.mxu0 0.0
    %267 = vmatmul.mubr.f32.gmra.mrb[0].mxu0 %v173
    %v268 = vpop.f32.mrb[0].mxu0
    %v269 = vadd.f32 0.0, %v268
    %v270 = vpop.f32.mrb[0].mxu0
    %271 = vmatprep.mubr.f32.mxu0 0.0
    %272 = vmatmul.mubr.f32.gmra.mrb[0].mxu0 %v176
    %v273 = vpop.f32.mrb[0].mxu0
    %v274 = vadd.f32 0.0, %v273
    %v275 = vpop.f32.mrb[0].mxu0
    %276 = vmatprep.mubr.f32.mxu0 0.0
    %277 = vmatmul.mubr.f32.gmra.mrb[0].mxu0 %v179
    %v278 = vpop.f32.mrb[0].mxu0
    %v279 = vadd.f32 0.0, %v278
    %v280 = vpop.f32.mrb[0].mxu0
    %281 = vmatprep.mubr.f32.mxu0 0.0
    %282 = vmatmul.mubr.f32.gmra.mrb[0].mxu0 %v182
    %v283 = vpop.f32.mrb[0].mxu0
    %v284 = vadd.f32 0.0, %v283
    %v285 = vpop.f32.mrb[0].mxu0
    %286 = vmatprep.mubr.f32.mxu0 0.0
    %287 = vmatmul.mubr.f32.gmra.mrb[0].mxu0 %v185
    %v288 = vpop.f32.mrb[0].mxu0
    %v289 = vadd.f32 0.0, %v288
    %v290 = vpop.f32.mrb[0].mxu0
    %291 = vmatprep.mubr.f32.mxu0 0.0
    %292 = vmatmul.mubr.f32.gmra.mrb[0].mxu0 %v188
    %v293 = vpop.f32.mrb[0].mxu0
    %v294 = vadd.f32 0.0, %v293
    %v295 = vpop.f32.mrb[0].mxu0
    %296 = vmatprep.mubr.f32.mxu0 0.0
    %297 = vmatmul.mubr.f32.gmra.mrb[0].mxu0 %v191
    %v298 = vpop.f32.mrb[0].mxu0
    %v299 = vadd.f32 0.0, %v298
    %v300 = vpop.f32.mrb[0].mxu0
    %301 = vmatprep.mubr.f32.mxu0 0.0
    %302 = vmatmul.mubr.f32.gmra.mrb[0].mxu0 %v194
    %v303 = vpop.f32.mrb[0].mxu0
    %v304 = vadd.f32 0.0, %v303
    %v305 = vpop.f32.mrb[0].mxu0
    %306 = vmatprep.mubr.f32.mxu0 0.0
    %307 = vmatmul.mubr.f32.gmra.mrb[0].mxu0 %v197
    %v308 = vpop.f32.mrb[0].mxu0
    %v309 = vadd.f32 0.0, %v308
    %v310 = vpop.f32.mrb[0].mxu0
    %311 = vmatprep.mubr.f32.mxu0 0.0
    %312 = vmatmul.mubr.f32.gmra.mrb[0].mxu0 %v200
    %v313 = vpop.f32.mrb[0].mxu0
    %v314 = vadd.f32 0.0, %v313
    %v315 = vpop.f32.mrb[0].mxu0
    %316 = vdwg.mxu0
    %v317 = vld [vmem:[%s9] sm:$0xff]
    %v318 = vld [vmem:[%s9 + $0x8] sm:$0xff]
    %vm319 = vcmask 269312
    %v321 = vsel %vm319, %v269, 0
    %v324 = vsel %vm319, %v274, 0
    %vm326 = vcmask 1040384
    %v328 = vsel %vm326, %v154, 0
    %330 = vmatprep.subr.mxu0 0.0
    %331 = vmatpush1.msra.mxu0 %v150
    %332 = vmatprep.subr.mxu0 0.0
    %333 = vmatpush1.msra.mxu0 %v151
    %334 = vmatprep.subr.mxu0 0.0
    %335 = vmatpush1.msra.mxu0 %v152
    %336 = vmatprep.subr.mxu0 0.0
    %337 = vmatpush1.msra.mxu0 %v153
    %338 = vmatprep.subr.mxu0 0.0
    %339 = vmatpush1.msra.mxu0 %v328
    %340 = vmatprep.subr.mxu0 0.0
    %341 = vmatpush1.msra.mxu0 0.0
    %342 = vmatprep.subr.mxu0 0.0
    %343 = vmatpush1.msra.mxu0 0.0
    %344 = vmatprep.subr.mxu0 0.0
    %345 = vmatpush1.msra.mxu0 0.0
    %346 = vmatprep.subr.mxu0 0.0
    %347 = vmatpush1.msra.mxu0 0.0
    %348 = vmatprep.subr.mxu0 0.0
    %349 = vmatpush1.msra.mxu0 0.0
    %350 = vmatprep.subr.mxu0 0.0
    %351 = vmatpush1.msra.mxu0 0.0
    %352 = vmatprep.subr.mxu0 0.0
    %353 = vmatpush1.msra.mxu0 0.0
    %354 = vmatprep.subr.mxu0 0.0
    %355 = vmatpush1.msra.mxu0 0.0
    %356 = vmatprep.subr.mxu0 0.0
    %357 = vmatpush1.msra.mxu0 0.0
    %358 = vmatprep.subr.mxu0 0.0
    %359 = vmatpush1.msra.mxu0 0.0
    %360 = vmatprep.subr.mxu0 0.0
    %361 = vmatpush1.msra.mxu0 0.0
    %362 = vmatprep.subr.mxu0 0.0
    %363 = vmatpush1.msra.mxu0 0.0
    %364 = vmatprep.subr.mxu0 0.0
    %365 = vmatpush1.msra.mxu0 0.0
    %366 = vmatprep.subr.mxu0 0.0
    %367 = vmatpush1.msra.mxu0 0.0
    %368 = vmatprep.subr.mxu0 0.0
    %369 = vmatpush1.msra.mxu0 0.0
    %370 = vmatprep.subr.mxu0 0.0
    %371 = vmatpush1.msra.mxu0 0.0
    %372 = vmatprep.subr.mxu0 0.0
    %373 = vmatpush1.msra.mxu0 0.0
    %374 = vmatprep.subr.mxu0 0.0
    %375 = vmatpush1.msra.mxu0 0.0
    %376 = vmatprep.subr.mxu0 0.0
    %377 = vmatpush1.msra.mxu0 0.0
    %378 = vmatprep.subr.mxu0 0.0
    %379 = vmatpush1.msra.mxu0 0.0
    %380 = vmatprep.subr.mxu0 0.0
    %381 = vmatpush1.msra.mxu0 0.0
    %382 = vmatprep.subr.mxu0 0.0
    %383 = vmatpush1.msra.mxu0 0.0
    %384 = vmatprep.subr.mxu0 0.0
    %385 = vmatpush1.msra.mxu0 0.0
    %386 = vmatprep.subr.mxu0 0.0
    %387 = vmatpush1.msra.mxu0 0.0
    %388 = vmatprep.subr.mxu0 0.0
    %389 = vmatpush1.msra.mxu0 0.0
    %390 = vmatprep.subr.mxu0 0.0
    %391 = vmatpush1.msra.mxu0 0.0
    %392 = vmatprep.subr.mxu0 0.0
    %393 = vmatpush1.msra.mxu0 0.0
    %394 = vmatprep.mubr.f32.mxu0 0.0
    %395 = vmatmul.mubr.f32.gmra.mrb[0].mxu0 %v321
    %v396 = vpop.f32.mrb[0].mxu0
    %v397 = vadd.f32 0.0, %v396
    %v398 = vpop.f32.mrb[0].mxu0
    %399 = vmatprep.mubr.f32.mxu0 0.0
    %400 = vmatmul.mubr.f32.gmra.mrb[0].mxu0 %v324
    %v401 = vpop.f32.mrb[0].mxu0
    %v402 = vadd.f32 0.0, %v401
    %v403 = vpop.f32.mrb[0].mxu0
    %404 = vdwg.mxu0
    %v405 = vadd.f32 %v317, %v397
    %v406 = vadd.f32 %v318, %v402
    %vm411 = vcmask 1046528
    %v412 = vrot.slane %v154, 1
    %v413 = vrot.slane %v155, 1
    %v414 = vsel %vm411, %v412, %v413
    %v415 = vrot.slane %v156, 1
    %v416 = vsel %vm411, %v413, %v415
    %v417 = vrot.slane %v157, 1
    %v418 = vsel %vm411, %v415, %v417
    %v419 = vrot.slane %v158, 1
    %v420 = vsel %vm411, %v417, %v419
    %v426 = vsel %vm319, %v279, 0
    %v429 = vsel %vm319, %v284, 0
    %v431 = vsel %vm326, %v419, 0
    %433 = vmatprep.subr.mxu0 0.0
    %434 = vmatpush1.msra.mxu0 %v414
    %435 = vmatprep.subr.mxu0 0.0
    %436 = vmatpush1.msra.mxu0 %v416
    %437 = vmatprep.subr.mxu0 0.0
    %438 = vmatpush1.msra.mxu0 %v418
    %439 = vmatprep.subr.mxu0 0.0
    %440 = vmatpush1.msra.mxu0 %v420
    %441 = vmatprep.subr.mxu0 0.0
    %442 = vmatpush1.msra.mxu0 %v431
    %443 = vmatprep.subr.mxu0 0.0
    %444 = vmatpush1.msra.mxu0 0.0
    %445 = vmatprep.subr.mxu0 0.0
    %446 = vmatpush1.msra.mxu0 0.0
    %447 = vmatprep.subr.mxu0 0.0
    %448 = vmatpush1.msra.mxu0 0.0
    %449 = vmatprep.subr.mxu0 0.0
    %450 = vmatpush1.msra.mxu0 0.0
    %451 = vmatprep.subr.mxu0 0.0
    %452 = vmatpush1.msra.mxu0 0.0
    %453 = vmatprep.subr.mxu0 0.0
    %454 = vmatpush1.msra.mxu0 0.0
    %455 = vmatprep.subr.mxu0 0.0
    %456 = vmatpush1.msra.mxu0 0.0
    %457 = vmatprep.subr.mxu0 0.0
    %458 = vmatpush1.msra.mxu0 0.0
    %459 = vmatprep.subr.mxu0 0.0
    %460 = vmatpush1.msra.mxu0 0.0
    %461 = vmatprep.subr.mxu0 0.0
    %462 = vmatpush1.msra.mxu0 0.0
    %463 = vmatprep.subr.mxu0 0.0
    %464 = vmatpush1.msra.mxu0 0.0
    %465 = vmatprep.subr.mxu0 0.0
    %466 = vmatpush1.msra.mxu0 0.0
    %467 = vmatprep.subr.mxu0 0.0
    %468 = vmatpush1.msra.mxu0 0.0
    %469 = vmatprep.subr.mxu0 0.0
    %470 = vmatpush1.msra.mxu0 0.0
    %471 = vmatprep.subr.mxu0 0.0
    %472 = vmatpush1.msra.mxu0 0.0
    %473 = vmatprep.subr.mxu0 0.0
    %474 = vmatpush1.msra.mxu0 0.0
    %475 = vmatprep.subr.mxu0 0.0
    %476 = vmatpush1.msra.mxu0 0.0
    %477 = vmatprep.subr.mxu0 0.0
    %478 = vmatpush1.msra.mxu0 0.0
    %479 = vmatprep.subr.mxu0 0.0
    %480 = vmatpush1.msra.mxu0 0.0
    %481 = vmatprep.subr.mxu0 0.0
    %482 = vmatpush1.msra.mxu0 0.0
    %483 = vmatprep.subr.mxu0 0.0
    %484 = vmatpush1.msra.mxu0 0.0
    %485 = vmatprep.subr.mxu0 0.0
    %486 = vmatpush1.msra.mxu0 0.0
    %487 = vmatprep.subr.mxu0 0.0
    %488 = vmatpush1.msra.mxu0 0.0
    %489 = vmatprep.subr.mxu0 0.0
    %490 = vmatpush1.msra.mxu0 0.0
    %491 = vmatprep.subr.mxu0 0.0
    %492 = vmatpush1.msra.mxu0 0.0
    %493 = vmatprep.subr.mxu0 0.0
    %494 = vmatpush1.msra.mxu0 0.0
    %495 = vmatprep.subr.mxu0 0.0
    %496 = vmatpush1.msra.mxu0 0.0
    %497 = vmatprep.mubr.f32.mxu0 0.0
    %498 = vmatmul.mubr.f32.gmra.mrb[0].mxu0 %v426
    %v499 = vpop.f32.mrb[0].mxu0
    %v500 = vadd.f32 0.0, %v499
    %v501 = vpop.f32.mrb[0].mxu0
    %502 = vmatprep.mubr.f32.mxu0 0.0
    %503 = vmatmul.mubr.f32.gmra.mrb[0].mxu0 %v429
    %v504 = vpop.f32.mrb[0].mxu0
    %v505 = vadd.f32 0.0, %v504
    %v506 = vpop.f32.mrb[0].mxu0
    %507 = vdwg.mxu0
    %v508 = vadd.f32 %v405, %v500
    %v509 = vadd.f32 %v406, %v505
    %vm514 = vcmask 1045504
    %v515 = vrot.slane %v158, 2
    %v516 = vrot.slane %v159, 2
    %v517 = vsel %vm514, %v515, %v516
    %v518 = vrot.slane %v160, 2
    %v519 = vsel %vm514, %v516, %v518
    %v520 = vrot.slane %v161, 2
    %v521 = vsel %vm514, %v518, %v520
    %v522 = vrot.slane %v162, 2
    %v523 = vsel %vm514, %v520, %v522
    %v529 = vsel %vm319, %v289, 0
    %v532 = vsel %vm319, %v294, 0
    %v534 = vsel %vm326, %v522, 0
    %536 = vmatprep.subr.mxu0 0.0
    %537 = vmatpush1.msra.mxu0 %v517
    %538 = vmatprep.subr.mxu0 0.0
    %539 = vmatpush1.msra.mxu0 %v519
    %540 = vmatprep.subr.mxu0 0.0
    %541 = vmatpush1.msra.mxu0 %v521
    %542 = vmatprep.subr.mxu0 0.0
    %543 = vmatpush1.msra.mxu0 %v523
    %544 = vmatprep.subr.mxu0 0.0
    %545 = vmatpush1.msra.mxu0 %v534
    %546 = vmatprep.subr.mxu0 0.0
    %547 = vmatpush1.msra.mxu0 0.0
    %548 = vmatprep.subr.mxu0 0.0
    %549 = vmatpush1.msra.mxu0 0.0
    %550 = vmatprep.subr.mxu0 0.0
    %551 = vmatpush1.msra.mxu0 0.0
    %552 = vmatprep.subr.mxu0 0.0
    %553 = vmatpush1.msra.mxu0 0.0
    %554 = vmatprep.subr.mxu0 0.0
    %555 = vmatpush1.msra.mxu0 0.0
    %556 = vmatprep.subr.mxu0 0.0
    %557 = vmatpush1.msra.mxu0 0.0
    %558 = vmatprep.subr.mxu0 0.0
    %559 = vmatpush1.msra.mxu0 0.0
    %560 = vmatprep.subr.mxu0 0.0
    %561 = vmatpush1.msra.mxu0 0.0
    %562 = vmatprep.subr.mxu0 0.0
    %563 = vmatpush1.msra.mxu0 0.0
    %564 = vmatprep.subr.mxu0 0.0
    %565 = vmatpush1.msra.mxu0 0.0
    %566 = vmatprep.subr.mxu0 0.0
    %567 = vmatpush1.msra.mxu0 0.0
    %568 = vmatprep.subr.mxu0 0.0
    %569 = vmatpush1.msra.mxu0 0.0
    %570 = vmatprep.subr.mxu0 0.0
    %571 = vmatpush1.msra.mxu0 0.0
    %572 = vmatprep.subr.mxu0 0.0
    %573 = vmatpush1.msra.mxu0 0.0
    %574 = vmatprep.subr.mxu0 0.0
    %575 = vmatpush1.msra.mxu0 0.0
    %576 = vmatprep.subr.mxu0 0.0
    %577 = vmatpush1.msra.mxu0 0.0
    %578 = vmatprep.subr.mxu0 0.0
    %579 = vmatpush1.msra.mxu0 0.0
    %580 = vmatprep.subr.mxu0 0.0
    %581 = vmatpush1.msra.mxu0 0.0
    %582 = vmatprep.subr.mxu0 0.0
    %583 = vmatpush1.msra.mxu0 0.0
    %584 = vmatprep.subr.mxu0 0.0
    %585 = vmatpush1.msra.mxu0 0.0
    %586 = vmatprep.subr.mxu0 0.0
    %587 = vmatpush1.msra.mxu0 0.0
    %588 = vmatprep.subr.mxu0 0.0
    %589 = vmatpush1.msra.mxu0 0.0
    %590 = vmatprep.subr.mxu0 0.0
    %591 = vmatpush1.msra.mxu0 0.0
    %592 = vmatprep.subr.mxu0 0.0
    %593 = vmatpush1.msra.mxu0 0.0
    %594 = vmatprep.subr.mxu0 0.0
    %595 = vmatpush1.msra.mxu0 0.0
    %596 = vmatprep.subr.mxu0 0.0
    %597 = vmatpush1.msra.mxu0 0.0
    %598 = vmatprep.subr.mxu0 0.0
    %599 = vmatpush1.msra.mxu0 0.0
    %600 = vmatprep.mubr.f32.mxu0 0.0
    %601 = vmatmul.mubr.f32.gmra.mrb[0].mxu0 %v529
    %v602 = vpop.f32.mrb[0].mxu0
    %v603 = vadd.f32 0.0, %v602
    %v604 = vpop.f32.mrb[0].mxu0
    %605 = vmatprep.mubr.f32.mxu0 0.0
    %606 = vmatmul.mubr.f32.gmra.mrb[0].mxu0 %v532
    %v607 = vpop.f32.mrb[0].mxu0
    %v608 = vadd.f32 0.0, %v607
    %v609 = vpop.f32.mrb[0].mxu0
    %610 = vdwg.mxu0
    %v611 = vadd.f32 %v508, %v603
    %v612 = vadd.f32 %v509, %v608
    %vm617 = vcmask 1044480
    %v618 = vrot.slane %v162, 3
    %v619 = vrot.slane %v163, 3
    %v620 = vsel %vm617, %v618, %v619
    %v621 = vrot.slane %v164, 3
    %v622 = vsel %vm617, %v619, %v621
    %v623 = vrot.slane %v165, 3
    %v624 = vsel %vm617, %v621, %v623
    %v625 = vrot.slane %v166, 3
    %v626 = vsel %vm617, %v623, %v625
    %v632 = vsel %vm319, %v299, 0
    %v635 = vsel %vm319, %v304, 0
    %v637 = vsel %vm326, %v625, 0
    %639 = vmatprep.subr.mxu0 0.0
    %640 = vmatpush1.msra.mxu0 %v620
    %641 = vmatprep.subr.mxu0 0.0
    %642 = vmatpush1.msra.mxu0 %v622
    %643 = vmatprep.subr.mxu0 0.0
    %644 = vmatpush1.msra.mxu0 %v624
    %645 = vmatprep.subr.mxu0 0.0
    %646 = vmatpush1.msra.mxu0 %v626
    %647 = vmatprep.subr.mxu0 0.0
    %648 = vmatpush1.msra.mxu0 %v637
    %649 = vmatprep.subr.mxu0 0.0
    %650 = vmatpush1.msra.mxu0 0.0
    %651 = vmatprep.subr.mxu0 0.0
    %652 = vmatpush1.msra.mxu0 0.0
    %653 = vmatprep.subr.mxu0 0.0
    %654 = vmatpush1.msra.mxu0 0.0
    %655 = vmatprep.subr.mxu0 0.0
    %656 = vmatpush1.msra.mxu0 0.0
    %657 = vmatprep.subr.mxu0 0.0
    %658 = vmatpush1.msra.mxu0 0.0
    %659 = vmatprep.subr.mxu0 0.0
    %660 = vmatpush1.msra.mxu0 0.0
    %661 = vmatprep.subr.mxu0 0.0
    %662 = vmatpush1.msra.mxu0 0.0
    %663 = vmatprep.subr.mxu0 0.0
    %664 = vmatpush1.msra.mxu0 0.0
    %665 = vmatprep.subr.mxu0 0.0
    %666 = vmatpush1.msra.mxu0 0.0
    %667 = vmatprep.subr.mxu0 0.0
    %668 = vmatpush1.msra.mxu0 0.0
    %669 = vmatprep.subr.mxu0 0.0
    %670 = vmatpush1.msra.mxu0 0.0
    %671 = vmatprep.subr.mxu0 0.0
    %672 = vmatpush1.msra.mxu0 0.0
    %673 = vmatprep.subr.mxu0 0.0
    %674 = vmatpush1.msra.mxu0 0.0
    %675 = vmatprep.subr.mxu0 0.0
    %676 = vmatpush1.msra.mxu0 0.0
    %677 = vmatprep.subr.mxu0 0.0
    %678 = vmatpush1.msra.mxu0 0.0
    %679 = vmatprep.subr.mxu0 0.0
    %680 = vmatpush1.msra.mxu0 0.0
    %681 = vmatprep.subr.mxu0 0.0
    %682 = vmatpush1.msra.mxu0 0.0
    %683 = vmatprep.subr.mxu0 0.0
    %684 = vmatpush1.msra.mxu0 0.0
    %685 = vmatprep.subr.mxu0 0.0
    %686 = vmatpush1.msra.mxu0 0.0
    %687 = vmatprep.subr.mxu0 0.0
    %688 = vmatpush1.msra.mxu0 0.0
    %689 = vmatprep.subr.mxu0 0.0
    %690 = vmatpush1.msra.mxu0 0.0
    %691 = vmatprep.subr.mxu0 0.0
    %692 = vmatpush1.msra.mxu0 0.0
    %693 = vmatprep.subr.mxu0 0.0
    %694 = vmatpush1.msra.mxu0 0.0
    %695 = vmatprep.subr.mxu0 0.0
    %696 = vmatpush1.msra.mxu0 0.0
    %697 = vmatprep.subr.mxu0 0.0
    %698 = vmatpush1.msra.mxu0 0.0
    %699 = vmatprep.subr.mxu0 0.0
    %700 = vmatpush1.msra.mxu0 0.0
    %701 = vmatprep.subr.mxu0 0.0
    %702 = vmatpush1.msra.mxu0 0.0
    %703 = vmatprep.mubr.f32.mxu0 0.0
    %704 = vmatmul.mubr.f32.gmra.mrb[0].mxu0 %v632
    %v705 = vpop.f32.mrb[0].mxu0
    %v706 = vadd.f32 0.0, %v705
    %v707 = vpop.f32.mrb[0].mxu0
    %708 = vmatprep.mubr.f32.mxu0 0.0
    %709 = vmatmul.mubr.f32.gmra.mrb[0].mxu0 %v635
    %v710 = vpop.f32.mrb[0].mxu0
    %v711 = vadd.f32 0.0, %v710
    %v712 = vpop.f32.mrb[0].mxu0
    %713 = vdwg.mxu0
    %v714 = vadd.f32 %v611, %v706
    %v715 = vadd.f32 %v612, %v711
    %vm720 = vcmask 1043456
    %v721 = vrot.slane %v166, 4
    %v722 = vrot.slane %v167, 4
    %v723 = vsel %vm720, %v721, %v722
    %v724 = vrot.slane %v168, 4
    %v725 = vsel %vm720, %v722, %v724
    %v726 = vrot.slane %v169, 4
    %v727 = vsel %vm720, %v724, %v726
    %v728 = vrot.slane %v170, 4
    %v729 = vsel %vm720, %v726, %v728
    %v735 = vsel %vm319, %v309, 0
    %v738 = vsel %vm319, %v314, 0
    %v740 = vsel %vm326, %v728, 0
    %742 = vmatprep.subr.mxu0 0.0
    %743 = vmatpush1.msra.mxu0 %v723
    %744 = vmatprep.subr.mxu0 0.0
    %745 = vmatpush1.msra.mxu0 %v725
    %746 = vmatprep.subr.mxu0 0.0
    %747 = vmatpush1.msra.mxu0 %v727
    %748 = vmatprep.subr.mxu0 0.0
    %749 = vmatpush1.msra.mxu0 %v729
    %750 = vmatprep.subr.mxu0 0.0
    %751 = vmatpush1.msra.mxu0 %v740
    %752 = vmatprep.subr.mxu0 0.0
    %753 = vmatpush1.msra.mxu0 0.0
    %754 = vmatprep.subr.mxu0 0.0
    %755 = vmatpush1.msra.mxu0 0.0
    %756 = vmatprep.subr.mxu0 0.0
    %757 = vmatpush1.msra.mxu0 0.0
    %758 = vmatprep.subr.mxu0 0.0
    %759 = vmatpush1.msra.mxu0 0.0
    %760 = vmatprep.subr.mxu0 0.0
    %761 = vmatpush1.msra.mxu0 0.0
    %762 = vmatprep.subr.mxu0 0.0
    %763 = vmatpush1.msra.mxu0 0.0
    %764 = vmatprep.subr.mxu0 0.0
    %765 = vmatpush1.msra.mxu0 0.0
    %766 = vmatprep.subr.mxu0 0.0
    %767 = vmatpush1.msra.mxu0 0.0
    %768 = vmatprep.subr.mxu0 0.0
    %769 = vmatpush1.msra.mxu0 0.0
    %770 = vmatprep.subr.mxu0 0.0
    %771 = vmatpush1.msra.mxu0 0.0
    %772 = vmatprep.subr.mxu0 0.0
    %773 = vmatpush1.msra.mxu0 0.0
    %774 = vmatprep.subr.mxu0 0.0
    %775 = vmatpush1.msra.mxu0 0.0
    %776 = vmatprep.subr.mxu0 0.0
    %777 = vmatpush1.msra.mxu0 0.0
    %778 = vmatprep.subr.mxu0 0.0
    %779 = vmatpush1.msra.mxu0 0.0
    %780 = vmatprep.subr.mxu0 0.0
    %781 = vmatpush1.msra.mxu0 0.0
    %782 = vmatprep.subr.mxu0 0.0
    %783 = vmatpush1.msra.mxu0 0.0
    %784 = vmatprep.subr.mxu0 0.0
    %785 = vmatpush1.msra.mxu0 0.0
    %786 = vmatprep.subr.mxu0 0.0
    %787 = vmatpush1.msra.mxu0 0.0
    %788 = vmatprep.subr.mxu0 0.0
    %789 = vmatpush1.msra.mxu0 0.0
    %790 = vmatprep.subr.mxu0 0.0
    %791 = vmatpush1.msra.mxu0 0.0
    %792 = vmatprep.subr.mxu0 0.0
    %793 = vmatpush1.msra.mxu0 0.0
    %794 = vmatprep.subr.mxu0 0.0
    %795 = vmatpush1.msra.mxu0 0.0
    %796 = vmatprep.subr.mxu0 0.0
    %797 = vmatpush1.msra.mxu0 0.0
    %798 = vmatprep.subr.mxu0 0.0
    %799 = vmatpush1.msra.mxu0 0.0
    %800 = vmatprep.subr.mxu0 0.0
    %801 = vmatpush1.msra.mxu0 0.0
    %802 = vmatprep.subr.mxu0 0.0
    %803 = vmatpush1.msra.mxu0 0.0
    %804 = vmatprep.subr.mxu0 0.0
    %805 = vmatpush1.msra.mxu0 0.0
    %806 = vmatprep.mubr.f32.mxu0 0.0
    %807 = vmatmul.mubr.f32.gmra.mrb[0].mxu0 %v735
    %v808 = vpop.f32.mrb[0].mxu0
    %v809 = vadd.f32 0.0, %v808
    %v810 = vpop.f32.mrb[0].mxu0
    %811 = vmatprep.mubr.f32.mxu0 0.0
    %812 = vmatmul.mubr.f32.gmra.mrb[0].mxu0 %v738
    %v813 = vpop.f32.mrb[0].mxu0
    %v814 = vadd.f32 0.0, %v813
    %v815 = vpop.f32.mrb[0].mxu0
    %816 = vdwg.mxu0
    %v817 = vadd.f32 %v714, %v809
    %v818 = vadd.f32 %v715, %v814
    %819 = vmatprep.subr.mxu0 0.0
    %820 = vmatpush1.msra.mxu0 %v137
    %821 = vmatprep.subr.mxu0 0.0
    %822 = vmatpush1.msra.mxu0 %v139
    %823 = vmatprep.subr.mxu0 0.0
    %824 = vmatpush1.msra.mxu0 0.0
    %825 = vmatprep.subr.mxu0 0.0
    %826 = vmatpush1.msra.mxu0 0.0
    %827 = vmatprep.subr.mxu0 0.0
    %828 = vmatpush1.msra.mxu0 0.0
    %829 = vmatprep.subr.mxu0 0.0
    %830 = vmatpush1.msra.mxu0 0.0
    %831 = vmatprep.subr.mxu0 0.0
    %832 = vmatpush1.msra.mxu0 0.0
    %833 = vmatprep.subr.mxu0 0.0
    %834 = vmatpush1.msra.mxu0 0.0
    %835 = vmatprep.subr.mxu0 0.0
    %836 = vmatpush1.msra.mxu0 0.0
    %837 = vmatprep.subr.mxu0 0.0
    %838 = vmatpush1.msra.mxu0 0.0
    %839 = vmatprep.subr.mxu0 0.0
    %840 = vmatpush1.msra.mxu0 0.0
    %841 = vmatprep.subr.mxu0 0.0
    %842 = vmatpush1.msra.mxu0 0.0
    %843 = vmatprep.subr.mxu0 0.0
    %844 = vmatpush1.msra.mxu0 0.0
    %845 = vmatprep.subr.mxu0 0.0
    %846 = vmatpush1.msra.mxu0 0.0
    %847 = vmatprep.subr.mxu0 0.0
    %848 = vmatpush1.msra.mxu0 0.0
    %849 = vmatprep.subr.mxu0 0.0
    %850 = vmatpush1.msra.mxu0 0.0
    %851 = vmatprep.subr.mxu0 0.0
    %852 = vmatpush1.msra.mxu0 0.0
    %853 = vmatprep.subr.mxu0 0.0
    %854 = vmatpush1.msra.mxu0 0.0
    %855 = vmatprep.subr.mxu0 0.0
    %856 = vmatpush1.msra.mxu0 0.0
    %857 = vmatprep.subr.mxu0 0.0
    %858 = vmatpush1.msra.mxu0 0.0
    %859 = vmatprep.subr.mxu0 0.0
    %860 = vmatpush1.msra.mxu0 0.0
    %861 = vmatprep.subr.mxu0 0.0
    %862 = vmatpush1.msra.mxu0 0.0
    %863 = vmatprep.subr.mxu0 0.0
    %864 = vmatpush1.msra.mxu0 0.0
    %865 = vmatprep.subr.mxu0 0.0
    %866 = vmatpush1.msra.mxu0 0.0
    %867 = vmatprep.subr.mxu0 0.0
    %868 = vmatpush1.msra.mxu0 0.0
    %869 = vmatprep.subr.mxu0 0.0
    %870 = vmatpush1.msra.mxu0 0.0
    %871 = vmatprep.subr.mxu0 0.0
    %872 = vmatpush1.msra.mxu0 0.0
    %873 = vmatprep.subr.mxu0 0.0
    %874 = vmatpush1.msra.mxu0 0.0
    %875 = vmatprep.subr.mxu0 0.0
    %876 = vmatpush1.msra.mxu0 0.0
    %877 = vmatprep.subr.mxu0 0.0
    %878 = vmatpush1.msra.mxu0 0.0
    %879 = vmatprep.subr.mxu0 0.0
    %880 = vmatpush1.msra.mxu0 0.0
    %881 = vmatprep.subr.mxu0 0.0
    %882 = vmatpush1.msra.mxu0 0.0
    %883 = vmatprep.mubr.f32.mxu0 0.0
    %884 = vmatmul.mubr.f32.gmra.mrb[0].mxu0 %v173
    %v885 = vpop.f32.mrb[0].mxu0
    %v886 = vadd.f32 0.0, %v885
    %v887 = vpop.f32.mrb[0].mxu0
    %888 = vmatprep.mubr.f32.mxu0 0.0
    %889 = vmatmul.mubr.f32.gmra.mrb[0].mxu0 %v176
    %v890 = vpop.f32.mrb[0].mxu0
    %v891 = vadd.f32 0.0, %v890
    %v892 = vpop.f32.mrb[0].mxu0
    %893 = vmatprep.mubr.f32.mxu0 0.0
    %894 = vmatmul.mubr.f32.gmra.mrb[0].mxu0 %v179
    %v895 = vpop.f32.mrb[0].mxu0
    %v896 = vadd.f32 0.0, %v895
    %v897 = vpop.f32.mrb[0].mxu0
    %898 = vmatprep.mubr.f32.mxu0 0.0
    %899 = vmatmul.mubr.f32.gmra.mrb[0].mxu0 %v182
    %v900 = vpop.f32.mrb[0].mxu0
    %v901 = vadd.f32 0.0, %v900
    %v902 = vpop.f32.mrb[0].mxu0
    %903 = vmatprep.mubr.f32.mxu0 0.0
    %904 = vmatmul.mubr.f32.gmra.mrb[0].mxu0 %v185
    %v905 = vpop.f32.mrb[0].mxu0
    %v906 = vadd.f32 0.0, %v905
    %v907 = vpop.f32.mrb[0].mxu0
    %908 = vmatprep.mubr.f32.mxu0 0.0
    %909 = vmatmul.mubr.f32.gmra.mrb[0].mxu0 %v188
    %v910 = vpop.f32.mrb[0].mxu0
    %v911 = vadd.f32 0.0, %v910
    %v912 = vpop.f32.mrb[0].mxu0
    %913 = vmatprep.mubr.f32.mxu0 0.0
    %914 = vmatmul.mubr.f32.gmra.mrb[0].mxu0 %v191
    %v915 = vpop.f32.mrb[0].mxu0
    %v916 = vadd.f32 0.0, %v915
    %v917 = vpop.f32.mrb[0].mxu0
    %918 = vmatprep.mubr.f32.mxu0 0.0
    %919 = vmatmul.mubr.f32.gmra.mrb[0].mxu0 %v194
    %v920 = vpop.f32.mrb[0].mxu0
    %v921 = vadd.f32 0.0, %v920
    %v922 = vpop.f32.mrb[0].mxu0
    %923 = vmatprep.mubr.f32.mxu0 0.0
    %924 = vmatmul.mubr.f32.gmra.mrb[0].mxu0 %v197
    %v925 = vpop.f32.mrb[0].mxu0
    %v926 = vadd.f32 0.0, %v925
    %v927 = vpop.f32.mrb[0].mxu0
    %928 = vmatprep.mubr.f32.mxu0 0.0
    %929 = vmatmul.mubr.f32.gmra.mrb[0].mxu0 %v200
    %v930 = vpop.f32.mrb[0].mxu0
    %v931 = vadd.f32 0.0, %v930
    %v932 = vpop.f32.mrb[0].mxu0
    %933 = vdwg.mxu0
    %v934 = vld [vmem:[%s9 + $0x10] sm:$0xff]
    %v935 = vld [vmem:[%s9 + $0x18] sm:$0xff]
    %v937 = vsel %vm319, %v886, 0
    %v940 = vsel %vm319, %v891, 0
    %942 = vmatprep.subr.mxu0 0.0
    %943 = vmatpush1.msra.mxu0 %v150
    %944 = vmatprep.subr.mxu0 0.0
    %945 = vmatpush1.msra.mxu0 %v151
    %946 = vmatprep.subr.mxu0 0.0
    %947 = vmatpush1.msra.mxu0 %v152
    %948 = vmatprep.subr.mxu0 0.0
    %949 = vmatpush1.msra.mxu0 %v153
    %950 = vmatprep.subr.mxu0 0.0
    %951 = vmatpush1.msra.mxu0 %v328
    %952 = vmatprep.subr.mxu0 0.0
    %953 = vmatpush1.msra.mxu0 0.0
    %954 = vmatprep.subr.mxu0 0.0
    %955 = vmatpush1.msra.mxu0 0.0
    %956 = vmatprep.subr.mxu0 0.0
    %957 = vmatpush1.msra.mxu0 0.0
    %958 = vmatprep.subr.mxu0 0.0
    %959 = vmatpush1.msra.mxu0 0.0
    %960 = vmatprep.subr.mxu0 0.0
    %961 = vmatpush1.msra.mxu0 0.0
    %962 = vmatprep.subr.mxu0 0.0
    %963 = vmatpush1.msra.mxu0 0.0
    %964 = vmatprep.subr.mxu0 0.0
    %965 = vmatpush1.msra.mxu0 0.0
    %966 = vmatprep.subr.mxu0 0.0
    %967 = vmatpush1.msra.mxu0 0.0
    %968 = vmatprep.subr.mxu0 0.0
    %969 = vmatpush1.msra.mxu0 0.0
    %970 = vmatprep.subr.mxu0 0.0
    %971 = vmatpush1.msra.mxu0 0.0
    %972 = vmatprep.subr.mxu0 0.0
    %973 = vmatpush1.msra.mxu0 0.0
    %974 = vmatprep.subr.mxu0 0.0
    %975 = vmatpush1.msra.mxu0 0.0
    %976 = vmatprep.subr.mxu0 0.0
    %977 = vmatpush1.msra.mxu0 0.0
    %978 = vmatprep.subr.mxu0 0.0
    %979 = vmatpush1.msra.mxu0 0.0
    %980 = vmatprep.subr.mxu0 0.0
    %981 = vmatpush1.msra.mxu0 0.0
    %982 = vmatprep.subr.mxu0 0.0
    %983 = vmatpush1.msra.mxu0 0.0
    %984 = vmatprep.subr.mxu0 0.0
    %985 = vmatpush1.msra.mxu0 0.0
    %986 = vmatprep.subr.mxu0 0.0
    %987 = vmatpush1.msra.mxu0 0.0
    %988 = vmatprep.subr.mxu0 0.0
    %989 = vmatpush1.msra.mxu0 0.0
    %990 = vmatprep.subr.mxu0 0.0
    %991 = vmatpush1.msra.mxu0 0.0
    %992 = vmatprep.subr.mxu0 0.0
    %993 = vmatpush1.msra.mxu0 0.0
    %994 = vmatprep.subr.mxu0 0.0
    %995 = vmatpush1.msra.mxu0 0.0
    %996 = vmatprep.subr.mxu0 0.0
    %997 = vmatpush1.msra.mxu0 0.0
    %998 = vmatprep.subr.mxu0 0.0
    %999 = vmatpush1.msra.mxu0 0.0
    %1000 = vmatprep.subr.mxu0 0.0
    %1001 = vmatpush1.msra.mxu0 0.0
    %1002 = vmatprep.subr.mxu0 0.0
    %1003 = vmatpush1.msra.mxu0 0.0
    %1004 = vmatprep.subr.mxu0 0.0
    %1005 = vmatpush1.msra.mxu0 0.0
    %1006 = vmatprep.mubr.f32.mxu0 0.0
    %1007 = vmatmul.mubr.f32.gmra.mrb[0].mxu0 %v937
    %v1008 = vpop.f32.mrb[0].mxu0
    %v1009 = vadd.f32 0.0, %v1008
    %v1010 = vpop.f32.mrb[0].mxu0
    %1011 = vmatprep.mubr.f32.mxu0 0.0
    %1012 = vmatmul.mubr.f32.gmra.mrb[0].mxu0 %v940
    %v1013 = vpop.f32.mrb[0].mxu0
    %v1014 = vadd.f32 0.0, %v1013
    %v1015 = vpop.f32.mrb[0].mxu0
    %1016 = vdwg.mxu0
    %v1017 = vadd.f32 %v934, %v1009
    %v1018 = vadd.f32 %v935, %v1014
    %v1020 = vsel %vm319, %v896, 0
    %v1023 = vsel %vm319, %v901, 0
    %1025 = vmatprep.subr.mxu0 0.0
    %1026 = vmatpush1.msra.mxu0 %v414
    %1027 = vmatprep.subr.mxu0 0.0
    %1028 = vmatpush1.msra.mxu0 %v416
    %1029 = vmatprep.subr.mxu0 0.0
    %1030 = vmatpush1.msra.mxu0 %v418
    %1031 = vmatprep.subr.mxu0 0.0
    %1032 = vmatpush1.msra.mxu0 %v420
    %1033 = vmatprep.subr.mxu0 0.0
    %1034 = vmatpush1.msra.mxu0 %v431
    %1035 = vmatprep.subr.mxu0 0.0
    %1036 = vmatpush1.msra.mxu0 0.0
    %1037 = vmatprep.subr.mxu0 0.0
    %1038 = vmatpush1.msra.mxu0 0.0
    %1039 = vmatprep.subr.mxu0 0.0
    %1040 = vmatpush1.msra.mxu0 0.0
    %1041 = vmatprep.subr.mxu0 0.0
    %1042 = vmatpush1.msra.mxu0 0.0
    %1043 = vmatprep.subr.mxu0 0.0
    %1044 = vmatpush1.msra.mxu0 0.0
    %1045 = vmatprep.subr.mxu0 0.0
    %1046 = vmatpush1.msra.mxu0 0.0
    %1047 = vmatprep.subr.mxu0 0.0
    %1048 = vmatpush1.msra.mxu0 0.0
    %1049 = vmatprep.subr.mxu0 0.0
    %1050 = vmatpush1.msra.mxu0 0.0
    %1051 = vmatprep.subr.mxu0 0.0
    %1052 = vmatpush1.msra.mxu0 0.0
    %1053 = vmatprep.subr.mxu0 0.0
    %1054 = vmatpush1.msra.mxu0 0.0
    %1055 = vmatprep.subr.mxu0 0.0
    %1056 = vmatpush1.msra.mxu0 0.0
    %1057 = vmatprep.subr.mxu0 0.0
    %1058 = vmatpush1.msra.mxu0 0.0
    %1059 = vmatprep.subr.mxu0 0.0
    %1060 = vmatpush1.msra.mxu0 0.0
    %1061 = vmatprep.subr.mxu0 0.0
    %1062 = vmatpush1.msra.mxu0 0.0
    %1063 = vmatprep.subr.mxu0 0.0
    %1064 = vmatpush1.msra.mxu0 0.0
    %1065 = vmatprep.subr.mxu0 0.0
    %1066 = vmatpush1.msra.mxu0 0.0
    %1067 = vmatprep.subr.mxu0 0.0
    %1068 = vmatpush1.msra.mxu0 0.0
    %1069 = vmatprep.subr.mxu0 0.0
    %1070 = vmatpush1.msra.mxu0 0.0
    %1071 = vmatprep.subr.mxu0 0.0
    %1072 = vmatpush1.msra.mxu0 0.0
    %1073 = vmatprep.subr.mxu0 0.0
    %1074 = vmatpush1.msra.mxu0 0.0
    %1075 = vmatprep.subr.mxu0 0.0
    %1076 = vmatpush1.msra.mxu0 0.0
    %1077 = vmatprep.subr.mxu0 0.0
    %1078 = vmatpush1.msra.mxu0 0.0
    %1079 = vmatprep.subr.mxu0 0.0
    %1080 = vmatpush1.msra.mxu0 0.0
    %1081 = vmatprep.subr.mxu0 0.0
    %1082 = vmatpush1.msra.mxu0 0.0
    %1083 = vmatprep.subr.mxu0 0.0
    %1084 = vmatpush1.msra.mxu0 0.0
    %1085 = vmatprep.subr.mxu0 0.0
    %1086 = vmatpush1.msra.mxu0 0.0
    %1087 = vmatprep.subr.mxu0 0.0
    %1088 = vmatpush1.msra.mxu0 0.0
    %1089 = vmatprep.mubr.f32.mxu0 0.0
    %1090 = vmatmul.mubr.f32.gmra.mrb[0].mxu0 %v1020
    %v1091 = vpop.f32.mrb[0].mxu0
    %v1092 = vadd.f32 0.0, %v1091
    %v1093 = vpop.f32.mrb[0].mxu0
    %1094 = vmatprep.mubr.f32.mxu0 0.0
    %1095 = vmatmul.mubr.f32.gmra.mrb[0].mxu0 %v1023
    %v1096 = vpop.f32.mrb[0].mxu0
    %v1097 = vadd.f32 0.0, %v1096
    %v1098 = vpop.f32.mrb[0].mxu0
    %1099 = vdwg.mxu0
    %v1100 = vadd.f32 %v1017, %v1092
    %v1101 = vadd.f32 %v1018, %v1097
    %v1103 = vsel %vm319, %v906, 0
    %v1106 = vsel %vm319, %v911, 0
    %1108 = vmatprep.subr.mxu0 0.0
    %1109 = vmatpush1.msra.mxu0 %v517
    %1110 = vmatprep.subr.mxu0 0.0
    %1111 = vmatpush1.msra.mxu0 %v519
    %1112 = vmatprep.subr.mxu0 0.0
    %1113 = vmatpush1.msra.mxu0 %v521
    %1114 = vmatprep.subr.mxu0 0.0
    %1115 = vmatpush1.msra.mxu0 %v523
    %1116 = vmatprep.subr.mxu0 0.0
    %1117 = vmatpush1.msra.mxu0 %v534
    %1118 = vmatprep.subr.mxu0 0.0
    %1119 = vmatpush1.msra.mxu0 0.0
    %1120 = vmatprep.subr.mxu0 0.0
    %1121 = vmatpush1.msra.mxu0 0.0
    %1122 = vmatprep.subr.mxu0 0.0
    %1123 = vmatpush1.msra.mxu0 0.0
    %1124 = vmatprep.subr.mxu0 0.0
    %1125 = vmatpush1.msra.mxu0 0.0
    %1126 = vmatprep.subr.mxu0 0.0
    %1127 = vmatpush1.msra.mxu0 0.0
    %1128 = vmatprep.subr.mxu0 0.0
    %1129 = vmatpush1.msra.mxu0 0.0
    %1130 = vmatprep.subr.mxu0 0.0
    %1131 = vmatpush1.msra.mxu0 0.0
    %1132 = vmatprep.subr.mxu0 0.0
    %1133 = vmatpush1.msra.mxu0 0.0
    %1134 = vmatprep.subr.mxu0 0.0
    %1135 = vmatpush1.msra.mxu0 0.0
    %1136 = vmatprep.subr.mxu0 0.0
    %1137 = vmatpush1.msra.mxu0 0.0
    %1138 = vmatprep.subr.mxu0 0.0
    %1139 = vmatpush1.msra.mxu0 0.0
    %1140 = vmatprep.subr.mxu0 0.0
    %1141 = vmatpush1.msra.mxu0 0.0
    %1142 = vmatprep.subr.mxu0 0.0
    %1143 = vmatpush1.msra.mxu0 0.0
    %1144 = vmatprep.subr.mxu0 0.0
    %1145 = vmatpush1.msra.mxu0 0.0
    %1146 = vmatprep.subr.mxu0 0.0
    %1147 = vmatpush1.msra.mxu0 0.0
    %1148 = vmatprep.subr.mxu0 0.0
    %1149 = vmatpush1.msra.mxu0 0.0
    %1150 = vmatprep.subr.mxu0 0.0
    %1151 = vmatpush1.msra.mxu0 0.0
    %1152 = vmatprep.subr.mxu0 0.0
    %1153 = vmatpush1.msra.mxu0 0.0
    %1154 = vmatprep.subr.mxu0 0.0
    %1155 = vmatpush1.msra.mxu0 0.0
    %1156 = vmatprep.subr.mxu0 0.0
    %1157 = vmatpush1.msra.mxu0 0.0
    %1158 = vmatprep.subr.mxu0 0.0
    %1159 = vmatpush1.msra.mxu0 0.0
    %1160 = vmatprep.subr.mxu0 0.0
    %1161 = vmatpush1.msra.mxu0 0.0
    %1162 = vmatprep.subr.mxu0 0.0
    %1163 = vmatpush1.msra.mxu0 0.0
    %1164 = vmatprep.subr.mxu0 0.0
    %1165 = vmatpush1.msra.mxu0 0.0
    %1166 = vmatprep.subr.mxu0 0.0
    %1167 = vmatpush1.msra.mxu0 0.0
    %1168 = vmatprep.subr.mxu0 0.0
    %1169 = vmatpush1.msra.mxu0 0.0
    %1170 = vmatprep.subr.mxu0 0.0
    %1171 = vmatpush1.msra.mxu0 0.0
    %1172 = vmatprep.mubr.f32.mxu0 0.0
    %1173 = vmatmul.mubr.f32.gmra.mrb[0].mxu0 %v1103
    %v1174 = vpop.f32.mrb[0].mxu0
    %v1175 = vadd.f32 0.0, %v1174
    %v1176 = vpop.f32.mrb[0].mxu0
    %1177 = vmatprep.mubr.f32.mxu0 0.0
    %1178 = vmatmul.mubr.f32.gmra.mrb[0].mxu0 %v1106
    %v1179 = vpop.f32.mrb[0].mxu0
    %v1180 = vadd.f32 0.0, %v1179
    %v1181 = vpop.f32.mrb[0].mxu0
    %1182 = vdwg.mxu0
    %v1183 = vadd.f32 %v1100, %v1175
    %v1184 = vadd.f32 %v1101, %v1180
    %v1186 = vsel %vm319, %v916, 0
    %v1189 = vsel %vm319, %v921, 0
    %1191 = vmatprep.subr.mxu0 0.0
    %1192 = vmatpush1.msra.mxu0 %v620
    %1193 = vmatprep.subr.mxu0 0.0
    %1194 = vmatpush1.msra.mxu0 %v622
    %1195 = vmatprep.subr.mxu0 0.0
    %1196 = vmatpush1.msra.mxu0 %v624
    %1197 = vmatprep.subr.mxu0 0.0
    %1198 = vmatpush1.msra.mxu0 %v626
    %1199 = vmatprep.subr.mxu0 0.0
    %1200 = vmatpush1.msra.mxu0 %v637
    %1201 = vmatprep.subr.mxu0 0.0
    %1202 = vmatpush1.msra.mxu0 0.0
    %1203 = vmatprep.subr.mxu0 0.0
    %1204 = vmatpush1.msra.mxu0 0.0
    %1205 = vmatprep.subr.mxu0 0.0
    %1206 = vmatpush1.msra.mxu0 0.0
    %1207 = vmatprep.subr.mxu0 0.0
    %1208 = vmatpush1.msra.mxu0 0.0
    %1209 = vmatprep.subr.mxu0 0.0
    %1210 = vmatpush1.msra.mxu0 0.0
    %1211 = vmatprep.subr.mxu0 0.0
    %1212 = vmatpush1.msra.mxu0 0.0
    %1213 = vmatprep.subr.mxu0 0.0
    %1214 = vmatpush1.msra.mxu0 0.0
    %1215 = vmatprep.subr.mxu0 0.0
    %1216 = vmatpush1.msra.mxu0 0.0
    %1217 = vmatprep.subr.mxu0 0.0
    %1218 = vmatpush1.msra.mxu0 0.0
    %1219 = vmatprep.subr.mxu0 0.0
    %1220 = vmatpush1.msra.mxu0 0.0
    %1221 = vmatprep.subr.mxu0 0.0
    %1222 = vmatpush1.msra.mxu0 0.0
    %1223 = vmatprep.subr.mxu0 0.0
    %1224 = vmatpush1.msra.mxu0 0.0
    %1225 = vmatprep.subr.mxu0 0.0
    %1226 = vmatpush1.msra.mxu0 0.0
    %1227 = vmatprep.subr.mxu0 0.0
    %1228 = vmatpush1.msra.mxu0 0.0
    %1229 = vmatprep.subr.mxu0 0.0
    %1230 = vmatpush1.msra.mxu0 0.0
    %1231 = vmatprep.subr.mxu0 0.0
    %1232 = vmatpush1.msra.mxu0 0.0
    %1233 = vmatprep.subr.mxu0 0.0
    %1234 = vmatpush1.msra.mxu0 0.0
    %1235 = vmatprep.subr.mxu0 0.0
    %1236 = vmatpush1.msra.mxu0 0.0
    %1237 = vmatprep.subr.mxu0 0.0
    %1238 = vmatpush1.msra.mxu0 0.0
    %1239 = vmatprep.subr.mxu0 0.0
    %1240 = vmatpush1.msra.mxu0 0.0
    %1241 = vmatprep.subr.mxu0 0.0
    %1242 = vmatpush1.msra.mxu0 0.0
    %1243 = vmatprep.subr.mxu0 0.0
    %1244 = vmatpush1.msra.mxu0 0.0
    %1245 = vmatprep.subr.mxu0 0.0
    %1246 = vmatpush1.msra.mxu0 0.0
    %1247 = vmatprep.subr.mxu0 0.0
    %1248 = vmatpush1.msra.mxu0 0.0
    %1249 = vmatprep.subr.mxu0 0.0
    %1250 = vmatpush1.msra.mxu0 0.0
    %1251 = vmatprep.subr.mxu0 0.0
    %1252 = vmatpush1.msra.mxu0 0.0
    %1253 = vmatprep.subr.mxu0 0.0
    %1254 = vmatpush1.msra.mxu0 0.0
    %1255 = vmatprep.mubr.f32.mxu0 0.0
    %1256 = vmatmul.mubr.f32.gmra.mrb[0].mxu0 %v1186
    %v1257 = vpop.f32.mrb[0].mxu0
    %v1258 = vadd.f32 0.0, %v1257
    %v1259 = vpop.f32.mrb[0].mxu0
    %1260 = vmatprep.mubr.f32.mxu0 0.0
    %1261 = vmatmul.mubr.f32.gmra.mrb[0].mxu0 %v1189
    %v1262 = vpop.f32.mrb[0].mxu0
    %v1263 = vadd.f32 0.0, %v1262
    %v1264 = vpop.f32.mrb[0].mxu0
    %1265 = vdwg.mxu0
    %v1266 = vadd.f32 %v1183, %v1258
    %v1267 = vadd.f32 %v1184, %v1263
    %v1269 = vsel %vm319, %v926, 0
    %v1272 = vsel %vm319, %v931, 0
    %1274 = vmatprep.subr.mxu0 0.0
    %1275 = vmatpush1.msra.mxu0 %v723
    %1276 = vmatprep.subr.mxu0 0.0
    %1277 = vmatpush1.msra.mxu0 %v725
    %1278 = vmatprep.subr.mxu0 0.0
    %1279 = vmatpush1.msra.mxu0 %v727
    %1280 = vmatprep.subr.mxu0 0.0
    %1281 = vmatpush1.msra.mxu0 %v729
    %1282 = vmatprep.subr.mxu0 0.0
    %1283 = vmatpush1.msra.mxu0 %v740
    %1284 = vmatprep.subr.mxu0 0.0
    %1285 = vmatpush1.msra.mxu0 0.0
    %1286 = vmatprep.subr.mxu0 0.0
    %1287 = vmatpush1.msra.mxu0 0.0
    %1288 = vmatprep.subr.mxu0 0.0
    %1289 = vmatpush1.msra.mxu0 0.0
    %1290 = vmatprep.subr.mxu0 0.0
    %1291 = vmatpush1.msra.mxu0 0.0
    %1292 = vmatprep.subr.mxu0 0.0
    %1293 = vmatpush1.msra.mxu0 0.0
    %1294 = vmatprep.subr.mxu0 0.0
    %1295 = vmatpush1.msra.mxu0 0.0
    %1296 = vmatprep.subr.mxu0 0.0
    %1297 = vmatpush1.msra.mxu0 0.0
    %1298 = vmatprep.subr.mxu0 0.0
    %1299 = vmatpush1.msra.mxu0 0.0
    %1300 = vmatprep.subr.mxu0 0.0
    %1301 = vmatpush1.msra.mxu0 0.0
    %1302 = vmatprep.subr.mxu0 0.0
    %1303 = vmatpush1.msra.mxu0 0.0
    %1304 = vmatprep.subr.mxu0 0.0
    %1305 = vmatpush1.msra.mxu0 0.0
    %1306 = vmatprep.subr.mxu0 0.0
    %1307 = vmatpush1.msra.mxu0 0.0
    %1308 = vmatprep.subr.mxu0 0.0
    %1309 = vmatpush1.msra.mxu0 0.0
    %1310 = vmatprep.subr.mxu0 0.0
    %1311 = vmatpush1.msra.mxu0 0.0
    %1312 = vmatprep.subr.mxu0 0.0
    %1313 = vmatpush1.msra.mxu0 0.0
    %1314 = vmatprep.subr.mxu0 0.0
    %1315 = vmatpush1.msra.mxu0 0.0
    %1316 = vmatprep.subr.mxu0 0.0
    %1317 = vmatpush1.msra.mxu0 0.0
    %1318 = vmatprep.subr.mxu0 0.0
    %1319 = vmatpush1.msra.mxu0 0.0
    %1320 = vmatprep.subr.mxu0 0.0
    %1321 = vmatpush1.msra.mxu0 0.0
    %1322 = vmatprep.subr.mxu0 0.0
    %1323 = vmatpush1.msra.mxu0 0.0
    %1324 = vmatprep.subr.mxu0 0.0
    %1325 = vmatpush1.msra.mxu0 0.0
    %1326 = vmatprep.subr.mxu0 0.0
    %1327 = vmatpush1.msra.mxu0 0.0
    %1328 = vmatprep.subr.mxu0 0.0
    %1329 = vmatpush1.msra.mxu0 0.0
    %1330 = vmatprep.subr.mxu0 0.0
    %1331 = vmatpush1.msra.mxu0 0.0
    %1332 = vmatprep.subr.mxu0 0.0
    %1333 = vmatpush1.msra.mxu0 0.0
    %1334 = vmatprep.subr.mxu0 0.0
    %1335 = vmatpush1.msra.mxu0 0.0
    %1336 = vmatprep.subr.mxu0 0.0
    %1337 = vmatpush1.msra.mxu0 0.0
    %1338 = vmatprep.mubr.f32.mxu0 0.0
    %1339 = vmatmul.mubr.f32.gmra.mrb[0].mxu0 %v1269
    %v1340 = vpop.f32.mrb[0].mxu0
    %v1341 = vadd.f32 0.0, %v1340
    %v1342 = vpop.f32.mrb[0].mxu0
    %1343 = vmatprep.mubr.f32.mxu0 0.0
    %1344 = vmatmul.mubr.f32.gmra.mrb[0].mxu0 %v1272
    %v1345 = vpop.f32.mrb[0].mxu0
    %v1346 = vadd.f32 0.0, %v1345
    %v1347 = vpop.f32.mrb[0].mxu0
    %1348 = vdwg.mxu0
    %v1349 = vadd.f32 %v1266, %v1341
    %v1350 = vadd.f32 %v1267, %v1346
    %vm1351 = vcmask 261120
    %v1352 = vsel %vm1351, %v817, 0.0
    %v1353 = vsel %vm1351, %v818, 0.0
    %v1354 = vadd.f32 %v1352, %v1353
    %v1355 = vrot.slane %v1354, 4
    %v1356 = vadd.f32 %v1354, %v1355
    %v1357 = vrot.slane %v1356, 2
    %v1358 = vadd.f32 %v1356, %v1357
    %v1359 = vrot.slane %v1358, 1
    %v1360 = vadd.f32 %v1358, %v1359
    %v1361 = vsel %vm1351, %v1349, 0.0
    %v1362 = vsel %vm1351, %v1350, 0.0
    %v1363 = vadd.f32 %v1361, %v1362
    %v1364 = vrot.slane %v1363, 4
    %v1365 = vadd.f32 %v1363, %v1364
    %v1366 = vrot.slane %v1365, 2
    %v1367 = vadd.f32 %v1365, %v1366
    %v1368 = vrot.slane %v1367, 1
    %v1369 = vadd.f32 %v1367, %v1368
    %v1370 = vadd.f32 %v1360, %v1369
    %v1371 = vmul.f32 %v1370, 0.03125
    %v1372 = vsub.f32 %v817, %v1371
    %v1373 = vsub.f32 %v818, %v1371
    %v1374 = vmul.f32 %v1372, %v1372
    %v1375 = vmul.f32 %v1373, %v1373
    %v1376 = vsel %vm1351, %v1374, 0.0
    %v1377 = vsel %vm1351, %v1375, 0.0
    %v1378 = vadd.f32 %v1376, %v1377
    %v1379 = vrot.slane %v1378, 4
    %v1380 = vadd.f32 %v1378, %v1379
    %v1381 = vrot.slane %v1380, 2
    %v1382 = vadd.f32 %v1380, %v1381
    %v1383 = vrot.slane %v1382, 1
    %v1384 = vadd.f32 %v1382, %v1383
    %v1385 = vsub.f32 %v1349, %v1371
    %v1386 = vsub.f32 %v1350, %v1371
    %v1387 = vmul.f32 %v1385, %v1385
    %v1388 = vmul.f32 %v1386, %v1386
    %v1389 = vsel %vm1351, %v1387, 0.0
    %v1390 = vsel %vm1351, %v1388, 0.0
    %v1391 = vadd.f32 %v1389, %v1390
    %v1392 = vrot.slane %v1391, 4
    %v1393 = vadd.f32 %v1391, %v1392
    %v1394 = vrot.slane %v1393, 2
    %v1395 = vadd.f32 %v1393, %v1394
    %v1396 = vrot.slane %v1395, 1
    %v1397 = vadd.f32 %v1395, %v1396
    %v1398 = vadd.f32 %v1384, %v1397
    %v1399 = vmul.f32 %v1398, 0.03125
    %v1400 = vadd.f32 %v1399, 1e-05
    %v1401 = vrsqrt.pop %v1400
    %v1402 = vld [vmem:[%s11] sm:$0x1]
    %v1403 = vld [vmem:[%s13] sm:$0x1]
    %v1404 = vmul.f32 %v1372, %v1401
    %v1405 = vmul.f32 %v1373, %v1401
    %v1407 = vlaneseq
    %v1408 = vshrl.u32 %v1407, 7
    %v1409 = vsub.s32 0, %v1408
    %v1410 = vrot.slane %v1402, %v1409
    %v1412 = vmul.f32 %v1404, %v1410
    %v1413 = vmul.f32 %v1405, %v1410
    %v1415 = vlaneseq
    %v1416 = vshrl.u32 %v1415, 7
    %v1417 = vsub.s32 0, %v1416
    %v1418 = vrot.slane %v1403, %v1417
    %v1420 = vadd.f32 %v1412, %v1418
    %v1421 = vadd.f32 %v1413, %v1418
    %v1422 = vxor.u32 %v1420, 2147483648
    %v1423 = vxor.u32 %v1421, 2147483648
    %v1424 = vmul.f32 %v1422, 1.442695
    %v1425 = vpow.pop %v1424
    %v1426 = vmul.f32 %v1423, 1.442695
    %v1427 = vpow.pop %v1426
    %v1428 = vadd.f32 %v1425, 1.0
    %v1429 = vadd.f32 %v1427, 1.0
    %v1430 = vrcp.pop %v1428
    %v1431 = vmul.f32 1.0, %v1430
    %v1432 = vrcp.pop %v1429
    %v1433 = vmul.f32 1.0, %v1432
    %1436 = vrot.lane.b32.xlu0 %v1431, 112
    %v1437 = vpop.permute.xlu0 %1436
    %1438 = vrot.lane.b32.xlu0 %v1433, 112
    %v1439 = vpop.permute.xlu0 %1438
    %v1442 = vmul.f32 %v1420, %v1437
    %v1443 = vmul.f32 %v1421, %v1439
    %v1444 = vmul.f32 %v1385, %v1401
    %v1445 = vmul.f32 %v1386, %v1401
    %v1446 = vmul.f32 %v1444, %v1410
    %v1447 = vmul.f32 %v1445, %v1410
    %v1448 = vadd.f32 %v1446, %v1418
    %v1449 = vadd.f32 %v1447, %v1418
    %v1450 = vxor.u32 %v1448, 2147483648
    %v1451 = vxor.u32 %v1449, 2147483648
    %v1452 = vmul.f32 %v1450, 1.442695
    %v1453 = vpow.pop %v1452
    %v1454 = vmul.f32 %v1451, 1.442695
    %v1455 = vpow.pop %v1454
    %v1456 = vadd.f32 %v1453, 1.0
    %v1457 = vadd.f32 %v1455, 1.0
    %v1458 = vrcp.pop %v1456
    %v1459 = vmul.f32 1.0, %v1458
    %v1460 = vrcp.pop %v1457
    %v1461 = vmul.f32 1.0, %v1460
    %1464 = vrot.lane.b32.xlu0 %v1459, 112
    %v1465 = vpop.permute.xlu0 %1464
    %1466 = vrot.lane.b32.xlu0 %v1461, 112
    %v1467 = vpop.permute.xlu0 %1466
    %v1470 = vmul.f32 %v1448, %v1465
    %v1471 = vmul.f32 %v1449, %v1467
    %v1472 = vld [vmem:[%s15] sm:$0xff]
    %v1473 = vld [vmem:[%s15 + $0x8] sm:$0xff]
    %v1474 = vld [vmem:[%s15 + $0x10] sm:$0xff]
    %v1475 = vld [vmem:[%s15 + $0x18] sm:$0xff]
    %v1476 = vld [vmem:[%s17] sm:$0xff]
    %v1477 = vld [vmem:[%s17 + $0x8] sm:$0xff]
    %v1478 = vld [vmem:[%s17 + $0x10] sm:$0xff]
    %v1479 = vld [vmem:[%s17 + $0x18] sm:$0xff]
    %v1480 = vld [vmem:[%s17 + $0x20] sm:$0xff]
    %v1481 = vld [vmem:[%s17 + $0x28] sm:$0xff]
    %v1482 = vld [vmem:[%s17 + $0x30] sm:$0xff]
    %v1483 = vld [vmem:[%s17 + $0x38] sm:$0xff]
    %v1485 = vsel %vm171, %v1472, 0
    %v1488 = vsel %vm171, %v1473, 0
    %v1491 = vsel %vm171, %v1474, 0
    %v1494 = vsel %vm171, %v1475, 0
    %1496 = vmatprep.subr.mxu0 0.0
    %1497 = vmatpush1.msra.mxu0 %v1442
    %1498 = vmatprep.subr.mxu0 0.0
    %1499 = vmatpush1.msra.mxu0 %v1443
    %1500 = vmatprep.subr.mxu0 0.0
    %1501 = vmatpush1.msra.mxu0 0.0
    %1502 = vmatprep.subr.mxu0 0.0
    %1503 = vmatpush1.msra.mxu0 0.0
    %1504 = vmatprep.subr.mxu0 0.0
    %1505 = vmatpush1.msra.mxu0 0.0
    %1506 = vmatprep.subr.mxu0 0.0
    %1507 = vmatpush1.msra.mxu0 0.0
    %1508 = vmatprep.subr.mxu0 0.0
    %1509 = vmatpush1.msra.mxu0 0.0
    %1510 = vmatprep.subr.mxu0 0.0
    %1511 = vmatpush1.msra.mxu0 0.0
    %1512 = vmatprep.subr.mxu0 0.0
    %1513 = vmatpush1.msra.mxu0 0.0
    %1514 = vmatprep.subr.mxu0 0.0
    %1515 = vmatpush1.msra.mxu0 0.0
    %1516 = vmatprep.subr.mxu0 0.0
    %1517 = vmatpush1.msra.mxu0 0.0
    %1518 = vmatprep.subr.mxu0 0.0
    %1519 = vmatpush1.msra.mxu0 0.0
    %1520 = vmatprep.subr.mxu0 0.0
    %1521 = vmatpush1.msra.mxu0 0.0
    %1522 = vmatprep.subr.mxu0 0.0
    %1523 = vmatpush1.msra.mxu0 0.0
    %1524 = vmatprep.subr.mxu0 0.0
    %1525 = vmatpush1.msra.mxu0 0.0
    %1526 = vmatprep.subr.mxu0 0.0
    %1527 = vmatpush1.msra.mxu0 0.0
    %1528 = vmatprep.subr.mxu0 0.0
    %1529 = vmatpush1.msra.mxu0 0.0
    %1530 = vmatprep.subr.mxu0 0.0
    %1531 = vmatpush1.msra.mxu0 0.0
    %1532 = vmatprep.subr.mxu0 0.0
    %1533 = vmatpush1.msra.mxu0 0.0
    %1534 = vmatprep.subr.mxu0 0.0
    %1535 = vmatpush1.msra.mxu0 0.0
    %1536 = vmatprep.subr.mxu0 0.0
    %1537 = vmatpush1.msra.mxu0 0.0
    %1538 = vmatprep.subr.mxu0 0.0
    %1539 = vmatpush1.msra.mxu0 0.0
    %1540 = vmatprep.subr.mxu0 0.0
    %1541 = vmatpush1.msra.mxu0 0.0
    %1542 = vmatprep.subr.mxu0 0.0
    %1543 = vmatpush1.msra.mxu0 0.0
    %1544 = vmatprep.subr.mxu0 0.0
    %1545 = vmatpush1.msra.mxu0 0.0
    %1546 = vmatprep.subr.mxu0 0.0
    %1547 = vmatpush1.msra.mxu0 0.0
    %1548 = vmatprep.subr.mxu0 0.0
    %1549 = vmatpush1.msra.mxu0 0.0
    %1550 = vmatprep.subr.mxu0 0.0
    %1551 = vmatpush1.msra.mxu0 0.0
    %1552 = vmatprep.subr.mxu0 0.0
    %1553 = vmatpush1.msra.mxu0 0.0
    %1554 = vmatprep.subr.mxu0 0.0
    %1555 = vmatpush1.msra.mxu0 0.0
    %1556 = vmatprep.subr.mxu0 0.0
    %1557 = vmatpush1.msra.mxu0 0.0
    %1558 = vmatprep.subr.mxu0 0.0
    %1559 = vmatpush1.msra.mxu0 0.0
    %1560 = vmatprep.mubr.f32.mxu0 0.0
    %1561 = vmatmul.mubr.f32.gmra.mrb[0].mxu0 %v1485
    %v1562 = vpop.f32.mrb[0].mxu0
    %v1563 = vadd.f32 0.0, %v1562
    %v1564 = vpop.f32.mrb[0].mxu0
    %1565 = vmatprep.mubr.f32.mxu0 0.0
    %1566 = vmatmul.mubr.f32.gmra.mrb[0].mxu0 %v1488
    %v1567 = vpop.f32.mrb[0].mxu0
    %v1568 = vadd.f32 0.0, %v1567
    %v1569 = vpop.f32.mrb[0].mxu0
    %1570 = vmatprep.mubr.f32.mxu0 0.0
    %1571 = vmatmul.mubr.f32.gmra.mrb[0].mxu0 %v1491
    %v1572 = vpop.f32.mrb[0].mxu0
    %v1573 = vadd.f32 0.0, %v1572
    %v1574 = vpop.f32.mrb[0].mxu0
    %1575 = vmatprep.mubr.f32.mxu0 0.0
    %1576 = vmatmul.mubr.f32.gmra.mrb[0].mxu0 %v1494
    %v1577 = vpop.f32.mrb[0].mxu0
    %v1578 = vadd.f32 0.0, %v1577
    %v1579 = vpop.f32.mrb[0].mxu0
    %1580 = vdwg.mxu0
    %v1581 = vld [vmem:[%s19] sm:$0xff]
    %v1583 = vsel %vm171, %v1563, 0
    %1585 = vmatprep.subr.mxu0 0.0
    %1586 = vmatpush1.msra.mxu0 %v1476
    %1587 = vmatprep.subr.mxu0 0.0
    %1588 = vmatpush1.msra.mxu0 %v1477
    %1589 = vmatprep.subr.mxu0 0.0
    %1590 = vmatpush1.msra.mxu0 0.0
    %1591 = vmatprep.subr.mxu0 0.0
    %1592 = vmatpush1.msra.mxu0 0.0
    %1593 = vmatprep.subr.mxu0 0.0
    %1594 = vmatpush1.msra.mxu0 0.0
    %1595 = vmatprep.subr.mxu0 0.0
    %1596 = vmatpush1.msra.mxu0 0.0
    %1597 = vmatprep.subr.mxu0 0.0
    %1598 = vmatpush1.msra.mxu0 0.0
    %1599 = vmatprep.subr.mxu0 0.0
    %1600 = vmatpush1.msra.mxu0 0.0
    %1601 = vmatprep.subr.mxu0 0.0
    %1602 = vmatpush1.msra.mxu0 0.0
    %1603 = vmatprep.subr.mxu0 0.0
    %1604 = vmatpush1.msra.mxu0 0.0
    %1605 = vmatprep.subr.mxu0 0.0
    %1606 = vmatpush1.msra.mxu0 0.0
    %1607 = vmatprep.subr.mxu0 0.0
    %1608 = vmatpush1.msra.mxu0 0.0
    %1609 = vmatprep.subr.mxu0 0.0
    %1610 = vmatpush1.msra.mxu0 0.0
    %1611 = vmatprep.subr.mxu0 0.0
    %1612 = vmatpush1.msra.mxu0 0.0
    %1613 = vmatprep.subr.mxu0 0.0
    %1614 = vmatpush1.msra.mxu0 0.0
    %1615 = vmatprep.subr.mxu0 0.0
    %1616 = vmatpush1.msra.mxu0 0.0
    %1617 = vmatprep.subr.mxu0 0.0
    %1618 = vmatpush1.msra.mxu0 0.0
    %1619 = vmatprep.subr.mxu0 0.0
    %1620 = vmatpush1.msra.mxu0 0.0
    %1621 = vmatprep.subr.mxu0 0.0
    %1622 = vmatpush1.msra.mxu0 0.0
    %1623 = vmatprep.subr.mxu0 0.0
    %1624 = vmatpush1.msra.mxu0 0.0
    %1625 = vmatprep.subr.mxu0 0.0
    %1626 = vmatpush1.msra.mxu0 0.0
    %1627 = vmatprep.subr.mxu0 0.0
    %1628 = vmatpush1.msra.mxu0 0.0
    %1629 = vmatprep.subr.mxu0 0.0
    %1630 = vmatpush1.msra.mxu0 0.0
    %1631 = vmatprep.subr.mxu0 0.0
    %1632 = vmatpush1.msra.mxu0 0.0
    %1633 = vmatprep.subr.mxu0 0.0
    %1634 = vmatpush1.msra.mxu0 0.0
    %1635 = vmatprep.subr.mxu0 0.0
    %1636 = vmatpush1.msra.mxu0 0.0
    %1637 = vmatprep.subr.mxu0 0.0
    %1638 = vmatpush1.msra.mxu0 0.0
    %1639 = vmatprep.subr.mxu0 0.0
    %1640 = vmatpush1.msra.mxu0 0.0
    %1641 = vmatprep.subr.mxu0 0.0
    %1642 = vmatpush1.msra.mxu0 0.0
    %1643 = vmatprep.subr.mxu0 0.0
    %1644 = vmatpush1.msra.mxu0 0.0
    %1645 = vmatprep.subr.mxu0 0.0
    %1646 = vmatpush1.msra.mxu0 0.0
    %1647 = vmatprep.subr.mxu0 0.0
    %1648 = vmatpush1.msra.mxu0 0.0
    %1649 = vmatprep.mubr.f32.mxu0 0.0
    %1650 = vmatmul.mubr.f32.gmra.mrb[0].mxu0 %v1583
    %v1651 = vpop.f32.mrb[0].mxu0
    %v1652 = vadd.f32 0.0, %v1651
    %v1653 = vpop.f32.mrb[0].mxu0
    %1654 = vdwg.mxu0
    %v1655 = vadd.f32 %v1581, %v1652
    %v1657 = vsel %vm171, %v1568, 0
    %1659 = vmatprep.subr.mxu0 0.0
    %1660 = vmatpush1.msra.mxu0 %v1478
    %1661 = vmatprep.subr.mxu0 0.0
    %1662 = vmatpush1.msra.mxu0 %v1479
    %1663 = vmatprep.subr.mxu0 0.0
    %1664 = vmatpush1.msra.mxu0 0.0
    %1665 = vmatprep.subr.mxu0 0.0
    %1666 = vmatpush1.msra.mxu0 0.0
    %1667 = vmatprep.subr.mxu0 0.0
    %1668 = vmatpush1.msra.mxu0 0.0
    %1669 = vmatprep.subr.mxu0 0.0
    %1670 = vmatpush1.msra.mxu0 0.0
    %1671 = vmatprep.subr.mxu0 0.0
    %1672 = vmatpush1.msra.mxu0 0.0
    %1673 = vmatprep.subr.mxu0 0.0
    %1674 = vmatpush1.msra.mxu0 0.0
    %1675 = vmatprep.subr.mxu0 0.0
    %1676 = vmatpush1.msra.mxu0 0.0
    %1677 = vmatprep.subr.mxu0 0.0
    %1678 = vmatpush1.msra.mxu0 0.0
    %1679 = vmatprep.subr.mxu0 0.0
    %1680 = vmatpush1.msra.mxu0 0.0
    %1681 = vmatprep.subr.mxu0 0.0
    %1682 = vmatpush1.msra.mxu0 0.0
    %1683 = vmatprep.subr.mxu0 0.0
    %1684 = vmatpush1.msra.mxu0 0.0
    %1685 = vmatprep.subr.mxu0 0.0
    %1686 = vmatpush1.msra.mxu0 0.0
    %1687 = vmatprep.subr.mxu0 0.0
    %1688 = vmatpush1.msra.mxu0 0.0
    %1689 = vmatprep.subr.mxu0 0.0
    %1690 = vmatpush1.msra.mxu0 0.0
    %1691 = vmatprep.subr.mxu0 0.0
    %1692 = vmatpush1.msra.mxu0 0.0
    %1693 = vmatprep.subr.mxu0 0.0
    %1694 = vmatpush1.msra.mxu0 0.0
    %1695 = vmatprep.subr.mxu0 0.0
    %1696 = vmatpush1.msra.mxu0 0.0
    %1697 = vmatprep.subr.mxu0 0.0
    %1698 = vmatpush1.msra.mxu0 0.0
    %1699 = vmatprep.subr.mxu0 0.0
    %1700 = vmatpush1.msra.mxu0 0.0
    %1701 = vmatprep.subr.mxu0 0.0
    %1702 = vmatpush1.msra.mxu0 0.0
    %1703 = vmatprep.subr.mxu0 0.0
    %1704 = vmatpush1.msra.mxu0 0.0
    %1705 = vmatprep.subr.mxu0 0.0
    %1706 = vmatpush1.msra.mxu0 0.0
    %1707 = vmatprep.subr.mxu0 0.0
    %1708 = vmatpush1.msra.mxu0 0.0
    %1709 = vmatprep.subr.mxu0 0.0
    %1710 = vmatpush1.msra.mxu0 0.0
    %1711 = vmatprep.subr.mxu0 0.0
    %1712 = vmatpush1.msra.mxu0 0.0
    %1713 = vmatprep.subr.mxu0 0.0
    %1714 = vmatpush1.msra.mxu0 0.0
    %1715 = vmatprep.subr.mxu0 0.0
    %1716 = vmatpush1.msra.mxu0 0.0
    %1717 = vmatprep.subr.mxu0 0.0
    %1718 = vmatpush1.msra.mxu0 0.0
    %1719 = vmatprep.subr.mxu0 0.0
    %1720 = vmatpush1.msra.mxu0 0.0
    %1721 = vmatprep.subr.mxu0 0.0
    %1722 = vmatpush1.msra.mxu0 0.0
    %1723 = vmatprep.mubr.f32.mxu0 0.0
    %1724 = vmatmul.mubr.f32.gmra.mrb[0].mxu0 %v1657
    %v1725 = vpop.f32.mrb[0].mxu0
    %v1726 = vadd.f32 0.0, %v1725
    %v1727 = vpop.f32.mrb[0].mxu0
    %1728 = vdwg.mxu0
    %v1729 = vadd.f32 %v1655, %v1726
    %v1731 = vsel %vm171, %v1573, 0
    %1733 = vmatprep.subr.mxu0 0.0
    %1734 = vmatpush1.msra.mxu0 %v1480
    %1735 = vmatprep.subr.mxu0 0.0
    %1736 = vmatpush1.msra.mxu0 %v1481
    %1737 = vmatprep.subr.mxu0 0.0
    %1738 = vmatpush1.msra.mxu0 0.0
    %1739 = vmatprep.subr.mxu0 0.0
    %1740 = vmatpush1.msra.mxu0 0.0
    %1741 = vmatprep.subr.mxu0 0.0
    %1742 = vmatpush1.msra.mxu0 0.0
    %1743 = vmatprep.subr.mxu0 0.0
    %1744 = vmatpush1.msra.mxu0 0.0
    %1745 = vmatprep.subr.mxu0 0.0
    %1746 = vmatpush1.msra.mxu0 0.0
    %1747 = vmatprep.subr.mxu0 0.0
    %1748 = vmatpush1.msra.mxu0 0.0
    %1749 = vmatprep.subr.mxu0 0.0
    %1750 = vmatpush1.msra.mxu0 0.0
    %1751 = vmatprep.subr.mxu0 0.0
    %1752 = vmatpush1.msra.mxu0 0.0
    %1753 = vmatprep.subr.mxu0 0.0
    %1754 = vmatpush1.msra.mxu0 0.0
    %1755 = vmatprep.subr.mxu0 0.0
    %1756 = vmatpush1.msra.mxu0 0.0
    %1757 = vmatprep.subr.mxu0 0.0
    %1758 = vmatpush1.msra.mxu0 0.0
    %1759 = vmatprep.subr.mxu0 0.0
    %1760 = vmatpush1.msra.mxu0 0.0
    %1761 = vmatprep.subr.mxu0 0.0
    %1762 = vmatpush1.msra.mxu0 0.0
    %1763 = vmatprep.subr.mxu0 0.0
    %1764 = vmatpush1.msra.mxu0 0.0
    %1765 = vmatprep.subr.mxu0 0.0
    %1766 = vmatpush1.msra.mxu0 0.0
    %1767 = vmatprep.subr.mxu0 0.0
    %1768 = vmatpush1.msra.mxu0 0.0
    %1769 = vmatprep.subr.mxu0 0.0
    %1770 = vmatpush1.msra.mxu0 0.0
    %1771 = vmatprep.subr.mxu0 0.0
    %1772 = vmatpush1.msra.mxu0 0.0
    %1773 = vmatprep.subr.mxu0 0.0
    %1774 = vmatpush1.msra.mxu0 0.0
    %1775 = vmatprep.subr.mxu0 0.0
    %1776 = vmatpush1.msra.mxu0 0.0
    %1777 = vmatprep.subr.mxu0 0.0
    %1778 = vmatpush1.msra.mxu0 0.0
    %1779 = vmatprep.subr.mxu0 0.0
    %1780 = vmatpush1.msra.mxu0 0.0
    %1781 = vmatprep.subr.mxu0 0.0
    %1782 = vmatpush1.msra.mxu0 0.0
    %1783 = vmatprep.subr.mxu0 0.0
    %1784 = vmatpush1.msra.mxu0 0.0
    %1785 = vmatprep.subr.mxu0 0.0
    %1786 = vmatpush1.msra.mxu0 0.0
    %1787 = vmatprep.subr.mxu0 0.0
    %1788 = vmatpush1.msra.mxu0 0.0
    %1789 = vmatprep.subr.mxu0 0.0
    %1790 = vmatpush1.msra.mxu0 0.0
    %1791 = vmatprep.subr.mxu0 0.0
    %1792 = vmatpush1.msra.mxu0 0.0
    %1793 = vmatprep.subr.mxu0 0.0
    %1794 = vmatpush1.msra.mxu0 0.0
    %1795 = vmatprep.subr.mxu0 0.0
    %1796 = vmatpush1.msra.mxu0 0.0
    %1797 = vmatprep.mubr.f32.mxu0 0.0
    %1798 = vmatmul.mubr.f32.gmra.mrb[0].mxu0 %v1731
    %v1799 = vpop.f32.mrb[0].mxu0
    %v1800 = vadd.f32 0.0, %v1799
    %v1801 = vpop.f32.mrb[0].mxu0
    %1802 = vdwg.mxu0
    %v1803 = vadd.f32 %v1729, %v1800
    %v1805 = vsel %vm171, %v1578, 0
    %1807 = vmatprep.subr.mxu0 0.0
    %1808 = vmatpush1.msra.mxu0 %v1482
    %1809 = vmatprep.subr.mxu0 0.0
    %1810 = vmatpush1.msra.mxu0 %v1483
    %1811 = vmatprep.subr.mxu0 0.0
    %1812 = vmatpush1.msra.mxu0 0.0
    %1813 = vmatprep.subr.mxu0 0.0
    %1814 = vmatpush1.msra.mxu0 0.0
    %1815 = vmatprep.subr.mxu0 0.0
    %1816 = vmatpush1.msra.mxu0 0.0
    %1817 = vmatprep.subr.mxu0 0.0
    %1818 = vmatpush1.msra.mxu0 0.0
    %1819 = vmatprep.subr.mxu0 0.0
    %1820 = vmatpush1.msra.mxu0 0.0
    %1821 = vmatprep.subr.mxu0 0.0
    %1822 = vmatpush1.msra.mxu0 0.0
    %1823 = vmatprep.subr.mxu0 0.0
    %1824 = vmatpush1.msra.mxu0 0.0
    %1825 = vmatprep.subr.mxu0 0.0
    %1826 = vmatpush1.msra.mxu0 0.0
    %1827 = vmatprep.subr.mxu0 0.0
    %1828 = vmatpush1.msra.mxu0 0.0
    %1829 = vmatprep.subr.mxu0 0.0
    %1830 = vmatpush1.msra.mxu0 0.0
    %1831 = vmatprep.subr.mxu0 0.0
    %1832 = vmatpush1.msra.mxu0 0.0
    %1833 = vmatprep.subr.mxu0 0.0
    %1834 = vmatpush1.msra.mxu0 0.0
    %1835 = vmatprep.subr.mxu0 0.0
    %1836 = vmatpush1.msra.mxu0 0.0
    %1837 = vmatprep.subr.mxu0 0.0
    %1838 = vmatpush1.msra.mxu0 0.0
    %1839 = vmatprep.subr.mxu0 0.0
    %1840 = vmatpush1.msra.mxu0 0.0
    %1841 = vmatprep.subr.mxu0 0.0
    %1842 = vmatpush1.msra.mxu0 0.0
    %1843 = vmatprep.subr.mxu0 0.0
    %1844 = vmatpush1.msra.mxu0 0.0
    %1845 = vmatprep.subr.mxu0 0.0
    %1846 = vmatpush1.msra.mxu0 0.0
    %1847 = vmatprep.subr.mxu0 0.0
    %1848 = vmatpush1.msra.mxu0 0.0
    %1849 = vmatprep.subr.mxu0 0.0
    %1850 = vmatpush1.msra.mxu0 0.0
    %1851 = vmatprep.subr.mxu0 0.0
    %1852 = vmatpush1.msra.mxu0 0.0
    %1853 = vmatprep.subr.mxu0 0.0
    %1854 = vmatpush1.msra.mxu0 0.0
    %1855 = vmatprep.subr.mxu0 0.0
    %1856 = vmatpush1.msra.mxu0 0.0
    %1857 = vmatprep.subr.mxu0 0.0
    %1858 = vmatpush1.msra.mxu0 0.0
    %1859 = vmatprep.subr.mxu0 0.0
    %1860 = vmatpush1.msra.mxu0 0.0
    %1861 = vmatprep.subr.mxu0 0.0
    %1862 = vmatpush1.msra.mxu0 0.0
    %1863 = vmatprep.subr.mxu0 0.0
    %1864 = vmatpush1.msra.mxu0 0.0
    %1865 = vmatprep.subr.mxu0 0.0
    %1866 = vmatpush1.msra.mxu0 0.0
    %1867 = vmatprep.subr.mxu0 0.0
    %1868 = vmatpush1.msra.mxu0 0.0
    %1869 = vmatprep.subr.mxu0 0.0
    %1870 = vmatpush1.msra.mxu0 0.0
    %1871 = vmatprep.mubr.f32.mxu0 0.0
    %1872 = vmatmul.mubr.f32.gmra.mrb[0].mxu0 %v1805
    %v1873 = vpop.f32.mrb[0].mxu0
    %v1874 = vadd.f32 0.0, %v1873
    %v1875 = vpop.f32.mrb[0].mxu0
    %1876 = vdwg.mxu0
    %v1877 = vadd.f32 %v1803, %v1874
    %1878 = vmatprep.subr.mxu0 0.0
    %1879 = vmatpush1.msra.mxu0 %v1470
    %1880 = vmatprep.subr.mxu0 0.0
    %1881 = vmatpush1.msra.mxu0 %v1471
    %1882 = vmatprep.subr.mxu0 0.0
    %1883 = vmatpush1.msra.mxu0 0.0
    %1884 = vmatprep.subr.mxu0 0.0
    %1885 = vmatpush1.msra.mxu0 0.0
    %1886 = vmatprep.subr.mxu0 0.0
    %1887 = vmatpush1.msra.mxu0 0.0
    %1888 = vmatprep.subr.mxu0 0.0
    %1889 = vmatpush1.msra.mxu0 0.0
    %1890 = vmatprep.subr.mxu0 0.0
    %1891 = vmatpush1.msra.mxu0 0.0
    %1892 = vmatprep.subr.mxu0 0.0
    %1893 = vmatpush1.msra.mxu0 0.0
    %1894 = vmatprep.subr.mxu0 0.0
    %1895 = vmatpush1.msra.mxu0 0.0
    %1896 = vmatprep.subr.mxu0 0.0
    %1897 = vmatpush1.msra.mxu0 0.0
    %1898 = vmatprep.subr.mxu0 0.0
    %1899 = vmatpush1.msra.mxu0 0.0
    %1900 = vmatprep.subr.mxu0 0.0
    %1901 = vmatpush1.msra.mxu0 0.0
    %1902 = vmatprep.subr.mxu0 0.0
    %1903 = vmatpush1.msra.mxu0 0.0
    %1904 = vmatprep.subr.mxu0 0.0
    %1905 = vmatpush1.msra.mxu0 0.0
    %1906 = vmatprep.subr.mxu0 0.0
    %1907 = vmatpush1.msra.mxu0 0.0
    %1908 = vmatprep.subr.mxu0 0.0
    %1909 = vmatpush1.msra.mxu0 0.0
    %1910 = vmatprep.subr.mxu0 0.0
    %1911 = vmatpush1.msra.mxu0 0.0
    %1912 = vmatprep.subr.mxu0 0.0
    %1913 = vmatpush1.msra.mxu0 0.0
    %1914 = vmatprep.subr.mxu0 0.0
    %1915 = vmatpush1.msra.mxu0 0.0
    %1916 = vmatprep.subr.mxu0 0.0
    %1917 = vmatpush1.msra.mxu0 0.0
    %1918 = vmatprep.subr.mxu0 0.0
    %1919 = vmatpush1.msra.mxu0 0.0
    %1920 = vmatprep.subr.mxu0 0.0
    %1921 = vmatpush1.msra.mxu0 0.0
    %1922 = vmatprep.subr.mxu0 0.0
    %1923 = vmatpush1.msra.mxu0 0.0
    %1924 = vmatprep.subr.mxu0 0.0
    %1925 = vmatpush1.msra.mxu0 0.0
    %1926 = vmatprep.subr.mxu0 0.0
    %1927 = vmatpush1.msra.mxu0 0.0
    %1928 = vmatprep.subr.mxu0 0.0
    %1929 = vmatpush1.msra.mxu0 0.0
    %1930 = vmatprep.subr.mxu0 0.0
    %1931 = vmatpush1.msra.mxu0 0.0
    %1932 = vmatprep.subr.mxu0 0.0
    %1933 = vmatpush1.msra.mxu0 0.0
    %1934 = vmatprep.subr.mxu0 0.0
    %1935 = vmatpush1.msra.mxu0 0.0
    %1936 = vmatprep.subr.mxu0 0.0
    %1937 = vmatpush1.msra.mxu0 0.0
    %1938 = vmatprep.subr.mxu0 0.0
    %1939 = vmatpush1.msra.mxu0 0.0
    %1940 = vmatprep.subr.mxu0 0.0
    %1941 = vmatpush1.msra.mxu0 0.0
    %1942 = vmatprep.mubr.f32.mxu0 0.0
    %1943 = vmatmul.mubr.f32.gmra.mrb[0].mxu0 %v1485
    %v1944 = vpop.f32.mrb[0].mxu0
    %v1945 = vadd.f32 0.0, %v1944
    %v1946 = vpop.f32.mrb[0].mxu0
    %1947 = vmatprep.mubr.f32.mxu0 0.0
    %1948 = vmatmul.mubr.f32.gmra.mrb[0].mxu0 %v1488
    %v1949 = vpop.f32.mrb[0].mxu0
    %v1950 = vadd.f32 0.0, %v1949
    %v1951 = vpop.f32.mrb[0].mxu0
    %1952 = vmatprep.mubr.f32.mxu0 0.0
    %1953 = vmatmul.mubr.f32.gmra.mrb[0].mxu0 %v1491
    %v1954 = vpop.f32.mrb[0].mxu0
    %v1955 = vadd.f32 0.0, %v1954
    %v1956 = vpop.f32.mrb[0].mxu0
    %1957 = vmatprep.mubr.f32.mxu0 0.0
    %1958 = vmatmul.mubr.f32.gmra.mrb[0].mxu0 %v1494
    %v1959 = vpop.f32.mrb[0].mxu0
    %v1960 = vadd.f32 0.0, %v1959
    %v1961 = vpop.f32.mrb[0].mxu0
    %1962 = vdwg.mxu0
    %v1963 = vld [vmem:[%s19 + $0x8] sm:$0xff]
    %v1965 = vsel %vm171, %v1945, 0
    %1967 = vmatprep.subr.mxu0 0.0
    %1968 = vmatpush1.msra.mxu0 %v1476
    %1969 = vmatprep.subr.mxu0 0.0
    %1970 = vmatpush1.msra.mxu0 %v1477
    %1971 = vmatprep.subr.mxu0 0.0
    %1972 = vmatpush1.msra.mxu0 0.0
    %1973 = vmatprep.subr.mxu0 0.0
    %1974 = vmatpush1.msra.mxu0 0.0
    %1975 = vmatprep.subr.mxu0 0.0
    %1976 = vmatpush1.msra.mxu0 0.0
    %1977 = vmatprep.subr.mxu0 0.0
    %1978 = vmatpush1.msra.mxu0 0.0
    %1979 = vmatprep.subr.mxu0 0.0
    %1980 = vmatpush1.msra.mxu0 0.0
    %1981 = vmatprep.subr.mxu0 0.0
    %1982 = vmatpush1.msra.mxu0 0.0
    %1983 = vmatprep.subr.mxu0 0.0
    %1984 = vmatpush1.msra.mxu0 0.0
    %1985 = vmatprep.subr.mxu0 0.0
    %1986 = vmatpush1.msra.mxu0 0.0
    %1987 = vmatprep.subr.mxu0 0.0
    %1988 = vmatpush1.msra.mxu0 0.0
    %1989 = vmatprep.subr.mxu0 0.0
    %1990 = vmatpush1.msra.mxu0 0.0
    %1991 = vmatprep.subr.mxu0 0.0
    %1992 = vmatpush1.msra.mxu0 0.0
    %1993 = vmatprep.subr.mxu0 0.0
    %1994 = vmatpush1.msra.mxu0 0.0
    %1995 = vmatprep.subr.mxu0 0.0
    %1996 = vmatpush1.msra.mxu0 0.0
    %1997 = vmatprep.subr.mxu0 0.0
    %1998 = vmatpush1.msra.mxu0 0.0
    %1999 = vmatprep.subr.mxu0 0.0
    %2000 = vmatpush1.msra.mxu0 0.0
    %2001 = vmatprep.subr.mxu0 0.0
    %2002 = vmatpush1.msra.mxu0 0.0
    %2003 = vmatprep.subr.mxu0 0.0
    %2004 = vmatpush1.msra.mxu0 0.0
    %2005 = vmatprep.subr.mxu0 0.0
    %2006 = vmatpush1.msra.mxu0 0.0
    %2007 = vmatprep.subr.mxu0 0.0
    %2008 = vmatpush1.msra.mxu0 0.0
    %2009 = vmatprep.subr.mxu0 0.0
    %2010 = vmatpush1.msra.mxu0 0.0
    %2011 = vmatprep.subr.mxu0 0.0
    %2012 = vmatpush1.msra.mxu0 0.0
    %2013 = vmatprep.subr.mxu0 0.0
    %2014 = vmatpush1.msra.mxu0 0.0
    %2015 = vmatprep.subr.mxu0 0.0
    %2016 = vmatpush1.msra.mxu0 0.0
    %2017 = vmatprep.subr.mxu0 0.0
    %2018 = vmatpush1.msra.mxu0 0.0
    %2019 = vmatprep.subr.mxu0 0.0
    %2020 = vmatpush1.msra.mxu0 0.0
    %2021 = vmatprep.subr.mxu0 0.0
    %2022 = vmatpush1.msra.mxu0 0.0
    %2023 = vmatprep.subr.mxu0 0.0
    %2024 = vmatpush1.msra.mxu0 0.0
    %2025 = vmatprep.subr.mxu0 0.0
    %2026 = vmatpush1.msra.mxu0 0.0
    %2027 = vmatprep.subr.mxu0 0.0
    %2028 = vmatpush1.msra.mxu0 0.0
    %2029 = vmatprep.subr.mxu0 0.0
    %2030 = vmatpush1.msra.mxu0 0.0
    %2031 = vmatprep.mubr.f32.mxu0 0.0
    %2032 = vmatmul.mubr.f32.gmra.mrb[0].mxu0 %v1965
    %v2033 = vpop.f32.mrb[0].mxu0
    %v2034 = vadd.f32 0.0, %v2033
    %v2035 = vpop.f32.mrb[0].mxu0
    %2036 = vdwg.mxu0
    %v2037 = vadd.f32 %v1963, %v2034
    %v2039 = vsel %vm171, %v1950, 0
    %2041 = vmatprep.subr.mxu0 0.0
    %2042 = vmatpush1.msra.mxu0 %v1478
    %2043 = vmatprep.subr.mxu0 0.0
    %2044 = vmatpush1.msra.mxu0 %v1479
    %2045 = vmatprep.subr.mxu0 0.0
    %2046 = vmatpush1.msra.mxu0 0.0
    %2047 = vmatprep.subr.mxu0 0.0
    %2048 = vmatpush1.msra.mxu0 0.0
    %2049 = vmatprep.subr.mxu0 0.0
    %2050 = vmatpush1.msra.mxu0 0.0
    %2051 = vmatprep.subr.mxu0 0.0
    %2052 = vmatpush1.msra.mxu0 0.0
    %2053 = vmatprep.subr.mxu0 0.0
    %2054 = vmatpush1.msra.mxu0 0.0
    %2055 = vmatprep.subr.mxu0 0.0
    %2056 = vmatpush1.msra.mxu0 0.0
    %2057 = vmatprep.subr.mxu0 0.0
    %2058 = vmatpush1.msra.mxu0 0.0
    %2059 = vmatprep.subr.mxu0 0.0
    %2060 = vmatpush1.msra.mxu0 0.0
    %2061 = vmatprep.subr.mxu0 0.0
    %2062 = vmatpush1.msra.mxu0 0.0
    %2063 = vmatprep.subr.mxu0 0.0
    %2064 = vmatpush1.msra.mxu0 0.0
    %2065 = vmatprep.subr.mxu0 0.0
    %2066 = vmatpush1.msra.mxu0 0.0
    %2067 = vmatprep.subr.mxu0 0.0
    %2068 = vmatpush1.msra.mxu0 0.0
    %2069 = vmatprep.subr.mxu0 0.0
    %2070 = vmatpush1.msra.mxu0 0.0
    %2071 = vmatprep.subr.mxu0 0.0
    %2072 = vmatpush1.msra.mxu0 0.0
    %2073 = vmatprep.subr.mxu0 0.0
    %2074 = vmatpush1.msra.mxu0 0.0
    %2075 = vmatprep.subr.mxu0 0.0
    %2076 = vmatpush1.msra.mxu0 0.0
    %2077 = vmatprep.subr.mxu0 0.0
    %2078 = vmatpush1.msra.mxu0 0.0
    %2079 = vmatprep.subr.mxu0 0.0
    %2080 = vmatpush1.msra.mxu0 0.0
    %2081 = vmatprep.subr.mxu0 0.0
    %2082 = vmatpush1.msra.mxu0 0.0
    %2083 = vmatprep.subr.mxu0 0.0
    %2084 = vmatpush1.msra.mxu0 0.0
    %2085 = vmatprep.subr.mxu0 0.0
    %2086 = vmatpush1.msra.mxu0 0.0
    %2087 = vmatprep.subr.mxu0 0.0
    %2088 = vmatpush1.msra.mxu0 0.0
    %2089 = vmatprep.subr.mxu0 0.0
    %2090 = vmatpush1.msra.mxu0 0.0
    %2091 = vmatprep.subr.mxu0 0.0
    %2092 = vmatpush1.msra.mxu0 0.0
    %2093 = vmatprep.subr.mxu0 0.0
    %2094 = vmatpush1.msra.mxu0 0.0
    %2095 = vmatprep.subr.mxu0 0.0
    %2096 = vmatpush1.msra.mxu0 0.0
    %2097 = vmatprep.subr.mxu0 0.0
    %2098 = vmatpush1.msra.mxu0 0.0
    %2099 = vmatprep.subr.mxu0 0.0
    %2100 = vmatpush1.msra.mxu0 0.0
    %2101 = vmatprep.subr.mxu0 0.0
    %2102 = vmatpush1.msra.mxu0 0.0
    %2103 = vmatprep.subr.mxu0 0.0
    %2104 = vmatpush1.msra.mxu0 0.0
    %2105 = vmatprep.mubr.f32.mxu0 0.0
    %2106 = vmatmul.mubr.f32.gmra.mrb[0].mxu0 %v2039
    %v2107 = vpop.f32.mrb[0].mxu0
    %v2108 = vadd.f32 0.0, %v2107
    %v2109 = vpop.f32.mrb[0].mxu0
    %2110 = vdwg.mxu0
    %v2111 = vadd.f32 %v2037, %v2108
    %v2113 = vsel %vm171, %v1955, 0
    %2115 = vmatprep.subr.mxu0 0.0
    %2116 = vmatpush1.msra.mxu0 %v1480
    %2117 = vmatprep.subr.mxu0 0.0
    %2118 = vmatpush1.msra.mxu0 %v1481
    %2119 = vmatprep.subr.mxu0 0.0
    %2120 = vmatpush1.msra.mxu0 0.0
    %2121 = vmatprep.subr.mxu0 0.0
    %2122 = vmatpush1.msra.mxu0 0.0
    %2123 = vmatprep.subr.mxu0 0.0
    %2124 = vmatpush1.msra.mxu0 0.0
    %2125 = vmatprep.subr.mxu0 0.0
    %2126 = vmatpush1.msra.mxu0 0.0
    %2127 = vmatprep.subr.mxu0 0.0
    %2128 = vmatpush1.msra.mxu0 0.0
    %2129 = vmatprep.subr.mxu0 0.0
    %2130 = vmatpush1.msra.mxu0 0.0
    %2131 = vmatprep.subr.mxu0 0.0
    %2132 = vmatpush1.msra.mxu0 0.0
    %2133 = vmatprep.subr.mxu0 0.0
    %2134 = vmatpush1.msra.mxu0 0.0
    %2135 = vmatprep.subr.mxu0 0.0
    %2136 = vmatpush1.msra.mxu0 0.0
    %2137 = vmatprep.subr.mxu0 0.0
    %2138 = vmatpush1.msra.mxu0 0.0
    %2139 = vmatprep.subr.mxu0 0.0
    %2140 = vmatpush1.msra.mxu0 0.0
    %2141 = vmatprep.subr.mxu0 0.0
    %2142 = vmatpush1.msra.mxu0 0.0
    %2143 = vmatprep.subr.mxu0 0.0
    %2144 = vmatpush1.msra.mxu0 0.0
    %2145 = vmatprep.subr.mxu0 0.0
    %2146 = vmatpush1.msra.mxu0 0.0
    %2147 = vmatprep.subr.mxu0 0.0
    %2148 = vmatpush1.msra.mxu0 0.0
    %2149 = vmatprep.subr.mxu0 0.0
    %2150 = vmatpush1.msra.mxu0 0.0
    %2151 = vmatprep.subr.mxu0 0.0
    %2152 = vmatpush1.msra.mxu0 0.0
    %2153 = vmatprep.subr.mxu0 0.0
    %2154 = vmatpush1.msra.mxu0 0.0
    %2155 = vmatprep.subr.mxu0 0.0
    %2156 = vmatpush1.msra.mxu0 0.0
    %2157 = vmatprep.subr.mxu0 0.0
    %2158 = vmatpush1.msra.mxu0 0.0
    %2159 = vmatprep.subr.mxu0 0.0
    %2160 = vmatpush1.msra.mxu0 0.0
    %2161 = vmatprep.subr.mxu0 0.0
    %2162 = vmatpush1.msra.mxu0 0.0
    %2163 = vmatprep.subr.mxu0 0.0
    %2164 = vmatpush1.msra.mxu0 0.0
    %2165 = vmatprep.subr.mxu0 0.0
    %2166 = vmatpush1.msra.mxu0 0.0
    %2167 = vmatprep.subr.mxu0 0.0
    %2168 = vmatpush1.msra.mxu0 0.0
    %2169 = vmatprep.subr.mxu0 0.0
    %2170 = vmatpush1.msra.mxu0 0.0
    %2171 = vmatprep.subr.mxu0 0.0
    %2172 = vmatpush1.msra.mxu0 0.0
    %2173 = vmatprep.subr.mxu0 0.0
    %2174 = vmatpush1.msra.mxu0 0.0
    %2175 = vmatprep.subr.mxu0 0.0
    %2176 = vmatpush1.msra.mxu0 0.0
    %2177 = vmatprep.subr.mxu0 0.0
    %2178 = vmatpush1.msra.mxu0 0.0
    %2179 = vmatprep.mubr.f32.mxu0 0.0
    %2180 = vmatmul.mubr.f32.gmra.mrb[0].mxu0 %v2113
    %v2181 = vpop.f32.mrb[0].mxu0
    %v2182 = vadd.f32 0.0, %v2181
    %v2183 = vpop.f32.mrb[0].mxu0
    %2184 = vdwg.mxu0
    %v2185 = vadd.f32 %v2111, %v2182
    %v2187 = vsel %vm171, %v1960, 0
    %2189 = vmatprep.subr.mxu0 0.0
    %2190 = vmatpush1.msra.mxu0 %v1482
    %2191 = vmatprep.subr.mxu0 0.0
    %2192 = vmatpush1.msra.mxu0 %v1483
    %2193 = vmatprep.subr.mxu0 0.0
    %2194 = vmatpush1.msra.mxu0 0.0
    %2195 = vmatprep.subr.mxu0 0.0
    %2196 = vmatpush1.msra.mxu0 0.0
    %2197 = vmatprep.subr.mxu0 0.0
    %2198 = vmatpush1.msra.mxu0 0.0
    %2199 = vmatprep.subr.mxu0 0.0
    %2200 = vmatpush1.msra.mxu0 0.0
    %2201 = vmatprep.subr.mxu0 0.0
    %2202 = vmatpush1.msra.mxu0 0.0
    %2203 = vmatprep.subr.mxu0 0.0
    %2204 = vmatpush1.msra.mxu0 0.0
    %2205 = vmatprep.subr.mxu0 0.0
    %2206 = vmatpush1.msra.mxu0 0.0
    %2207 = vmatprep.subr.mxu0 0.0
    %2208 = vmatpush1.msra.mxu0 0.0
    %2209 = vmatprep.subr.mxu0 0.0
    %2210 = vmatpush1.msra.mxu0 0.0
    %2211 = vmatprep.subr.mxu0 0.0
    %2212 = vmatpush1.msra.mxu0 0.0
    %2213 = vmatprep.subr.mxu0 0.0
    %2214 = vmatpush1.msra.mxu0 0.0
    %2215 = vmatprep.subr.mxu0 0.0
    %2216 = vmatpush1.msra.mxu0 0.0
    %2217 = vmatprep.subr.mxu0 0.0
    %2218 = vmatpush1.msra.mxu0 0.0
    %2219 = vmatprep.subr.mxu0 0.0
    %2220 = vmatpush1.msra.mxu0 0.0
    %2221 = vmatprep.subr.mxu0 0.0
    %2222 = vmatpush1.msra.mxu0 0.0
    %2223 = vmatprep.subr.mxu0 0.0
    %2224 = vmatpush1.msra.mxu0 0.0
    %2225 = vmatprep.subr.mxu0 0.0
    %2226 = vmatpush1.msra.mxu0 0.0
    %2227 = vmatprep.subr.mxu0 0.0
    %2228 = vmatpush1.msra.mxu0 0.0
    %2229 = vmatprep.subr.mxu0 0.0
    %2230 = vmatpush1.msra.mxu0 0.0
    %2231 = vmatprep.subr.mxu0 0.0
    %2232 = vmatpush1.msra.mxu0 0.0
    %2233 = vmatprep.subr.mxu0 0.0
    %2234 = vmatpush1.msra.mxu0 0.0
    %2235 = vmatprep.subr.mxu0 0.0
    %2236 = vmatpush1.msra.mxu0 0.0
    %2237 = vmatprep.subr.mxu0 0.0
    %2238 = vmatpush1.msra.mxu0 0.0
    %2239 = vmatprep.subr.mxu0 0.0
    %2240 = vmatpush1.msra.mxu0 0.0
    %2241 = vmatprep.subr.mxu0 0.0
    %2242 = vmatpush1.msra.mxu0 0.0
    %2243 = vmatprep.subr.mxu0 0.0
    %2244 = vmatpush1.msra.mxu0 0.0
    %2245 = vmatprep.subr.mxu0 0.0
    %2246 = vmatpush1.msra.mxu0 0.0
    %2247 = vmatprep.subr.mxu0 0.0
    %2248 = vmatpush1.msra.mxu0 0.0
    %2249 = vmatprep.subr.mxu0 0.0
    %2250 = vmatpush1.msra.mxu0 0.0
    %2251 = vmatprep.subr.mxu0 0.0
    %2252 = vmatpush1.msra.mxu0 0.0
    %2253 = vmatprep.mubr.f32.mxu0 0.0
    %2254 = vmatmul.mubr.f32.gmra.mrb[0].mxu0 %v2187
    %v2255 = vpop.f32.mrb[0].mxu0
    %v2256 = vadd.f32 0.0, %v2255
    %v2257 = vpop.f32.mrb[0].mxu0
    %2258 = vdwg.mxu0
    %v2259 = vadd.f32 %v2185, %v2256
    %v2260 = vsel %vm171, %v1877, 0.0
    %v2261 = vrot.slane %v2260, 4
    %v2262 = vadd.f32 %v2260, %v2261
    %v2263 = vrot.slane %v2262, 2
    %v2264 = vadd.f32 %v2262, %v2263
    %v2265 = vrot.slane %v2264, 1
    %v2266 = vadd.f32 %v2264, %v2265
    %v2267 = vsel %vm171, %v2259, 0.0
    %v2268 = vrot.slane %v2267, 4
    %v2269 = vadd.f32 %v2267, %v2268
    %v2270 = vrot.slane %v2269, 2
    %v2271 = vadd.f32 %v2269, %v2270
    %v2272 = vrot.slane %v2271, 1
    %v2273 = vadd.f32 %v2271, %v2272
    %v2274 = vadd.f32 %v2266, %v2273
    %v2275 = vmul.f32 %v2274, 0.0625
    %v2276 = vsub.f32 %v1877, %v2275
    %v2277 = vmul.f32 %v2276, %v2276
    %v2278 = vsel %vm171, %v2277, 0.0
    %v2279 = vrot.slane %v2278, 4
    %v2280 = vadd.f32 %v2278, %v2279
    %v2281 = vrot.slane %v2280, 2
    %v2282 = vadd.f32 %v2280, %v2281
    %v2283 = vrot.slane %v2282, 1
    %v2284 = vadd.f32 %v2282, %v2283
    %v2285 = vsub.f32 %v2259, %v2275
    %v2286 = vmul.f32 %v2285, %v2285
    %v2287 = vsel %vm171, %v2286, 0.0
    %v2288 = vrot.slane %v2287, 4
    %v2289 = vadd.f32 %v2287, %v2288
    %v2290 = vrot.slane %v2289, 2
    %v2291 = vadd.f32 %v2289, %v2290
    %v2292 = vrot.slane %v2291, 1
    %v2293 = vadd.f32 %v2291, %v2292
    %v2294 = vadd.f32 %v2284, %v2293
    %v2295 = vmul.f32 %v2294, 0.0625
    %v2296 = vadd.f32 %v2295, 1e-05
    %v2297 = vrsqrt.pop %v2296
    %v2298 = vld [vmem:[%s21] sm:$0x1]
    %v2299 = vld [vmem:[%s23] sm:$0x1]
    %v2300 = vmul.f32 %v2276, %v2297
    %v2302 = vlaneseq
    %v2303 = vshrl.u32 %v2302, 7
    %v2304 = vsub.s32 0, %v2303
    %v2305 = vrot.slane %v2298, %v2304
    %v2307 = vmul.f32 %v2300, %v2305
    %v2309 = vlaneseq
    %v2310 = vshrl.u32 %v2309, 7
    %v2311 = vsub.s32 0, %v2310
    %v2312 = vrot.slane %v2299, %v2311
    %v2314 = vadd.f32 %v2307, %v2312
    %v2315 = vxor.u32 %v2314, 2147483648
    %v2316 = vmul.f32 %v2315, 1.442695
    %v2317 = vpow.pop %v2316
    %v2318 = vadd.f32 %v2317, 1.0
    %v2319 = vrcp.pop %v2318
    %v2320 = vmul.f32 1.0, %v2319
    %2322 = vrot.lane.b32.xlu0 %v2320, 120
    %v2323 = vpop.permute.xlu0 %2322
    %v2325 = vmul.f32 %v2314, %v2323
    %v2326 = vmul.f32 %v2285, %v2297
    %v2327 = vmul.f32 %v2326, %v2305
    %v2328 = vadd.f32 %v2327, %v2312
    %v2329 = vxor.u32 %v2328, 2147483648
    %v2330 = vmul.f32 %v2329, 1.442695
    %v2331 = vpow.pop %v2330
    %v2332 = vadd.f32 %v2331, 1.0
    %v2333 = vrcp.pop %v2332
    %v2334 = vmul.f32 1.0, %v2333
    %2336 = vrot.lane.b32.xlu0 %v2334, 120
    %v2337 = vpop.permute.xlu0 %2336
    %v2339 = vmul.f32 %v2328, %v2337
    %v2340 = vld [vmem:[%s25] sm:$0xff]
    %v2341 = vld [vmem:[%s25 + $0x8] sm:$0xff]
    %v2342 = vld [vmem:[%s27] sm:$0xff]
    %v2343 = vld [vmem:[%s27 + $0x8] sm:$0xff]
    %v2344 = vld [vmem:[%s27 + $0x10] sm:$0xff]
    %v2345 = vld [vmem:[%s27 + $0x18] sm:$0xff]
    %vm2346 = vcmask 64512
    %v2348 = vsel %vm2346, %v2340, 0
    %v2351 = vsel %vm2346, %v2341, 0
    %2353 = vmatprep.subr.mxu0 0.0
    %2354 = vmatpush1.msra.mxu0 %v2325
    %2355 = vmatprep.subr.mxu0 0.0
    %2356 = vmatpush1.msra.mxu0 0.0
    %2357 = vmatprep.subr.mxu0 0.0
    %2358 = vmatpush1.msra.mxu0 0.0
    %2359 = vmatprep.subr.mxu0 0.0
    %2360 = vmatpush1.msra.mxu0 0.0
    %2361 = vmatprep.subr.mxu0 0.0
    %2362 = vmatpush1.msra.mxu0 0.0
    %2363 = vmatprep.subr.mxu0 0.0
    %2364 = vmatpush1.msra.mxu0 0.0
    %2365 = vmatprep.subr.mxu0 0.0
    %2366 = vmatpush1.msra.mxu0 0.0
    %2367 = vmatprep.subr.mxu0 0.0
    %2368 = vmatpush1.msra.mxu0 0.0
    %2369 = vmatprep.subr.mxu0 0.0
    %2370 = vmatpush1.msra.mxu0 0.0
    %2371 = vmatprep.subr.mxu0 0.0
    %2372 = vmatpush1.msra.mxu0 0.0
    %2373 = vmatprep.subr.mxu0 0.0
    %2374 = vmatpush1.msra.mxu0 0.0
    %2375 = vmatprep.subr.mxu0 0.0
    %2376 = vmatpush1.msra.mxu0 0.0
    %2377 = vmatprep.subr.mxu0 0.0
    %2378 = vmatpush1.msra.mxu0 0.0
    %2379 = vmatprep.subr.mxu0 0.0
    %2380 = vmatpush1.msra.mxu0 0.0
    %2381 = vmatprep.subr.mxu0 0.0
    %2382 = vmatpush1.msra.mxu0 0.0
    %2383 = vmatprep.subr.mxu0 0.0
    %2384 = vmatpush1.msra.mxu0 0.0
    %2385 = vmatprep.subr.mxu0 0.0
    %2386 = vmatpush1.msra.mxu0 0.0
    %2387 = vmatprep.subr.mxu0 0.0
    %2388 = vmatpush1.msra.mxu0 0.0
    %2389 = vmatprep.subr.mxu0 0.0
    %2390 = vmatpush1.msra.mxu0 0.0
    %2391 = vmatprep.subr.mxu0 0.0
    %2392 = vmatpush1.msra.mxu0 0.0
    %2393 = vmatprep.subr.mxu0 0.0
    %2394 = vmatpush1.msra.mxu0 0.0
    %2395 = vmatprep.subr.mxu0 0.0
    %2396 = vmatpush1.msra.mxu0 0.0
    %2397 = vmatprep.subr.mxu0 0.0
    %2398 = vmatpush1.msra.mxu0 0.0
    %2399 = vmatprep.subr.mxu0 0.0
    %2400 = vmatpush1.msra.mxu0 0.0
    %2401 = vmatprep.subr.mxu0 0.0
    %2402 = vmatpush1.msra.mxu0 0.0
    %2403 = vmatprep.subr.mxu0 0.0
    %2404 = vmatpush1.msra.mxu0 0.0
    %2405 = vmatprep.subr.mxu0 0.0
    %2406 = vmatpush1.msra.mxu0 0.0
    %2407 = vmatprep.subr.mxu0 0.0
    %2408 = vmatpush1.msra.mxu0 0.0
    %2409 = vmatprep.subr.mxu0 0.0
    %2410 = vmatpush1.msra.mxu0 0.0
    %2411 = vmatprep.subr.mxu0 0.0
    %2412 = vmatpush1.msra.mxu0 0.0
    %2413 = vmatprep.subr.mxu0 0.0
    %2414 = vmatpush1.msra.mxu0 0.0
    %2415 = vmatprep.subr.mxu0 0.0
    %2416 = vmatpush1.msra.mxu0 0.0
    %2417 = vmatprep.mubr.f32.mxu0 0.0
    %2418 = vmatmul.mubr.f32.gmra.mrb[0].mxu0 %v2348
    %v2419 = vpop.f32.mrb[0].mxu0
    %v2420 = vadd.f32 0.0, %v2419
    %v2421 = vpop.f32.mrb[0].mxu0
    %2422 = vmatprep.mubr.f32.mxu0 0.0
    %2423 = vmatmul.mubr.f32.gmra.mrb[0].mxu0 %v2351
    %v2424 = vpop.f32.mrb[0].mxu0
    %v2425 = vadd.f32 0.0, %v2424
    %v2426 = vpop.f32.mrb[0].mxu0
    %2427 = vdwg.mxu0
    %v2428 = vld [vmem:[%s29] sm:$0xf]
    %v2430 = vsel %vm2346, %v2420, 0
    %2432 = vmatprep.subr.mxu0 0.0
    %2433 = vmatpush1.msra.mxu0 %v2342
    %2434 = vmatprep.subr.mxu0 0.0
    %2435 = vmatpush1.msra.mxu0 0.0
    %2436 = vmatprep.subr.mxu0 0.0
    %2437 = vmatpush1.msra.mxu0 0.0
    %2438 = vmatprep.subr.mxu0 0.0
    %2439 = vmatpush1.msra.mxu0 0.0
    %2440 = vmatprep.subr.mxu0 0.0
    %2441 = vmatpush1.msra.mxu0 0.0
    %2442 = vmatprep.subr.mxu0 0.0
    %2443 = vmatpush1.msra.mxu0 0.0
    %2444 = vmatprep.subr.mxu0 0.0
    %2445 = vmatpush1.msra.mxu0 0.0
    %2446 = vmatprep.subr.mxu0 0.0
    %2447 = vmatpush1.msra.mxu0 0.0
    %2448 = vmatprep.subr.mxu0 0.0
    %2449 = vmatpush1.msra.mxu0 0.0
    %2450 = vmatprep.subr.mxu0 0.0
    %2451 = vmatpush1.msra.mxu0 0.0
    %2452 = vmatprep.subr.mxu0 0.0
    %2453 = vmatpush1.msra.mxu0 0.0
    %2454 = vmatprep.subr.mxu0 0.0
    %2455 = vmatpush1.msra.mxu0 0.0
    %2456 = vmatprep.subr.mxu0 0.0
    %2457 = vmatpush1.msra.mxu0 0.0
    %2458 = vmatprep.subr.mxu0 0.0
    %2459 = vmatpush1.msra.mxu0 0.0
    %2460 = vmatprep.subr.mxu0 0.0
    %2461 = vmatpush1.msra.mxu0 0.0
    %2462 = vmatprep.subr.mxu0 0.0
    %2463 = vmatpush1.msra.mxu0 0.0
    %2464 = vmatprep.subr.mxu0 0.0
    %2465 = vmatpush1.msra.mxu0 0.0
    %2466 = vmatprep.subr.mxu0 0.0
    %2467 = vmatpush1.msra.mxu0 0.0
    %2468 = vmatprep.subr.mxu0 0.0
    %2469 = vmatpush1.msra.mxu0 0.0
    %2470 = vmatprep.subr.mxu0 0.0
    %2471 = vmatpush1.msra.mxu0 0.0
    %2472 = vmatprep.subr.mxu0 0.0
    %2473 = vmatpush1.msra.mxu0 0.0
    %2474 = vmatprep.subr.mxu0 0.0
    %2475 = vmatpush1.msra.mxu0 0.0
    %2476 = vmatprep.subr.mxu0 0.0
    %2477 = vmatpush1.msra.mxu0 0.0
    %2478 = vmatprep.subr.mxu0 0.0
    %2479 = vmatpush1.msra.mxu0 0.0
    %2480 = vmatprep.subr.mxu0 0.0
    %2481 = vmatpush1.msra.mxu0 0.0
    %2482 = vmatprep.subr.mxu0 0.0
    %2483 = vmatpush1.msra.mxu0 0.0
    %2484 = vmatprep.subr.mxu0 0.0
    %2485 = vmatpush1.msra.mxu0 0.0
    %2486 = vmatprep.subr.mxu0 0.0
    %2487 = vmatpush1.msra.mxu0 0.0
    %2488 = vmatprep.subr.mxu0 0.0
    %2489 = vmatpush1.msra.mxu0 0.0
    %2490 = vmatprep.subr.mxu0 0.0
    %2491 = vmatpush1.msra.mxu0 0.0
    %2492 = vmatprep.subr.mxu0 0.0
    %2493 = vmatpush1.msra.mxu0 0.0
    %2494 = vmatprep.subr.mxu0 0.0
    %2495 = vmatpush1.msra.mxu0 0.0
    %2496 = vmatprep.mubr.f32.mxu0 0.0
    %2497 = vmatmul.mubr.f32.gmra.mrb[0].mxu0 %v2430
    %v2498 = vpop.f32.mrb[0].mxu0
    %v2499 = vadd.f32 0.0, %v2498
    %v2500 = vpop.f32.mrb[0].mxu0
    %2501 = vdwg.mxu0
    %v2502 = vadd.f32 %v2428, %v2499
    %v2503 = vrot.slane %v2420, 4
    %v2504 = vsel %vm2346, %v2503, 0
    %2506 = vmatprep.subr.mxu0 0.0
    %2507 = vmatpush1.msra.mxu0 %v2343
    %2508 = vmatprep.subr.mxu0 0.0
    %2509 = vmatpush1.msra.mxu0 0.0
    %2510 = vmatprep.subr.mxu0 0.0
    %2511 = vmatpush1.msra.mxu0 0.0
    %2512 = vmatprep.subr.mxu0 0.0
    %2513 = vmatpush1.msra.mxu0 0.0
    %2514 = vmatprep.subr.mxu0 0.0
    %2515 = vmatpush1.msra.mxu0 0.0
    %2516 = vmatprep.subr.mxu0 0.0
    %2517 = vmatpush1.msra.mxu0 0.0
    %2518 = vmatprep.subr.mxu0 0.0
    %2519 = vmatpush1.msra.mxu0 0.0
    %2520 = vmatprep.subr.mxu0 0.0
    %2521 = vmatpush1.msra.mxu0 0.0
    %2522 = vmatprep.subr.mxu0 0.0
    %2523 = vmatpush1.msra.mxu0 0.0
    %2524 = vmatprep.subr.mxu0 0.0
    %2525 = vmatpush1.msra.mxu0 0.0
    %2526 = vmatprep.subr.mxu0 0.0
    %2527 = vmatpush1.msra.mxu0 0.0
    %2528 = vmatprep.subr.mxu0 0.0
    %2529 = vmatpush1.msra.mxu0 0.0
    %2530 = vmatprep.subr.mxu0 0.0
    %2531 = vmatpush1.msra.mxu0 0.0
    %2532 = vmatprep.subr.mxu0 0.0
    %2533 = vmatpush1.msra.mxu0 0.0
    %2534 = vmatprep.subr.mxu0 0.0
    %2535 = vmatpush1.msra.mxu0 0.0
    %2536 = vmatprep.subr.mxu0 0.0
    %2537 = vmatpush1.msra.mxu0 0.0
    %2538 = vmatprep.subr.mxu0 0.0
    %2539 = vmatpush1.msra.mxu0 0.0
    %2540 = vmatprep.subr.mxu0 0.0
    %2541 = vmatpush1.msra.mxu0 0.0
    %2542 = vmatprep.subr.mxu0 0.0
    %2543 = vmatpush1.msra.mxu0 0.0
    %2544 = vmatprep.subr.mxu0 0.0
    %2545 = vmatpush1.msra.mxu0 0.0
    %2546 = vmatprep.subr.mxu0 0.0
    %2547 = vmatpush1.msra.mxu0 0.0
    %2548 = vmatprep.subr.mxu0 0.0
    %2549 = vmatpush1.msra.mxu0 0.0
    %2550 = vmatprep.subr.mxu0 0.0
    %2551 = vmatpush1.msra.mxu0 0.0
    %2552 = vmatprep.subr.mxu0 0.0
    %2553 = vmatpush1.msra.mxu0 0.0
    %2554 = vmatprep.subr.mxu0 0.0
    %2555 = vmatpush1.msra.mxu0 0.0
    %2556 = vmatprep.subr.mxu0 0.0
    %2557 = vmatpush1.msra.mxu0 0.0
    %2558 = vmatprep.subr.mxu0 0.0
    %2559 = vmatpush1.msra.mxu0 0.0
    %2560 = vmatprep.subr.mxu0 0.0
    %2561 = vmatpush1.msra.mxu0 0.0
    %2562 = vmatprep.subr.mxu0 0.0
    %2563 = vmatpush1.msra.mxu0 0.0
    %2564 = vmatprep.subr.mxu0 0.0
    %2565 = vmatpush1.msra.mxu0 0.0
    %2566 = vmatprep.subr.mxu0 0.0
    %2567 = vmatpush1.msra.mxu0 0.0
    %2568 = vmatprep.subr.mxu0 0.0
    %2569 = vmatpush1.msra.mxu0 0.0
    %2570 = vmatprep.mubr.f32.mxu0 0.0
    %2571 = vmatmul.mubr.f32.gmra.mrb[0].mxu0 %v2504
    %v2572 = vpop.f32.mrb[0].mxu0
    %v2573 = vadd.f32 0.0, %v2572
    %v2574 = vpop.f32.mrb[0].mxu0
    %2575 = vdwg.mxu0
    %v2576 = vadd.f32 %v2502, %v2573
    %v2578 = vsel %vm2346, %v2425, 0
    %2580 = vmatprep.subr.mxu0 0.0
    %2581 = vmatpush1.msra.mxu0 %v2344
    %2582 = vmatprep.subr.mxu0 0.0
    %2583 = vmatpush1.msra.mxu0 0.0
    %2584 = vmatprep.subr.mxu0 0.0
    %2585 = vmatpush1.msra.mxu0 0.0
    %2586 = vmatprep.subr.mxu0 0.0
    %2587 = vmatpush1.msra.mxu0 0.0
    %2588 = vmatprep.subr.mxu0 0.0
    %2589 = vmatpush1.msra.mxu0 0.0
    %2590 = vmatprep.subr.mxu0 0.0
    %2591 = vmatpush1.msra.mxu0 0.0
    %2592 = vmatprep.subr.mxu0 0.0
    %2593 = vmatpush1.msra.mxu0 0.0
    %2594 = vmatprep.subr.mxu0 0.0
    %2595 = vmatpush1.msra.mxu0 0.0
    %2596 = vmatprep.subr.mxu0 0.0
    %2597 = vmatpush1.msra.mxu0 0.0
    %2598 = vmatprep.subr.mxu0 0.0
    %2599 = vmatpush1.msra.mxu0 0.0
    %2600 = vmatprep.subr.mxu0 0.0
    %2601 = vmatpush1.msra.mxu0 0.0
    %2602 = vmatprep.subr.mxu0 0.0
    %2603 = vmatpush1.msra.mxu0 0.0
    %2604 = vmatprep.subr.mxu0 0.0
    %2605 = vmatpush1.msra.mxu0 0.0
    %2606 = vmatprep.subr.mxu0 0.0
    %2607 = vmatpush1.msra.mxu0 0.0
    %2608 = vmatprep.subr.mxu0 0.0
    %2609 = vmatpush1.msra.mxu0 0.0
    %2610 = vmatprep.subr.mxu0 0.0
    %2611 = vmatpush1.msra.mxu0 0.0
    %2612 = vmatprep.subr.mxu0 0.0
    %2613 = vmatpush1.msra.mxu0 0.0
    %2614 = vmatprep.subr.mxu0 0.0
    %2615 = vmatpush1.msra.mxu0 0.0
    %2616 = vmatprep.subr.mxu0 0.0
    %2617 = vmatpush1.msra.mxu0 0.0
    %2618 = vmatprep.subr.mxu0 0.0
    %2619 = vmatpush1.msra.mxu0 0.0
    %2620 = vmatprep.subr.mxu0 0.0
    %2621 = vmatpush1.msra.mxu0 0.0
    %2622 = vmatprep.subr.mxu0 0.0
    %2623 = vmatpush1.msra.mxu0 0.0
    %2624 = vmatprep.subr.mxu0 0.0
    %2625 = vmatpush1.msra.mxu0 0.0
    %2626 = vmatprep.subr.mxu0 0.0
    %2627 = vmatpush1.msra.mxu0 0.0
    %2628 = vmatprep.subr.mxu0 0.0
    %2629 = vmatpush1.msra.mxu0 0.0
    %2630 = vmatprep.subr.mxu0 0.0
    %2631 = vmatpush1.msra.mxu0 0.0
    %2632 = vmatprep.subr.mxu0 0.0
    %2633 = vmatpush1.msra.mxu0 0.0
    %2634 = vmatprep.subr.mxu0 0.0
    %2635 = vmatpush1.msra.mxu0 0.0
    %2636 = vmatprep.subr.mxu0 0.0
    %2637 = vmatpush1.msra.mxu0 0.0
    %2638 = vmatprep.subr.mxu0 0.0
    %2639 = vmatpush1.msra.mxu0 0.0
    %2640 = vmatprep.subr.mxu0 0.0
    %2641 = vmatpush1.msra.mxu0 0.0
    %2642 = vmatprep.subr.mxu0 0.0
    %2643 = vmatpush1.msra.mxu0 0.0
    %2644 = vmatprep.mubr.f32.mxu0 0.0
    %2645 = vmatmul.mubr.f32.gmra.mrb[0].mxu0 %v2578
    %v2646 = vpop.f32.mrb[0].mxu0
    %v2647 = vadd.f32 0.0, %v2646
    %v2648 = vpop.f32.mrb[0].mxu0
    %2649 = vdwg.mxu0
    %v2650 = vadd.f32 %v2576, %v2647
    %v2651 = vrot.slane %v2425, 4
    %v2652 = vsel %vm2346, %v2651, 0
    %2654 = vmatprep.subr.mxu0 0.0
    %2655 = vmatpush1.msra.mxu0 %v2345
    %2656 = vmatprep.subr.mxu0 0.0
    %2657 = vmatpush1.msra.mxu0 0.0
    %2658 = vmatprep.subr.mxu0 0.0
    %2659 = vmatpush1.msra.mxu0 0.0
    %2660 = vmatprep.subr.mxu0 0.0
    %2661 = vmatpush1.msra.mxu0 0.0
    %2662 = vmatprep.subr.mxu0 0.0
    %2663 = vmatpush1.msra.mxu0 0.0
    %2664 = vmatprep.subr.mxu0 0.0
    %2665 = vmatpush1.msra.mxu0 0.0
    %2666 = vmatprep.subr.mxu0 0.0
    %2667 = vmatpush1.msra.mxu0 0.0
    %2668 = vmatprep.subr.mxu0 0.0
    %2669 = vmatpush1.msra.mxu0 0.0
    %2670 = vmatprep.subr.mxu0 0.0
    %2671 = vmatpush1.msra.mxu0 0.0
    %2672 = vmatprep.subr.mxu0 0.0
    %2673 = vmatpush1.msra.mxu0 0.0
    %2674 = vmatprep.subr.mxu0 0.0
    %2675 = vmatpush1.msra.mxu0 0.0
    %2676 = vmatprep.subr.mxu0 0.0
    %2677 = vmatpush1.msra.mxu0 0.0
    %2678 = vmatprep.subr.mxu0 0.0
    %2679 = vmatpush1.msra.mxu0 0.0
    %2680 = vmatprep.subr.mxu0 0.0
    %2681 = vmatpush1.msra.mxu0 0.0
    %2682 = vmatprep.subr.mxu0 0.0
    %2683 = vmatpush1.msra.mxu0 0.0
    %2684 = vmatprep.subr.mxu0 0.0
    %2685 = vmatpush1.msra.mxu0 0.0
    %2686 = vmatprep.subr.mxu0 0.0
    %2687 = vmatpush1.msra.mxu0 0.0
    %2688 = vmatprep.subr.mxu0 0.0
    %2689 = vmatpush1.msra.mxu0 0.0
    %2690 = vmatprep.subr.mxu0 0.0
    %2691 = vmatpush1.msra.mxu0 0.0
    %2692 = vmatprep.subr.mxu0 0.0
    %2693 = vmatpush1.msra.mxu0 0.0
    %2694 = vmatprep.subr.mxu0 0.0
    %2695 = vmatpush1.msra.mxu0 0.0
    %2696 = vmatprep.subr.mxu0 0.0
    %2697 = vmatpush1.msra.mxu0 0.0
    %2698 = vmatprep.subr.mxu0 0.0
    %2699 = vmatpush1.msra.mxu0 0.0
    %2700 = vmatprep.subr.mxu0 0.0
    %2701 = vmatpush1.msra.mxu0 0.0
    %2702 = vmatprep.subr.mxu0 0.0
    %2703 = vmatpush1.msra.mxu0 0.0
    %2704 = vmatprep.subr.mxu0 0.0
    %2705 = vmatpush1.msra.mxu0 0.0
    %2706 = vmatprep.subr.mxu0 0.0
    %2707 = vmatpush1.msra.mxu0 0.0
    %2708 = vmatprep.subr.mxu0 0.0
    %2709 = vmatpush1.msra.mxu0 0.0
    %2710 = vmatprep.subr.mxu0 0.0
    %2711 = vmatpush1.msra.mxu0 0.0
    %2712 = vmatprep.subr.mxu0 0.0
    %2713 = vmatpush1.msra.mxu0 0.0
    %2714 = vmatprep.subr.mxu0 0.0
    %2715 = vmatpush1.msra.mxu0 0.0
    %2716 = vmatprep.subr.mxu0 0.0
    %2717 = vmatpush1.msra.mxu0 0.0
    %2718 = vmatprep.mubr.f32.mxu0 0.0
    %2719 = vmatmul.mubr.f32.gmra.mrb[0].mxu0 %v2652
    %v2720 = vpop.f32.mrb[0].mxu0
    %v2721 = vadd.f32 0.0, %v2720
    %v2722 = vpop.f32.mrb[0].mxu0
    %2723 = vdwg.mxu0
    %v2724 = vadd.f32 %v2650, %v2721
    %2725 = vmatprep.subr.mxu0 0.0
    %2726 = vmatpush1.msra.mxu0 %v2339
    %2727 = vmatprep.subr.mxu0 0.0
    %2728 = vmatpush1.msra.mxu0 0.0
    %2729 = vmatprep.subr.mxu0 0.0
    %2730 = vmatpush1.msra.mxu0 0.0
    %2731 = vmatprep.subr.mxu0 0.0
    %2732 = vmatpush1.msra.mxu0 0.0
    %2733 = vmatprep.subr.mxu0 0.0
    %2734 = vmatpush1.msra.mxu0 0.0
    %2735 = vmatprep.subr.mxu0 0.0
    %2736 = vmatpush1.msra.mxu0 0.0
    %2737 = vmatprep.subr.mxu0 0.0
    %2738 = vmatpush1.msra.mxu0 0.0
    %2739 = vmatprep.subr.mxu0 0.0
    %2740 = vmatpush1.msra.mxu0 0.0
    %2741 = vmatprep.subr.mxu0 0.0
    %2742 = vmatpush1.msra.mxu0 0.0
    %2743 = vmatprep.subr.mxu0 0.0
    %2744 = vmatpush1.msra.mxu0 0.0
    %2745 = vmatprep.subr.mxu0 0.0
    %2746 = vmatpush1.msra.mxu0 0.0
    %2747 = vmatprep.subr.mxu0 0.0
    %2748 = vmatpush1.msra.mxu0 0.0
    %2749 = vmatprep.subr.mxu0 0.0
    %2750 = vmatpush1.msra.mxu0 0.0
    %2751 = vmatprep.subr.mxu0 0.0
    %2752 = vmatpush1.msra.mxu0 0.0
    %2753 = vmatprep.subr.mxu0 0.0
    %2754 = vmatpush1.msra.mxu0 0.0
    %2755 = vmatprep.subr.mxu0 0.0
    %2756 = vmatpush1.msra.mxu0 0.0
    %2757 = vmatprep.subr.mxu0 0.0
    %2758 = vmatpush1.msra.mxu0 0.0
    %2759 = vmatprep.subr.mxu0 0.0
    %2760 = vmatpush1.msra.mxu0 0.0
    %2761 = vmatprep.subr.mxu0 0.0
    %2762 = vmatpush1.msra.mxu0 0.0
    %2763 = vmatprep.subr.mxu0 0.0
    %2764 = vmatpush1.msra.mxu0 0.0
    %2765 = vmatprep.subr.mxu0 0.0
    %2766 = vmatpush1.msra.mxu0 0.0
    %2767 = vmatprep.subr.mxu0 0.0
    %2768 = vmatpush1.msra.mxu0 0.0
    %2769 = vmatprep.subr.mxu0 0.0
    %2770 = vmatpush1.msra.mxu0 0.0
    %2771 = vmatprep.subr.mxu0 0.0
    %2772 = vmatpush1.msra.mxu0 0.0
    %2773 = vmatprep.subr.mxu0 0.0
    %2774 = vmatpush1.msra.mxu0 0.0
    %2775 = vmatprep.subr.mxu0 0.0
    %2776 = vmatpush1.msra.mxu0 0.0
    %2777 = vmatprep.subr.mxu0 0.0
    %2778 = vmatpush1.msra.mxu0 0.0
    %2779 = vmatprep.subr.mxu0 0.0
    %2780 = vmatpush1.msra.mxu0 0.0
    %2781 = vmatprep.subr.mxu0 0.0
    %2782 = vmatpush1.msra.mxu0 0.0
    %2783 = vmatprep.subr.mxu0 0.0
    %2784 = vmatpush1.msra.mxu0 0.0
    %2785 = vmatprep.subr.mxu0 0.0
    %2786 = vmatpush1.msra.mxu0 0.0
    %2787 = vmatprep.subr.mxu0 0.0
    %2788 = vmatpush1.msra.mxu0 0.0
    %2789 = vmatprep.mubr.f32.mxu0 0.0
    %2790 = vmatmul.mubr.f32.gmra.mrb[0].mxu0 %v2348
    %v2791 = vpop.f32.mrb[0].mxu0
    %v2792 = vadd.f32 0.0, %v2791
    %v2793 = vpop.f32.mrb[0].mxu0
    %2794 = vmatprep.mubr.f32.mxu0 0.0
    %2795 = vmatmul.mubr.f32.gmra.mrb[0].mxu0 %v2351
    %v2796 = vpop.f32.mrb[0].mxu0
    %v2797 = vadd.f32 0.0, %v2796
    %v2798 = vpop.f32.mrb[0].mxu0
    %2799 = vdwg.mxu0
    %v2800 = vld [vmem:[%s29 + $0x4] sm:$0xf]
    %v2802 = vsel %vm2346, %v2792, 0
    %2804 = vmatprep.subr.mxu0 0.0
    %2805 = vmatpush1.msra.mxu0 %v2342
    %2806 = vmatprep.subr.mxu0 0.0
    %2807 = vmatpush1.msra.mxu0 0.0
    %2808 = vmatprep.subr.mxu0 0.0
    %2809 = vmatpush1.msra.mxu0 0.0
    %2810 = vmatprep.subr.mxu0 0.0
    %2811 = vmatpush1.msra.mxu0 0.0
    %2812 = vmatprep.subr.mxu0 0.0
    %2813 = vmatpush1.msra.mxu0 0.0
    %2814 = vmatprep.subr.mxu0 0.0
    %2815 = vmatpush1.msra.mxu0 0.0
    %2816 = vmatprep.subr.mxu0 0.0
    %2817 = vmatpush1.msra.mxu0 0.0
    %2818 = vmatprep.subr.mxu0 0.0
    %2819 = vmatpush1.msra.mxu0 0.0
    %2820 = vmatprep.subr.mxu0 0.0
    %2821 = vmatpush1.msra.mxu0 0.0
    %2822 = vmatprep.subr.mxu0 0.0
    %2823 = vmatpush1.msra.mxu0 0.0
    %2824 = vmatprep.subr.mxu0 0.0
    %2825 = vmatpush1.msra.mxu0 0.0
    %2826 = vmatprep.subr.mxu0 0.0
    %2827 = vmatpush1.msra.mxu0 0.0
    %2828 = vmatprep.subr.mxu0 0.0
    %2829 = vmatpush1.msra.mxu0 0.0
    %2830 = vmatprep.subr.mxu0 0.0
    %2831 = vmatpush1.msra.mxu0 0.0
    %2832 = vmatprep.subr.mxu0 0.0
    %2833 = vmatpush1.msra.mxu0 0.0
    %2834 = vmatprep.subr.mxu0 0.0
    %2835 = vmatpush1.msra.mxu0 0.0
    %2836 = vmatprep.subr.mxu0 0.0
    %2837 = vmatpush1.msra.mxu0 0.0
    %2838 = vmatprep.subr.mxu0 0.0
    %2839 = vmatpush1.msra.mxu0 0.0
    %2840 = vmatprep.subr.mxu0 0.0
    %2841 = vmatpush1.msra.mxu0 0.0
    %2842 = vmatprep.subr.mxu0 0.0
    %2843 = vmatpush1.msra.mxu0 0.0
    %2844 = vmatprep.subr.mxu0 0.0
    %2845 = vmatpush1.msra.mxu0 0.0
    %2846 = vmatprep.subr.mxu0 0.0
    %2847 = vmatpush1.msra.mxu0 0.0
    %2848 = vmatprep.subr.mxu0 0.0
    %2849 = vmatpush1.msra.mxu0 0.0
    %2850 = vmatprep.subr.mxu0 0.0
    %2851 = vmatpush1.msra.mxu0 0.0
    %2852 = vmatprep.subr.mxu0 0.0
    %2853 = vmatpush1.msra.mxu0 0.0
    %2854 = vmatprep.subr.mxu0 0.0
    %2855 = vmatpush1.msra.mxu0 0.0
    %2856 = vmatprep.subr.mxu0 0.0
    %2857 = vmatpush1.msra.mxu0 0.0
    %2858 = vmatprep.subr.mxu0 0.0
    %2859 = vmatpush1.msra.mxu0 0.0
    %2860 = vmatprep.subr.mxu0 0.0
    %2861 = vmatpush1.msra.mxu0 0.0
    %2862 = vmatprep.subr.mxu0 0.0
    %2863 = vmatpush1.msra.mxu0 0.0
    %2864 = vmatprep.subr.mxu0 0.0
    %2865 = vmatpush1.msra.mxu0 0.0
    %2866 = vmatprep.subr.mxu0 0.0
    %2867 = vmatpush1.msra.mxu0 0.0
    %2868 = vmatprep.mubr.f32.mxu0 0.0
    %2869 = vmatmul.mubr.f32.gmra.mrb[0].mxu0 %v2802
    %v2870 = vpop.f32.mrb[0].mxu0
    %v2871 = vadd.f32 0.0, %v2870
    %v2872 = vpop.f32.mrb[0].mxu0
    %2873 = vdwg.mxu0
    %v2874 = vadd.f32 %v2800, %v2871
    %v2875 = vrot.slane %v2792, 4
    %v2876 = vsel %vm2346, %v2875, 0
    %2878 = vmatprep.subr.mxu0 0.0
    %2879 = vmatpush1.msra.mxu0 %v2343
    %2880 = vmatprep.subr.mxu0 0.0
    %2881 = vmatpush1.msra.mxu0 0.0
    %2882 = vmatprep.subr.mxu0 0.0
    %2883 = vmatpush1.msra.mxu0 0.0
    %2884 = vmatprep.subr.mxu0 0.0
    %2885 = vmatpush1.msra.mxu0 0.0
    %2886 = vmatprep.subr.mxu0 0.0
    %2887 = vmatpush1.msra.mxu0 0.0
    %2888 = vmatprep.subr.mxu0 0.0
    %2889 = vmatpush1.msra.mxu0 0.0
    %2890 = vmatprep.subr.mxu0 0.0
    %2891 = vmatpush1.msra.mxu0 0.0
    %2892 = vmatprep.subr.mxu0 0.0
    %2893 = vmatpush1.msra.mxu0 0.0
    %2894 = vmatprep.subr.mxu0 0.0
    %2895 = vmatpush1.msra.mxu0 0.0
    %2896 = vmatprep.subr.mxu0 0.0
    %2897 = vmatpush1.msra.mxu0 0.0
    %2898 = vmatprep.subr.mxu0 0.0
    %2899 = vmatpush1.msra.mxu0 0.0
    %2900 = vmatprep.subr.mxu0 0.0
    %2901 = vmatpush1.msra.mxu0 0.0
    %2902 = vmatprep.subr.mxu0 0.0
    %2903 = vmatpush1.msra.mxu0 0.0
    %2904 = vmatprep.subr.mxu0 0.0
    %2905 = vmatpush1.msra.mxu0 0.0
    %2906 = vmatprep.subr.mxu0 0.0
    %2907 = vmatpush1.msra.mxu0 0.0
    %2908 = vmatprep.subr.mxu0 0.0
    %2909 = vmatpush1.msra.mxu0 0.0
    %2910 = vmatprep.subr.mxu0 0.0
    %2911 = vmatpush1.msra.mxu0 0.0
    %2912 = vmatprep.subr.mxu0 0.0
    %2913 = vmatpush1.msra.mxu0 0.0
    %2914 = vmatprep.subr.mxu0 0.0
    %2915 = vmatpush1.msra.mxu0 0.0
    %2916 = vmatprep.subr.mxu0 0.0
    %2917 = vmatpush1.msra.mxu0 0.0
    %2918 = vmatprep.subr.mxu0 0.0
    %2919 = vmatpush1.msra.mxu0 0.0
    %2920 = vmatprep.subr.mxu0 0.0
    %2921 = vmatpush1.msra.mxu0 0.0
    %2922 = vmatprep.subr.mxu0 0.0
    %2923 = vmatpush1.msra.mxu0 0.0
    %2924 = vmatprep.subr.mxu0 0.0
    %2925 = vmatpush1.msra.mxu0 0.0
    %2926 = vmatprep.subr.mxu0 0.0
    %2927 = vmatpush1.msra.mxu0 0.0
    %2928 = vmatprep.subr.mxu0 0.0
    %2929 = vmatpush1.msra.mxu0 0.0
    %2930 = vmatprep.subr.mxu0 0.0
    %2931 = vmatpush1.msra.mxu0 0.0
    %2932 = vmatprep.subr.mxu0 0.0
    %2933 = vmatpush1.msra.mxu0 0.0
    %2934 = vmatprep.subr.mxu0 0.0
    %2935 = vmatpush1.msra.mxu0 0.0
    %2936 = vmatprep.subr.mxu0 0.0
    %2937 = vmatpush1.msra.mxu0 0.0
    %2938 = vmatprep.subr.mxu0 0.0
    %2939 = vmatpush1.msra.mxu0 0.0
    %2940 = vmatprep.subr.mxu0 0.0
    %2941 = vmatpush1.msra.mxu0 0.0
    %2942 = vmatprep.mubr.f32.mxu0 0.0
    %2943 = vmatmul.mubr.f32.gmra.mrb[0].mxu0 %v2876
    %v2944 = vpop.f32.mrb[0].mxu0
    %v2945 = vadd.f32 0.0, %v2944
    %v2946 = vpop.f32.mrb[0].mxu0
    %2947 = vdwg.mxu0
    %v2948 = vadd.f32 %v2874, %v2945
    %v2950 = vsel %vm2346, %v2797, 0
    %2952 = vmatprep.subr.mxu0 0.0
    %2953 = vmatpush1.msra.mxu0 %v2344
    %2954 = vmatprep.subr.mxu0 0.0
    %2955 = vmatpush1.msra.mxu0 0.0
    %2956 = vmatprep.subr.mxu0 0.0
    %2957 = vmatpush1.msra.mxu0 0.0
    %2958 = vmatprep.subr.mxu0 0.0
    %2959 = vmatpush1.msra.mxu0 0.0
    %2960 = vmatprep.subr.mxu0 0.0
    %2961 = vmatpush1.msra.mxu0 0.0
    %2962 = vmatprep.subr.mxu0 0.0
    %2963 = vmatpush1.msra.mxu0 0.0
    %2964 = vmatprep.subr.mxu0 0.0
    %2965 = vmatpush1.msra.mxu0 0.0
    %2966 = vmatprep.subr.mxu0 0.0
    %2967 = vmatpush1.msra.mxu0 0.0
    %2968 = vmatprep.subr.mxu0 0.0
    %2969 = vmatpush1.msra.mxu0 0.0
    %2970 = vmatprep.subr.mxu0 0.0
    %2971 = vmatpush1.msra.mxu0 0.0
    %2972 = vmatprep.subr.mxu0 0.0
    %2973 = vmatpush1.msra.mxu0 0.0
    %2974 = vmatprep.subr.mxu0 0.0
    %2975 = vmatpush1.msra.mxu0 0.0
    %2976 = vmatprep.subr.mxu0 0.0
    %2977 = vmatpush1.msra.mxu0 0.0
    %2978 = vmatprep.subr.mxu0 0.0
    %2979 = vmatpush1.msra.mxu0 0.0
    %2980 = vmatprep.subr.mxu0 0.0
    %2981 = vmatpush1.msra.mxu0 0.0
    %2982 = vmatprep.subr.mxu0 0.0
    %2983 = vmatpush1.msra.mxu0 0.0
    %2984 = vmatprep.subr.mxu0 0.0
    %2985 = vmatpush1.msra.mxu0 0.0
    %2986 = vmatprep.subr.mxu0 0.0
    %2987 = vmatpush1.msra.mxu0 0.0
    %2988 = vmatprep.subr.mxu0 0.0
    %2989 = vmatpush1.msra.mxu0 0.0
    %2990 = vmatprep.subr.mxu0 0.0
    %2991 = vmatpush1.msra.mxu0 0.0
    %2992 = vmatprep.subr.mxu0 0.0
    %2993 = vmatpush1.msra.mxu0 0.0
    %2994 = vmatprep.subr.mxu0 0.0
    %2995 = vmatpush1.msra.mxu0 0.0
    %2996 = vmatprep.subr.mxu0 0.0
    %2997 = vmatpush1.msra.mxu0 0.0
    %2998 = vmatprep.subr.mxu0 0.0
    %2999 = vmatpush1.msra.mxu0 0.0
    %3000 = vmatprep.subr.mxu0 0.0
    %3001 = vmatpush1.msra.mxu0 0.0
    %3002 = vmatprep.subr.mxu0 0.0
    %3003 = vmatpush1.msra.mxu0 0.0
    %3004 = vmatprep.subr.mxu0 0.0
    %3005 = vmatpush1.msra.mxu0 0.0
    %3006 = vmatprep.subr.mxu0 0.0
    %3007 = vmatpush1.msra.mxu0 0.0
    %3008 = vmatprep.subr.mxu0 0.0
    %3009 = vmatpush1.msra.mxu0 0.0
    %3010 = vmatprep.subr.mxu0 0.0
    %3011 = vmatpush1.msra.mxu0 0.0
    %3012 = vmatprep.subr.mxu0 0.0
    %3013 = vmatpush1.msra.mxu0 0.0
    %3014 = vmatprep.subr.mxu0 0.0
    %3015 = vmatpush1.msra.mxu0 0.0
    %3016 = vmatprep.mubr.f32.mxu0 0.0
    %3017 = vmatmul.mubr.f32.gmra.mrb[0].mxu0 %v2950
    %v3018 = vpop.f32.mrb[0].mxu0
    %v3019 = vadd.f32 0.0, %v3018
    %v3020 = vpop.f32.mrb[0].mxu0
    %3021 = vdwg.mxu0
    %v3022 = vadd.f32 %v2948, %v3019
    %v3023 = vrot.slane %v2797, 4
    %v3024 = vsel %vm2346, %v3023, 0
    %3026 = vmatprep.subr.mxu0 0.0
    %3027 = vmatpush1.msra.mxu0 %v2345
    %3028 = vmatprep.subr.mxu0 0.0
    %3029 = vmatpush1.msra.mxu0 0.0
    %3030 = vmatprep.subr.mxu0 0.0
    %3031 = vmatpush1.msra.mxu0 0.0
    %3032 = vmatprep.subr.mxu0 0.0
    %3033 = vmatpush1.msra.mxu0 0.0
    %3034 = vmatprep.subr.mxu0 0.0
    %3035 = vmatpush1.msra.mxu0 0.0
    %3036 = vmatprep.subr.mxu0 0.0
    %3037 = vmatpush1.msra.mxu0 0.0
    %3038 = vmatprep.subr.mxu0 0.0
    %3039 = vmatpush1.msra.mxu0 0.0
    %3040 = vmatprep.subr.mxu0 0.0
    %3041 = vmatpush1.msra.mxu0 0.0
    %3042 = vmatprep.subr.mxu0 0.0
    %3043 = vmatpush1.msra.mxu0 0.0
    %3044 = vmatprep.subr.mxu0 0.0
    %3045 = vmatpush1.msra.mxu0 0.0
    %3046 = vmatprep.subr.mxu0 0.0
    %3047 = vmatpush1.msra.mxu0 0.0
    %3048 = vmatprep.subr.mxu0 0.0
    %3049 = vmatpush1.msra.mxu0 0.0
    %3050 = vmatprep.subr.mxu0 0.0
    %3051 = vmatpush1.msra.mxu0 0.0
    %3052 = vmatprep.subr.mxu0 0.0
    %3053 = vmatpush1.msra.mxu0 0.0
    %3054 = vmatprep.subr.mxu0 0.0
    %3055 = vmatpush1.msra.mxu0 0.0
    %3056 = vmatprep.subr.mxu0 0.0
    %3057 = vmatpush1.msra.mxu0 0.0
    %3058 = vmatprep.subr.mxu0 0.0
    %3059 = vmatpush1.msra.mxu0 0.0
    %3060 = vmatprep.subr.mxu0 0.0
    %3061 = vmatpush1.msra.mxu0 0.0
    %3062 = vmatprep.subr.mxu0 0.0
    %3063 = vmatpush1.msra.mxu0 0.0
    %3064 = vmatprep.subr.mxu0 0.0
    %3065 = vmatpush1.msra.mxu0 0.0
    %3066 = vmatprep.subr.mxu0 0.0
    %3067 = vmatpush1.msra.mxu0 0.0
    %3068 = vmatprep.subr.mxu0 0.0
    %3069 = vmatpush1.msra.mxu0 0.0
    %3070 = vmatprep.subr.mxu0 0.0
    %3071 = vmatpush1.msra.mxu0 0.0
    %3072 = vmatprep.subr.mxu0 0.0
    %3073 = vmatpush1.msra.mxu0 0.0
    %3074 = vmatprep.subr.mxu0 0.0
    %3075 = vmatpush1.msra.mxu0 0.0
    %3076 = vmatprep.subr.mxu0 0.0
    %3077 = vmatpush1.msra.mxu0 0.0
    %3078 = vmatprep.subr.mxu0 0.0
    %3079 = vmatpush1.msra.mxu0 0.0
    %3080 = vmatprep.subr.mxu0 0.0
    %3081 = vmatpush1.msra.mxu0 0.0
    %3082 = vmatprep.subr.mxu0 0.0
    %3083 = vmatpush1.msra.mxu0 0.0
    %3084 = vmatprep.subr.mxu0 0.0
    %3085 = vmatpush1.msra.mxu0 0.0
    %3086 = vmatprep.subr.mxu0 0.0
    %3087 = vmatpush1.msra.mxu0 0.0
    %3088 = vmatprep.subr.mxu0 0.0
    %3089 = vmatpush1.msra.mxu0 0.0
    %3090 = vmatprep.mubr.f32.mxu0 0.0
    %3091 = vmatmul.mubr.f32.gmra.mrb[0].mxu0 %v3024
    %v3092 = vpop.f32.mrb[0].mxu0
    %v3093 = vadd.f32 0.0, %v3092
    %v3094 = vpop.f32.mrb[0].mxu0
    %3095 = vdwg.mxu0
    %v3096 = vadd.f32 %v3022, %v3093
    %vm3097 = vcmask 27648
    %3098 = vst.msk [vmem:[%s59] sm:$0xf] %vm3097, %v2724
    %3100 = vrot.lane.b32.xlu0 %v2724, 124
    %v3101 = vpop.permute.xlu0 %3100
    %3103 = vst.msk [vmem:[%s61] sm:$0xf] %vm3097, %v3101
    %v3104 = vld [vmem:[%s3] sm:$0xf]
    %v3105 = vmul.f32 %v2724, 0.5
    %v3106 = vmul.f32 %v3105, 1.442695
    %v3107 = vpow.pop %v3106
    %3109 = vrot.lane.b32.xlu0 %v3107, 124
    %v3110 = vpop.permute.xlu0 %3109
    %v3112 = vmul.f32 %v3104, %v3110
    %v3113 = vadd.f32 %v2724, %v3112
    %3114 = vst.msk [vmem:[%s59 + $0x4] sm:$0xf] %vm3097, %v3096
    %3116 = vrot.lane.b32.xlu0 %v3096, 124
    %v3117 = vpop.permute.xlu0 %3116
    %3119 = vst.msk [vmem:[%s61 + $0x4] sm:$0xf] %vm3097, %v3117
    %v3120 = vld [vmem:[%s3 + $0x4] sm:$0xf]
    %v3121 = vmul.f32 %v3096, 0.5
    %v3122 = vmul.f32 %v3121, 1.442695
    %v3123 = vpow.pop %v3122
    %3125 = vrot.lane.b32.xlu0 %v3123, 124
    %v3126 = vpop.permute.xlu0 %3125
    %v3128 = vmul.f32 %v3120, %v3126
    %v3129 = vadd.f32 %v3096, %v3128
    %v3130 = vld [vmem:[%s31] sm:$0xff]
    %v3131 = vld [vmem:[%s31 + $0x8] sm:$0xff]
    %v3132 = vld [vmem:[%s31 + $0x10] sm:$0xff]
    %v3133 = vld [vmem:[%s31 + $0x18] sm:$0xff]
    %v3134 = vld [vmem:[%s33] sm:$0xff]
    %v3135 = vld [vmem:[%s33 + $0x8] sm:$0xff]
    %vm3136 = vcmask 31744
    %v3138 = vsel %vm3136, %v3130, 0
    %v3141 = vsel %vm3136, %v3131, 0
    %v3144 = vsel %vm3136, %v3132, 0
    %v3147 = vsel %vm3136, %v3133, 0
    %v3150 = vsel %vm720, %v3113, 0
    %3152 = vmatprep.subr.mxu0 0.0
    %3153 = vmatpush1.msra.mxu0 %v3150
    %3154 = vmatprep.subr.mxu0 0.0
    %3155 = vmatpush1.msra.mxu0 0.0
    %3156 = vmatprep.subr.mxu0 0.0
    %3157 = vmatpush1.msra.mxu0 0.0
    %3158 = vmatprep.subr.mxu0 0.0
    %3159 = vmatpush1.msra.mxu0 0.0
    %3160 = vmatprep.subr.mxu0 0.0
    %3161 = vmatpush1.msra.mxu0 0.0
    %3162 = vmatprep.subr.mxu0 0.0
    %3163 = vmatpush1.msra.mxu0 0.0
    %3164 = vmatprep.subr.mxu0 0.0
    %3165 = vmatpush1.msra.mxu0 0.0
    %3166 = vmatprep.subr.mxu0 0.0
    %3167 = vmatpush1.msra.mxu0 0.0
    %3168 = vmatprep.subr.mxu0 0.0
    %3169 = vmatpush1.msra.mxu0 0.0
    %3170 = vmatprep.subr.mxu0 0.0
    %3171 = vmatpush1.msra.mxu0 0.0
    %3172 = vmatprep.subr.mxu0 0.0
    %3173 = vmatpush1.msra.mxu0 0.0
    %3174 = vmatprep.subr.mxu0 0.0
    %3175 = vmatpush1.msra.mxu0 0.0
    %3176 = vmatprep.subr.mxu0 0.0
    %3177 = vmatpush1.msra.mxu0 0.0
    %3178 = vmatprep.subr.mxu0 0.0
    %3179 = vmatpush1.msra.mxu0 0.0
    %3180 = vmatprep.subr.mxu0 0.0
    %3181 = vmatpush1.msra.mxu0 0.0
    %3182 = vmatprep.subr.mxu0 0.0
    %3183 = vmatpush1.msra.mxu0 0.0
    %3184 = vmatprep.subr.mxu0 0.0
    %3185 = vmatpush1.msra.mxu0 0.0
    %3186 = vmatprep.subr.mxu0 0.0
    %3187 = vmatpush1.msra.mxu0 0.0
    %3188 = vmatprep.subr.mxu0 0.0
    %3189 = vmatpush1.msra.mxu0 0.0
    %3190 = vmatprep.subr.mxu0 0.0
    %3191 = vmatpush1.msra.mxu0 0.0
    %3192 = vmatprep.subr.mxu0 0.0
    %3193 = vmatpush1.msra.mxu0 0.0
    %3194 = vmatprep.subr.mxu0 0.0
    %3195 = vmatpush1.msra.mxu0 0.0
    %3196 = vmatprep.subr.mxu0 0.0
    %3197 = vmatpush1.msra.mxu0 0.0
    %3198 = vmatprep.subr.mxu0 0.0
    %3199 = vmatpush1.msra.mxu0 0.0
    %3200 = vmatprep.subr.mxu0 0.0
    %3201 = vmatpush1.msra.mxu0 0.0
    %3202 = vmatprep.subr.mxu0 0.0
    %3203 = vmatpush1.msra.mxu0 0.0
    %3204 = vmatprep.subr.mxu0 0.0
    %3205 = vmatpush1.msra.mxu0 0.0
    %3206 = vmatprep.subr.mxu0 0.0
    %3207 = vmatpush1.msra.mxu0 0.0
    %3208 = vmatprep.subr.mxu0 0.0
    %3209 = vmatpush1.msra.mxu0 0.0
    %3210 = vmatprep.subr.mxu0 0.0
    %3211 = vmatpush1.msra.mxu0 0.0
    %3212 = vmatprep.subr.mxu0 0.0
    %3213 = vmatpush1.msra.mxu0 0.0
    %3214 = vmatprep.subr.mxu0 0.0
    %3215 = vmatpush1.msra.mxu0 0.0
    %3216 = vmatprep.mubr.f32.mxu0 0.0
    %3217 = vmatmul.mubr.f32.gmra.mrb[0].mxu0 %v3138
    %v3218 = vpop.f32.mrb[0].mxu0
    %v3219 = vadd.f32 0.0, %v3218
    %v3220 = vpop.f32.mrb[0].mxu0
    %3221 = vmatprep.mubr.f32.mxu0 0.0
    %3222 = vmatmul.mubr.f32.gmra.mrb[0].mxu0 %v3141
    %v3223 = vpop.f32.mrb[0].mxu0
    %v3224 = vadd.f32 0.0, %v3223
    %v3225 = vpop.f32.mrb[0].mxu0
    %3226 = vmatprep.mubr.f32.mxu0 0.0
    %3227 = vmatmul.mubr.f32.gmra.mrb[0].mxu0 %v3144
    %v3228 = vpop.f32.mrb[0].mxu0
    %v3229 = vadd.f32 0.0, %v3228
    %v3230 = vpop.f32.mrb[0].mxu0
    %3231 = vmatprep.mubr.f32.mxu0 0.0
    %3232 = vmatmul.mubr.f32.gmra.mrb[0].mxu0 %v3147
    %v3233 = vpop.f32.mrb[0].mxu0
    %v3234 = vadd.f32 0.0, %v3233
    %v3235 = vpop.f32.mrb[0].mxu0
    %3236 = vdwg.mxu0
    %v3237 = vld [vmem:[%s35] sm:$0xff]
    %v3239 = vsel %vm3136, %v3219, 0
    %v3242 = vsel %vm720, %v3134, 0
    %3244 = vmatprep.subr.mxu0 0.0
    %3245 = vmatpush1.msra.mxu0 %v3242
    %3246 = vmatprep.subr.mxu0 0.0
    %3247 = vmatpush1.msra.mxu0 0.0
    %3248 = vmatprep.subr.mxu0 0.0
    %3249 = vmatpush1.msra.mxu0 0.0
    %3250 = vmatprep.subr.mxu0 0.0
    %3251 = vmatpush1.msra.mxu0 0.0
    %3252 = vmatprep.subr.mxu0 0.0
    %3253 = vmatpush1.msra.mxu0 0.0
    %3254 = vmatprep.subr.mxu0 0.0
    %3255 = vmatpush1.msra.mxu0 0.0
    %3256 = vmatprep.subr.mxu0 0.0
    %3257 = vmatpush1.msra.mxu0 0.0
    %3258 = vmatprep.subr.mxu0 0.0
    %3259 = vmatpush1.msra.mxu0 0.0
    %3260 = vmatprep.subr.mxu0 0.0
    %3261 = vmatpush1.msra.mxu0 0.0
    %3262 = vmatprep.subr.mxu0 0.0
    %3263 = vmatpush1.msra.mxu0 0.0
    %3264 = vmatprep.subr.mxu0 0.0
    %3265 = vmatpush1.msra.mxu0 0.0
    %3266 = vmatprep.subr.mxu0 0.0
    %3267 = vmatpush1.msra.mxu0 0.0
    %3268 = vmatprep.subr.mxu0 0.0
    %3269 = vmatpush1.msra.mxu0 0.0
    %3270 = vmatprep.subr.mxu0 0.0
    %3271 = vmatpush1.msra.mxu0 0.0
    %3272 = vmatprep.subr.mxu0 0.0
    %3273 = vmatpush1.msra.mxu0 0.0
    %3274 = vmatprep.subr.mxu0 0.0
    %3275 = vmatpush1.msra.mxu0 0.0
    %3276 = vmatprep.subr.mxu0 0.0
    %3277 = vmatpush1.msra.mxu0 0.0
    %3278 = vmatprep.subr.mxu0 0.0
    %3279 = vmatpush1.msra.mxu0 0.0
    %3280 = vmatprep.subr.mxu0 0.0
    %3281 = vmatpush1.msra.mxu0 0.0
    %3282 = vmatprep.subr.mxu0 0.0
    %3283 = vmatpush1.msra.mxu0 0.0
    %3284 = vmatprep.subr.mxu0 0.0
    %3285 = vmatpush1.msra.mxu0 0.0
    %3286 = vmatprep.subr.mxu0 0.0
    %3287 = vmatpush1.msra.mxu0 0.0
    %3288 = vmatprep.subr.mxu0 0.0
    %3289 = vmatpush1.msra.mxu0 0.0
    %3290 = vmatprep.subr.mxu0 0.0
    %3291 = vmatpush1.msra.mxu0 0.0
    %3292 = vmatprep.subr.mxu0 0.0
    %3293 = vmatpush1.msra.mxu0 0.0
    %3294 = vmatprep.subr.mxu0 0.0
    %3295 = vmatpush1.msra.mxu0 0.0
    %3296 = vmatprep.subr.mxu0 0.0
    %3297 = vmatpush1.msra.mxu0 0.0
    %3298 = vmatprep.subr.mxu0 0.0
    %3299 = vmatpush1.msra.mxu0 0.0
    %3300 = vmatprep.subr.mxu0 0.0
    %3301 = vmatpush1.msra.mxu0 0.0
    %3302 = vmatprep.subr.mxu0 0.0
    %3303 = vmatpush1.msra.mxu0 0.0
    %3304 = vmatprep.subr.mxu0 0.0
    %3305 = vmatpush1.msra.mxu0 0.0
    %3306 = vmatprep.subr.mxu0 0.0
    %3307 = vmatpush1.msra.mxu0 0.0
    %3308 = vmatprep.mubr.f32.mxu0 0.0
    %3309 = vmatmul.mubr.f32.gmra.mrb[0].mxu0 %v3239
    %v3310 = vpop.f32.mrb[0].mxu0
    %v3311 = vadd.f32 0.0, %v3310
    %v3312 = vpop.f32.mrb[0].mxu0
    %3313 = vdwg.mxu0
    %v3314 = vadd.f32 %v3237, %v3311
    %v3315 = vrot.slane %v3134, 4
    %v3317 = vsel %vm3136, %v3224, 0
    %v3319 = vsel %vm720, %v3315, 0
    %3321 = vmatprep.subr.mxu0 0.0
    %3322 = vmatpush1.msra.mxu0 %v3319
    %3323 = vmatprep.subr.mxu0 0.0
    %3324 = vmatpush1.msra.mxu0 0.0
    %3325 = vmatprep.subr.mxu0 0.0
    %3326 = vmatpush1.msra.mxu0 0.0
    %3327 = vmatprep.subr.mxu0 0.0
    %3328 = vmatpush1.msra.mxu0 0.0
    %3329 = vmatprep.subr.mxu0 0.0
    %3330 = vmatpush1.msra.mxu0 0.0
    %3331 = vmatprep.subr.mxu0 0.0
    %3332 = vmatpush1.msra.mxu0 0.0
    %3333 = vmatprep.subr.mxu0 0.0
    %3334 = vmatpush1.msra.mxu0 0.0
    %3335 = vmatprep.subr.mxu0 0.0
    %3336 = vmatpush1.msra.mxu0 0.0
    %3337 = vmatprep.subr.mxu0 0.0
    %3338 = vmatpush1.msra.mxu0 0.0
    %3339 = vmatprep.subr.mxu0 0.0
    %3340 = vmatpush1.msra.mxu0 0.0
    %3341 = vmatprep.subr.mxu0 0.0
    %3342 = vmatpush1.msra.mxu0 0.0
    %3343 = vmatprep.subr.mxu0 0.0
    %3344 = vmatpush1.msra.mxu0 0.0
    %3345 = vmatprep.subr.mxu0 0.0
    %3346 = vmatpush1.msra.mxu0 0.0
    %3347 = vmatprep.subr.mxu0 0.0
    %3348 = vmatpush1.msra.mxu0 0.0
    %3349 = vmatprep.subr.mxu0 0.0
    %3350 = vmatpush1.msra.mxu0 0.0
    %3351 = vmatprep.subr.mxu0 0.0
    %3352 = vmatpush1.msra.mxu0 0.0
    %3353 = vmatprep.subr.mxu0 0.0
    %3354 = vmatpush1.msra.mxu0 0.0
    %3355 = vmatprep.subr.mxu0 0.0
    %3356 = vmatpush1.msra.mxu0 0.0
    %3357 = vmatprep.subr.mxu0 0.0
    %3358 = vmatpush1.msra.mxu0 0.0
    %3359 = vmatprep.subr.mxu0 0.0
    %3360 = vmatpush1.msra.mxu0 0.0
    %3361 = vmatprep.subr.mxu0 0.0
    %3362 = vmatpush1.msra.mxu0 0.0
    %3363 = vmatprep.subr.mxu0 0.0
    %3364 = vmatpush1.msra.mxu0 0.0
    %3365 = vmatprep.subr.mxu0 0.0
    %3366 = vmatpush1.msra.mxu0 0.0
    %3367 = vmatprep.subr.mxu0 0.0
    %3368 = vmatpush1.msra.mxu0 0.0
    %3369 = vmatprep.subr.mxu0 0.0
    %3370 = vmatpush1.msra.mxu0 0.0
    %3371 = vmatprep.subr.mxu0 0.0
    %3372 = vmatpush1.msra.mxu0 0.0
    %3373 = vmatprep.subr.mxu0 0.0
    %3374 = vmatpush1.msra.mxu0 0.0
    %3375 = vmatprep.subr.mxu0 0.0
    %3376 = vmatpush1.msra.mxu0 0.0
    %3377 = vmatprep.subr.mxu0 0.0
    %3378 = vmatpush1.msra.mxu0 0.0
    %3379 = vmatprep.subr.mxu0 0.0
    %3380 = vmatpush1.msra.mxu0 0.0
    %3381 = vmatprep.subr.mxu0 0.0
    %3382 = vmatpush1.msra.mxu0 0.0
    %3383 = vmatprep.subr.mxu0 0.0
    %3384 = vmatpush1.msra.mxu0 0.0
    %3385 = vmatprep.mubr.f32.mxu0 0.0
    %3386 = vmatmul.mubr.f32.gmra.mrb[0].mxu0 %v3317
    %v3387 = vpop.f32.mrb[0].mxu0
    %v3388 = vadd.f32 0.0, %v3387
    %v3389 = vpop.f32.mrb[0].mxu0
    %3390 = vdwg.mxu0
    %v3391 = vadd.f32 %v3314, %v3388
    %v3393 = vsel %vm3136, %v3229, 0
    %v3396 = vsel %vm720, %v3135, 0
    %3398 = vmatprep.subr.mxu0 0.0
    %3399 = vmatpush1.msra.mxu0 %v3396
    %3400 = vmatprep.subr.mxu0 0.0
    %3401 = vmatpush1.msra.mxu0 0.0
    %3402 = vmatprep.subr.mxu0 0.0
    %3403 = vmatpush1.msra.mxu0 0.0
    %3404 = vmatprep.subr.mxu0 0.0
    %3405 = vmatpush1.msra.mxu0 0.0
    %3406 = vmatprep.subr.mxu0 0.0
    %3407 = vmatpush1.msra.mxu0 0.0
    %3408 = vmatprep.subr.mxu0 0.0
    %3409 = vmatpush1.msra.mxu0 0.0
    %3410 = vmatprep.subr.mxu0 0.0
    %3411 = vmatpush1.msra.mxu0 0.0
    %3412 = vmatprep.subr.mxu0 0.0
    %3413 = vmatpush1.msra.mxu0 0.0
    %3414 = vmatprep.subr.mxu0 0.0
    %3415 = vmatpush1.msra.mxu0 0.0
    %3416 = vmatprep.subr.mxu0 0.0
    %3417 = vmatpush1.msra.mxu0 0.0
    %3418 = vmatprep.subr.mxu0 0.0
    %3419 = vmatpush1.msra.mxu0 0.0
    %3420 = vmatprep.subr.mxu0 0.0
    %3421 = vmatpush1.msra.mxu0 0.0
    %3422 = vmatprep.subr.mxu0 0.0
    %3423 = vmatpush1.msra.mxu0 0.0
    %3424 = vmatprep.subr.mxu0 0.0
    %3425 = vmatpush1.msra.mxu0 0.0
    %3426 = vmatprep.subr.mxu0 0.0
    %3427 = vmatpush1.msra.mxu0 0.0
    %3428 = vmatprep.subr.mxu0 0.0
    %3429 = vmatpush1.msra.mxu0 0.0
    %3430 = vmatprep.subr.mxu0 0.0
    %3431 = vmatpush1.msra.mxu0 0.0
    %3432 = vmatprep.subr.mxu0 0.0
    %3433 = vmatpush1.msra.mxu0 0.0
    %3434 = vmatprep.subr.mxu0 0.0
    %3435 = vmatpush1.msra.mxu0 0.0
    %3436 = vmatprep.subr.mxu0 0.0
    %3437 = vmatpush1.msra.mxu0 0.0
    %3438 = vmatprep.subr.mxu0 0.0
    %3439 = vmatpush1.msra.mxu0 0.0
    %3440 = vmatprep.subr.mxu0 0.0
    %3441 = vmatpush1.msra.mxu0 0.0
    %3442 = vmatprep.subr.mxu0 0.0
    %3443 = vmatpush1.msra.mxu0 0.0
    %3444 = vmatprep.subr.mxu0 0.0
    %3445 = vmatpush1.msra.mxu0 0.0
    %3446 = vmatprep.subr.mxu0 0.0
    %3447 = vmatpush1.msra.mxu0 0.0
    %3448 = vmatprep.subr.mxu0 0.0
    %3449 = vmatpush1.msra.mxu0 0.0
    %3450 = vmatprep.subr.mxu0 0.0
    %3451 = vmatpush1.msra.mxu0 0.0
    %3452 = vmatprep.subr.mxu0 0.0
    %3453 = vmatpush1.msra.mxu0 0.0
    %3454 = vmatprep.subr.mxu0 0.0
    %3455 = vmatpush1.msra.mxu0 0.0
    %3456 = vmatprep.subr.mxu0 0.0
    %3457 = vmatpush1.msra.mxu0 0.0
    %3458 = vmatprep.subr.mxu0 0.0
    %3459 = vmatpush1.msra.mxu0 0.0
    %3460 = vmatprep.subr.mxu0 0.0
    %3461 = vmatpush1.msra.mxu0 0.0
    %3462 = vmatprep.mubr.f32.mxu0 0.0
    %3463 = vmatmul.mubr.f32.gmra.mrb[0].mxu0 %v3393
    %v3464 = vpop.f32.mrb[0].mxu0
    %v3465 = vadd.f32 0.0, %v3464
    %v3466 = vpop.f32.mrb[0].mxu0
    %3467 = vdwg.mxu0
    %v3468 = vadd.f32 %v3391, %v3465
    %v3469 = vrot.slane %v3135, 4
    %v3471 = vsel %vm3136, %v3234, 0
    %v3473 = vsel %vm720, %v3469, 0
    %3475 = vmatprep.subr.mxu0 0.0
    %3476 = vmatpush1.msra.mxu0 %v3473
    %3477 = vmatprep.subr.mxu0 0.0
    %3478 = vmatpush1.msra.mxu0 0.0
    %3479 = vmatprep.subr.mxu0 0.0
    %3480 = vmatpush1.msra.mxu0 0.0
    %3481 = vmatprep.subr.mxu0 0.0
    %3482 = vmatpush1.msra.mxu0 0.0
    %3483 = vmatprep.subr.mxu0 0.0
    %3484 = vmatpush1.msra.mxu0 0.0
    %3485 = vmatprep.subr.mxu0 0.0
    %3486 = vmatpush1.msra.mxu0 0.0
    %3487 = vmatprep.subr.mxu0 0.0
    %3488 = vmatpush1.msra.mxu0 0.0
    %3489 = vmatprep.subr.mxu0 0.0
    %3490 = vmatpush1.msra.mxu0 0.0
    %3491 = vmatprep.subr.mxu0 0.0
    %3492 = vmatpush1.msra.mxu0 0.0
    %3493 = vmatprep.subr.mxu0 0.0
    %3494 = vmatpush1.msra.mxu0 0.0
    %3495 = vmatprep.subr.mxu0 0.0
    %3496 = vmatpush1.msra.mxu0 0.0
    %3497 = vmatprep.subr.mxu0 0.0
    %3498 = vmatpush1.msra.mxu0 0.0
    %3499 = vmatprep.subr.mxu0 0.0
    %3500 = vmatpush1.msra.mxu0 0.0
    %3501 = vmatprep.subr.mxu0 0.0
    %3502 = vmatpush1.msra.mxu0 0.0
    %3503 = vmatprep.subr.mxu0 0.0
    %3504 = vmatpush1.msra.mxu0 0.0
    %3505 = vmatprep.subr.mxu0 0.0
    %3506 = vmatpush1.msra.mxu0 0.0
    %3507 = vmatprep.subr.mxu0 0.0
    %3508 = vmatpush1.msra.mxu0 0.0
    %3509 = vmatprep.subr.mxu0 0.0
    %3510 = vmatpush1.msra.mxu0 0.0
    %3511 = vmatprep.subr.mxu0 0.0
    %3512 = vmatpush1.msra.mxu0 0.0
    %3513 = vmatprep.subr.mxu0 0.0
    %3514 = vmatpush1.msra.mxu0 0.0
    %3515 = vmatprep.subr.mxu0 0.0
    %3516 = vmatpush1.msra.mxu0 0.0
    %3517 = vmatprep.subr.mxu0 0.0
    %3518 = vmatpush1.msra.mxu0 0.0
    %3519 = vmatprep.subr.mxu0 0.0
    %3520 = vmatpush1.msra.mxu0 0.0
    %3521 = vmatprep.subr.mxu0 0.0
    %3522 = vmatpush1.msra.mxu0 0.0
    %3523 = vmatprep.subr.mxu0 0.0
    %3524 = vmatpush1.msra.mxu0 0.0
    %3525 = vmatprep.subr.mxu0 0.0
    %3526 = vmatpush1.msra.mxu0 0.0
    %3527 = vmatprep.subr.mxu0 0.0
    %3528 = vmatpush1.msra.mxu0 0.0
    %3529 = vmatprep.subr.mxu0 0.0
    %3530 = vmatpush1.msra.mxu0 0.0
    %3531 = vmatprep.subr.mxu0 0.0
    %3532 = vmatpush1.msra.mxu0 0.0
    %3533 = vmatprep.subr.mxu0 0.0
    %3534 = vmatpush1.msra.mxu0 0.0
    %3535 = vmatprep.subr.mxu0 0.0
    %3536 = vmatpush1.msra.mxu0 0.0
    %3537 = vmatprep.subr.mxu0 0.0
    %3538 = vmatpush1.msra.mxu0 0.0
    %3539 = vmatprep.mubr.f32.mxu0 0.0
    %3540 = vmatmul.mubr.f32.gmra.mrb[0].mxu0 %v3471
    %v3541 = vpop.f32.mrb[0].mxu0
    %v3542 = vadd.f32 0.0, %v3541
    %v3543 = vpop.f32.mrb[0].mxu0
    %3544 = vdwg.mxu0
    %v3545 = vadd.f32 %v3468, %v3542
    %v3547 = vsel %vm720, %v3129, 0
    %3549 = vmatprep.subr.mxu0 0.0
    %3550 = vmatpush1.msra.mxu0 %v3547
    %3551 = vmatprep.subr.mxu0 0.0
    %3552 = vmatpush1.msra.mxu0 0.0
    %3553 = vmatprep.subr.mxu0 0.0
    %3554 = vmatpush1.msra.mxu0 0.0
    %3555 = vmatprep.subr.mxu0 0.0
    %3556 = vmatpush1.msra.mxu0 0.0
    %3557 = vmatprep.subr.mxu0 0.0
    %3558 = vmatpush1.msra.mxu0 0.0
    %3559 = vmatprep.subr.mxu0 0.0
    %3560 = vmatpush1.msra.mxu0 0.0
    %3561 = vmatprep.subr.mxu0 0.0
    %3562 = vmatpush1.msra.mxu0 0.0
    %3563 = vmatprep.subr.mxu0 0.0
    %3564 = vmatpush1.msra.mxu0 0.0
    %3565 = vmatprep.subr.mxu0 0.0
    %3566 = vmatpush1.msra.mxu0 0.0
    %3567 = vmatprep.subr.mxu0 0.0
    %3568 = vmatpush1.msra.mxu0 0.0
    %3569 = vmatprep.subr.mxu0 0.0
    %3570 = vmatpush1.msra.mxu0 0.0
    %3571 = vmatprep.subr.mxu0 0.0
    %3572 = vmatpush1.msra.mxu0 0.0
    %3573 = vmatprep.subr.mxu0 0.0
    %3574 = vmatpush1.msra.mxu0 0.0
    %3575 = vmatprep.subr.mxu0 0.0
    %3576 = vmatpush1.msra.mxu0 0.0
    %3577 = vmatprep.subr.mxu0 0.0
    %3578 = vmatpush1.msra.mxu0 0.0
    %3579 = vmatprep.subr.mxu0 0.0
    %3580 = vmatpush1.msra.mxu0 0.0
    %3581 = vmatprep.subr.mxu0 0.0
    %3582 = vmatpush1.msra.mxu0 0.0
    %3583 = vmatprep.subr.mxu0 0.0
    %3584 = vmatpush1.msra.mxu0 0.0
    %3585 = vmatprep.subr.mxu0 0.0
    %3586 = vmatpush1.msra.mxu0 0.0
    %3587 = vmatprep.subr.mxu0 0.0
    %3588 = vmatpush1.msra.mxu0 0.0
    %3589 = vmatprep.subr.mxu0 0.0
    %3590 = vmatpush1.msra.mxu0 0.0
    %3591 = vmatprep.subr.mxu0 0.0
    %3592 = vmatpush1.msra.mxu0 0.0
    %3593 = vmatprep.subr.mxu0 0.0
    %3594 = vmatpush1.msra.mxu0 0.0
    %3595 = vmatprep.subr.mxu0 0.0
    %3596 = vmatpush1.msra.mxu0 0.0
    %3597 = vmatprep.subr.mxu0 0.0
    %3598 = vmatpush1.msra.mxu0 0.0
    %3599 = vmatprep.subr.mxu0 0.0
    %3600 = vmatpush1.msra.mxu0 0.0
    %3601 = vmatprep.subr.mxu0 0.0
    %3602 = vmatpush1.msra.mxu0 0.0
    %3603 = vmatprep.subr.mxu0 0.0
    %3604 = vmatpush1.msra.mxu0 0.0
    %3605 = vmatprep.subr.mxu0 0.0
    %3606 = vmatpush1.msra.mxu0 0.0
    %3607 = vmatprep.subr.mxu0 0.0
    %3608 = vmatpush1.msra.mxu0 0.0
    %3609 = vmatprep.subr.mxu0 0.0
    %3610 = vmatpush1.msra.mxu0 0.0
    %3611 = vmatprep.subr.mxu0 0.0
    %3612 = vmatpush1.msra.mxu0 0.0
    %3613 = vmatprep.mubr.f32.mxu0 0.0
    %3614 = vmatmul.mubr.f32.gmra.mrb[0].mxu0 %v3138
    %v3615 = vpop.f32.mrb[0].mxu0
    %v3616 = vadd.f32 0.0, %v3615
    %v3617 = vpop.f32.mrb[0].mxu0
    %3618 = vmatprep.mubr.f32.mxu0 0.0
    %3619 = vmatmul.mubr.f32.gmra.mrb[0].mxu0 %v3141
    %v3620 = vpop.f32.mrb[0].mxu0
    %v3621 = vadd.f32 0.0, %v3620
    %v3622 = vpop.f32.mrb[0].mxu0
    %3623 = vmatprep.mubr.f32.mxu0 0.0
    %3624 = vmatmul.mubr.f32.gmra.mrb[0].mxu0 %v3144
    %v3625 = vpop.f32.mrb[0].mxu0
    %v3626 = vadd.f32 0.0, %v3625
    %v3627 = vpop.f32.mrb[0].mxu0
    %3628 = vmatprep.mubr.f32.mxu0 0.0
    %3629 = vmatmul.mubr.f32.gmra.mrb[0].mxu0 %v3147
    %v3630 = vpop.f32.mrb[0].mxu0
    %v3631 = vadd.f32 0.0, %v3630
    %v3632 = vpop.f32.mrb[0].mxu0
    %3633 = vdwg.mxu0
    %v3634 = vld [vmem:[%s35 + $0x8] sm:$0xff]
    %v3636 = vsel %vm3136, %v3616, 0
    %3638 = vmatprep.subr.mxu0 0.0
    %3639 = vmatpush1.msra.mxu0 %v3242
    %3640 = vmatprep.subr.mxu0 0.0
    %3641 = vmatpush1.msra.mxu0 0.0
    %3642 = vmatprep.subr.mxu0 0.0
    %3643 = vmatpush1.msra.mxu0 0.0
    %3644 = vmatprep.subr.mxu0 0.0
    %3645 = vmatpush1.msra.mxu0 0.0
    %3646 = vmatprep.subr.mxu0 0.0
    %3647 = vmatpush1.msra.mxu0 0.0
    %3648 = vmatprep.subr.mxu0 0.0
    %3649 = vmatpush1.msra.mxu0 0.0
    %3650 = vmatprep.subr.mxu0 0.0
    %3651 = vmatpush1.msra.mxu0 0.0
    %3652 = vmatprep.subr.mxu0 0.0
    %3653 = vmatpush1.msra.mxu0 0.0
    %3654 = vmatprep.subr.mxu0 0.0
    %3655 = vmatpush1.msra.mxu0 0.0
    %3656 = vmatprep.subr.mxu0 0.0
    %3657 = vmatpush1.msra.mxu0 0.0
    %3658 = vmatprep.subr.mxu0 0.0
    %3659 = vmatpush1.msra.mxu0 0.0
    %3660 = vmatprep.subr.mxu0 0.0
    %3661 = vmatpush1.msra.mxu0 0.0
    %3662 = vmatprep.subr.mxu0 0.0
    %3663 = vmatpush1.msra.mxu0 0.0
    %3664 = vmatprep.subr.mxu0 0.0
    %3665 = vmatpush1.msra.mxu0 0.0
    %3666 = vmatprep.subr.mxu0 0.0
    %3667 = vmatpush1.msra.mxu0 0.0
    %3668 = vmatprep.subr.mxu0 0.0
    %3669 = vmatpush1.msra.mxu0 0.0
    %3670 = vmatprep.subr.mxu0 0.0
    %3671 = vmatpush1.msra.mxu0 0.0
    %3672 = vmatprep.subr.mxu0 0.0
    %3673 = vmatpush1.msra.mxu0 0.0
    %3674 = vmatprep.subr.mxu0 0.0
    %3675 = vmatpush1.msra.mxu0 0.0
    %3676 = vmatprep.subr.mxu0 0.0
    %3677 = vmatpush1.msra.mxu0 0.0
    %3678 = vmatprep.subr.mxu0 0.0
    %3679 = vmatpush1.msra.mxu0 0.0
    %3680 = vmatprep.subr.mxu0 0.0
    %3681 = vmatpush1.msra.mxu0 0.0
    %3682 = vmatprep.subr.mxu0 0.0
    %3683 = vmatpush1.msra.mxu0 0.0
    %3684 = vmatprep.subr.mxu0 0.0
    %3685 = vmatpush1.msra.mxu0 0.0
    %3686 = vmatprep.subr.mxu0 0.0
    %3687 = vmatpush1.msra.mxu0 0.0
    %3688 = vmatprep.subr.mxu0 0.0
    %3689 = vmatpush1.msra.mxu0 0.0
    %3690 = vmatprep.subr.mxu0 0.0
    %3691 = vmatpush1.msra.mxu0 0.0
    %3692 = vmatprep.subr.mxu0 0.0
    %3693 = vmatpush1.msra.mxu0 0.0
    %3694 = vmatprep.subr.mxu0 0.0
    %3695 = vmatpush1.msra.mxu0 0.0
    %3696 = vmatprep.subr.mxu0 0.0
    %3697 = vmatpush1.msra.mxu0 0.0
    %3698 = vmatprep.subr.mxu0 0.0
    %3699 = vmatpush1.msra.mxu0 0.0
    %3700 = vmatprep.subr.mxu0 0.0
    %3701 = vmatpush1.msra.mxu0 0.0
    %3702 = vmatprep.mubr.f32.mxu0 0.0
    %3703 = vmatmul.mubr.f32.gmra.mrb[0].mxu0 %v3636
    %v3704 = vpop.f32.mrb[0].mxu0
    %v3705 = vadd.f32 0.0, %v3704
    %v3706 = vpop.f32.mrb[0].mxu0
    %3707 = vdwg.mxu0
    %v3708 = vadd.f32 %v3634, %v3705
    %v3710 = vsel %vm3136, %v3621, 0
    %3712 = vmatprep.subr.mxu0 0.0
    %3713 = vmatpush1.msra.mxu0 %v3319
    %3714 = vmatprep.subr.mxu0 0.0
    %3715 = vmatpush1.msra.mxu0 0.0
    %3716 = vmatprep.subr.mxu0 0.0
    %3717 = vmatpush1.msra.mxu0 0.0
    %3718 = vmatprep.subr.mxu0 0.0
    %3719 = vmatpush1.msra.mxu0 0.0
    %3720 = vmatprep.subr.mxu0 0.0
    %3721 = vmatpush1.msra.mxu0 0.0
    %3722 = vmatprep.subr.mxu0 0.0
    %3723 = vmatpush1.msra.mxu0 0.0
    %3724 = vmatprep.subr.mxu0 0.0
    %3725 = vmatpush1.msra.mxu0 0.0
    %3726 = vmatprep.subr.mxu0 0.0
    %3727 = vmatpush1.msra.mxu0 0.0
    %3728 = vmatprep.subr.mxu0 0.0
    %3729 = vmatpush1.msra.mxu0 0.0
    %3730 = vmatprep.subr.mxu0 0.0
    %3731 = vmatpush1.msra.mxu0 0.0
    %3732 = vmatprep.subr.mxu0 0.0
    %3733 = vmatpush1.msra.mxu0 0.0
    %3734 = vmatprep.subr.mxu0 0.0
    %3735 = vmatpush1.msra.mxu0 0.0
    %3736 = vmatprep.subr.mxu0 0.0
    %3737 = vmatpush1.msra.mxu0 0.0
    %3738 = vmatprep.subr.mxu0 0.0
    %3739 = vmatpush1.msra.mxu0 0.0
    %3740 = vmatprep.subr.mxu0 0.0
    %3741 = vmatpush1.msra.mxu0 0.0
    %3742 = vmatprep.subr.mxu0 0.0
    %3743 = vmatpush1.msra.mxu0 0.0
    %3744 = vmatprep.subr.mxu0 0.0
    %3745 = vmatpush1.msra.mxu0 0.0
    %3746 = vmatprep.subr.mxu0 0.0
    %3747 = vmatpush1.msra.mxu0 0.0
    %3748 = vmatprep.subr.mxu0 0.0
    %3749 = vmatpush1.msra.mxu0 0.0
    %3750 = vmatprep.subr.mxu0 0.0
    %3751 = vmatpush1.msra.mxu0 0.0
    %3752 = vmatprep.subr.mxu0 0.0
    %3753 = vmatpush1.msra.mxu0 0.0
    %3754 = vmatprep.subr.mxu0 0.0
    %3755 = vmatpush1.msra.mxu0 0.0
    %3756 = vmatprep.subr.mxu0 0.0
    %3757 = vmatpush1.msra.mxu0 0.0
    %3758 = vmatprep.subr.mxu0 0.0
    %3759 = vmatpush1.msra.mxu0 0.0
    %3760 = vmatprep.subr.mxu0 0.0
    %3761 = vmatpush1.msra.mxu0 0.0
    %3762 = vmatprep.subr.mxu0 0.0
    %3763 = vmatpush1.msra.mxu0 0.0
    %3764 = vmatprep.subr.mxu0 0.0
    %3765 = vmatpush1.msra.mxu0 0.0
    %3766 = vmatprep.subr.mxu0 0.0
    %3767 = vmatpush1.msra.mxu0 0.0
    %3768 = vmatprep.subr.mxu0 0.0
    %3769 = vmatpush1.msra.mxu0 0.0
    %3770 = vmatprep.subr.mxu0 0.0
    %3771 = vmatpush1.msra.mxu0 0.0
    %3772 = vmatprep.subr.mxu0 0.0
    %3773 = vmatpush1.msra.mxu0 0.0
    %3774 = vmatprep.subr.mxu0 0.0
    %3775 = vmatpush1.msra.mxu0 0.0
    %3776 = vmatprep.mubr.f32.mxu0 0.0
    %3777 = vmatmul.mubr.f32.gmra.mrb[0].mxu0 %v3710
    %v3778 = vpop.f32.mrb[0].mxu0
    %v3779 = vadd.f32 0.0, %v3778
    %v3780 = vpop.f32.mrb[0].mxu0
    %3781 = vdwg.mxu0
    %v3782 = vadd.f32 %v3708, %v3779
    %v3784 = vsel %vm3136, %v3626, 0
    %3786 = vmatprep.subr.mxu0 0.0
    %3787 = vmatpush1.msra.mxu0 %v3396
    %3788 = vmatprep.subr.mxu0 0.0
    %3789 = vmatpush1.msra.mxu0 0.0
    %3790 = vmatprep.subr.mxu0 0.0
    %3791 = vmatpush1.msra.mxu0 0.0
    %3792 = vmatprep.subr.mxu0 0.0
    %3793 = vmatpush1.msra.mxu0 0.0
    %3794 = vmatprep.subr.mxu0 0.0
    %3795 = vmatpush1.msra.mxu0 0.0
    %3796 = vmatprep.subr.mxu0 0.0
    %3797 = vmatpush1.msra.mxu0 0.0
    %3798 = vmatprep.subr.mxu0 0.0
    %3799 = vmatpush1.msra.mxu0 0.0
    %3800 = vmatprep.subr.mxu0 0.0
    %3801 = vmatpush1.msra.mxu0 0.0
    %3802 = vmatprep.subr.mxu0 0.0
    %3803 = vmatpush1.msra.mxu0 0.0
    %3804 = vmatprep.subr.mxu0 0.0
    %3805 = vmatpush1.msra.mxu0 0.0
    %3806 = vmatprep.subr.mxu0 0.0
    %3807 = vmatpush1.msra.mxu0 0.0
    %3808 = vmatprep.subr.mxu0 0.0
    %3809 = vmatpush1.msra.mxu0 0.0
    %3810 = vmatprep.subr.mxu0 0.0
    %3811 = vmatpush1.msra.mxu0 0.0
    %3812 = vmatprep.subr.mxu0 0.0
    %3813 = vmatpush1.msra.mxu0 0.0
    %3814 = vmatprep.subr.mxu0 0.0
    %3815 = vmatpush1.msra.mxu0 0.0
    %3816 = vmatprep.subr.mxu0 0.0
    %3817 = vmatpush1.msra.mxu0 0.0
    %3818 = vmatprep.subr.mxu0 0.0
    %3819 = vmatpush1.msra.mxu0 0.0
    %3820 = vmatprep.subr.mxu0 0.0
    %3821 = vmatpush1.msra.mxu0 0.0
    %3822 = vmatprep.subr.mxu0 0.0
    %3823 = vmatpush1.msra.mxu0 0.0
    %3824 = vmatprep.subr.mxu0 0.0
    %3825 = vmatpush1.msra.mxu0 0.0
    %3826 = vmatprep.subr.mxu0 0.0
    %3827 = vmatpush1.msra.mxu0 0.0
    %3828 = vmatprep.subr.mxu0 0.0
    %3829 = vmatpush1.msra.mxu0 0.0
    %3830 = vmatprep.subr.mxu0 0.0
    %3831 = vmatpush1.msra.mxu0 0.0
    %3832 = vmatprep.subr.mxu0 0.0
    %3833 = vmatpush1.msra.mxu0 0.0
    %3834 = vmatprep.subr.mxu0 0.0
    %3835 = vmatpush1.msra.mxu0 0.0
    %3836 = vmatprep.subr.mxu0 0.0
    %3837 = vmatpush1.msra.mxu0 0.0
    %3838 = vmatprep.subr.mxu0 0.0
    %3839 = vmatpush1.msra.mxu0 0.0
    %3840 = vmatprep.subr.mxu0 0.0
    %3841 = vmatpush1.msra.mxu0 0.0
    %3842 = vmatprep.subr.mxu0 0.0
    %3843 = vmatpush1.msra.mxu0 0.0
    %3844 = vmatprep.subr.mxu0 0.0
    %3845 = vmatpush1.msra.mxu0 0.0
    %3846 = vmatprep.subr.mxu0 0.0
    %3847 = vmatpush1.msra.mxu0 0.0
    %3848 = vmatprep.subr.mxu0 0.0
    %3849 = vmatpush1.msra.mxu0 0.0
    %3850 = vmatprep.mubr.f32.mxu0 0.0
    %3851 = vmatmul.mubr.f32.gmra.mrb[0].mxu0 %v3784
    %v3852 = vpop.f32.mrb[0].mxu0
    %v3853 = vadd.f32 0.0, %v3852
    %v3854 = vpop.f32.mrb[0].mxu0
    %3855 = vdwg.mxu0
    %v3856 = vadd.f32 %v3782, %v3853
    %v3858 = vsel %vm3136, %v3631, 0
    %3860 = vmatprep.subr.mxu0 0.0
    %3861 = vmatpush1.msra.mxu0 %v3473
    %3862 = vmatprep.subr.mxu0 0.0
    %3863 = vmatpush1.msra.mxu0 0.0
    %3864 = vmatprep.subr.mxu0 0.0
    %3865 = vmatpush1.msra.mxu0 0.0
    %3866 = vmatprep.subr.mxu0 0.0
    %3867 = vmatpush1.msra.mxu0 0.0
    %3868 = vmatprep.subr.mxu0 0.0
    %3869 = vmatpush1.msra.mxu0 0.0
    %3870 = vmatprep.subr.mxu0 0.0
    %3871 = vmatpush1.msra.mxu0 0.0
    %3872 = vmatprep.subr.mxu0 0.0
    %3873 = vmatpush1.msra.mxu0 0.0
    %3874 = vmatprep.subr.mxu0 0.0
    %3875 = vmatpush1.msra.mxu0 0.0
    %3876 = vmatprep.subr.mxu0 0.0
    %3877 = vmatpush1.msra.mxu0 0.0
    %3878 = vmatprep.subr.mxu0 0.0
    %3879 = vmatpush1.msra.mxu0 0.0
    %3880 = vmatprep.subr.mxu0 0.0
    %3881 = vmatpush1.msra.mxu0 0.0
    %3882 = vmatprep.subr.mxu0 0.0
    %3883 = vmatpush1.msra.mxu0 0.0
    %3884 = vmatprep.subr.mxu0 0.0
    %3885 = vmatpush1.msra.mxu0 0.0
    %3886 = vmatprep.subr.mxu0 0.0
    %3887 = vmatpush1.msra.mxu0 0.0
    %3888 = vmatprep.subr.mxu0 0.0
    %3889 = vmatpush1.msra.mxu0 0.0
    %3890 = vmatprep.subr.mxu0 0.0
    %3891 = vmatpush1.msra.mxu0 0.0
    %3892 = vmatprep.subr.mxu0 0.0
    %3893 = vmatpush1.msra.mxu0 0.0
    %3894 = vmatprep.subr.mxu0 0.0
    %3895 = vmatpush1.msra.mxu0 0.0
    %3896 = vmatprep.subr.mxu0 0.0
    %3897 = vmatpush1.msra.mxu0 0.0
    %3898 = vmatprep.subr.mxu0 0.0
    %3899 = vmatpush1.msra.mxu0 0.0
    %3900 = vmatprep.subr.mxu0 0.0
    %3901 = vmatpush1.msra.mxu0 0.0
    %3902 = vmatprep.subr.mxu0 0.0
    %3903 = vmatpush1.msra.mxu0 0.0
    %3904 = vmatprep.subr.mxu0 0.0
    %3905 = vmatpush1.msra.mxu0 0.0
    %3906 = vmatprep.subr.mxu0 0.0
    %3907 = vmatpush1.msra.mxu0 0.0
    %3908 = vmatprep.subr.mxu0 0.0
    %3909 = vmatpush1.msra.mxu0 0.0
    %3910 = vmatprep.subr.mxu0 0.0
    %3911 = vmatpush1.msra.mxu0 0.0
    %3912 = vmatprep.subr.mxu0 0.0
    %3913 = vmatpush1.msra.mxu0 0.0
    %3914 = vmatprep.subr.mxu0 0.0
    %3915 = vmatpush1.msra.mxu0 0.0
    %3916 = vmatprep.subr.mxu0 0.0
    %3917 = vmatpush1.msra.mxu0 0.0
    %3918 = vmatprep.subr.mxu0 0.0
    %3919 = vmatpush1.msra.mxu0 0.0
    %3920 = vmatprep.subr.mxu0 0.0
    %3921 = vmatpush1.msra.mxu0 0.0
    %3922 = vmatprep.subr.mxu0 0.0
    %3923 = vmatpush1.msra.mxu0 0.0
    %3924 = vmatprep.mubr.f32.mxu0 0.0
    %3925 = vmatmul.mubr.f32.gmra.mrb[0].mxu0 %v3858
    %v3926 = vpop.f32.mrb[0].mxu0
    %v3927 = vadd.f32 0.0, %v3926
    %v3928 = vpop.f32.mrb[0].mxu0
    %3929 = vdwg.mxu0
    %v3930 = vadd.f32 %v3856, %v3927
    %v3931 = vsel %vm171, %v3545, 0.0
    %v3932 = vrot.slane %v3931, 4
    %v3933 = vadd.f32 %v3931, %v3932
    %v3934 = vrot.slane %v3933, 2
    %v3935 = vadd.f32 %v3933, %v3934
    %v3936 = vrot.slane %v3935, 1
    %v3937 = vadd.f32 %v3935, %v3936
    %v3938 = vsel %vm171, %v3930, 0.0
    %v3939 = vrot.slane %v3938, 4
    %v3940 = vadd.f32 %v3938, %v3939
    %v3941 = vrot.slane %v3940, 2
    %v3942 = vadd.f32 %v3940, %v3941
    %v3943 = vrot.slane %v3942, 1
    %v3944 = vadd.f32 %v3942, %v3943
    %v3945 = vadd.f32 %v3937, %v3944
    %v3946 = vmul.f32 %v3945, 0.0625
    %v3947 = vsub.f32 %v3545, %v3946
    %v3948 = vmul.f32 %v3947, %v3947
    %v3949 = vsel %vm171, %v3948, 0.0
    %v3950 = vrot.slane %v3949, 4
    %v3951 = vadd.f32 %v3949, %v3950
    %v3952 = vrot.slane %v3951, 2
    %v3953 = vadd.f32 %v3951, %v3952
    %v3954 = vrot.slane %v3953, 1
    %v3955 = vadd.f32 %v3953, %v3954
    %v3956 = vsub.f32 %v3930, %v3946
    %v3957 = vmul.f32 %v3956, %v3956
    %v3958 = vsel %vm171, %v3957, 0.0
    %v3959 = vrot.slane %v3958, 4
    %v3960 = vadd.f32 %v3958, %v3959
    %v3961 = vrot.slane %v3960, 2
    %v3962 = vadd.f32 %v3960, %v3961
    %v3963 = vrot.slane %v3962, 1
    %v3964 = vadd.f32 %v3962, %v3963
    %v3965 = vadd.f32 %v3955, %v3964
    %v3966 = vmul.f32 %v3965, 0.0625
    %v3967 = vadd.f32 %v3966, 1e-05
    %v3968 = vrsqrt.pop %v3967
    %v3969 = vld [vmem:[%s37] sm:$0x1]
    %v3970 = vld [vmem:[%s39] sm:$0x1]
    %v3971 = vmul.f32 %v3947, %v3968
    %v3973 = vlaneseq
    %v3974 = vshrl.u32 %v3973, 7
    %v3975 = vsub.s32 0, %v3974
    %v3976 = vrot.slane %v3969, %v3975
    %v3978 = vmul.f32 %v3971, %v3976
    %v3980 = vlaneseq
    %v3981 = vshrl.u32 %v3980, 7
    %v3982 = vsub.s32 0, %v3981
    %v3983 = vrot.slane %v3970, %v3982
    %v3985 = vadd.f32 %v3978, %v3983
    %v3986 = vxor.u32 %v3985, 2147483648
    %v3987 = vmul.f32 %v3986, 1.442695
    %v3988 = vpow.pop %v3987
    %v3989 = vadd.f32 %v3988, 1.0
    %v3990 = vrcp.pop %v3989
    %v3991 = vmul.f32 1.0, %v3990
    %3993 = vrot.lane.b32.xlu0 %v3991, 120
    %v3994 = vpop.permute.xlu0 %3993
    %v3996 = vmul.f32 %v3985, %v3994
    %v3997 = vmul.f32 %v3956, %v3968
    %v3998 = vmul.f32 %v3997, %v3976
    %v3999 = vadd.f32 %v3998, %v3983
    %v4000 = vxor.u32 %v3999, 2147483648
    %v4001 = vmul.f32 %v4000, 1.442695
    %v4002 = vpow.pop %v4001
    %v4003 = vadd.f32 %v4002, 1.0
    %v4004 = vrcp.pop %v4003
    %v4005 = vmul.f32 1.0, %v4004
    %4007 = vrot.lane.b32.xlu0 %v4005, 120
    %v4008 = vpop.permute.xlu0 %4007
    %v4010 = vmul.f32 %v3999, %v4008
    %v4011 = vld [vmem:[%s41] sm:$0xff]
    %v4012 = vld [vmem:[%s41 + $0x8] sm:$0xff]
    %v4013 = vld [vmem:[%s41 + $0x10] sm:$0xff]
    %v4014 = vld [vmem:[%s41 + $0x18] sm:$0xff]
    %v4015 = vld [vmem:[%s41 + $0x20] sm:$0xff]
    %v4016 = vld [vmem:[%s41 + $0x28] sm:$0xff]
    %v4017 = vld [vmem:[%s41 + $0x30] sm:$0xff]
    %v4018 = vld [vmem:[%s41 + $0x38] sm:$0xff]
    %v4019 = vld [vmem:[%s43] sm:$0xff]
    %v4020 = vld [vmem:[%s43 + $0x8] sm:$0xff]
    %v4021 = vld [vmem:[%s43 + $0x10] sm:$0xff]
    %v4022 = vld [vmem:[%s43 + $0x18] sm:$0xff]
    %v4024 = vsel %vm2346, %v4011, 0
    %v4027 = vsel %vm2346, %v4012, 0
    %v4030 = vsel %vm2346, %v4013, 0
    %v4033 = vsel %vm2346, %v4014, 0
    %v4036 = vsel %vm2346, %v4015, 0
    %v4039 = vsel %vm2346, %v4016, 0
    %v4042 = vsel %vm2346, %v4017, 0
    %v4045 = vsel %vm2346, %v4018, 0
    %4047 = vmatprep.subr.mxu0 0.0
    %4048 = vmatpush1.msra.mxu0 %v3996
    %4049 = vmatprep.subr.mxu0 0.0
    %4050 = vmatpush1.msra.mxu0 0.0
    %4051 = vmatprep.subr.mxu0 0.0
    %4052 = vmatpush1.msra.mxu0 0.0
    %4053 = vmatprep.subr.mxu0 0.0
    %4054 = vmatpush1.msra.mxu0 0.0
    %4055 = vmatprep.subr.mxu0 0.0
    %4056 = vmatpush1.msra.mxu0 0.0
    %4057 = vmatprep.subr.mxu0 0.0
    %4058 = vmatpush1.msra.mxu0 0.0
    %4059 = vmatprep.subr.mxu0 0.0
    %4060 = vmatpush1.msra.mxu0 0.0
    %4061 = vmatprep.subr.mxu0 0.0
    %4062 = vmatpush1.msra.mxu0 0.0
    %4063 = vmatprep.subr.mxu0 0.0
    %4064 = vmatpush1.msra.mxu0 0.0
    %4065 = vmatprep.subr.mxu0 0.0
    %4066 = vmatpush1.msra.mxu0 0.0
    %4067 = vmatprep.subr.mxu0 0.0
    %4068 = vmatpush1.msra.mxu0 0.0
    %4069 = vmatprep.subr.mxu0 0.0
    %4070 = vmatpush1.msra.mxu0 0.0
    %4071 = vmatprep.subr.mxu0 0.0
    %4072 = vmatpush1.msra.mxu0 0.0
    %4073 = vmatprep.subr.mxu0 0.0
    %4074 = vmatpush1.msra.mxu0 0.0
    %4075 = vmatprep.subr.mxu0 0.0
    %4076 = vmatpush1.msra.mxu0 0.0
    %4077 = vmatprep.subr.mxu0 0.0
    %4078 = vmatpush1.msra.mxu0 0.0
    %4079 = vmatprep.subr.mxu0 0.0
    %4080 = vmatpush1.msra.mxu0 0.0
    %4081 = vmatprep.subr.mxu0 0.0
    %4082 = vmatpush1.msra.mxu0 0.0
    %4083 = vmatprep.subr.mxu0 0.0
    %4084 = vmatpush1.msra.mxu0 0.0
    %4085 = vmatprep.subr.mxu0 0.0
    %4086 = vmatpush1.msra.mxu0 0.0
    %4087 = vmatprep.subr.mxu0 0.0
    %4088 = vmatpush1.msra.mxu0 0.0
    %4089 = vmatprep.subr.mxu0 0.0
    %4090 = vmatpush1.msra.mxu0 0.0
    %4091 = vmatprep.subr.mxu0 0.0
    %4092 = vmatpush1.msra.mxu0 0.0
    %4093 = vmatprep.subr.mxu0 0.0
    %4094 = vmatpush1.msra.mxu0 0.0
    %4095 = vmatprep.subr.mxu0 0.0
    %4096 = vmatpush1.msra.mxu0 0.0
    %4097 = vmatprep.subr.mxu0 0.0
    %4098 = vmatpush1.msra.mxu0 0.0
    %4099 = vmatprep.subr.mxu0 0.0
    %4100 = vmatpush1.msra.mxu0 0.0
    %4101 = vmatprep.subr.mxu0 0.0
    %4102 = vmatpush1.msra.mxu0 0.0
    %4103 = vmatprep.subr.mxu0 0.0
    %4104 = vmatpush1.msra.mxu0 0.0
    %4105 = vmatprep.subr.mxu0 0.0
    %4106 = vmatpush1.msra.mxu0 0.0
    %4107 = vmatprep.subr.mxu0 0.0
    %4108 = vmatpush1.msra.mxu0 0.0
    %4109 = vmatprep.subr.mxu0 0.0
    %4110 = vmatpush1.msra.mxu0 0.0
    %4111 = vmatprep.mubr.f32.mxu0 0.0
    %4112 = vmatmul.mubr.f32.gmra.mrb[0].mxu0 %v4024
    %v4113 = vpop.f32.mrb[0].mxu0
    %v4114 = vadd.f32 0.0, %v4113
    %v4115 = vpop.f32.mrb[0].mxu0
    %4116 = vmatprep.mubr.f32.mxu0 0.0
    %4117 = vmatmul.mubr.f32.gmra.mrb[0].mxu0 %v4027
    %v4118 = vpop.f32.mrb[0].mxu0
    %v4119 = vadd.f32 0.0, %v4118
    %v4120 = vpop.f32.mrb[0].mxu0
    %4121 = vmatprep.mubr.f32.mxu0 0.0
    %4122 = vmatmul.mubr.f32.gmra.mrb[0].mxu0 %v4030
    %v4123 = vpop.f32.mrb[0].mxu0
    %v4124 = vadd.f32 0.0, %v4123
    %v4125 = vpop.f32.mrb[0].mxu0
    %4126 = vmatprep.mubr.f32.mxu0 0.0
    %4127 = vmatmul.mubr.f32.gmra.mrb[0].mxu0 %v4033
    %v4128 = vpop.f32.mrb[0].mxu0
    %v4129 = vadd.f32 0.0, %v4128
    %v4130 = vpop.f32.mrb[0].mxu0
    %4131 = vmatprep.mubr.f32.mxu0 0.0
    %4132 = vmatmul.mubr.f32.gmra.mrb[0].mxu0 %v4036
    %v4133 = vpop.f32.mrb[0].mxu0
    %v4134 = vadd.f32 0.0, %v4133
    %v4135 = vpop.f32.mrb[0].mxu0
    %4136 = vmatprep.mubr.f32.mxu0 0.0
    %4137 = vmatmul.mubr.f32.gmra.mrb[0].mxu0 %v4039
    %v4138 = vpop.f32.mrb[0].mxu0
    %v4139 = vadd.f32 0.0, %v4138
    %v4140 = vpop.f32.mrb[0].mxu0
    %4141 = vmatprep.mubr.f32.mxu0 0.0
    %4142 = vmatmul.mubr.f32.gmra.mrb[0].mxu0 %v4042
    %v4143 = vpop.f32.mrb[0].mxu0
    %v4144 = vadd.f32 0.0, %v4143
    %v4145 = vpop.f32.mrb[0].mxu0
    %4146 = vmatprep.mubr.f32.mxu0 0.0
    %4147 = vmatmul.mubr.f32.gmra.mrb[0].mxu0 %v4045
    %v4148 = vpop.f32.mrb[0].mxu0
    %v4149 = vadd.f32 0.0, %v4148
    %v4150 = vpop.f32.mrb[0].mxu0
    %4151 = vdwg.mxu0
    %v4152 = vld [vmem:[%s45] sm:$0xff]
    %v4153 = vld [vmem:[%s45 + $0x8] sm:$0xff]
    %v4155 = vsel %vm2346, %v4114, 0
    %v4158 = vsel %vm2346, %v4119, 0
    %4160 = vmatprep.subr.mxu0 0.0
    %4161 = vmatpush1.msra.mxu0 %v4019
    %4162 = vmatprep.subr.mxu0 0.0
    %4163 = vmatpush1.msra.mxu0 0.0
    %4164 = vmatprep.subr.mxu0 0.0
    %4165 = vmatpush1.msra.mxu0 0.0
    %4166 = vmatprep.subr.mxu0 0.0
    %4167 = vmatpush1.msra.mxu0 0.0
    %4168 = vmatprep.subr.mxu0 0.0
    %4169 = vmatpush1.msra.mxu0 0.0
    %4170 = vmatprep.subr.mxu0 0.0
    %4171 = vmatpush1.msra.mxu0 0.0
    %4172 = vmatprep.subr.mxu0 0.0
    %4173 = vmatpush1.msra.mxu0 0.0
    %4174 = vmatprep.subr.mxu0 0.0
    %4175 = vmatpush1.msra.mxu0 0.0
    %4176 = vmatprep.subr.mxu0 0.0
    %4177 = vmatpush1.msra.mxu0 0.0
    %4178 = vmatprep.subr.mxu0 0.0
    %4179 = vmatpush1.msra.mxu0 0.0
    %4180 = vmatprep.subr.mxu0 0.0
    %4181 = vmatpush1.msra.mxu0 0.0
    %4182 = vmatprep.subr.mxu0 0.0
    %4183 = vmatpush1.msra.mxu0 0.0
    %4184 = vmatprep.subr.mxu0 0.0
    %4185 = vmatpush1.msra.mxu0 0.0
    %4186 = vmatprep.subr.mxu0 0.0
    %4187 = vmatpush1.msra.mxu0 0.0
    %4188 = vmatprep.subr.mxu0 0.0
    %4189 = vmatpush1.msra.mxu0 0.0
    %4190 = vmatprep.subr.mxu0 0.0
    %4191 = vmatpush1.msra.mxu0 0.0
    %4192 = vmatprep.subr.mxu0 0.0
    %4193 = vmatpush1.msra.mxu0 0.0
    %4194 = vmatprep.subr.mxu0 0.0
    %4195 = vmatpush1.msra.mxu0 0.0
    %4196 = vmatprep.subr.mxu0 0.0
    %4197 = vmatpush1.msra.mxu0 0.0
    %4198 = vmatprep.subr.mxu0 0.0
    %4199 = vmatpush1.msra.mxu0 0.0
    %4200 = vmatprep.subr.mxu0 0.0
    %4201 = vmatpush1.msra.mxu0 0.0
    %4202 = vmatprep.subr.mxu0 0.0
    %4203 = vmatpush1.msra.mxu0 0.0
    %4204 = vmatprep.subr.mxu0 0.0
    %4205 = vmatpush1.msra.mxu0 0.0
    %4206 = vmatprep.subr.mxu0 0.0
    %4207 = vmatpush1.msra.mxu0 0.0
    %4208 = vmatprep.subr.mxu0 0.0
    %4209 = vmatpush1.msra.mxu0 0.0
    %4210 = vmatprep.subr.mxu0 0.0
    %4211 = vmatpush1.msra.mxu0 0.0
    %4212 = vmatprep.subr.mxu0 0.0
    %4213 = vmatpush1.msra.mxu0 0.0
    %4214 = vmatprep.subr.mxu0 0.0
    %4215 = vmatpush1.msra.mxu0 0.0
    %4216 = vmatprep.subr.mxu0 0.0
    %4217 = vmatpush1.msra.mxu0 0.0
    %4218 = vmatprep.subr.mxu0 0.0
    %4219 = vmatpush1.msra.mxu0 0.0
    %4220 = vmatprep.subr.mxu0 0.0
    %4221 = vmatpush1.msra.mxu0 0.0
    %4222 = vmatprep.subr.mxu0 0.0
    %4223 = vmatpush1.msra.mxu0 0.0
    %4224 = vmatprep.mubr.f32.mxu0 0.0
    %4225 = vmatmul.mubr.f32.gmra.mrb[0].mxu0 %v4155
    %v4226 = vpop.f32.mrb[0].mxu0
    %v4227 = vadd.f32 0.0, %v4226
    %v4228 = vpop.f32.mrb[0].mxu0
    %4229 = vmatprep.mubr.f32.mxu0 0.0
    %4230 = vmatmul.mubr.f32.gmra.mrb[0].mxu0 %v4158
    %v4231 = vpop.f32.mrb[0].mxu0
    %v4232 = vadd.f32 0.0, %v4231
    %v4233 = vpop.f32.mrb[0].mxu0
    %4234 = vdwg.mxu0
    %v4235 = vadd.f32 %v4152, %v4227
    %v4236 = vadd.f32 %v4153, %v4232
    %v4238 = vsel %vm2346, %v4124, 0
    %v4241 = vsel %vm2346, %v4129, 0
    %4243 = vmatprep.subr.mxu0 0.0
    %4244 = vmatpush1.msra.mxu0 %v4020
    %4245 = vmatprep.subr.mxu0 0.0
    %4246 = vmatpush1.msra.mxu0 0.0
    %4247 = vmatprep.subr.mxu0 0.0
    %4248 = vmatpush1.msra.mxu0 0.0
    %4249 = vmatprep.subr.mxu0 0.0
    %4250 = vmatpush1.msra.mxu0 0.0
    %4251 = vmatprep.subr.mxu0 0.0
    %4252 = vmatpush1.msra.mxu0 0.0
    %4253 = vmatprep.subr.mxu0 0.0
    %4254 = vmatpush1.msra.mxu0 0.0
    %4255 = vmatprep.subr.mxu0 0.0
    %4256 = vmatpush1.msra.mxu0 0.0
    %4257 = vmatprep.subr.mxu0 0.0
    %4258 = vmatpush1.msra.mxu0 0.0
    %4259 = vmatprep.subr.mxu0 0.0
    %4260 = vmatpush1.msra.mxu0 0.0
    %4261 = vmatprep.subr.mxu0 0.0
    %4262 = vmatpush1.msra.mxu0 0.0
    %4263 = vmatprep.subr.mxu0 0.0
    %4264 = vmatpush1.msra.mxu0 0.0
    %4265 = vmatprep.subr.mxu0 0.0
    %4266 = vmatpush1.msra.mxu0 0.0
    %4267 = vmatprep.subr.mxu0 0.0
    %4268 = vmatpush1.msra.mxu0 0.0
    %4269 = vmatprep.subr.mxu0 0.0
    %4270 = vmatpush1.msra.mxu0 0.0
    %4271 = vmatprep.subr.mxu0 0.0
    %4272 = vmatpush1.msra.mxu0 0.0
    %4273 = vmatprep.subr.mxu0 0.0
    %4274 = vmatpush1.msra.mxu0 0.0
    %4275 = vmatprep.subr.mxu0 0.0
    %4276 = vmatpush1.msra.mxu0 0.0
    %4277 = vmatprep.subr.mxu0 0.0
    %4278 = vmatpush1.msra.mxu0 0.0
    %4279 = vmatprep.subr.mxu0 0.0
    %4280 = vmatpush1.msra.mxu0 0.0
    %4281 = vmatprep.subr.mxu0 0.0
    %4282 = vmatpush1.msra.mxu0 0.0
    %4283 = vmatprep.subr.mxu0 0.0
    %4284 = vmatpush1.msra.mxu0 0.0
    %4285 = vmatprep.subr.mxu0 0.0
    %4286 = vmatpush1.msra.mxu0 0.0
    %4287 = vmatprep.subr.mxu0 0.0
    %4288 = vmatpush1.msra.mxu0 0.0
    %4289 = vmatprep.subr.mxu0 0.0
    %4290 = vmatpush1.msra.mxu0 0.0
    %4291 = vmatprep.subr.mxu0 0.0
    %4292 = vmatpush1.msra.mxu0 0.0
    %4293 = vmatprep.subr.mxu0 0.0
    %4294 = vmatpush1.msra.mxu0 0.0
    %4295 = vmatprep.subr.mxu0 0.0
    %4296 = vmatpush1.msra.mxu0 0.0
    %4297 = vmatprep.subr.mxu0 0.0
    %4298 = vmatpush1.msra.mxu0 0.0
    %4299 = vmatprep.subr.mxu0 0.0
    %4300 = vmatpush1.msra.mxu0 0.0
    %4301 = vmatprep.subr.mxu0 0.0
    %4302 = vmatpush1.msra.mxu0 0.0
    %4303 = vmatprep.subr.mxu0 0.0
    %4304 = vmatpush1.msra.mxu0 0.0
    %4305 = vmatprep.subr.mxu0 0.0
    %4306 = vmatpush1.msra.mxu0 0.0
    %4307 = vmatprep.mubr.f32.mxu0 0.0
    %4308 = vmatmul.mubr.f32.gmra.mrb[0].mxu0 %v4238
    %v4309 = vpop.f32.mrb[0].mxu0
    %v4310 = vadd.f32 0.0, %v4309
    %v4311 = vpop.f32.mrb[0].mxu0
    %4312 = vmatprep.mubr.f32.mxu0 0.0
    %4313 = vmatmul.mubr.f32.gmra.mrb[0].mxu0 %v4241
    %v4314 = vpop.f32.mrb[0].mxu0
    %v4315 = vadd.f32 0.0, %v4314
    %v4316 = vpop.f32.mrb[0].mxu0
    %4317 = vdwg.mxu0
    %v4318 = vadd.f32 %v4235, %v4310
    %v4319 = vadd.f32 %v4236, %v4315
    %v4321 = vsel %vm2346, %v4134, 0
    %v4324 = vsel %vm2346, %v4139, 0
    %4326 = vmatprep.subr.mxu0 0.0
    %4327 = vmatpush1.msra.mxu0 %v4021
    %4328 = vmatprep.subr.mxu0 0.0
    %4329 = vmatpush1.msra.mxu0 0.0
    %4330 = vmatprep.subr.mxu0 0.0
    %4331 = vmatpush1.msra.mxu0 0.0
    %4332 = vmatprep.subr.mxu0 0.0
    %4333 = vmatpush1.msra.mxu0 0.0
    %4334 = vmatprep.subr.mxu0 0.0
    %4335 = vmatpush1.msra.mxu0 0.0
    %4336 = vmatprep.subr.mxu0 0.0
    %4337 = vmatpush1.msra.mxu0 0.0
    %4338 = vmatprep.subr.mxu0 0.0
    %4339 = vmatpush1.msra.mxu0 0.0
    %4340 = vmatprep.subr.mxu0 0.0
    %4341 = vmatpush1.msra.mxu0 0.0
    %4342 = vmatprep.subr.mxu0 0.0
    %4343 = vmatpush1.msra.mxu0 0.0
    %4344 = vmatprep.subr.mxu0 0.0
    %4345 = vmatpush1.msra.mxu0 0.0
    %4346 = vmatprep.subr.mxu0 0.0
    %4347 = vmatpush1.msra.mxu0 0.0
    %4348 = vmatprep.subr.mxu0 0.0
    %4349 = vmatpush1.msra.mxu0 0.0
    %4350 = vmatprep.subr.mxu0 0.0
    %4351 = vmatpush1.msra.mxu0 0.0
    %4352 = vmatprep.subr.mxu0 0.0
    %4353 = vmatpush1.msra.mxu0 0.0
    %4354 = vmatprep.subr.mxu0 0.0
    %4355 = vmatpush1.msra.mxu0 0.0
    %4356 = vmatprep.subr.mxu0 0.0
    %4357 = vmatpush1.msra.mxu0 0.0
    %4358 = vmatprep.subr.mxu0 0.0
    %4359 = vmatpush1.msra.mxu0 0.0
    %4360 = vmatprep.subr.mxu0 0.0
    %4361 = vmatpush1.msra.mxu0 0.0
    %4362 = vmatprep.subr.mxu0 0.0
    %4363 = vmatpush1.msra.mxu0 0.0
    %4364 = vmatprep.subr.mxu0 0.0
    %4365 = vmatpush1.msra.mxu0 0.0
    %4366 = vmatprep.subr.mxu0 0.0
    %4367 = vmatpush1.msra.mxu0 0.0
    %4368 = vmatprep.subr.mxu0 0.0
    %4369 = vmatpush1.msra.mxu0 0.0
    %4370 = vmatprep.subr.mxu0 0.0
    %4371 = vmatpush1.msra.mxu0 0.0
    %4372 = vmatprep.subr.mxu0 0.0
    %4373 = vmatpush1.msra.mxu0 0.0
    %4374 = vmatprep.subr.mxu0 0.0
    %4375 = vmatpush1.msra.mxu0 0.0
    %4376 = vmatprep.subr.mxu0 0.0
    %4377 = vmatpush1.msra.mxu0 0.0
    %4378 = vmatprep.subr.mxu0 0.0
    %4379 = vmatpush1.msra.mxu0 0.0
    %4380 = vmatprep.subr.mxu0 0.0
    %4381 = vmatpush1.msra.mxu0 0.0
    %4382 = vmatprep.subr.mxu0 0.0
    %4383 = vmatpush1.msra.mxu0 0.0
    %4384 = vmatprep.subr.mxu0 0.0
    %4385 = vmatpush1.msra.mxu0 0.0
    %4386 = vmatprep.subr.mxu0 0.0
    %4387 = vmatpush1.msra.mxu0 0.0
    %4388 = vmatprep.subr.mxu0 0.0
    %4389 = vmatpush1.msra.mxu0 0.0
    %4390 = vmatprep.mubr.f32.mxu0 0.0
    %4391 = vmatmul.mubr.f32.gmra.mrb[0].mxu0 %v4321
    %v4392 = vpop.f32.mrb[0].mxu0
    %v4393 = vadd.f32 0.0, %v4392
    %v4394 = vpop.f32.mrb[0].mxu0
    %4395 = vmatprep.mubr.f32.mxu0 0.0
    %4396 = vmatmul.mubr.f32.gmra.mrb[0].mxu0 %v4324
    %v4397 = vpop.f32.mrb[0].mxu0
    %v4398 = vadd.f32 0.0, %v4397
    %v4399 = vpop.f32.mrb[0].mxu0
    %4400 = vdwg.mxu0
    %v4401 = vadd.f32 %v4318, %v4393
    %v4402 = vadd.f32 %v4319, %v4398
    %v4404 = vsel %vm2346, %v4144, 0
    %v4407 = vsel %vm2346, %v4149, 0
    %4409 = vmatprep.subr.mxu0 0.0
    %4410 = vmatpush1.msra.mxu0 %v4022
    %4411 = vmatprep.subr.mxu0 0.0
    %4412 = vmatpush1.msra.mxu0 0.0
    %4413 = vmatprep.subr.mxu0 0.0
    %4414 = vmatpush1.msra.mxu0 0.0
    %4415 = vmatprep.subr.mxu0 0.0
    %4416 = vmatpush1.msra.mxu0 0.0
    %4417 = vmatprep.subr.mxu0 0.0
    %4418 = vmatpush1.msra.mxu0 0.0
    %4419 = vmatprep.subr.mxu0 0.0
    %4420 = vmatpush1.msra.mxu0 0.0
    %4421 = vmatprep.subr.mxu0 0.0
    %4422 = vmatpush1.msra.mxu0 0.0
    %4423 = vmatprep.subr.mxu0 0.0
    %4424 = vmatpush1.msra.mxu0 0.0
    %4425 = vmatprep.subr.mxu0 0.0
    %4426 = vmatpush1.msra.mxu0 0.0
    %4427 = vmatprep.subr.mxu0 0.0
    %4428 = vmatpush1.msra.mxu0 0.0
    %4429 = vmatprep.subr.mxu0 0.0
    %4430 = vmatpush1.msra.mxu0 0.0
    %4431 = vmatprep.subr.mxu0 0.0
    %4432 = vmatpush1.msra.mxu0 0.0
    %4433 = vmatprep.subr.mxu0 0.0
    %4434 = vmatpush1.msra.mxu0 0.0
    %4435 = vmatprep.subr.mxu0 0.0
    %4436 = vmatpush1.msra.mxu0 0.0
    %4437 = vmatprep.subr.mxu0 0.0
    %4438 = vmatpush1.msra.mxu0 0.0
    %4439 = vmatprep.subr.mxu0 0.0
    %4440 = vmatpush1.msra.mxu0 0.0
    %4441 = vmatprep.subr.mxu0 0.0
    %4442 = vmatpush1.msra.mxu0 0.0
    %4443 = vmatprep.subr.mxu0 0.0
    %4444 = vmatpush1.msra.mxu0 0.0
    %4445 = vmatprep.subr.mxu0 0.0
    %4446 = vmatpush1.msra.mxu0 0.0
    %4447 = vmatprep.subr.mxu0 0.0
    %4448 = vmatpush1.msra.mxu0 0.0
    %4449 = vmatprep.subr.mxu0 0.0
    %4450 = vmatpush1.msra.mxu0 0.0
    %4451 = vmatprep.subr.mxu0 0.0
    %4452 = vmatpush1.msra.mxu0 0.0
    %4453 = vmatprep.subr.mxu0 0.0
    %4454 = vmatpush1.msra.mxu0 0.0
    %4455 = vmatprep.subr.mxu0 0.0
    %4456 = vmatpush1.msra.mxu0 0.0
    %4457 = vmatprep.subr.mxu0 0.0
    %4458 = vmatpush1.msra.mxu0 0.0
    %4459 = vmatprep.subr.mxu0 0.0
    %4460 = vmatpush1.msra.mxu0 0.0
    %4461 = vmatprep.subr.mxu0 0.0
    %4462 = vmatpush1.msra.mxu0 0.0
    %4463 = vmatprep.subr.mxu0 0.0
    %4464 = vmatpush1.msra.mxu0 0.0
    %4465 = vmatprep.subr.mxu0 0.0
    %4466 = vmatpush1.msra.mxu0 0.0
    %4467 = vmatprep.subr.mxu0 0.0
    %4468 = vmatpush1.msra.mxu0 0.0
    %4469 = vmatprep.subr.mxu0 0.0
    %4470 = vmatpush1.msra.mxu0 0.0
    %4471 = vmatprep.subr.mxu0 0.0
    %4472 = vmatpush1.msra.mxu0 0.0
    %4473 = vmatprep.mubr.f32.mxu0 0.0
    %4474 = vmatmul.mubr.f32.gmra.mrb[0].mxu0 %v4404
    %v4475 = vpop.f32.mrb[0].mxu0
    %v4476 = vadd.f32 0.0, %v4475
    %v4477 = vpop.f32.mrb[0].mxu0
    %4478 = vmatprep.mubr.f32.mxu0 0.0
    %4479 = vmatmul.mubr.f32.gmra.mrb[0].mxu0 %v4407
    %v4480 = vpop.f32.mrb[0].mxu0
    %v4481 = vadd.f32 0.0, %v4480
    %v4482 = vpop.f32.mrb[0].mxu0
    %4483 = vdwg.mxu0
    %v4484 = vadd.f32 %v4401, %v4476
    %v4485 = vadd.f32 %v4402, %v4481
    %4486 = vmatprep.subr.mxu0 0.0
    %4487 = vmatpush1.msra.mxu0 %v4010
    %4488 = vmatprep.subr.mxu0 0.0
    %4489 = vmatpush1.msra.mxu0 0.0
    %4490 = vmatprep.subr.mxu0 0.0
    %4491 = vmatpush1.msra.mxu0 0.0
    %4492 = vmatprep.subr.mxu0 0.0
    %4493 = vmatpush1.msra.mxu0 0.0
    %4494 = vmatprep.subr.mxu0 0.0
    %4495 = vmatpush1.msra.mxu0 0.0
    %4496 = vmatprep.subr.mxu0 0.0
    %4497 = vmatpush1.msra.mxu0 0.0
    %4498 = vmatprep.subr.mxu0 0.0
    %4499 = vmatpush1.msra.mxu0 0.0
    %4500 = vmatprep.subr.mxu0 0.0
    %4501 = vmatpush1.msra.mxu0 0.0
    %4502 = vmatprep.subr.mxu0 0.0
    %4503 = vmatpush1.msra.mxu0 0.0
    %4504 = vmatprep.subr.mxu0 0.0
    %4505 = vmatpush1.msra.mxu0 0.0
    %4506 = vmatprep.subr.mxu0 0.0
    %4507 = vmatpush1.msra.mxu0 0.0
    %4508 = vmatprep.subr.mxu0 0.0
    %4509 = vmatpush1.msra.mxu0 0.0
    %4510 = vmatprep.subr.mxu0 0.0
    %4511 = vmatpush1.msra.mxu0 0.0
    %4512 = vmatprep.subr.mxu0 0.0
    %4513 = vmatpush1.msra.mxu0 0.0
    %4514 = vmatprep.subr.mxu0 0.0
    %4515 = vmatpush1.msra.mxu0 0.0
    %4516 = vmatprep.subr.mxu0 0.0
    %4517 = vmatpush1.msra.mxu0 0.0
    %4518 = vmatprep.subr.mxu0 0.0
    %4519 = vmatpush1.msra.mxu0 0.0
    %4520 = vmatprep.subr.mxu0 0.0
    %4521 = vmatpush1.msra.mxu0 0.0
    %4522 = vmatprep.subr.mxu0 0.0
    %4523 = vmatpush1.msra.mxu0 0.0
    %4524 = vmatprep.subr.mxu0 0.0
    %4525 = vmatpush1.msra.mxu0 0.0
    %4526 = vmatprep.subr.mxu0 0.0
    %4527 = vmatpush1.msra.mxu0 0.0
    %4528 = vmatprep.subr.mxu0 0.0
    %4529 = vmatpush1.msra.mxu0 0.0
    %4530 = vmatprep.subr.mxu0 0.0
    %4531 = vmatpush1.msra.mxu0 0.0
    %4532 = vmatprep.subr.mxu0 0.0
    %4533 = vmatpush1.msra.mxu0 0.0
    %4534 = vmatprep.subr.mxu0 0.0
    %4535 = vmatpush1.msra.mxu0 0.0
    %4536 = vmatprep.subr.mxu0 0.0
    %4537 = vmatpush1.msra.mxu0 0.0
    %4538 = vmatprep.subr.mxu0 0.0
    %4539 = vmatpush1.msra.mxu0 0.0
    %4540 = vmatprep.subr.mxu0 0.0
    %4541 = vmatpush1.msra.mxu0 0.0
    %4542 = vmatprep.subr.mxu0 0.0
    %4543 = vmatpush1.msra.mxu0 0.0
    %4544 = vmatprep.subr.mxu0 0.0
    %4545 = vmatpush1.msra.mxu0 0.0
    %4546 = vmatprep.subr.mxu0 0.0
    %4547 = vmatpush1.msra.mxu0 0.0
    %4548 = vmatprep.subr.mxu0 0.0
    %4549 = vmatpush1.msra.mxu0 0.0
    %4550 = vmatprep.mubr.f32.mxu0 0.0
    %4551 = vmatmul.mubr.f32.gmra.mrb[0].mxu0 %v4024
    %v4552 = vpop.f32.mrb[0].mxu0
    %v4553 = vadd.f32 0.0, %v4552
    %v4554 = vpop.f32.mrb[0].mxu0
    %4555 = vmatprep.mubr.f32.mxu0 0.0
    %4556 = vmatmul.mubr.f32.gmra.mrb[0].mxu0 %v4027
    %v4557 = vpop.f32.mrb[0].mxu0
    %v4558 = vadd.f32 0.0, %v4557
    %v4559 = vpop.f32.mrb[0].mxu0
    %4560 = vmatprep.mubr.f32.mxu0 0.0
    %4561 = vmatmul.mubr.f32.gmra.mrb[0].mxu0 %v4030
    %v4562 = vpop.f32.mrb[0].mxu0
    %v4563 = vadd.f32 0.0, %v4562
    %v4564 = vpop.f32.mrb[0].mxu0
    %4565 = vmatprep.mubr.f32.mxu0 0.0
    %4566 = vmatmul.mubr.f32.gmra.mrb[0].mxu0 %v4033
    %v4567 = vpop.f32.mrb[0].mxu0
    %v4568 = vadd.f32 0.0, %v4567
    %v4569 = vpop.f32.mrb[0].mxu0
    %4570 = vmatprep.mubr.f32.mxu0 0.0
    %4571 = vmatmul.mubr.f32.gmra.mrb[0].mxu0 %v4036
    %v4572 = vpop.f32.mrb[0].mxu0
    %v4573 = vadd.f32 0.0, %v4572
    %v4574 = vpop.f32.mrb[0].mxu0
    %4575 = vmatprep.mubr.f32.mxu0 0.0
    %4576 = vmatmul.mubr.f32.gmra.mrb[0].mxu0 %v4039
    %v4577 = vpop.f32.mrb[0].mxu0
    %v4578 = vadd.f32 0.0, %v4577
    %v4579 = vpop.f32.mrb[0].mxu0
    %4580 = vmatprep.mubr.f32.mxu0 0.0
    %4581 = vmatmul.mubr.f32.gmra.mrb[0].mxu0 %v4042
    %v4582 = vpop.f32.mrb[0].mxu0
    %v4583 = vadd.f32 0.0, %v4582
    %v4584 = vpop.f32.mrb[0].mxu0
    %4585 = vmatprep.mubr.f32.mxu0 0.0
    %4586 = vmatmul.mubr.f32.gmra.mrb[0].mxu0 %v4045
    %v4587 = vpop.f32.mrb[0].mxu0
    %v4588 = vadd.f32 0.0, %v4587
    %v4589 = vpop.f32.mrb[0].mxu0
    %4590 = vdwg.mxu0
    %v4591 = vld [vmem:[%s45 + $0x10] sm:$0xff]
    %v4592 = vld [vmem:[%s45 + $0x18] sm:$0xff]
    %v4594 = vsel %vm2346, %v4553, 0
    %v4597 = vsel %vm2346, %v4558, 0
    %4599 = vmatprep.subr.mxu0 0.0
    %4600 = vmatpush1.msra.mxu0 %v4019
    %4601 = vmatprep.subr.mxu0 0.0
    %4602 = vmatpush1.msra.mxu0 0.0
    %4603 = vmatprep.subr.mxu0 0.0
    %4604 = vmatpush1.msra.mxu0 0.0
    %4605 = vmatprep.subr.mxu0 0.0
    %4606 = vmatpush1.msra.mxu0 0.0
    %4607 = vmatprep.subr.mxu0 0.0
    %4608 = vmatpush1.msra.mxu0 0.0
    %4609 = vmatprep.subr.mxu0 0.0
    %4610 = vmatpush1.msra.mxu0 0.0
    %4611 = vmatprep.subr.mxu0 0.0
    %4612 = vmatpush1.msra.mxu0 0.0
    %4613 = vmatprep.subr.mxu0 0.0
    %4614 = vmatpush1.msra.mxu0 0.0
    %4615 = vmatprep.subr.mxu0 0.0
    %4616 = vmatpush1.msra.mxu0 0.0
    %4617 = vmatprep.subr.mxu0 0.0
    %4618 = vmatpush1.msra.mxu0 0.0
    %4619 = vmatprep.subr.mxu0 0.0
    %4620 = vmatpush1.msra.mxu0 0.0
    %4621 = vmatprep.subr.mxu0 0.0
    %4622 = vmatpush1.msra.mxu0 0.0
    %4623 = vmatprep.subr.mxu0 0.0
    %4624 = vmatpush1.msra.mxu0 0.0
    %4625 = vmatprep.subr.mxu0 0.0
    %4626 = vmatpush1.msra.mxu0 0.0
    %4627 = vmatprep.subr.mxu0 0.0
    %4628 = vmatpush1.msra.mxu0 0.0
    %4629 = vmatprep.subr.mxu0 0.0
    %4630 = vmatpush1.msra.mxu0 0.0
    %4631 = vmatprep.subr.mxu0 0.0
    %4632 = vmatpush1.msra.mxu0 0.0
    %4633 = vmatprep.subr.mxu0 0.0
    %4634 = vmatpush1.msra.mxu0 0.0
    %4635 = vmatprep.subr.mxu0 0.0
    %4636 = vmatpush1.msra.mxu0 0.0
    %4637 = vmatprep.subr.mxu0 0.0
    %4638 = vmatpush1.msra.mxu0 0.0
    %4639 = vmatprep.subr.mxu0 0.0
    %4640 = vmatpush1.msra.mxu0 0.0
    %4641 = vmatprep.subr.mxu0 0.0
    %4642 = vmatpush1.msra.mxu0 0.0
    %4643 = vmatprep.subr.mxu0 0.0
    %4644 = vmatpush1.msra.mxu0 0.0
    %4645 = vmatprep.subr.mxu0 0.0
    %4646 = vmatpush1.msra.mxu0 0.0
    %4647 = vmatprep.subr.mxu0 0.0
    %4648 = vmatpush1.msra.mxu0 0.0
    %4649 = vmatprep.subr.mxu0 0.0
    %4650 = vmatpush1.msra.mxu0 0.0
    %4651 = vmatprep.subr.mxu0 0.0
    %4652 = vmatpush1.msra.mxu0 0.0
    %4653 = vmatprep.subr.mxu0 0.0
    %4654 = vmatpush1.msra.mxu0 0.0
    %4655 = vmatprep.subr.mxu0 0.0
    %4656 = vmatpush1.msra.mxu0 0.0
    %4657 = vmatprep.subr.mxu0 0.0
    %4658 = vmatpush1.msra.mxu0 0.0
    %4659 = vmatprep.subr.mxu0 0.0
    %4660 = vmatpush1.msra.mxu0 0.0
    %4661 = vmatprep.subr.mxu0 0.0
    %4662 = vmatpush1.msra.mxu0 0.0
    %4663 = vmatprep.mubr.f32.mxu0 0.0
    %4664 = vmatmul.mubr.f32.gmra.mrb[0].mxu0 %v4594
    %v4665 = vpop.f32.mrb[0].mxu0
    %v4666 = vadd.f32 0.0, %v4665
    %v4667 = vpop.f32.mrb[0].mxu0
    %4668 = vmatprep.mubr.f32.mxu0 0.0
    %4669 = vmatmul.mubr.f32.gmra.mrb[0].mxu0 %v4597
    %v4670 = vpop.f32.mrb[0].mxu0
    %v4671 = vadd.f32 0.0, %v4670
    %v4672 = vpop.f32.mrb[0].mxu0
    %4673 = vdwg.mxu0
    %v4674 = vadd.f32 %v4591, %v4666
    %v4675 = vadd.f32 %v4592, %v4671
    %v4677 = vsel %vm2346, %v4563, 0
    %v4680 = vsel %vm2346, %v4568, 0
    %4682 = vmatprep.subr.mxu0 0.0
    %4683 = vmatpush1.msra.mxu0 %v4020
    %4684 = vmatprep.subr.mxu0 0.0
    %4685 = vmatpush1.msra.mxu0 0.0
    %4686 = vmatprep.subr.mxu0 0.0
    %4687 = vmatpush1.msra.mxu0 0.0
    %4688 = vmatprep.subr.mxu0 0.0
    %4689 = vmatpush1.msra.mxu0 0.0
    %4690 = vmatprep.subr.mxu0 0.0
    %4691 = vmatpush1.msra.mxu0 0.0
    %4692 = vmatprep.subr.mxu0 0.0
    %4693 = vmatpush1.msra.mxu0 0.0
    %4694 = vmatprep.subr.mxu0 0.0
    %4695 = vmatpush1.msra.mxu0 0.0
    %4696 = vmatprep.subr.mxu0 0.0
    %4697 = vmatpush1.msra.mxu0 0.0
    %4698 = vmatprep.subr.mxu0 0.0
    %4699 = vmatpush1.msra.mxu0 0.0
    %4700 = vmatprep.subr.mxu0 0.0
    %4701 = vmatpush1.msra.mxu0 0.0
    %4702 = vmatprep.subr.mxu0 0.0
    %4703 = vmatpush1.msra.mxu0 0.0
    %4704 = vmatprep.subr.mxu0 0.0
    %4705 = vmatpush1.msra.mxu0 0.0
    %4706 = vmatprep.subr.mxu0 0.0
    %4707 = vmatpush1.msra.mxu0 0.0
    %4708 = vmatprep.subr.mxu0 0.0
    %4709 = vmatpush1.msra.mxu0 0.0
    %4710 = vmatprep.subr.mxu0 0.0
    %4711 = vmatpush1.msra.mxu0 0.0
    %4712 = vmatprep.subr.mxu0 0.0
    %4713 = vmatpush1.msra.mxu0 0.0
    %4714 = vmatprep.subr.mxu0 0.0
    %4715 = vmatpush1.msra.mxu0 0.0
    %4716 = vmatprep.subr.mxu0 0.0
    %4717 = vmatpush1.msra.mxu0 0.0
    %4718 = vmatprep.subr.mxu0 0.0
    %4719 = vmatpush1.msra.mxu0 0.0
    %4720 = vmatprep.subr.mxu0 0.0
    %4721 = vmatpush1.msra.mxu0 0.0
    %4722 = vmatprep.subr.mxu0 0.0
    %4723 = vmatpush1.msra.mxu0 0.0
    %4724 = vmatprep.subr.mxu0 0.0
    %4725 = vmatpush1.msra.mxu0 0.0
    %4726 = vmatprep.subr.mxu0 0.0
    %4727 = vmatpush1.msra.mxu0 0.0
    %4728 = vmatprep.subr.mxu0 0.0
    %4729 = vmatpush1.msra.mxu0 0.0
    %4730 = vmatprep.subr.mxu0 0.0
    %4731 = vmatpush1.msra.mxu0 0.0
    %4732 = vmatprep.subr.mxu0 0.0
    %4733 = vmatpush1.msra.mxu0 0.0
    %4734 = vmatprep.subr.mxu0 0.0
    %4735 = vmatpush1.msra.mxu0 0.0
    %4736 = vmatprep.subr.mxu0 0.0
    %4737 = vmatpush1.msra.mxu0 0.0
    %4738 = vmatprep.subr.mxu0 0.0
    %4739 = vmatpush1.msra.mxu0 0.0
    %4740 = vmatprep.subr.mxu0 0.0
    %4741 = vmatpush1.msra.mxu0 0.0
    %4742 = vmatprep.subr.mxu0 0.0
    %4743 = vmatpush1.msra.mxu0 0.0
    %4744 = vmatprep.subr.mxu0 0.0
    %4745 = vmatpush1.msra.mxu0 0.0
    %4746 = vmatprep.mubr.f32.mxu0 0.0
    %4747 = vmatmul.mubr.f32.gmra.mrb[0].mxu0 %v4677
    %v4748 = vpop.f32.mrb[0].mxu0
    %v4749 = vadd.f32 0.0, %v4748
    %v4750 = vpop.f32.mrb[0].mxu0
    %4751 = vmatprep.mubr.f32.mxu0 0.0
    %4752 = vmatmul.mubr.f32.gmra.mrb[0].mxu0 %v4680
    %v4753 = vpop.f32.mrb[0].mxu0
    %v4754 = vadd.f32 0.0, %v4753
    %v4755 = vpop.f32.mrb[0].mxu0
    %4756 = vdwg.mxu0
    %v4757 = vadd.f32 %v4674, %v4749
    %v4758 = vadd.f32 %v4675, %v4754
    %v4760 = vsel %vm2346, %v4573, 0
    %v4763 = vsel %vm2346, %v4578, 0
    %4765 = vmatprep.subr.mxu0 0.0
    %4766 = vmatpush1.msra.mxu0 %v4021
    %4767 = vmatprep.subr.mxu0 0.0
    %4768 = vmatpush1.msra.mxu0 0.0
    %4769 = vmatprep.subr.mxu0 0.0
    %4770 = vmatpush1.msra.mxu0 0.0
    %4771 = vmatprep.subr.mxu0 0.0
    %4772 = vmatpush1.msra.mxu0 0.0
    %4773 = vmatprep.subr.mxu0 0.0
    %4774 = vmatpush1.msra.mxu0 0.0
    %4775 = vmatprep.subr.mxu0 0.0
    %4776 = vmatpush1.msra.mxu0 0.0
    %4777 = vmatprep.subr.mxu0 0.0
    %4778 = vmatpush1.msra.mxu0 0.0
    %4779 = vmatprep.subr.mxu0 0.0
    %4780 = vmatpush1.msra.mxu0 0.0
    %4781 = vmatprep.subr.mxu0 0.0
    %4782 = vmatpush1.msra.mxu0 0.0
    %4783 = vmatprep.subr.mxu0 0.0
    %4784 = vmatpush1.msra.mxu0 0.0
    %4785 = vmatprep.subr.mxu0 0.0
    %4786 = vmatpush1.msra.mxu0 0.0
    %4787 = vmatprep.subr.mxu0 0.0
    %4788 = vmatpush1.msra.mxu0 0.0
    %4789 = vmatprep.subr.mxu0 0.0
    %4790 = vmatpush1.msra.mxu0 0.0
    %4791 = vmatprep.subr.mxu0 0.0
    %4792 = vmatpush1.msra.mxu0 0.0
    %4793 = vmatprep.subr.mxu0 0.0
    %4794 = vmatpush1.msra.mxu0 0.0
    %4795 = vmatprep.subr.mxu0 0.0
    %4796 = vmatpush1.msra.mxu0 0.0
    %4797 = vmatprep.subr.mxu0 0.0
    %4798 = vmatpush1.msra.mxu0 0.0
    %4799 = vmatprep.subr.mxu0 0.0
    %4800 = vmatpush1.msra.mxu0 0.0
    %4801 = vmatprep.subr.mxu0 0.0
    %4802 = vmatpush1.msra.mxu0 0.0
    %4803 = vmatprep.subr.mxu0 0.0
    %4804 = vmatpush1.msra.mxu0 0.0
    %4805 = vmatprep.subr.mxu0 0.0
    %4806 = vmatpush1.msra.mxu0 0.0
    %4807 = vmatprep.subr.mxu0 0.0
    %4808 = vmatpush1.msra.mxu0 0.0
    %4809 = vmatprep.subr.mxu0 0.0
    %4810 = vmatpush1.msra.mxu0 0.0
    %4811 = vmatprep.subr.mxu0 0.0
    %4812 = vmatpush1.msra.mxu0 0.0
    %4813 = vmatprep.subr.mxu0 0.0
    %4814 = vmatpush1.msra.mxu0 0.0
    %4815 = vmatprep.subr.mxu0 0.0
    %4816 = vmatpush1.msra.mxu0 0.0
    %4817 = vmatprep.subr.mxu0 0.0
    %4818 = vmatpush1.msra.mxu0 0.0
    %4819 = vmatprep.subr.mxu0 0.0
    %4820 = vmatpush1.msra.mxu0 0.0
    %4821 = vmatprep.subr.mxu0 0.0
    %4822 = vmatpush1.msra.mxu0 0.0
    %4823 = vmatprep.subr.mxu0 0.0
    %4824 = vmatpush1.msra.mxu0 0.0
    %4825 = vmatprep.subr.mxu0 0.0
    %4826 = vmatpush1.msra.mxu0 0.0
    %4827 = vmatprep.subr.mxu0 0.0
    %4828 = vmatpush1.msra.mxu0 0.0
    %4829 = vmatprep.mubr.f32.mxu0 0.0
    %4830 = vmatmul.mubr.f32.gmra.mrb[0].mxu0 %v4760
    %v4831 = vpop.f32.mrb[0].mxu0
    %v4832 = vadd.f32 0.0, %v4831
    %v4833 = vpop.f32.mrb[0].mxu0
    %4834 = vmatprep.mubr.f32.mxu0 0.0
    %4835 = vmatmul.mubr.f32.gmra.mrb[0].mxu0 %v4763
    %v4836 = vpop.f32.mrb[0].mxu0
    %v4837 = vadd.f32 0.0, %v4836
    %v4838 = vpop.f32.mrb[0].mxu0
    %4839 = vdwg.mxu0
    %v4840 = vadd.f32 %v4757, %v4832
    %v4841 = vadd.f32 %v4758, %v4837
    %v4843 = vsel %vm2346, %v4583, 0
    %v4846 = vsel %vm2346, %v4588, 0
    %4848 = vmatprep.subr.mxu0 0.0
    %4849 = vmatpush1.msra.mxu0 %v4022
    %4850 = vmatprep.subr.mxu0 0.0
    %4851 = vmatpush1.msra.mxu0 0.0
    %4852 = vmatprep.subr.mxu0 0.0
    %4853 = vmatpush1.msra.mxu0 0.0
    %4854 = vmatprep.subr.mxu0 0.0
    %4855 = vmatpush1.msra.mxu0 0.0
    %4856 = vmatprep.subr.mxu0 0.0
    %4857 = vmatpush1.msra.mxu0 0.0
    %4858 = vmatprep.subr.mxu0 0.0
    %4859 = vmatpush1.msra.mxu0 0.0
    %4860 = vmatprep.subr.mxu0 0.0
    %4861 = vmatpush1.msra.mxu0 0.0
    %4862 = vmatprep.subr.mxu0 0.0
    %4863 = vmatpush1.msra.mxu0 0.0
    %4864 = vmatprep.subr.mxu0 0.0
    %4865 = vmatpush1.msra.mxu0 0.0
    %4866 = vmatprep.subr.mxu0 0.0
    %4867 = vmatpush1.msra.mxu0 0.0
    %4868 = vmatprep.subr.mxu0 0.0
    %4869 = vmatpush1.msra.mxu0 0.0
    %4870 = vmatprep.subr.mxu0 0.0
    %4871 = vmatpush1.msra.mxu0 0.0
    %4872 = vmatprep.subr.mxu0 0.0
    %4873 = vmatpush1.msra.mxu0 0.0
    %4874 = vmatprep.subr.mxu0 0.0
    %4875 = vmatpush1.msra.mxu0 0.0
    %4876 = vmatprep.subr.mxu0 0.0
    %4877 = vmatpush1.msra.mxu0 0.0
    %4878 = vmatprep.subr.mxu0 0.0
    %4879 = vmatpush1.msra.mxu0 0.0
    %4880 = vmatprep.subr.mxu0 0.0
    %4881 = vmatpush1.msra.mxu0 0.0
    %4882 = vmatprep.subr.mxu0 0.0
    %4883 = vmatpush1.msra.mxu0 0.0
    %4884 = vmatprep.subr.mxu0 0.0
    %4885 = vmatpush1.msra.mxu0 0.0
    %4886 = vmatprep.subr.mxu0 0.0
    %4887 = vmatpush1.msra.mxu0 0.0
    %4888 = vmatprep.subr.mxu0 0.0
    %4889 = vmatpush1.msra.mxu0 0.0
    %4890 = vmatprep.subr.mxu0 0.0
    %4891 = vmatpush1.msra.mxu0 0.0
    %4892 = vmatprep.subr.mxu0 0.0
    %4893 = vmatpush1.msra.mxu0 0.0
    %4894 = vmatprep.subr.mxu0 0.0
    %4895 = vmatpush1.msra.mxu0 0.0
    %4896 = vmatprep.subr.mxu0 0.0
    %4897 = vmatpush1.msra.mxu0 0.0
    %4898 = vmatprep.subr.mxu0 0.0
    %4899 = vmatpush1.msra.mxu0 0.0
    %4900 = vmatprep.subr.mxu0 0.0
    %4901 = vmatpush1.msra.mxu0 0.0
    %4902 = vmatprep.subr.mxu0 0.0
    %4903 = vmatpush1.msra.mxu0 0.0
    %4904 = vmatprep.subr.mxu0 0.0
    %4905 = vmatpush1.msra.mxu0 0.0
    %4906 = vmatprep.subr.mxu0 0.0
    %4907 = vmatpush1.msra.mxu0 0.0
    %4908 = vmatprep.subr.mxu0 0.0
    %4909 = vmatpush1.msra.mxu0 0.0
    %4910 = vmatprep.subr.mxu0 0.0
    %4911 = vmatpush1.msra.mxu0 0.0
    %4912 = vmatprep.mubr.f32.mxu0 0.0
    %4913 = vmatmul.mubr.f32.gmra.mrb[0].mxu0 %v4843
    %v4914 = vpop.f32.mrb[0].mxu0
    %v4915 = vadd.f32 0.0, %v4914
    %v4916 = vpop.f32.mrb[0].mxu0
    %4917 = vmatprep.mubr.f32.mxu0 0.0
    %4918 = vmatmul.mubr.f32.gmra.mrb[0].mxu0 %v4846
    %v4919 = vpop.f32.mrb[0].mxu0
    %v4920 = vadd.f32 0.0, %v4919
    %v4921 = vpop.f32.mrb[0].mxu0
    %4922 = vdwg.mxu0
    %v4923 = vadd.f32 %v4840, %v4915
    %v4924 = vadd.f32 %v4841, %v4920
    %v4925 = vsel %vm1351, %v4484, 0.0
    %v4926 = vsel %vm1351, %v4485, 0.0
    %v4927 = vadd.f32 %v4925, %v4926
    %v4928 = vrot.slane %v4927, 4
    %v4929 = vadd.f32 %v4927, %v4928
    %v4930 = vrot.slane %v4929, 2
    %v4931 = vadd.f32 %v4929, %v4930
    %v4932 = vrot.slane %v4931, 1
    %v4933 = vadd.f32 %v4931, %v4932
    %v4934 = vsel %vm1351, %v4923, 0.0
    %v4935 = vsel %vm1351, %v4924, 0.0
    %v4936 = vadd.f32 %v4934, %v4935
    %v4937 = vrot.slane %v4936, 4
    %v4938 = vadd.f32 %v4936, %v4937
    %v4939 = vrot.slane %v4938, 2
    %v4940 = vadd.f32 %v4938, %v4939
    %v4941 = vrot.slane %v4940, 1
    %v4942 = vadd.f32 %v4940, %v4941
    %v4943 = vadd.f32 %v4933, %v4942
    %v4944 = vmul.f32 %v4943, 0.03125
    %v4945 = vsub.f32 %v4484, %v4944
    %v4946 = vsub.f32 %v4485, %v4944
    %v4947 = vmul.f32 %v4945, %v4945
    %v4948 = vmul.f32 %v4946, %v4946
    %v4949 = vsel %vm1351, %v4947, 0.0
    %v4950 = vsel %vm1351, %v4948, 0.0
    %v4951 = vadd.f32 %v4949, %v4950
    %v4952 = vrot.slane %v4951, 4
    %v4953 = vadd.f32 %v4951, %v4952
    %v4954 = vrot.slane %v4953, 2
    %v4955 = vadd.f32 %v4953, %v4954
    %v4956 = vrot.slane %v4955, 1
    %v4957 = vadd.f32 %v4955, %v4956
    %v4958 = vsub.f32 %v4923, %v4944
    %v4959 = vsub.f32 %v4924, %v4944
    %v4960 = vmul.f32 %v4958, %v4958
    %v4961 = vmul.f32 %v4959, %v4959
    %v4962 = vsel %vm1351, %v4960, 0.0
    %v4963 = vsel %vm1351, %v4961, 0.0
    %v4964 = vadd.f32 %v4962, %v4963
    %v4965 = vrot.slane %v4964, 4
    %v4966 = vadd.f32 %v4964, %v4965
    %v4967 = vrot.slane %v4966, 2
    %v4968 = vadd.f32 %v4966, %v4967
    %v4969 = vrot.slane %v4968, 1
    %v4970 = vadd.f32 %v4968, %v4969
    %v4971 = vadd.f32 %v4957, %v4970
    %v4972 = vmul.f32 %v4971, 0.03125
    %v4973 = vadd.f32 %v4972, 1e-05
    %v4974 = vrsqrt.pop %v4973
    %v4975 = vld [vmem:[%s47] sm:$0x1]
    %v4976 = vld [vmem:[%s49] sm:$0x1]
    %v4977 = vmul.f32 %v4945, %v4974
    %v4978 = vmul.f32 %v4946, %v4974
    %v4980 = vlaneseq
    %v4981 = vshrl.u32 %v4980, 7
    %v4982 = vsub.s32 0, %v4981
    %v4983 = vrot.slane %v4975, %v4982
    %v4985 = vmul.f32 %v4977, %v4983
    %v4986 = vmul.f32 %v4978, %v4983
    %v4988 = vlaneseq
    %v4989 = vshrl.u32 %v4988, 7
    %v4990 = vsub.s32 0, %v4989
    %v4991 = vrot.slane %v4976, %v4990
    %v4993 = vadd.f32 %v4985, %v4991
    %v4994 = vadd.f32 %v4986, %v4991
    %v4995 = vxor.u32 %v4993, 2147483648
    %v4996 = vxor.u32 %v4994, 2147483648
    %v4997 = vmul.f32 %v4995, 1.442695
    %v4998 = vpow.pop %v4997
    %v4999 = vmul.f32 %v4996, 1.442695
    %v5000 = vpow.pop %v4999
    %v5001 = vadd.f32 %v4998, 1.0
    %v5002 = vadd.f32 %v5000, 1.0
    %v5003 = vrcp.pop %v5001
    %v5004 = vmul.f32 1.0, %v5003
    %v5005 = vrcp.pop %v5002
    %v5006 = vmul.f32 1.0, %v5005
    %5009 = vrot.lane.b32.xlu0 %v5004, 112
    %v5010 = vpop.permute.xlu0 %5009
    %5011 = vrot.lane.b32.xlu0 %v5006, 112
    %v5012 = vpop.permute.xlu0 %5011
    %v5015 = vmul.f32 %v4993, %v5010
    %v5016 = vmul.f32 %v4994, %v5012
    %v5017 = vmul.f32 %v4958, %v4974
    %v5018 = vmul.f32 %v4959, %v4974
    %v5019 = vmul.f32 %v5017, %v4983
    %v5020 = vmul.f32 %v5018, %v4983
    %v5021 = vadd.f32 %v5019, %v4991
    %v5022 = vadd.f32 %v5020, %v4991
    %v5023 = vxor.u32 %v5021, 2147483648
    %v5024 = vxor.u32 %v5022, 2147483648
    %v5025 = vmul.f32 %v5023, 1.442695
    %v5026 = vpow.pop %v5025
    %v5027 = vmul.f32 %v5024, 1.442695
    %v5028 = vpow.pop %v5027
    %v5029 = vadd.f32 %v5026, 1.0
    %v5030 = vadd.f32 %v5028, 1.0
    %v5031 = vrcp.pop %v5029
    %v5032 = vmul.f32 1.0, %v5031
    %v5033 = vrcp.pop %v5030
    %v5034 = vmul.f32 1.0, %v5033
    %5037 = vrot.lane.b32.xlu0 %v5032, 112
    %v5038 = vpop.permute.xlu0 %5037
    %5039 = vrot.lane.b32.xlu0 %v5034, 112
    %v5040 = vpop.permute.xlu0 %5039
    %v5043 = vmul.f32 %v5021, %v5038
    %v5044 = vmul.f32 %v5022, %v5040
    %v5045 = vld [vmem:[%s51] sm:$0xff]
    %v5046 = vld [vmem:[%s51 + $0x8] sm:$0xff]
    %v5047 = vld [vmem:[%s51 + $0x10] sm:$0xff]
    %v5048 = vld [vmem:[%s51 + $0x18] sm:$0xff]
    %v5049 = vld [vmem:[%s51 + $0x20] sm:$0xff]
    %v5050 = vld [vmem:[%s51 + $0x28] sm:$0xff]
    %v5051 = vld [vmem:[%s51 + $0x30] sm:$0xff]
    %v5052 = vld [vmem:[%s51 + $0x38] sm:$0xff]
    %v5053 = vld [vmem:[%s51 + $0x40] sm:$0xff]
    %v5054 = vld [vmem:[%s51 + $0x48] sm:$0xff]
    %v5055 = vld [vmem:[%s53] sm:$0xff]
    %v5056 = vld [vmem:[%s53 + $0x8] sm:$0xff]
    %v5057 = vld [vmem:[%s53 + $0x10] sm:$0xff]
    %v5058 = vld [vmem:[%s53 + $0x18] sm:$0xff]
    %v5059 = vld [vmem:[%s53 + $0x20] sm:$0xff]
    %v5060 = vld [vmem:[%s53 + $0x28] sm:$0xff]
    %v5061 = vld [vmem:[%s53 + $0x30] sm:$0xff]
    %v5062 = vld [vmem:[%s53 + $0x38] sm:$0xff]
    %v5063 = vld [vmem:[%s53 + $0x40] sm:$0xff]
    %v5064 = vld [vmem:[%s53 + $0x48] sm:$0xff]
    %v5066 = vsel %vm171, %v5045, 0
    %v5069 = vsel %vm171, %v5046, 0
    %v5072 = vsel %vm171, %v5047, 0
    %v5075 = vsel %vm171, %v5048, 0
    %v5078 = vsel %vm171, %v5049, 0
    %v5081 = vsel %vm171, %v5050, 0
    %v5084 = vsel %vm171, %v5051, 0
    %v5087 = vsel %vm171, %v5052, 0
    %v5090 = vsel %vm171, %v5053, 0
    %v5093 = vsel %vm171, %v5054, 0
    %5095 = vmatprep.subr.mxu0 0.0
    %5096 = vmatpush1.msra.mxu0 %v5015
    %5097 = vmatprep.subr.mxu0 0.0
    %5098 = vmatpush1.msra.mxu0 %v5016
    %5099 = vmatprep.subr.mxu0 0.0
    %5100 = vmatpush1.msra.mxu0 0.0
    %5101 = vmatprep.subr.mxu0 0.0
    %5102 = vmatpush1.msra.mxu0 0.0
    %5103 = vmatprep.subr.mxu0 0.0
    %5104 = vmatpush1.msra.mxu0 0.0
    %5105 = vmatprep.subr.mxu0 0.0
    %5106 = vmatpush1.msra.mxu0 0.0
    %5107 = vmatprep.subr.mxu0 0.0
    %5108 = vmatpush1.msra.mxu0 0.0
    %5109 = vmatprep.subr.mxu0 0.0
    %5110 = vmatpush1.msra.mxu0 0.0
    %5111 = vmatprep.subr.mxu0 0.0
    %5112 = vmatpush1.msra.mxu0 0.0
    %5113 = vmatprep.subr.mxu0 0.0
    %5114 = vmatpush1.msra.mxu0 0.0
    %5115 = vmatprep.subr.mxu0 0.0
    %5116 = vmatpush1.msra.mxu0 0.0
    %5117 = vmatprep.subr.mxu0 0.0
    %5118 = vmatpush1.msra.mxu0 0.0
    %5119 = vmatprep.subr.mxu0 0.0
    %5120 = vmatpush1.msra.mxu0 0.0
    %5121 = vmatprep.subr.mxu0 0.0
    %5122 = vmatpush1.msra.mxu0 0.0
    %5123 = vmatprep.subr.mxu0 0.0
    %5124 = vmatpush1.msra.mxu0 0.0
    %5125 = vmatprep.subr.mxu0 0.0
    %5126 = vmatpush1.msra.mxu0 0.0
    %5127 = vmatprep.subr.mxu0 0.0
    %5128 = vmatpush1.msra.mxu0 0.0
    %5129 = vmatprep.subr.mxu0 0.0
    %5130 = vmatpush1.msra.mxu0 0.0
    %5131 = vmatprep.subr.mxu0 0.0
    %5132 = vmatpush1.msra.mxu0 0.0
    %5133 = vmatprep.subr.mxu0 0.0
    %5134 = vmatpush1.msra.mxu0 0.0
    %5135 = vmatprep.subr.mxu0 0.0
    %5136 = vmatpush1.msra.mxu0 0.0
    %5137 = vmatprep.subr.mxu0 0.0
    %5138 = vmatpush1.msra.mxu0 0.0
    %5139 = vmatprep.subr.mxu0 0.0
    %5140 = vmatpush1.msra.mxu0 0.0
    %5141 = vmatprep.subr.mxu0 0.0
    %5142 = vmatpush1.msra.mxu0 0.0
    %5143 = vmatprep.subr.mxu0 0.0
    %5144 = vmatpush1.msra.mxu0 0.0
    %5145 = vmatprep.subr.mxu0 0.0
    %5146 = vmatpush1.msra.mxu0 0.0
    %5147 = vmatprep.subr.mxu0 0.0
    %5148 = vmatpush1.msra.mxu0 0.0
    %5149 = vmatprep.subr.mxu0 0.0
    %5150 = vmatpush1.msra.mxu0 0.0
    %5151 = vmatprep.subr.mxu0 0.0
    %5152 = vmatpush1.msra.mxu0 0.0
    %5153 = vmatprep.subr.mxu0 0.0
    %5154 = vmatpush1.msra.mxu0 0.0
    %5155 = vmatprep.subr.mxu0 0.0
    %5156 = vmatpush1.msra.mxu0 0.0
    %5157 = vmatprep.subr.mxu0 0.0
    %5158 = vmatpush1.msra.mxu0 0.0
    %5159 = vmatprep.mubr.f32.mxu0 0.0
    %5160 = vmatmul.mubr.f32.gmra.mrb[0].mxu0 %v5066
    %v5161 = vpop.f32.mrb[0].mxu0
    %v5162 = vadd.f32 0.0, %v5161
    %v5163 = vpop.f32.mrb[0].mxu0
    %5164 = vmatprep.mubr.f32.mxu0 0.0
    %5165 = vmatmul.mubr.f32.gmra.mrb[0].mxu0 %v5069
    %v5166 = vpop.f32.mrb[0].mxu0
    %v5167 = vadd.f32 0.0, %v5166
    %v5168 = vpop.f32.mrb[0].mxu0
    %5169 = vmatprep.mubr.f32.mxu0 0.0
    %5170 = vmatmul.mubr.f32.gmra.mrb[0].mxu0 %v5072
    %v5171 = vpop.f32.mrb[0].mxu0
    %v5172 = vadd.f32 0.0, %v5171
    %v5173 = vpop.f32.mrb[0].mxu0
    %5174 = vmatprep.mubr.f32.mxu0 0.0
    %5175 = vmatmul.mubr.f32.gmra.mrb[0].mxu0 %v5075
    %v5176 = vpop.f32.mrb[0].mxu0
    %v5177 = vadd.f32 0.0, %v5176
    %v5178 = vpop.f32.mrb[0].mxu0
    %5179 = vmatprep.mubr.f32.mxu0 0.0
    %5180 = vmatmul.mubr.f32.gmra.mrb[0].mxu0 %v5078
    %v5181 = vpop.f32.mrb[0].mxu0
    %v5182 = vadd.f32 0.0, %v5181
    %v5183 = vpop.f32.mrb[0].mxu0
    %5184 = vmatprep.mubr.f32.mxu0 0.0
    %5185 = vmatmul.mubr.f32.gmra.mrb[0].mxu0 %v5081
    %v5186 = vpop.f32.mrb[0].mxu0
    %v5187 = vadd.f32 0.0, %v5186
    %v5188 = vpop.f32.mrb[0].mxu0
    %5189 = vmatprep.mubr.f32.mxu0 0.0
    %5190 = vmatmul.mubr.f32.gmra.mrb[0].mxu0 %v5084
    %v5191 = vpop.f32.mrb[0].mxu0
    %v5192 = vadd.f32 0.0, %v5191
    %v5193 = vpop.f32.mrb[0].mxu0
    %5194 = vmatprep.mubr.f32.mxu0 0.0
    %5195 = vmatmul.mubr.f32.gmra.mrb[0].mxu0 %v5087
    %v5196 = vpop.f32.mrb[0].mxu0
    %v5197 = vadd.f32 0.0, %v5196
    %v5198 = vpop.f32.mrb[0].mxu0
    %5199 = vmatprep.mubr.f32.mxu0 0.0
    %5200 = vmatmul.mubr.f32.gmra.mrb[0].mxu0 %v5090
    %v5201 = vpop.f32.mrb[0].mxu0
    %v5202 = vadd.f32 0.0, %v5201
    %v5203 = vpop.f32.mrb[0].mxu0
    %5204 = vmatprep.mubr.f32.mxu0 0.0
    %5205 = vmatmul.mubr.f32.gmra.mrb[0].mxu0 %v5093
    %v5206 = vpop.f32.mrb[0].mxu0
    %v5207 = vadd.f32 0.0, %v5206
    %v5208 = vpop.f32.mrb[0].mxu0
    %5209 = vdwg.mxu0
    %v5210 = vld [vmem:[%s55] sm:$0xff]
    %v5211 = vld [vmem:[%s55 + $0x8] sm:$0xff]
    %v5213 = vsel %vm171, %v5162, 0
    %v5216 = vsel %vm171, %v5167, 0
    %5218 = vmatprep.subr.mxu0 0.0
    %5219 = vmatpush1.msra.mxu0 %v5055
    %5220 = vmatprep.subr.mxu0 0.0
    %5221 = vmatpush1.msra.mxu0 %v5056
    %5222 = vmatprep.subr.mxu0 0.0
    %5223 = vmatpush1.msra.mxu0 0.0
    %5224 = vmatprep.subr.mxu0 0.0
    %5225 = vmatpush1.msra.mxu0 0.0
    %5226 = vmatprep.subr.mxu0 0.0
    %5227 = vmatpush1.msra.mxu0 0.0
    %5228 = vmatprep.subr.mxu0 0.0
    %5229 = vmatpush1.msra.mxu0 0.0
    %5230 = vmatprep.subr.mxu0 0.0
    %5231 = vmatpush1.msra.mxu0 0.0
    %5232 = vmatprep.subr.mxu0 0.0
    %5233 = vmatpush1.msra.mxu0 0.0
    %5234 = vmatprep.subr.mxu0 0.0
    %5235 = vmatpush1.msra.mxu0 0.0
    %5236 = vmatprep.subr.mxu0 0.0
    %5237 = vmatpush1.msra.mxu0 0.0
    %5238 = vmatprep.subr.mxu0 0.0
    %5239 = vmatpush1.msra.mxu0 0.0
    %5240 = vmatprep.subr.mxu0 0.0
    %5241 = vmatpush1.msra.mxu0 0.0
    %5242 = vmatprep.subr.mxu0 0.0
    %5243 = vmatpush1.msra.mxu0 0.0
    %5244 = vmatprep.subr.mxu0 0.0
    %5245 = vmatpush1.msra.mxu0 0.0
    %5246 = vmatprep.subr.mxu0 0.0
    %5247 = vmatpush1.msra.mxu0 0.0
    %5248 = vmatprep.subr.mxu0 0.0
    %5249 = vmatpush1.msra.mxu0 0.0
    %5250 = vmatprep.subr.mxu0 0.0
    %5251 = vmatpush1.msra.mxu0 0.0
    %5252 = vmatprep.subr.mxu0 0.0
    %5253 = vmatpush1.msra.mxu0 0.0
    %5254 = vmatprep.subr.mxu0 0.0
    %5255 = vmatpush1.msra.mxu0 0.0
    %5256 = vmatprep.subr.mxu0 0.0
    %5257 = vmatpush1.msra.mxu0 0.0
    %5258 = vmatprep.subr.mxu0 0.0
    %5259 = vmatpush1.msra.mxu0 0.0
    %5260 = vmatprep.subr.mxu0 0.0
    %5261 = vmatpush1.msra.mxu0 0.0
    %5262 = vmatprep.subr.mxu0 0.0
    %5263 = vmatpush1.msra.mxu0 0.0
    %5264 = vmatprep.subr.mxu0 0.0
    %5265 = vmatpush1.msra.mxu0 0.0
    %5266 = vmatprep.subr.mxu0 0.0
    %5267 = vmatpush1.msra.mxu0 0.0
    %5268 = vmatprep.subr.mxu0 0.0
    %5269 = vmatpush1.msra.mxu0 0.0
    %5270 = vmatprep.subr.mxu0 0.0
    %5271 = vmatpush1.msra.mxu0 0.0
    %5272 = vmatprep.subr.mxu0 0.0
    %5273 = vmatpush1.msra.mxu0 0.0
    %5274 = vmatprep.subr.mxu0 0.0
    %5275 = vmatpush1.msra.mxu0 0.0
    %5276 = vmatprep.subr.mxu0 0.0
    %5277 = vmatpush1.msra.mxu0 0.0
    %5278 = vmatprep.subr.mxu0 0.0
    %5279 = vmatpush1.msra.mxu0 0.0
    %5280 = vmatprep.subr.mxu0 0.0
    %5281 = vmatpush1.msra.mxu0 0.0
    %5282 = vmatprep.mubr.f32.mxu0 0.0
    %5283 = vmatmul.mubr.f32.gmra.mrb[0].mxu0 %v5213
    %v5284 = vpop.f32.mrb[0].mxu0
    %v5285 = vadd.f32 0.0, %v5284
    %v5286 = vpop.f32.mrb[0].mxu0
    %5287 = vmatprep.mubr.f32.mxu0 0.0
    %5288 = vmatmul.mubr.f32.gmra.mrb[0].mxu0 %v5216
    %v5289 = vpop.f32.mrb[0].mxu0
    %v5290 = vadd.f32 0.0, %v5289
    %v5291 = vpop.f32.mrb[0].mxu0
    %5292 = vdwg.mxu0
    %v5293 = vadd.f32 %v5210, %v5285
    %v5294 = vadd.f32 %v5211, %v5290
    %v5296 = vsel %vm171, %v5172, 0
    %v5299 = vsel %vm171, %v5177, 0
    %5301 = vmatprep.subr.mxu0 0.0
    %5302 = vmatpush1.msra.mxu0 %v5057
    %5303 = vmatprep.subr.mxu0 0.0
    %5304 = vmatpush1.msra.mxu0 %v5058
    %5305 = vmatprep.subr.mxu0 0.0
    %5306 = vmatpush1.msra.mxu0 0.0
    %5307 = vmatprep.subr.mxu0 0.0
    %5308 = vmatpush1.msra.mxu0 0.0
    %5309 = vmatprep.subr.mxu0 0.0
    %5310 = vmatpush1.msra.mxu0 0.0
    %5311 = vmatprep.subr.mxu0 0.0
    %5312 = vmatpush1.msra.mxu0 0.0
    %5313 = vmatprep.subr.mxu0 0.0
    %5314 = vmatpush1.msra.mxu0 0.0
    %5315 = vmatprep.subr.mxu0 0.0
    %5316 = vmatpush1.msra.mxu0 0.0
    %5317 = vmatprep.subr.mxu0 0.0
    %5318 = vmatpush1.msra.mxu0 0.0
    %5319 = vmatprep.subr.mxu0 0.0
    %5320 = vmatpush1.msra.mxu0 0.0
    %5321 = vmatprep.subr.mxu0 0.0
    %5322 = vmatpush1.msra.mxu0 0.0
    %5323 = vmatprep.subr.mxu0 0.0
    %5324 = vmatpush1.msra.mxu0 0.0
    %5325 = vmatprep.subr.mxu0 0.0
    %5326 = vmatpush1.msra.mxu0 0.0
    %5327 = vmatprep.subr.mxu0 0.0
    %5328 = vmatpush1.msra.mxu0 0.0
    %5329 = vmatprep.subr.mxu0 0.0
    %5330 = vmatpush1.msra.mxu0 0.0
    %5331 = vmatprep.subr.mxu0 0.0
    %5332 = vmatpush1.msra.mxu0 0.0
    %5333 = vmatprep.subr.mxu0 0.0
    %5334 = vmatpush1.msra.mxu0 0.0
    %5335 = vmatprep.subr.mxu0 0.0
    %5336 = vmatpush1.msra.mxu0 0.0
    %5337 = vmatprep.subr.mxu0 0.0
    %5338 = vmatpush1.msra.mxu0 0.0
    %5339 = vmatprep.subr.mxu0 0.0
    %5340 = vmatpush1.msra.mxu0 0.0
    %5341 = vmatprep.subr.mxu0 0.0
    %5342 = vmatpush1.msra.mxu0 0.0
    %5343 = vmatprep.subr.mxu0 0.0
    %5344 = vmatpush1.msra.mxu0 0.0
    %5345 = vmatprep.subr.mxu0 0.0
    %5346 = vmatpush1.msra.mxu0 0.0
    %5347 = vmatprep.subr.mxu0 0.0
    %5348 = vmatpush1.msra.mxu0 0.0
    %5349 = vmatprep.subr.mxu0 0.0
    %5350 = vmatpush1.msra.mxu0 0.0
    %5351 = vmatprep.subr.mxu0 0.0
    %5352 = vmatpush1.msra.mxu0 0.0
    %5353 = vmatprep.subr.mxu0 0.0
    %5354 = vmatpush1.msra.mxu0 0.0
    %5355 = vmatprep.subr.mxu0 0.0
    %5356 = vmatpush1.msra.mxu0 0.0
    %5357 = vmatprep.subr.mxu0 0.0
    %5358 = vmatpush1.msra.mxu0 0.0
    %5359 = vmatprep.subr.mxu0 0.0
    %5360 = vmatpush1.msra.mxu0 0.0
    %5361 = vmatprep.subr.mxu0 0.0
    %5362 = vmatpush1.msra.mxu0 0.0
    %5363 = vmatprep.subr.mxu0 0.0
    %5364 = vmatpush1.msra.mxu0 0.0
    %5365 = vmatprep.mubr.f32.mxu0 0.0
    %5366 = vmatmul.mubr.f32.gmra.mrb[0].mxu0 %v5296
    %v5367 = vpop.f32.mrb[0].mxu0
    %v5368 = vadd.f32 0.0, %v5367
    %v5369 = vpop.f32.mrb[0].mxu0
    %5370 = vmatprep.mubr.f32.mxu0 0.0
    %5371 = vmatmul.mubr.f32.gmra.mrb[0].mxu0 %v5299
    %v5372 = vpop.f32.mrb[0].mxu0
    %v5373 = vadd.f32 0.0, %v5372
    %v5374 = vpop.f32.mrb[0].mxu0
    %5375 = vdwg.mxu0
    %v5376 = vadd.f32 %v5293, %v5368
    %v5377 = vadd.f32 %v5294, %v5373
    %v5379 = vsel %vm171, %v5182, 0
    %v5382 = vsel %vm171, %v5187, 0
    %5384 = vmatprep.subr.mxu0 0.0
    %5385 = vmatpush1.msra.mxu0 %v5059
    %5386 = vmatprep.subr.mxu0 0.0
    %5387 = vmatpush1.msra.mxu0 %v5060
    %5388 = vmatprep.subr.mxu0 0.0
    %5389 = vmatpush1.msra.mxu0 0.0
    %5390 = vmatprep.subr.mxu0 0.0
    %5391 = vmatpush1.msra.mxu0 0.0
    %5392 = vmatprep.subr.mxu0 0.0
    %5393 = vmatpush1.msra.mxu0 0.0
    %5394 = vmatprep.subr.mxu0 0.0
    %5395 = vmatpush1.msra.mxu0 0.0
    %5396 = vmatprep.subr.mxu0 0.0
    %5397 = vmatpush1.msra.mxu0 0.0
    %5398 = vmatprep.subr.mxu0 0.0
    %5399 = vmatpush1.msra.mxu0 0.0
    %5400 = vmatprep.subr.mxu0 0.0
    %5401 = vmatpush1.msra.mxu0 0.0
    %5402 = vmatprep.subr.mxu0 0.0
    %5403 = vmatpush1.msra.mxu0 0.0
    %5404 = vmatprep.subr.mxu0 0.0
    %5405 = vmatpush1.msra.mxu0 0.0
    %5406 = vmatprep.subr.mxu0 0.0
    %5407 = vmatpush1.msra.mxu0 0.0
    %5408 = vmatprep.subr.mxu0 0.0
    %5409 = vmatpush1.msra.mxu0 0.0
    %5410 = vmatprep.subr.mxu0 0.0
    %5411 = vmatpush1.msra.mxu0 0.0
    %5412 = vmatprep.subr.mxu0 0.0
    %5413 = vmatpush1.msra.mxu0 0.0
    %5414 = vmatprep.subr.mxu0 0.0
    %5415 = vmatpush1.msra.mxu0 0.0
    %5416 = vmatprep.subr.mxu0 0.0
    %5417 = vmatpush1.msra.mxu0 0.0
    %5418 = vmatprep.subr.mxu0 0.0
    %5419 = vmatpush1.msra.mxu0 0.0
    %5420 = vmatprep.subr.mxu0 0.0
    %5421 = vmatpush1.msra.mxu0 0.0
    %5422 = vmatprep.subr.mxu0 0.0
    %5423 = vmatpush1.msra.mxu0 0.0
    %5424 = vmatprep.subr.mxu0 0.0
    %5425 = vmatpush1.msra.mxu0 0.0
    %5426 = vmatprep.subr.mxu0 0.0
    %5427 = vmatpush1.msra.mxu0 0.0
    %5428 = vmatprep.subr.mxu0 0.0
    %5429 = vmatpush1.msra.mxu0 0.0
    %5430 = vmatprep.subr.mxu0 0.0
    %5431 = vmatpush1.msra.mxu0 0.0
    %5432 = vmatprep.subr.mxu0 0.0
    %5433 = vmatpush1.msra.mxu0 0.0
    %5434 = vmatprep.subr.mxu0 0.0
    %5435 = vmatpush1.msra.mxu0 0.0
    %5436 = vmatprep.subr.mxu0 0.0
    %5437 = vmatpush1.msra.mxu0 0.0
    %5438 = vmatprep.subr.mxu0 0.0
    %5439 = vmatpush1.msra.mxu0 0.0
    %5440 = vmatprep.subr.mxu0 0.0
    %5441 = vmatpush1.msra.mxu0 0.0
    %5442 = vmatprep.subr.mxu0 0.0
    %5443 = vmatpush1.msra.mxu0 0.0
    %5444 = vmatprep.subr.mxu0 0.0
    %5445 = vmatpush1.msra.mxu0 0.0
    %5446 = vmatprep.subr.mxu0 0.0
    %5447 = vmatpush1.msra.mxu0 0.0
    %5448 = vmatprep.mubr.f32.mxu0 0.0
    %5449 = vmatmul.mubr.f32.gmra.mrb[0].mxu0 %v5379
    %v5450 = vpop.f32.mrb[0].mxu0
    %v5451 = vadd.f32 0.0, %v5450
    %v5452 = vpop.f32.mrb[0].mxu0
    %5453 = vmatprep.mubr.f32.mxu0 0.0
    %5454 = vmatmul.mubr.f32.gmra.mrb[0].mxu0 %v5382
    %v5455 = vpop.f32.mrb[0].mxu0
    %v5456 = vadd.f32 0.0, %v5455
    %v5457 = vpop.f32.mrb[0].mxu0
    %5458 = vdwg.mxu0
    %v5459 = vadd.f32 %v5376, %v5451
    %v5460 = vadd.f32 %v5377, %v5456
    %v5462 = vsel %vm171, %v5192, 0
    %v5465 = vsel %vm171, %v5197, 0
    %5467 = vmatprep.subr.mxu0 0.0
    %5468 = vmatpush1.msra.mxu0 %v5061
    %5469 = vmatprep.subr.mxu0 0.0
    %5470 = vmatpush1.msra.mxu0 %v5062
    %5471 = vmatprep.subr.mxu0 0.0
    %5472 = vmatpush1.msra.mxu0 0.0
    %5473 = vmatprep.subr.mxu0 0.0
    %5474 = vmatpush1.msra.mxu0 0.0
    %5475 = vmatprep.subr.mxu0 0.0
    %5476 = vmatpush1.msra.mxu0 0.0
    %5477 = vmatprep.subr.mxu0 0.0
    %5478 = vmatpush1.msra.mxu0 0.0
    %5479 = vmatprep.subr.mxu0 0.0
    %5480 = vmatpush1.msra.mxu0 0.0
    %5481 = vmatprep.subr.mxu0 0.0
    %5482 = vmatpush1.msra.mxu0 0.0
    %5483 = vmatprep.subr.mxu0 0.0
    %5484 = vmatpush1.msra.mxu0 0.0
    %5485 = vmatprep.subr.mxu0 0.0
    %5486 = vmatpush1.msra.mxu0 0.0
    %5487 = vmatprep.subr.mxu0 0.0
    %5488 = vmatpush1.msra.mxu0 0.0
    %5489 = vmatprep.subr.mxu0 0.0
    %5490 = vmatpush1.msra.mxu0 0.0
    %5491 = vmatprep.subr.mxu0 0.0
    %5492 = vmatpush1.msra.mxu0 0.0
    %5493 = vmatprep.subr.mxu0 0.0
    %5494 = vmatpush1.msra.mxu0 0.0
    %5495 = vmatprep.subr.mxu0 0.0
    %5496 = vmatpush1.msra.mxu0 0.0
    %5497 = vmatprep.subr.mxu0 0.0
    %5498 = vmatpush1.msra.mxu0 0.0
    %5499 = vmatprep.subr.mxu0 0.0
    %5500 = vmatpush1.msra.mxu0 0.0
    %5501 = vmatprep.subr.mxu0 0.0
    %5502 = vmatpush1.msra.mxu0 0.0
    %5503 = vmatprep.subr.mxu0 0.0
    %5504 = vmatpush1.msra.mxu0 0.0
    %5505 = vmatprep.subr.mxu0 0.0
    %5506 = vmatpush1.msra.mxu0 0.0
    %5507 = vmatprep.subr.mxu0 0.0
    %5508 = vmatpush1.msra.mxu0 0.0
    %5509 = vmatprep.subr.mxu0 0.0
    %5510 = vmatpush1.msra.mxu0 0.0
    %5511 = vmatprep.subr.mxu0 0.0
    %5512 = vmatpush1.msra.mxu0 0.0
    %5513 = vmatprep.subr.mxu0 0.0
    %5514 = vmatpush1.msra.mxu0 0.0
    %5515 = vmatprep.subr.mxu0 0.0
    %5516 = vmatpush1.msra.mxu0 0.0
    %5517 = vmatprep.subr.mxu0 0.0
    %5518 = vmatpush1.msra.mxu0 0.0
    %5519 = vmatprep.subr.mxu0 0.0
    %5520 = vmatpush1.msra.mxu0 0.0
    %5521 = vmatprep.subr.mxu0 0.0
    %5522 = vmatpush1.msra.mxu0 0.0
    %5523 = vmatprep.subr.mxu0 0.0
    %5524 = vmatpush1.msra.mxu0 0.0
    %5525 = vmatprep.subr.mxu0 0.0
    %5526 = vmatpush1.msra.mxu0 0.0
    %5527 = vmatprep.subr.mxu0 0.0
    %5528 = vmatpush1.msra.mxu0 0.0
    %5529 = vmatprep.subr.mxu0 0.0
    %5530 = vmatpush1.msra.mxu0 0.0
    %5531 = vmatprep.mubr.f32.mxu0 0.0
    %5532 = vmatmul.mubr.f32.gmra.mrb[0].mxu0 %v5462
    %v5533 = vpop.f32.mrb[0].mxu0
    %v5534 = vadd.f32 0.0, %v5533
    %v5535 = vpop.f32.mrb[0].mxu0
    %5536 = vmatprep.mubr.f32.mxu0 0.0
    %5537 = vmatmul.mubr.f32.gmra.mrb[0].mxu0 %v5465
    %v5538 = vpop.f32.mrb[0].mxu0
    %v5539 = vadd.f32 0.0, %v5538
    %v5540 = vpop.f32.mrb[0].mxu0
    %5541 = vdwg.mxu0
    %v5542 = vadd.f32 %v5459, %v5534
    %v5543 = vadd.f32 %v5460, %v5539
    %v5545 = vsel %vm171, %v5202, 0
    %v5548 = vsel %vm171, %v5207, 0
    %5550 = vmatprep.subr.mxu0 0.0
    %5551 = vmatpush1.msra.mxu0 %v5063
    %5552 = vmatprep.subr.mxu0 0.0
    %5553 = vmatpush1.msra.mxu0 %v5064
    %5554 = vmatprep.subr.mxu0 0.0
    %5555 = vmatpush1.msra.mxu0 0.0
    %5556 = vmatprep.subr.mxu0 0.0
    %5557 = vmatpush1.msra.mxu0 0.0
    %5558 = vmatprep.subr.mxu0 0.0
    %5559 = vmatpush1.msra.mxu0 0.0
    %5560 = vmatprep.subr.mxu0 0.0
    %5561 = vmatpush1.msra.mxu0 0.0
    %5562 = vmatprep.subr.mxu0 0.0
    %5563 = vmatpush1.msra.mxu0 0.0
    %5564 = vmatprep.subr.mxu0 0.0
    %5565 = vmatpush1.msra.mxu0 0.0
    %5566 = vmatprep.subr.mxu0 0.0
    %5567 = vmatpush1.msra.mxu0 0.0
    %5568 = vmatprep.subr.mxu0 0.0
    %5569 = vmatpush1.msra.mxu0 0.0
    %5570 = vmatprep.subr.mxu0 0.0
    %5571 = vmatpush1.msra.mxu0 0.0
    %5572 = vmatprep.subr.mxu0 0.0
    %5573 = vmatpush1.msra.mxu0 0.0
    %5574 = vmatprep.subr.mxu0 0.0
    %5575 = vmatpush1.msra.mxu0 0.0
    %5576 = vmatprep.subr.mxu0 0.0
    %5577 = vmatpush1.msra.mxu0 0.0
    %5578 = vmatprep.subr.mxu0 0.0
    %5579 = vmatpush1.msra.mxu0 0.0
    %5580 = vmatprep.subr.mxu0 0.0
    %5581 = vmatpush1.msra.mxu0 0.0
    %5582 = vmatprep.subr.mxu0 0.0
    %5583 = vmatpush1.msra.mxu0 0.0
    %5584 = vmatprep.subr.mxu0 0.0
    %5585 = vmatpush1.msra.mxu0 0.0
    %5586 = vmatprep.subr.mxu0 0.0
    %5587 = vmatpush1.msra.mxu0 0.0
    %5588 = vmatprep.subr.mxu0 0.0
    %5589 = vmatpush1.msra.mxu0 0.0
    %5590 = vmatprep.subr.mxu0 0.0
    %5591 = vmatpush1.msra.mxu0 0.0
    %5592 = vmatprep.subr.mxu0 0.0
    %5593 = vmatpush1.msra.mxu0 0.0
    %5594 = vmatprep.subr.mxu0 0.0
    %5595 = vmatpush1.msra.mxu0 0.0
    %5596 = vmatprep.subr.mxu0 0.0
    %5597 = vmatpush1.msra.mxu0 0.0
    %5598 = vmatprep.subr.mxu0 0.0
    %5599 = vmatpush1.msra.mxu0 0.0
    %5600 = vmatprep.subr.mxu0 0.0
    %5601 = vmatpush1.msra.mxu0 0.0
    %5602 = vmatprep.subr.mxu0 0.0
    %5603 = vmatpush1.msra.mxu0 0.0
    %5604 = vmatprep.subr.mxu0 0.0
    %5605 = vmatpush1.msra.mxu0 0.0
    %5606 = vmatprep.subr.mxu0 0.0
    %5607 = vmatpush1.msra.mxu0 0.0
    %5608 = vmatprep.subr.mxu0 0.0
    %5609 = vmatpush1.msra.mxu0 0.0
    %5610 = vmatprep.subr.mxu0 0.0
    %5611 = vmatpush1.msra.mxu0 0.0
    %5612 = vmatprep.subr.mxu0 0.0
    %5613 = vmatpush1.msra.mxu0 0.0
    %5614 = vmatprep.mubr.f32.mxu0 0.0
    %5615 = vmatmul.mubr.f32.gmra.mrb[0].mxu0 %v5545
    %v5616 = vpop.f32.mrb[0].mxu0
    %v5617 = vadd.f32 0.0, %v5616
    %v5618 = vpop.f32.mrb[0].mxu0
    %5619 = vmatprep.mubr.f32.mxu0 0.0
    %5620 = vmatmul.mubr.f32.gmra.mrb[0].mxu0 %v5548
    %v5621 = vpop.f32.mrb[0].mxu0
    %v5622 = vadd.f32 0.0, %v5621
    %v5623 = vpop.f32.mrb[0].mxu0
    %5624 = vdwg.mxu0
    %v5625 = vadd.f32 %v5542, %v5617
    %v5626 = vadd.f32 %v5543, %v5622
    %5627 = vmatprep.subr.mxu0 0.0
    %5628 = vmatpush1.msra.mxu0 %v5043
    %5629 = vmatprep.subr.mxu0 0.0
    %5630 = vmatpush1.msra.mxu0 %v5044
    %5631 = vmatprep.subr.mxu0 0.0
    %5632 = vmatpush1.msra.mxu0 0.0
    %5633 = vmatprep.subr.mxu0 0.0
    %5634 = vmatpush1.msra.mxu0 0.0
    %5635 = vmatprep.subr.mxu0 0.0
    %5636 = vmatpush1.msra.mxu0 0.0
    %5637 = vmatprep.subr.mxu0 0.0
    %5638 = vmatpush1.msra.mxu0 0.0
    %5639 = vmatprep.subr.mxu0 0.0
    %5640 = vmatpush1.msra.mxu0 0.0
    %5641 = vmatprep.subr.mxu0 0.0
    %5642 = vmatpush1.msra.mxu0 0.0
    %5643 = vmatprep.subr.mxu0 0.0
    %5644 = vmatpush1.msra.mxu0 0.0
    %5645 = vmatprep.subr.mxu0 0.0
    %5646 = vmatpush1.msra.mxu0 0.0
    %5647 = vmatprep.subr.mxu0 0.0
    %5648 = vmatpush1.msra.mxu0 0.0
    %5649 = vmatprep.subr.mxu0 0.0
    %5650 = vmatpush1.msra.mxu0 0.0
    %5651 = vmatprep.subr.mxu0 0.0
    %5652 = vmatpush1.msra.mxu0 0.0
    %5653 = vmatprep.subr.mxu0 0.0
    %5654 = vmatpush1.msra.mxu0 0.0
    %5655 = vmatprep.subr.mxu0 0.0
    %5656 = vmatpush1.msra.mxu0 0.0
    %5657 = vmatprep.subr.mxu0 0.0
    %5658 = vmatpush1.msra.mxu0 0.0
    %5659 = vmatprep.subr.mxu0 0.0
    %5660 = vmatpush1.msra.mxu0 0.0
    %5661 = vmatprep.subr.mxu0 0.0
    %5662 = vmatpush1.msra.mxu0 0.0
    %5663 = vmatprep.subr.mxu0 0.0
    %5664 = vmatpush1.msra.mxu0 0.0
    %5665 = vmatprep.subr.mxu0 0.0
    %5666 = vmatpush1.msra.mxu0 0.0
    %5667 = vmatprep.subr.mxu0 0.0
    %5668 = vmatpush1.msra.mxu0 0.0
    %5669 = vmatprep.subr.mxu0 0.0
    %5670 = vmatpush1.msra.mxu0 0.0
    %5671 = vmatprep.subr.mxu0 0.0
    %5672 = vmatpush1.msra.mxu0 0.0
    %5673 = vmatprep.subr.mxu0 0.0
    %5674 = vmatpush1.msra.mxu0 0.0
    %5675 = vmatprep.subr.mxu0 0.0
    %5676 = vmatpush1.msra.mxu0 0.0
    %5677 = vmatprep.subr.mxu0 0.0
    %5678 = vmatpush1.msra.mxu0 0.0
    %5679 = vmatprep.subr.mxu0 0.0
    %5680 = vmatpush1.msra.mxu0 0.0
    %5681 = vmatprep.subr.mxu0 0.0
    %5682 = vmatpush1.msra.mxu0 0.0
    %5683 = vmatprep.subr.mxu0 0.0
    %5684 = vmatpush1.msra.mxu0 0.0
    %5685 = vmatprep.subr.mxu0 0.0
    %5686 = vmatpush1.msra.mxu0 0.0
    %5687 = vmatprep.subr.mxu0 0.0
    %5688 = vmatpush1.msra.mxu0 0.0
    %5689 = vmatprep.subr.mxu0 0.0
    %5690 = vmatpush1.msra.mxu0 0.0
    %5691 = vmatprep.mubr.f32.mxu0 0.0
    %5692 = vmatmul.mubr.f32.gmra.mrb[0].mxu0 %v5066
    %v5693 = vpop.f32.mrb[0].mxu0
    %v5694 = vadd.f32 0.0, %v5693
    %v5695 = vpop.f32.mrb[0].mxu0
    %5696 = vmatprep.mubr.f32.mxu0 0.0
    %5697 = vmatmul.mubr.f32.gmra.mrb[0].mxu0 %v5069
    %v5698 = vpop.f32.mrb[0].mxu0
    %v5699 = vadd.f32 0.0, %v5698
    %v5700 = vpop.f32.mrb[0].mxu0
    %5701 = vmatprep.mubr.f32.mxu0 0.0
    %5702 = vmatmul.mubr.f32.gmra.mrb[0].mxu0 %v5072
    %v5703 = vpop.f32.mrb[0].mxu0
    %v5704 = vadd.f32 0.0, %v5703
    %v5705 = vpop.f32.mrb[0].mxu0
    %5706 = vmatprep.mubr.f32.mxu0 0.0
    %5707 = vmatmul.mubr.f32.gmra.mrb[0].mxu0 %v5075
    %v5708 = vpop.f32.mrb[0].mxu0
    %v5709 = vadd.f32 0.0, %v5708
    %v5710 = vpop.f32.mrb[0].mxu0
    %5711 = vmatprep.mubr.f32.mxu0 0.0
    %5712 = vmatmul.mubr.f32.gmra.mrb[0].mxu0 %v5078
    %v5713 = vpop.f32.mrb[0].mxu0
    %v5714 = vadd.f32 0.0, %v5713
    %v5715 = vpop.f32.mrb[0].mxu0
    %5716 = vmatprep.mubr.f32.mxu0 0.0
    %5717 = vmatmul.mubr.f32.gmra.mrb[0].mxu0 %v5081
    %v5718 = vpop.f32.mrb[0].mxu0
    %v5719 = vadd.f32 0.0, %v5718
    %v5720 = vpop.f32.mrb[0].mxu0
    %5721 = vmatprep.mubr.f32.mxu0 0.0
    %5722 = vmatmul.mubr.f32.gmra.mrb[0].mxu0 %v5084
    %v5723 = vpop.f32.mrb[0].mxu0
    %v5724 = vadd.f32 0.0, %v5723
    %v5725 = vpop.f32.mrb[0].mxu0
    %5726 = vmatprep.mubr.f32.mxu0 0.0
    %5727 = vmatmul.mubr.f32.gmra.mrb[0].mxu0 %v5087
    %v5728 = vpop.f32.mrb[0].mxu0
    %v5729 = vadd.f32 0.0, %v5728
    %v5730 = vpop.f32.mrb[0].mxu0
    %5731 = vmatprep.mubr.f32.mxu0 0.0
    %5732 = vmatmul.mubr.f32.gmra.mrb[0].mxu0 %v5090
    %v5733 = vpop.f32.mrb[0].mxu0
    %v5734 = vadd.f32 0.0, %v5733
    %v5735 = vpop.f32.mrb[0].mxu0
    %5736 = vmatprep.mubr.f32.mxu0 0.0
    %5737 = vmatmul.mubr.f32.gmra.mrb[0].mxu0 %v5093
    %v5738 = vpop.f32.mrb[0].mxu0
    %v5739 = vadd.f32 0.0, %v5738
    %v5740 = vpop.f32.mrb[0].mxu0
    %5741 = vdwg.mxu0
    %v5742 = vld [vmem:[%s55 + $0x10] sm:$0xff]
    %v5743 = vld [vmem:[%s55 + $0x18] sm:$0xff]
    %v5745 = vsel %vm171, %v5694, 0
    %v5748 = vsel %vm171, %v5699, 0
    %5750 = vmatprep.subr.mxu0 0.0
    %5751 = vmatpush1.msra.mxu0 %v5055
    %5752 = vmatprep.subr.mxu0 0.0
    %5753 = vmatpush1.msra.mxu0 %v5056
    %5754 = vmatprep.subr.mxu0 0.0
    %5755 = vmatpush1.msra.mxu0 0.0
    %5756 = vmatprep.subr.mxu0 0.0
    %5757 = vmatpush1.msra.mxu0 0.0
    %5758 = vmatprep.subr.mxu0 0.0
    %5759 = vmatpush1.msra.mxu0 0.0
    %5760 = vmatprep.subr.mxu0 0.0
    %5761 = vmatpush1.msra.mxu0 0.0
    %5762 = vmatprep.subr.mxu0 0.0
    %5763 = vmatpush1.msra.mxu0 0.0
    %5764 = vmatprep.subr.mxu0 0.0
    %5765 = vmatpush1.msra.mxu0 0.0
    %5766 = vmatprep.subr.mxu0 0.0
    %5767 = vmatpush1.msra.mxu0 0.0
    %5768 = vmatprep.subr.mxu0 0.0
    %5769 = vmatpush1.msra.mxu0 0.0
    %5770 = vmatprep.subr.mxu0 0.0
    %5771 = vmatpush1.msra.mxu0 0.0
    %5772 = vmatprep.subr.mxu0 0.0
    %5773 = vmatpush1.msra.mxu0 0.0
    %5774 = vmatprep.subr.mxu0 0.0
    %5775 = vmatpush1.msra.mxu0 0.0
    %5776 = vmatprep.subr.mxu0 0.0
    %5777 = vmatpush1.msra.mxu0 0.0
    %5778 = vmatprep.subr.mxu0 0.0
    %5779 = vmatpush1.msra.mxu0 0.0
    %5780 = vmatprep.subr.mxu0 0.0
    %5781 = vmatpush1.msra.mxu0 0.0
    %5782 = vmatprep.subr.mxu0 0.0
    %5783 = vmatpush1.msra.mxu0 0.0
    %5784 = vmatprep.subr.mxu0 0.0
    %5785 = vmatpush1.msra.mxu0 0.0
    %5786 = vmatprep.subr.mxu0 0.0
    %5787 = vmatpush1.msra.mxu0 0.0
    %5788 = vmatprep.subr.mxu0 0.0
    %5789 = vmatpush1.msra.mxu0 0.0
    %5790 = vmatprep.subr.mxu0 0.0
    %5791 = vmatpush1.msra.mxu0 0.0
    %5792 = vmatprep.subr.mxu0 0.0
    %5793 = vmatpush1.msra.mxu0 0.0
    %5794 = vmatprep.subr.mxu0 0.0
    %5795 = vmatpush1.msra.mxu0 0.0
    %5796 = vmatprep.subr.mxu0 0.0
    %5797 = vmatpush1.msra.mxu0 0.0
    %5798 = vmatprep.subr.mxu0 0.0
    %5799 = vmatpush1.msra.mxu0 0.0
    %5800 = vmatprep.subr.mxu0 0.0
    %5801 = vmatpush1.msra.mxu0 0.0
    %5802 = vmatprep.subr.mxu0 0.0
    %5803 = vmatpush1.msra.mxu0 0.0
    %5804 = vmatprep.subr.mxu0 0.0
    %5805 = vmatpush1.msra.mxu0 0.0
    %5806 = vmatprep.subr.mxu0 0.0
    %5807 = vmatpush1.msra.mxu0 0.0
    %5808 = vmatprep.subr.mxu0 0.0
    %5809 = vmatpush1.msra.mxu0 0.0
    %5810 = vmatprep.subr.mxu0 0.0
    %5811 = vmatpush1.msra.mxu0 0.0
    %5812 = vmatprep.subr.mxu0 0.0
    %5813 = vmatpush1.msra.mxu0 0.0
    %5814 = vmatprep.mubr.f32.mxu0 0.0
    %5815 = vmatmul.mubr.f32.gmra.mrb[0].mxu0 %v5745
    %v5816 = vpop.f32.mrb[0].mxu0
    %v5817 = vadd.f32 0.0, %v5816
    %v5818 = vpop.f32.mrb[0].mxu0
    %5819 = vmatprep.mubr.f32.mxu0 0.0
    %5820 = vmatmul.mubr.f32.gmra.mrb[0].mxu0 %v5748
    %v5821 = vpop.f32.mrb[0].mxu0
    %v5822 = vadd.f32 0.0, %v5821
    %v5823 = vpop.f32.mrb[0].mxu0
    %5824 = vdwg.mxu0
    %v5825 = vadd.f32 %v5742, %v5817
    %v5826 = vadd.f32 %v5743, %v5822
    %v5828 = vsel %vm171, %v5704, 0
    %v5831 = vsel %vm171, %v5709, 0
    %5833 = vmatprep.subr.mxu0 0.0
    %5834 = vmatpush1.msra.mxu0 %v5057
    %5835 = vmatprep.subr.mxu0 0.0
    %5836 = vmatpush1.msra.mxu0 %v5058
    %5837 = vmatprep.subr.mxu0 0.0
    %5838 = vmatpush1.msra.mxu0 0.0
    %5839 = vmatprep.subr.mxu0 0.0
    %5840 = vmatpush1.msra.mxu0 0.0
    %5841 = vmatprep.subr.mxu0 0.0
    %5842 = vmatpush1.msra.mxu0 0.0
    %5843 = vmatprep.subr.mxu0 0.0
    %5844 = vmatpush1.msra.mxu0 0.0
    %5845 = vmatprep.subr.mxu0 0.0
    %5846 = vmatpush1.msra.mxu0 0.0
    %5847 = vmatprep.subr.mxu0 0.0
    %5848 = vmatpush1.msra.mxu0 0.0
    %5849 = vmatprep.subr.mxu0 0.0
    %5850 = vmatpush1.msra.mxu0 0.0
    %5851 = vmatprep.subr.mxu0 0.0
    %5852 = vmatpush1.msra.mxu0 0.0
    %5853 = vmatprep.subr.mxu0 0.0
    %5854 = vmatpush1.msra.mxu0 0.0
    %5855 = vmatprep.subr.mxu0 0.0
    %5856 = vmatpush1.msra.mxu0 0.0
    %5857 = vmatprep.subr.mxu0 0.0
    %5858 = vmatpush1.msra.mxu0 0.0
    %5859 = vmatprep.subr.mxu0 0.0
    %5860 = vmatpush1.msra.mxu0 0.0
    %5861 = vmatprep.subr.mxu0 0.0
    %5862 = vmatpush1.msra.mxu0 0.0
    %5863 = vmatprep.subr.mxu0 0.0
    %5864 = vmatpush1.msra.mxu0 0.0
    %5865 = vmatprep.subr.mxu0 0.0
    %5866 = vmatpush1.msra.mxu0 0.0
    %5867 = vmatprep.subr.mxu0 0.0
    %5868 = vmatpush1.msra.mxu0 0.0
    %5869 = vmatprep.subr.mxu0 0.0
    %5870 = vmatpush1.msra.mxu0 0.0
    %5871 = vmatprep.subr.mxu0 0.0
    %5872 = vmatpush1.msra.mxu0 0.0
    %5873 = vmatprep.subr.mxu0 0.0
    %5874 = vmatpush1.msra.mxu0 0.0
    %5875 = vmatprep.subr.mxu0 0.0
    %5876 = vmatpush1.msra.mxu0 0.0
    %5877 = vmatprep.subr.mxu0 0.0
    %5878 = vmatpush1.msra.mxu0 0.0
    %5879 = vmatprep.subr.mxu0 0.0
    %5880 = vmatpush1.msra.mxu0 0.0
    %5881 = vmatprep.subr.mxu0 0.0
    %5882 = vmatpush1.msra.mxu0 0.0
    %5883 = vmatprep.subr.mxu0 0.0
    %5884 = vmatpush1.msra.mxu0 0.0
    %5885 = vmatprep.subr.mxu0 0.0
    %5886 = vmatpush1.msra.mxu0 0.0
    %5887 = vmatprep.subr.mxu0 0.0
    %5888 = vmatpush1.msra.mxu0 0.0
    %5889 = vmatprep.subr.mxu0 0.0
    %5890 = vmatpush1.msra.mxu0 0.0
    %5891 = vmatprep.subr.mxu0 0.0
    %5892 = vmatpush1.msra.mxu0 0.0
    %5893 = vmatprep.subr.mxu0 0.0
    %5894 = vmatpush1.msra.mxu0 0.0
    %5895 = vmatprep.subr.mxu0 0.0
    %5896 = vmatpush1.msra.mxu0 0.0
    %5897 = vmatprep.mubr.f32.mxu0 0.0
    %5898 = vmatmul.mubr.f32.gmra.mrb[0].mxu0 %v5828
    %v5899 = vpop.f32.mrb[0].mxu0
    %v5900 = vadd.f32 0.0, %v5899
    %v5901 = vpop.f32.mrb[0].mxu0
    %5902 = vmatprep.mubr.f32.mxu0 0.0
    %5903 = vmatmul.mubr.f32.gmra.mrb[0].mxu0 %v5831
    %v5904 = vpop.f32.mrb[0].mxu0
    %v5905 = vadd.f32 0.0, %v5904
    %v5906 = vpop.f32.mrb[0].mxu0
    %5907 = vdwg.mxu0
    %v5908 = vadd.f32 %v5825, %v5900
    %v5909 = vadd.f32 %v5826, %v5905
    %v5911 = vsel %vm171, %v5714, 0
    %v5914 = vsel %vm171, %v5719, 0
    %5916 = vmatprep.subr.mxu0 0.0
    %5917 = vmatpush1.msra.mxu0 %v5059
    %5918 = vmatprep.subr.mxu0 0.0
    %5919 = vmatpush1.msra.mxu0 %v5060
    %5920 = vmatprep.subr.mxu0 0.0
    %5921 = vmatpush1.msra.mxu0 0.0
    %5922 = vmatprep.subr.mxu0 0.0
    %5923 = vmatpush1.msra.mxu0 0.0
    %5924 = vmatprep.subr.mxu0 0.0
    %5925 = vmatpush1.msra.mxu0 0.0
    %5926 = vmatprep.subr.mxu0 0.0
    %5927 = vmatpush1.msra.mxu0 0.0
    %5928 = vmatprep.subr.mxu0 0.0
    %5929 = vmatpush1.msra.mxu0 0.0
    %5930 = vmatprep.subr.mxu0 0.0
    %5931 = vmatpush1.msra.mxu0 0.0
    %5932 = vmatprep.subr.mxu0 0.0
    %5933 = vmatpush1.msra.mxu0 0.0
    %5934 = vmatprep.subr.mxu0 0.0
    %5935 = vmatpush1.msra.mxu0 0.0
    %5936 = vmatprep.subr.mxu0 0.0
    %5937 = vmatpush1.msra.mxu0 0.0
    %5938 = vmatprep.subr.mxu0 0.0
    %5939 = vmatpush1.msra.mxu0 0.0
    %5940 = vmatprep.subr.mxu0 0.0
    %5941 = vmatpush1.msra.mxu0 0.0
    %5942 = vmatprep.subr.mxu0 0.0
    %5943 = vmatpush1.msra.mxu0 0.0
    %5944 = vmatprep.subr.mxu0 0.0
    %5945 = vmatpush1.msra.mxu0 0.0
    %5946 = vmatprep.subr.mxu0 0.0
    %5947 = vmatpush1.msra.mxu0 0.0
    %5948 = vmatprep.subr.mxu0 0.0
    %5949 = vmatpush1.msra.mxu0 0.0
    %5950 = vmatprep.subr.mxu0 0.0
    %5951 = vmatpush1.msra.mxu0 0.0
    %5952 = vmatprep.subr.mxu0 0.0
    %5953 = vmatpush1.msra.mxu0 0.0
    %5954 = vmatprep.subr.mxu0 0.0
    %5955 = vmatpush1.msra.mxu0 0.0
    %5956 = vmatprep.subr.mxu0 0.0
    %5957 = vmatpush1.msra.mxu0 0.0
    %5958 = vmatprep.subr.mxu0 0.0
    %5959 = vmatpush1.msra.mxu0 0.0
    %5960 = vmatprep.subr.mxu0 0.0
    %5961 = vmatpush1.msra.mxu0 0.0
    %5962 = vmatprep.subr.mxu0 0.0
    %5963 = vmatpush1.msra.mxu0 0.0
    %5964 = vmatprep.subr.mxu0 0.0
    %5965 = vmatpush1.msra.mxu0 0.0
    %5966 = vmatprep.subr.mxu0 0.0
    %5967 = vmatpush1.msra.mxu0 0.0
    %5968 = vmatprep.subr.mxu0 0.0
    %5969 = vmatpush1.msra.mxu0 0.0
    %5970 = vmatprep.subr.mxu0 0.0
    %5971 = vmatpush1.msra.mxu0 0.0
    %5972 = vmatprep.subr.mxu0 0.0
    %5973 = vmatpush1.msra.mxu0 0.0
    %5974 = vmatprep.subr.mxu0 0.0
    %5975 = vmatpush1.msra.mxu0 0.0
    %5976 = vmatprep.subr.mxu0 0.0
    %5977 = vmatpush1.msra.mxu0 0.0
    %5978 = vmatprep.subr.mxu0 0.0
    %5979 = vmatpush1.msra.mxu0 0.0
    %5980 = vmatprep.mubr.f32.mxu0 0.0
    %5981 = vmatmul.mubr.f32.gmra.mrb[0].mxu0 %v5911
    %v5982 = vpop.f32.mrb[0].mxu0
    %v5983 = vadd.f32 0.0, %v5982
    %v5984 = vpop.f32.mrb[0].mxu0
    %5985 = vmatprep.mubr.f32.mxu0 0.0
    %5986 = vmatmul.mubr.f32.gmra.mrb[0].mxu0 %v5914
    %v5987 = vpop.f32.mrb[0].mxu0
    %v5988 = vadd.f32 0.0, %v5987
    %v5989 = vpop.f32.mrb[0].mxu0
    %5990 = vdwg.mxu0
    %v5991 = vadd.f32 %v5908, %v5983
    %v5992 = vadd.f32 %v5909, %v5988
    %v5994 = vsel %vm171, %v5724, 0
    %v5997 = vsel %vm171, %v5729, 0
    %5999 = vmatprep.subr.mxu0 0.0
    %6000 = vmatpush1.msra.mxu0 %v5061
    %6001 = vmatprep.subr.mxu0 0.0
    %6002 = vmatpush1.msra.mxu0 %v5062
    %6003 = vmatprep.subr.mxu0 0.0
    %6004 = vmatpush1.msra.mxu0 0.0
    %6005 = vmatprep.subr.mxu0 0.0
    %6006 = vmatpush1.msra.mxu0 0.0
    %6007 = vmatprep.subr.mxu0 0.0
    %6008 = vmatpush1.msra.mxu0 0.0
    %6009 = vmatprep.subr.mxu0 0.0
    %6010 = vmatpush1.msra.mxu0 0.0
    %6011 = vmatprep.subr.mxu0 0.0
    %6012 = vmatpush1.msra.mxu0 0.0
    %6013 = vmatprep.subr.mxu0 0.0
    %6014 = vmatpush1.msra.mxu0 0.0
    %6015 = vmatprep.subr.mxu0 0.0
    %6016 = vmatpush1.msra.mxu0 0.0
    %6017 = vmatprep.subr.mxu0 0.0
    %6018 = vmatpush1.msra.mxu0 0.0
    %6019 = vmatprep.subr.mxu0 0.0
    %6020 = vmatpush1.msra.mxu0 0.0
    %6021 = vmatprep.subr.mxu0 0.0
    %6022 = vmatpush1.msra.mxu0 0.0
    %6023 = vmatprep.subr.mxu0 0.0
    %6024 = vmatpush1.msra.mxu0 0.0
    %6025 = vmatprep.subr.mxu0 0.0
    %6026 = vmatpush1.msra.mxu0 0.0
    %6027 = vmatprep.subr.mxu0 0.0
    %6028 = vmatpush1.msra.mxu0 0.0
    %6029 = vmatprep.subr.mxu0 0.0
    %6030 = vmatpush1.msra.mxu0 0.0
    %6031 = vmatprep.subr.mxu0 0.0
    %6032 = vmatpush1.msra.mxu0 0.0
    %6033 = vmatprep.subr.mxu0 0.0
    %6034 = vmatpush1.msra.mxu0 0.0
    %6035 = vmatprep.subr.mxu0 0.0
    %6036 = vmatpush1.msra.mxu0 0.0
    %6037 = vmatprep.subr.mxu0 0.0
    %6038 = vmatpush1.msra.mxu0 0.0
    %6039 = vmatprep.subr.mxu0 0.0
    %6040 = vmatpush1.msra.mxu0 0.0
    %6041 = vmatprep.subr.mxu0 0.0
    %6042 = vmatpush1.msra.mxu0 0.0
    %6043 = vmatprep.subr.mxu0 0.0
    %6044 = vmatpush1.msra.mxu0 0.0
    %6045 = vmatprep.subr.mxu0 0.0
    %6046 = vmatpush1.msra.mxu0 0.0
    %6047 = vmatprep.subr.mxu0 0.0
    %6048 = vmatpush1.msra.mxu0 0.0
    %6049 = vmatprep.subr.mxu0 0.0
    %6050 = vmatpush1.msra.mxu0 0.0
    %6051 = vmatprep.subr.mxu0 0.0
    %6052 = vmatpush1.msra.mxu0 0.0
    %6053 = vmatprep.subr.mxu0 0.0
    %6054 = vmatpush1.msra.mxu0 0.0
    %6055 = vmatprep.subr.mxu0 0.0
    %6056 = vmatpush1.msra.mxu0 0.0
    %6057 = vmatprep.subr.mxu0 0.0
    %6058 = vmatpush1.msra.mxu0 0.0
    %6059 = vmatprep.subr.mxu0 0.0
    %6060 = vmatpush1.msra.mxu0 0.0
    %6061 = vmatprep.subr.mxu0 0.0
    %6062 = vmatpush1.msra.mxu0 0.0
    %6063 = vmatprep.mubr.f32.mxu0 0.0
    %6064 = vmatmul.mubr.f32.gmra.mrb[0].mxu0 %v5994
    %v6065 = vpop.f32.mrb[0].mxu0
    %v6066 = vadd.f32 0.0, %v6065
    %v6067 = vpop.f32.mrb[0].mxu0
    %6068 = vmatprep.mubr.f32.mxu0 0.0
    %6069 = vmatmul.mubr.f32.gmra.mrb[0].mxu0 %v5997
    %v6070 = vpop.f32.mrb[0].mxu0
    %v6071 = vadd.f32 0.0, %v6070
    %v6072 = vpop.f32.mrb[0].mxu0
    %6073 = vdwg.mxu0
    %v6074 = vadd.f32 %v5991, %v6066
    %v6075 = vadd.f32 %v5992, %v6071
    %v6077 = vsel %vm171, %v5734, 0
    %v6080 = vsel %vm171, %v5739, 0
    %6082 = vmatprep.subr.mxu0 0.0
    %6083 = vmatpush1.msra.mxu0 %v5063
    %6084 = vmatprep.subr.mxu0 0.0
    %6085 = vmatpush1.msra.mxu0 %v5064
    %6086 = vmatprep.subr.mxu0 0.0
    %6087 = vmatpush1.msra.mxu0 0.0
    %6088 = vmatprep.subr.mxu0 0.0
    %6089 = vmatpush1.msra.mxu0 0.0
    %6090 = vmatprep.subr.mxu0 0.0
    %6091 = vmatpush1.msra.mxu0 0.0
    %6092 = vmatprep.subr.mxu0 0.0
    %6093 = vmatpush1.msra.mxu0 0.0
    %6094 = vmatprep.subr.mxu0 0.0
    %6095 = vmatpush1.msra.mxu0 0.0
    %6096 = vmatprep.subr.mxu0 0.0
    %6097 = vmatpush1.msra.mxu0 0.0
    %6098 = vmatprep.subr.mxu0 0.0
    %6099 = vmatpush1.msra.mxu0 0.0
    %6100 = vmatprep.subr.mxu0 0.0
    %6101 = vmatpush1.msra.mxu0 0.0
    %6102 = vmatprep.subr.mxu0 0.0
    %6103 = vmatpush1.msra.mxu0 0.0
    %6104 = vmatprep.subr.mxu0 0.0
    %6105 = vmatpush1.msra.mxu0 0.0
    %6106 = vmatprep.subr.mxu0 0.0
    %6107 = vmatpush1.msra.mxu0 0.0
    %6108 = vmatprep.subr.mxu0 0.0
    %6109 = vmatpush1.msra.mxu0 0.0
    %6110 = vmatprep.subr.mxu0 0.0
    %6111 = vmatpush1.msra.mxu0 0.0
    %6112 = vmatprep.subr.mxu0 0.0
    %6113 = vmatpush1.msra.mxu0 0.0
    %6114 = vmatprep.subr.mxu0 0.0
    %6115 = vmatpush1.msra.mxu0 0.0
    %6116 = vmatprep.subr.mxu0 0.0
    %6117 = vmatpush1.msra.mxu0 0.0
    %6118 = vmatprep.subr.mxu0 0.0
    %6119 = vmatpush1.msra.mxu0 0.0
    %6120 = vmatprep.subr.mxu0 0.0
    %6121 = vmatpush1.msra.mxu0 0.0
    %6122 = vmatprep.subr.mxu0 0.0
    %6123 = vmatpush1.msra.mxu0 0.0
    %6124 = vmatprep.subr.mxu0 0.0
    %6125 = vmatpush1.msra.mxu0 0.0
    %6126 = vmatprep.subr.mxu0 0.0
    %6127 = vmatpush1.msra.mxu0 0.0
    %6128 = vmatprep.subr.mxu0 0.0
    %6129 = vmatpush1.msra.mxu0 0.0
    %6130 = vmatprep.subr.mxu0 0.0
    %6131 = vmatpush1.msra.mxu0 0.0
    %6132 = vmatprep.subr.mxu0 0.0
    %6133 = vmatpush1.msra.mxu0 0.0
    %6134 = vmatprep.subr.mxu0 0.0
    %6135 = vmatpush1.msra.mxu0 0.0
    %6136 = vmatprep.subr.mxu0 0.0
    %6137 = vmatpush1.msra.mxu0 0.0
    %6138 = vmatprep.subr.mxu0 0.0
    %6139 = vmatpush1.msra.mxu0 0.0
    %6140 = vmatprep.subr.mxu0 0.0
    %6141 = vmatpush1.msra.mxu0 0.0
    %6142 = vmatprep.subr.mxu0 0.0
    %6143 = vmatpush1.msra.mxu0 0.0
    %6144 = vmatprep.subr.mxu0 0.0
    %6145 = vmatpush1.msra.mxu0 0.0
    %6146 = vmatprep.mubr.f32.mxu0 0.0
    %6147 = vmatmul.mubr.f32.gmra.mrb[0].mxu0 %v6077
    %v6148 = vpop.f32.mrb[0].mxu0
    %v6149 = vadd.f32 0.0, %v6148
    %v6150 = vpop.f32.mrb[0].mxu0
    %6151 = vmatprep.mubr.f32.mxu0 0.0
    %6152 = vmatmul.mubr.f32.gmra.mrb[0].mxu0 %v6080
    %v6153 = vpop.f32.mrb[0].mxu0
    %v6154 = vadd.f32 0.0, %v6153
    %v6155 = vpop.f32.mrb[0].mxu0
    %6156 = vdwg.mxu0
    %v6157 = vadd.f32 %v6074, %v6149
    %v6158 = vadd.f32 %v6075, %v6154
    %6159 = vst.msk [vmem:[#allocation2] sm:$0xff] %vm319, %v5625
    %6160 = vst.msk [vmem:[#allocation2 + $0x8] sm:$0xff] %vm319, %v5626
    %6161 = vst.msk [vmem:[#allocation2 + $0x10] sm:$0xff] %vm319, %v6157
    %6162 = vst.msk [vmem:[#allocation2 + $0x18] sm:$0xff] %vm319, %v6158
    // Predicated region
    $region114: #{cvae_forward.1} parent=1 // pred_check
      _
    $region115: #{cvae_forward.1} parent=1 // pred_check_branch
      %6164 = sbr.rel (0) target = $region117
    $region116: #{cvae_forward.1} parent=1 // pred_region
      %s6166 = ssub.s32 512, 512
      %6167 = vsyncadd [#allocation3], %s6166
      %s6168 = sshll.u32 [#allocation2], 4
      %s6169 = int_to_ptr.vmem [resolvable:$true] %s6168
      %6174 = dma.vmem_to_hbm [thread:$0]  %s6169, 512, %s57, [#allocation3], 128, 128, 8
    $region117: #{cvae_forward.1} parent=1 // pred_fallthru
      _
    // Predicated region
    $region118: #{cvae_forward.1} parent=1 // pred_check
      _
    $region119: #{cvae_forward.1} parent=1 // pred_check_branch
      %6176 = sbr.rel (0) target = $region121
    $region120: #{cvae_forward.1} parent=1 // pred_region
      _
    $region121: #{cvae_forward.1} parent=1 // pred_fallthru
      _
    // Predicated region
    $region122: #{cvae_forward.1} parent=1 // pred_check
      _
    $region123: #{cvae_forward.1} parent=1 // pred_check_branch
      %6178 = sbr.rel (0) target = $region125
    $region124: #{cvae_forward.1} parent=1 // pred_region
      _
    $region125: #{cvae_forward.1} parent=1 // pred_fallthru
      _
    // Predicated region
    $region126: #{cvae_forward.1} parent=1 // pred_check
      _
    $region127: #{cvae_forward.1} parent=1 // pred_check_branch
      %6180 = sbr.rel (0) target = $region129
    $region128: #{cvae_forward.1} parent=1 // pred_region
      %6181 = dma.done [#allocation3], 512
    $region129: #{cvae_forward.1} parent=1 // pred_fallthru
      _
    // Predicated region
    $region130: #{cvae_forward.1} parent=1 // pred_check
      _
    $region131: #{cvae_forward.1} parent=1 // pred_check_branch
      %6183 = sbr.rel (0) target = $region133
    $region132: #{cvae_forward.1} parent=1 // pred_region
      _
    $region133: #{cvae_forward.1} parent=1 // pred_fallthru
      _
    // Predicated region
    $region134: #{cvae_forward.1} parent=1 // pred_check
      _
    $region135: #{cvae_forward.1} parent=1 // pred_check_branch
      %6185 = sbr.rel (0) target = $region137
    $region136: #{cvae_forward.1} parent=1 // pred_region
      _
    $region137: #{cvae_forward.1} parent=1 // pred_fallthru
      _
    %6186 = vsyncpa [#allocation3], 1

</llo_original>
